<compile_context>
chip_gen: v6e
topology: v6e:2x2x1
jax: 0.10.0
libtpu: 0.0.40
codegen_flags: <defaults>
</compile_context>

<pallas_src>
import functools
import math

import jax
import jax.numpy as jnp
from jax.experimental import pallas as pl
from jax.experimental.pallas import tpu as pltpu


# --------------------------------------------------------------------------
# in-kernel helpers
# --------------------------------------------------------------------------
def _layernorm(x, g, b, eps=1e-5):
    # Two-pass statistics (mean, then variance of the centered values) to
    # match PyTorch nn.LayerNorm and avoid E[x^2]-E[x]^2 cancellation.
    mu = jnp.mean(x, axis=-1, keepdims=True)
    xc = x - mu
    var = jnp.mean(xc * xc, axis=-1, keepdims=True)
    return xc * jax.lax.rsqrt(var + eps) * g + b


def _split_heads(t, num_heads, dk, fast):
    """[S, D] -> [H, S, dk] head-major view."""
    S = t.shape[0]
    if fast:
        # one reshape + one lane-layout-aware transpose (no H-way slice+stack)
        return pltpu.einshape("shd->hsd", t.reshape(S, num_heads, dk))
    # conservative fallback (previously validated lowering)
    return jnp.stack([t[:, h * dk:(h + 1) * dk] for h in range(num_heads)],
                     axis=0)


def _merge_heads(o, fast):
    """[H, S, dk] -> [S, H*dk]."""
    H, S, dk = o.shape
    if fast:
        return pltpu.einshape("hsd->shd", o).reshape(S, H * dk)
    return jnp.concatenate([o[h] for h in range(H)], axis=-1)


def _mha(h_rows, kv_rows, Bt, Sq, Sk,
         w_q, b_q, w_k, b_k, w_v, b_v, w_o, b_o,
         num_heads, *, causal, mask, fast):
    """Multi-head attention over a batch-tile.

    h_rows:  [Bt*Sq, D] f32 (LayerNormed query source rows)
    kv_rows: [Bt*Sk, D] f32 (key/value source rows)
    w_*: bf16 [D, D]; b_*: f32 [1, D]
    mask: optional f32 [Bt, Sq, Sk] (1 = keep, 0 = mask out); ignored if causal.
    """
    D = h_rows.shape[1]
    dk = D // num_heads
    scale = 1.0 / math.sqrt(dk)

    hb = h_rows.astype(jnp.bfloat16)
    kvb = kv_rows.astype(jnp.bfloat16)

    # Full-width projections over all Bt*S rows at once (one MXU call each),
    # f32 accumulation; 1/sqrt(dk) folded into q (O(rows*D), not O(H*S^2)).
    q_all = (jnp.dot(hb, w_q, preferred_element_type=jnp.float32) + b_q) * scale
    k_all = jnp.dot(kvb, w_k, preferred_element_type=jnp.float32) + b_k
    v_all = jnp.dot(kvb, w_v, preferred_element_type=jnp.float32) + b_v

    if causal:
        # In-kernel causal mask as an additive bias (no [B,S,S] HBM traffic).
        row = jax.lax.broadcasted_iota(jnp.int32, (Sq, Sk), 0)
        col = jax.lax.broadcasted_iota(jnp.int32, (Sq, Sk), 1)
        bias = jnp.where(row >= col, jnp.float32(0.0), jnp.float32(-1e9))

    ctx = []
    for b in range(Bt):  # static unroll over the (small) batch tile
        q3 = _split_heads(q_all[b * Sq:(b + 1) * Sq], num_heads, dk, fast)
        k3 = _split_heads(k_all[b * Sk:(b + 1) * Sk], num_heads, dk, fast)
        v3 = _split_heads(v_all[b * Sk:(b + 1) * Sk], num_heads, dk, fast)

        # Batched contraction for all heads at once.
        s = jnp.einsum('hqd,hkd->hqk',
                       q3.astype(jnp.bfloat16), k3.astype(jnp.bfloat16),
                       preferred_element_type=jnp.float32)        # [H,Sq,Sk]
        if causal:
            s = s + bias[None, :, :]
        elif mask is not None:
            # NOTE: a fully-masked row softmaxes over -1e9 (uniform, not
            # zero); fine for causal/padding-free use (matches reference).
            s = jnp.where(mask[b][None, :, :] > 0.5, s, jnp.float32(-1e9))

        m = jnp.max(s, axis=-1, keepdims=True)
        p = jnp.exp(s - m)                                        # unnormalized
        denom = jnp.sum(p, axis=-1, keepdims=True)                # [H,Sq,1]
        o = jnp.einsum('hqk,hkd->hqd',
                       p.astype(jnp.bfloat16), v3.astype(jnp.bfloat16),
                       preferred_element_type=jnp.float32)        # [H,Sq,dk]
        # Deferred (flash-style) normalization on the small [H,Sq,dk] tensor;
        # pl.reciprocal(approx=True) uses the EUP slot.
        o = o * pl.reciprocal(denom, approx=True)
        ctx.append(_merge_heads(o, fast))                         # [Sq, D]

    ctx_rows = ctx[0] if Bt == 1 else jnp.concatenate(ctx, axis=0)  # [Bt*Sq,D]
    # Single fused output projection for the whole batch tile (full-D
    # contraction, one MXU call).
    return jnp.dot(ctx_rows.astype(jnp.bfloat16), w_o,
                   preferred_element_type=jnp.float32) + b_o


# --------------------------------------------------------------------------
# kernel
# --------------------------------------------------------------------------
def decoder_layer_kernel(*refs, num_heads, ffn_chunk, causal, fast_heads):
    refs = list(refs)
    x_ref = refs.pop(0)           # [Bt, St, D] f32
    mem_ref = refs.pop(0)         # [Bt, Sm, D] f32
    mask = None if causal else refs.pop(0)[...]   # [Bt, St, St] f32 or None
    out_ref = refs.pop(-1)        # [Bt, St, D] f32
    (g1_ref, b1_ref,
     wq1_ref, bq1_ref, wk1_ref, bk1_ref, wv1_ref, bv1_ref, wo1_ref, bo1_ref,
     g2_ref, b2_ref,
     wq2_ref, bq2_ref, wk2_ref, bk2_ref, wv2_ref, bv2_ref, wo2_ref, bo2_ref,
     g3_ref, b3_ref,
     w1_ref, bf1_ref, w2_ref, bf2_ref) = refs

    x = x_ref[...]
    mem = mem_ref[...]
    Bt, St, D = x.shape
    Sm = mem.shape[1]
    R = Bt * St

    xr = x.reshape(R, D)                 # row-major view of the batch tile
    mr = mem.reshape(Bt * Sm, D)

    # ---- sublayer[0]: x + dropout(self_attn(LN(x), LN(x), LN(x), tgt_mask))
    h = _layernorm(xr, g1_ref[...], b1_ref[...])
    sa = _mha(h, h, Bt, St, St,
              wq1_ref[...], bq1_ref[...], wk1_ref[...], bk1_ref[...],
              wv1_ref[...], bv1_ref[...], wo1_ref[...], bo1_ref[...],
              num_heads, causal=causal, mask=mask, fast=fast_heads)
    # TODO(synk): dropout omitted (eval mode -> identity).
    x1 = xr + sa

    # ---- sublayer[1]: x + dropout(src_attn(LN(x), memory, memory)) --------
    h2 = _layernorm(x1, g2_ref[...], b2_ref[...])
    ca = _mha(h2, mr, Bt, St, Sm,
              wq2_ref[...], bq2_ref[...], wk2_ref[...], bk2_ref[...],
              wv2_ref[...], bv2_ref[...], wo2_ref[...], bo2_ref[...],
              num_heads, causal=False, mask=None, fast=fast_heads)
    x2 = x1 + ca

    # ---- sublayer[2]: x + dropout(feed_forward(LN(x))) ---------------------
    h3 = _layernorm(x2, g3_ref[...], b3_ref[...])
    h3b = h3.astype(jnp.bfloat16)
    d_ff = w1_ref.shape[1]
    chunk = min(ffn_chunk, d_ff)

    if chunk >= d_ff:
        # Single-shot FFN (D_FF fits one chunk).
        f = jnp.maximum(jnp.dot(h3b, w1_ref[...],
                                preferred_element_type=jnp.float32)
                        + bf1_ref[...], 0.0)
        ffn = jnp.dot(f.astype(jnp.bfloat16), w2_ref[...],
                      preferred_element_type=jnp.float32)
    elif d_ff % chunk == 0 and chunk % 128 == 0:
        # fori_loop over D_FF chunks: bounds live ranges at real D_FF (the
        # static Python loop fully unrolls and inflates vreg pressure).
        def body(i, acc):
            c0 = pl.multiple_of(i * chunk, chunk)
            f = jnp.dot(h3b, w1_ref[:, pl.ds(c0, chunk)],
                        preferred_element_type=jnp.float32)
            f = jnp.maximum(f + bf1_ref[:, pl.ds(c0, chunk)], 0.0)
            return acc + jnp.dot(f.astype(jnp.bfloat16),
                                 w2_ref[pl.ds(c0, chunk), :],
                                 preferred_element_type=jnp.float32)
        ffn = jax.lax.fori_loop(0, d_ff // chunk, body,
                                jnp.zeros((R, D), jnp.float32))
    else:
        # Static fallback for odd chunk sizes.
        ffn = jnp.zeros((R, D), jnp.float32)
        for c0 in range(0, d_ff, chunk):
            c1 = min(c0 + chunk, d_ff)
            f = jnp.maximum(jnp.dot(h3b, w1_ref[:, c0:c1],
                                    preferred_element_type=jnp.float32)
                            + bf1_ref[:, c0:c1], 0.0)
            ffn = ffn + jnp.dot(f.astype(jnp.bfloat16), w2_ref[c0:c1, :],
                                preferred_element_type=jnp.float32)

    # Single lane-dense store of the final residual output.
    out_ref[...] = (x2 + ffn + bf2_ref[...]).reshape(Bt, St, D)


# --------------------------------------------------------------------------
# wrapper
# --------------------------------------------------------------------------
_PARAM_ORDER = ['g1', 'b1',
                'wq1', 'bq1', 'wk1', 'bk1', 'wv1', 'bv1', 'wo1', 'bo1',
                'g2', 'b2',
                'wq2', 'bq2', 'wk2', 'bk2', 'wv2', 'bv2', 'wo2', 'bo2',
                'g3', 'b3',
                'w1', 'bf1', 'w2', 'bf2']


def _pick_block_b(B, St):
    # Pack several batch elements per grid step (amortize ~0.35 us/step,
    # denser DMAs, more rows per MXU call) while keeping <= ~512 rows/step.
    max_bb = max(1, 512 // max(St, 1))
    bb = 1
    for cand in range(1, min(B, max_bb) + 1):
        if B % cand == 0:
            bb = cand
    return bb


def _pick_vmem_limit():
    # v7x has only 64 MiB physical VMEM per TC; v5e/v6e have 128 MiB.
    try:
        kind = jax.devices()[0].device_kind.lower()
    except Exception:
        return None
    if "v7" in kind:
        return 40 * 1024 * 1024
    if "v5" in kind or "v6" in kind:
        return 96 * 1024 * 1024
    if "v4" in kind:
        return 64 * 1024 * 1024
    return None


def decoder_layer(x, memory, tgt_mask, params, num_heads, *,
                  ffn_chunk=512, block_b=None):
    """tgt_mask=None means 'causal' (mask generated in-kernel, no mask DMA)."""
    B, St, D = x.shape
    Sm = memory.shape[1]
    assert D % num_heads == 0
    causal = tgt_mask is None

    if block_b is None:
        block_b = _pick_block_b(B, St)
    assert B % block_b == 0
    grid = (B // block_b,)

    def run(single_buffer_weights, fast_heads):
        in_specs = [
            pl.BlockSpec((block_b, St, D), lambda i: (i, 0, 0)),
            pl.BlockSpec((block_b, Sm, D), lambda i: (i, 0, 0)),
        ]
        args = [x, memory]
        if not causal:
            in_specs.append(pl.BlockSpec((block_b, St, St), lambda i: (i, 0, 0)))
            args.append(tgt_mask)
        for name in _PARAM_ORDER:
            p = params[name]
            kw = {}
            if single_buffer_weights:
                # Grid-invariant weights never need re-DMA: single-buffer
                # them (halves resident-weight VMEM; decisive on v7x).
                kw['pipeline_mode'] = pl.Buffered(1)
            in_specs.append(
                pl.BlockSpec(p.shape, lambda i, n=p.ndim: (0,) * n, **kw))
            args.append(p)

        kernel = functools.partial(decoder_layer_kernel,
                                   num_heads=num_heads, ffn_chunk=ffn_chunk,
                                   causal=causal, fast_heads=fast_heads)
        call = pl.pallas_call(
            kernel,
            out_shape=jax.ShapeDtypeStruct((B, St, D), jnp.float32),
            grid_spec=pltpu.PrefetchScalarGridSpec(
                num_scalar_prefetch=0,
                grid=grid,
                in_specs=in_specs,
                out_specs=pl.BlockSpec((block_b, St, D), lambda i: (i, 0, 0)),
            ),
            compiler_params=pltpu.CompilerParams(
                dimension_semantics=("parallel",),
                vmem_limit_bytes=_pick_vmem_limit(),
            ),
        )
        return call(*args)

    try:
        return run(single_buffer_weights=True, fast_heads=True)
    except Exception:
        # Defensive fallback: some jax/libtpu versions reject Buffered(1) or
        # the reshape/einshape head split; retry with the conservative
        # (previously validated) lowering so the kernel always runs.
        return run(single_buffer_weights=False, fast_heads=False)


# ----------------------------- reference (pure JAX) -------------------------
def decoder_layer_ref(x, memory, tgt_mask, p, num_heads):
    B, St, D = x.shape
    dk = D // num_heads
    scale = 1.0 / math.sqrt(dk)

    def ln(y, g, b):
        mu = jnp.mean(y, -1, keepdims=True)
        var = jnp.mean((y - mu) ** 2, -1, keepdims=True)
        return (y - mu) / jnp.sqrt(var + 1e-5) * g + b

    def bdot(a, w):  # mirror the kernel's bf16-operand / f32-accumulate dots
        return jnp.dot(a.astype(jnp.bfloat16), w,
                       preferred_element_type=jnp.float32)

    def mha(h, kv, wq, bq, wk, bk, wv, bv, wo, bo, mask):
        Sq, Sk = h.shape[1], kv.shape[1]
        q = (bdot(h, wq) + bq[0]) * scale
        k = bdot(kv, wk) + bk[0]
        v = bdot(kv, wv) + bv[0]
        q = q.reshape(B, Sq, num_heads, dk).transpose(0, 2, 1, 3)
        k = k.reshape(B, Sk, num_heads, dk).transpose(0, 2, 1, 3)
        v = v.reshape(B, Sk, num_heads, dk).transpose(0, 2, 1, 3)
        s = jnp.einsum('bhqd,bhkd->bhqk',
                       q.astype(jnp.bfloat16), k.astype(jnp.bfloat16),
                       preferred_element_type=jnp.float32)
        if mask is not None:
            s = jnp.where(mask[:, None, :, :] > 0.5, s, -1e9)
        a = jax.nn.softmax(s, axis=-1)
        o = jnp.einsum('bhqk,bhkd->bhqd',
                       a.astype(jnp.bfloat16), v.astype(jnp.bfloat16),
                       preferred_element_type=jnp.float32)
        o = o.transpose(0, 2, 1, 3).reshape(B, Sq, D)
        return bdot(o, wo) + bo[0]

    h = ln(x, p['g1'], p['b1'])
    x = x + mha(h, h, p['wq1'], p['bq1'], p['wk1'], p['bk1'],
                p['wv1'], p['bv1'], p['wo1'], p['bo1'], tgt_mask)
    h = ln(x, p['g2'], p['b2'])
    x = x + mha(h, memory, p['wq2'], p['bq2'], p['wk2'], p['bk2'],
                p['wv2'], p['bv2'], p['wo2'], p['bo2'], None)
    h = ln(x, p['g3'], p['b3'])
    f = jnp.maximum(bdot(h, p['w1']) + p['bf1'][0], 0.0)
    f = bdot(f, p['w2']) + p['bf2'][0]
    return x + f


if __name__ == "__main__":
    B, S_TGT, S_MEM, D, H, D_FF = 2, 8, 16, 32, 4, 64

    key = jax.random.PRNGKey(0)
    keys = jax.random.split(key, 32)

    def rnd(k, shape, scale=0.1, dtype=jnp.float32):
        return (scale * jax.random.normal(k, shape)).astype(dtype)

    bf16 = jnp.bfloat16
    params = {
        'g1': jnp.ones((1, D), jnp.float32), 'b1': jnp.zeros((1, D), jnp.float32),
        'wq1': rnd(keys[0], (D, D), dtype=bf16), 'bq1': rnd(keys[1], (1, D)),
        'wk1': rnd(keys[2], (D, D), dtype=bf16), 'bk1': rnd(keys[3], (1, D)),
        'wv1': rnd(keys[4], (D, D), dtype=bf16), 'bv1': rnd(keys[5], (1, D)),
        'wo1': rnd(keys[6], (D, D), dtype=bf16), 'bo1': rnd(keys[7], (1, D)),
        'g2': jnp.ones((1, D), jnp.float32), 'b2': jnp.zeros((1, D), jnp.float32),
        'wq2': rnd(keys[8], (D, D), dtype=bf16), 'bq2': rnd(keys[9], (1, D)),
        'wk2': rnd(keys[10], (D, D), dtype=bf16), 'bk2': rnd(keys[11], (1, D)),
        'wv2': rnd(keys[12], (D, D), dtype=bf16), 'bv2': rnd(keys[13], (1, D)),
        'wo2': rnd(keys[14], (D, D), dtype=bf16), 'bo2': rnd(keys[15], (1, D)),
        'g3': jnp.ones((1, D), jnp.float32), 'b3': jnp.zeros((1, D), jnp.float32),
        'w1': rnd(keys[16], (D, D_FF), dtype=bf16), 'bf1': rnd(keys[17], (1, D_FF)),
        'w2': rnd(keys[18], (D_FF, D), dtype=bf16), 'bf2': rnd(keys[19], (1, D)),
    }

    x = jax.random.normal(keys[20], (B, S_TGT, D), jnp.float32)
    memory = jax.random.normal(keys[21], (B, S_MEM, D), jnp.float32)
    tgt_mask = jnp.broadcast_to(
        jnp.tril(jnp.ones((S_TGT, S_TGT), jnp.float32)), (B, S_TGT, S_TGT))
    tgt_mask = jnp.array(tgt_mask)

    ref = decoder_layer_ref(x, memory, tgt_mask, params, num_heads=H)

    # 1) optimized path: causal mask generated in-kernel (no mask DMA)
    out = decoder_layer(x, memory, None, params, num_heads=H)
    out = jax.block_until_ready(out)
    assert out.shape == (B, S_TGT, D)
    err = float(jnp.max(jnp.abs(out - ref)))
    assert err < 1e-2, f"causal-path mismatch vs reference: max|diff|={err}"

    # 2) explicit-mask path (general tgt_mask support)
    out2 = decoder_layer(x, memory, tgt_mask, params, num_heads=H)
    out2 = jax.block_until_ready(out2)
    err2 = float(jnp.max(jnp.abs(out2 - ref)))
    assert err2 < 1e-2, f"mask-path mismatch vs reference: max|diff|={err2}"

    print("KERNEL_OK")
</pallas_src>

<mosaic_0001>
module attributes {stable_mosaic.version = 11 : i64} {
  func.func @decoder_layer_kernel(%arg0: i32, %arg1: memref<2x8x32xf32, #tpu.memory_space<vmem>>, %arg2: memref<2x16x32xf32, #tpu.memory_space<vmem>>, %arg3: memref<1x32xf32, #tpu.memory_space<vmem>>, %arg4: memref<1x32xf32, #tpu.memory_space<vmem>>, %arg5: memref<32x32xbf16, #tpu.memory_space<vmem>>, %arg6: memref<1x32xf32, #tpu.memory_space<vmem>>, %arg7: memref<32x32xbf16, #tpu.memory_space<vmem>>, %arg8: memref<1x32xf32, #tpu.memory_space<vmem>>, %arg9: memref<32x32xbf16, #tpu.memory_space<vmem>>, %arg10: memref<1x32xf32, #tpu.memory_space<vmem>>, %arg11: memref<32x32xbf16, #tpu.memory_space<vmem>>, %arg12: memref<1x32xf32, #tpu.memory_space<vmem>>, %arg13: memref<1x32xf32, #tpu.memory_space<vmem>>, %arg14: memref<1x32xf32, #tpu.memory_space<vmem>>, %arg15: memref<32x32xbf16, #tpu.memory_space<vmem>>, %arg16: memref<1x32xf32, #tpu.memory_space<vmem>>, %arg17: memref<32x32xbf16, #tpu.memory_space<vmem>>, %arg18: memref<1x32xf32, #tpu.memory_space<vmem>>, %arg19: memref<32x32xbf16, #tpu.memory_space<vmem>>, %arg20: memref<1x32xf32, #tpu.memory_space<vmem>>, %arg21: memref<32x32xbf16, #tpu.memory_space<vmem>>, %arg22: memref<1x32xf32, #tpu.memory_space<vmem>>, %arg23: memref<1x32xf32, #tpu.memory_space<vmem>>, %arg24: memref<1x32xf32, #tpu.memory_space<vmem>>, %arg25: memref<32x64xbf16, #tpu.memory_space<vmem>>, %arg26: memref<1x64xf32, #tpu.memory_space<vmem>>, %arg27: memref<64x32xbf16, #tpu.memory_space<vmem>>, %arg28: memref<1x32xf32, #tpu.memory_space<vmem>>, %arg29: memref<2x8x32xf32, #tpu.memory_space<vmem>>) attributes {dimension_semantics = [#tpu.dimension_semantics<parallel>], iteration_bounds = array<i64: 1>, scalar_prefetch = 0 : i64, scratch_operands = 0 : i64, tpu.core_type = #tpu.core_type<tc>, window_params = [{transform_indices = @transform_0, window_bounds = array<i64: 2, 8, 32>}, {transform_indices = @transform_1, window_bounds = array<i64: 2, 16, 32>}, {pipeline_mode = #tpu.pipeline_mode<synchronous>, transform_indices = @transform_2, window_bounds = array<i64: 1, 32>}, {pipeline_mode = #tpu.pipeline_mode<synchronous>, transform_indices = @transform_3, window_bounds = array<i64: 1, 32>}, {pipeline_mode = #tpu.pipeline_mode<synchronous>, transform_indices = @transform_4, window_bounds = array<i64: 32, 32>}, {pipeline_mode = #tpu.pipeline_mode<synchronous>, transform_indices = @transform_5, window_bounds = array<i64: 1, 32>}, {pipeline_mode = #tpu.pipeline_mode<synchronous>, transform_indices = @transform_6, window_bounds = array<i64: 32, 32>}, {pipeline_mode = #tpu.pipeline_mode<synchronous>, transform_indices = @transform_7, window_bounds = array<i64: 1, 32>}, {pipeline_mode = #tpu.pipeline_mode<synchronous>, transform_indices = @transform_8, window_bounds = array<i64: 32, 32>}, {pipeline_mode = #tpu.pipeline_mode<synchronous>, transform_indices = @transform_9, window_bounds = array<i64: 1, 32>}, {pipeline_mode = #tpu.pipeline_mode<synchronous>, transform_indices = @transform_10, window_bounds = array<i64: 32, 32>}, {pipeline_mode = #tpu.pipeline_mode<synchronous>, transform_indices = @transform_11, window_bounds = array<i64: 1, 32>}, {pipeline_mode = #tpu.pipeline_mode<synchronous>, transform_indices = @transform_12, window_bounds = array<i64: 1, 32>}, {pipeline_mode = #tpu.pipeline_mode<synchronous>, transform_indices = @transform_13, window_bounds = array<i64: 1, 32>}, {pipeline_mode = #tpu.pipeline_mode<synchronous>, transform_indices = @transform_14, window_bounds = array<i64: 32, 32>}, {pipeline_mode = #tpu.pipeline_mode<synchronous>, transform_indices = @transform_15, window_bounds = array<i64: 1, 32>}, {pipeline_mode = #tpu.pipeline_mode<synchronous>, transform_indices = @transform_16, window_bounds = array<i64: 32, 32>}, {pipeline_mode = #tpu.pipeline_mode<synchronous>, transform_indices = @transform_17, window_bounds = array<i64: 1, 32>}, {pipeline_mode = #tpu.pipeline_mode<synchronous>, transform_indices = @transform_18, window_bounds = array<i64: 32, 32>}, {pipeline_mode = #tpu.pipeline_mode<synchronous>, transform_indices = @transform_19, window_bounds = array<i64: 1, 32>}, {pipeline_mode = #tpu.pipeline_mode<synchronous>, transform_indices = @transform_20, window_bounds = array<i64: 32, 32>}, {pipeline_mode = #tpu.pipeline_mode<synchronous>, transform_indices = @transform_21, window_bounds = array<i64: 1, 32>}, {pipeline_mode = #tpu.pipeline_mode<synchronous>, transform_indices = @transform_22, window_bounds = array<i64: 1, 32>}, {pipeline_mode = #tpu.pipeline_mode<synchronous>, transform_indices = @transform_23, window_bounds = array<i64: 1, 32>}, {pipeline_mode = #tpu.pipeline_mode<synchronous>, transform_indices = @transform_24, window_bounds = array<i64: 32, 64>}, {pipeline_mode = #tpu.pipeline_mode<synchronous>, transform_indices = @transform_25, window_bounds = array<i64: 1, 64>}, {pipeline_mode = #tpu.pipeline_mode<synchronous>, transform_indices = @transform_26, window_bounds = array<i64: 64, 32>}, {pipeline_mode = #tpu.pipeline_mode<synchronous>, transform_indices = @transform_27, window_bounds = array<i64: 1, 32>}, {transform_indices = @transform_28, window_bounds = array<i64: 2, 8, 32>}]} {
    %c0 = arith.constant 0 : index
    %c0_0 = arith.constant 0 : index
    %c0_1 = arith.constant 0 : index
    %0 = vector.load %arg1[%c0, %c0_0, %c0_1] : memref<2x8x32xf32, #tpu.memory_space<vmem>>, vector<2x8x32xf32>
    %c0_2 = arith.constant 0 : index
    %c0_3 = arith.constant 0 : index
    %c0_4 = arith.constant 0 : index
    %1 = vector.load %arg2[%c0_2, %c0_3, %c0_4] : memref<2x16x32xf32, #tpu.memory_space<vmem>>, vector<2x16x32xf32>
    %2 = vector.shape_cast %0 : vector<2x8x32xf32> to vector<16x32xf32>
    %3 = vector.shape_cast %1 : vector<2x16x32xf32> to vector<32x32xf32>
    %c0_5 = arith.constant 0 : index
    %c0_6 = arith.constant 0 : index
    %4 = vector.load %arg3[%c0_5, %c0_6] : memref<1x32xf32, #tpu.memory_space<vmem>>, vector<1x32xf32>
    %c0_7 = arith.constant 0 : index
    %c0_8 = arith.constant 0 : index
    %5 = vector.load %arg4[%c0_7, %c0_8] : memref<1x32xf32, #tpu.memory_space<vmem>>, vector<1x32xf32>
    %cst = arith.constant dense<0.000000e+00> : vector<16xf32>
    %6 = vector.multi_reduction <add>, %2, %cst [1] : vector<16x32xf32> to vector<16xf32>
    %7 = vector.shape_cast %6 : vector<16xf32> to vector<16x1xf32>
    %cst_9 = arith.constant 3.200000e+01 : f32
    %8 = vector.broadcast %cst_9 : f32 to vector<16x1xf32>
    %9 = arith.divf %7, %8 : vector<16x1xf32>
    %10 = vector.broadcast %9 : vector<16x1xf32> to vector<16x32xf32>
    %11 = arith.subf %2, %10 : vector<16x32xf32>
    %12 = arith.mulf %11, %11 : vector<16x32xf32>
    %cst_10 = arith.constant dense<0.000000e+00> : vector<16xf32>
    %13 = vector.multi_reduction <add>, %12, %cst_10 [1] : vector<16x32xf32> to vector<16xf32>
    %14 = vector.shape_cast %13 : vector<16xf32> to vector<16x1xf32>
    %cst_11 = arith.constant 3.200000e+01 : f32
    %15 = vector.broadcast %cst_11 : f32 to vector<16x1xf32>
    %16 = arith.divf %14, %15 : vector<16x1xf32>
    %cst_12 = arith.constant 9.99999974E-6 : f32
    %17 = vector.broadcast %cst_12 : f32 to vector<16x1xf32>
    %18 = arith.addf %16, %17 : vector<16x1xf32>
    %19 = math.rsqrt %18 : vector<16x1xf32>
    %20 = vector.broadcast %19 : vector<16x1xf32> to vector<16x32xf32>
    %21 = arith.mulf %11, %20 : vector<16x32xf32>
    %22 = vector.broadcast %4 : vector<1x32xf32> to vector<16x32xf32>
    %23 = arith.mulf %21, %22 : vector<16x32xf32>
    %24 = vector.broadcast %5 : vector<1x32xf32> to vector<16x32xf32>
    %25 = arith.addf %23, %24 : vector<16x32xf32>
    %c0_13 = arith.constant 0 : index
    %c0_14 = arith.constant 0 : index
    %26 = vector.load %arg5[%c0_13, %c0_14] : memref<32x32xbf16, #tpu.memory_space<vmem>>, vector<32x32xbf16>
    %c0_15 = arith.constant 0 : index
    %c0_16 = arith.constant 0 : index
    %27 = vector.load %arg6[%c0_15, %c0_16] : memref<1x32xf32, #tpu.memory_space<vmem>>, vector<1x32xf32>
    %c0_17 = arith.constant 0 : index
    %c0_18 = arith.constant 0 : index
    %28 = vector.load %arg7[%c0_17, %c0_18] : memref<32x32xbf16, #tpu.memory_space<vmem>>, vector<32x32xbf16>
    %c0_19 = arith.constant 0 : index
    %c0_20 = arith.constant 0 : index
    %29 = vector.load %arg8[%c0_19, %c0_20] : memref<1x32xf32, #tpu.memory_space<vmem>>, vector<1x32xf32>
    %c0_21 = arith.constant 0 : index
    %c0_22 = arith.constant 0 : index
    %30 = vector.load %arg9[%c0_21, %c0_22] : memref<32x32xbf16, #tpu.memory_space<vmem>>, vector<32x32xbf16>
    %c0_23 = arith.constant 0 : index
    %c0_24 = arith.constant 0 : index
    %31 = vector.load %arg10[%c0_23, %c0_24] : memref<1x32xf32, #tpu.memory_space<vmem>>, vector<1x32xf32>
    %c0_25 = arith.constant 0 : index
    %c0_26 = arith.constant 0 : index
    %32 = vector.load %arg11[%c0_25, %c0_26] : memref<32x32xbf16, #tpu.memory_space<vmem>>, vector<32x32xbf16>
    %c0_27 = arith.constant 0 : index
    %c0_28 = arith.constant 0 : index
    %33 = vector.load %arg12[%c0_27, %c0_28] : memref<1x32xf32, #tpu.memory_space<vmem>>, vector<1x32xf32>
    %34 = arith.truncf %25 : vector<16x32xf32> to vector<16x32xbf16>
    %35 = arith.truncf %25 : vector<16x32xf32> to vector<16x32xbf16>
    %cst_29 = arith.constant dense<0.000000e+00> : vector<16x32xf32>
    %36 = tpu.matmul %34, %26, %cst_29 {dimension_numbers = #tpu.dot_dimension_numbers<[1], [0], [0], [1], [0, 0, 1, 1], [], []>} : vector<16x32xbf16>, vector<32x32xbf16>, vector<16x32xf32> -> vector<16x32xf32>
    %37 = vector.broadcast %27 : vector<1x32xf32> to vector<16x32xf32>
    %38 = arith.addf %36, %37 : vector<16x32xf32>
    %cst_30 = arith.constant 0.353553385 : f32
    %39 = vector.broadcast %cst_30 : f32 to vector<16x32xf32>
    %40 = arith.mulf %38, %39 : vector<16x32xf32>
    %cst_31 = arith.constant dense<0.000000e+00> : vector<16x32xf32>
    %41 = tpu.matmul %35, %28, %cst_31 {dimension_numbers = #tpu.dot_dimension_numbers<[1], [0], [0], [1], [0, 0, 1, 1], [], []>} : vector<16x32xbf16>, vector<32x32xbf16>, vector<16x32xf32> -> vector<16x32xf32>
    %42 = vector.broadcast %29 : vector<1x32xf32> to vector<16x32xf32>
    %43 = arith.addf %41, %42 : vector<16x32xf32>
    %cst_32 = arith.constant dense<0.000000e+00> : vector<16x32xf32>
    %44 = tpu.matmul %35, %30, %cst_32 {dimension_numbers = #tpu.dot_dimension_numbers<[1], [0], [0], [1], [0, 0, 1, 1], [], []>} : vector<16x32xbf16>, vector<32x32xbf16>, vector<16x32xf32> -> vector<16x32xf32>
    %45 = vector.broadcast %31 : vector<1x32xf32> to vector<16x32xf32>
    %46 = arith.addf %44, %45 : vector<16x32xf32>
    %47 = tpu.iota {dimensions = array<i32: 0>} : vector<8x8xi32>
    %48 = tpu.iota {dimensions = array<i32: 1>} : vector<8x8xi32>
    %49 = arith.cmpi sge, %47, %48 : vector<8x8xi32>
    %cst_33 = arith.constant 0.000000e+00 : f32
    %cst_34 = arith.constant -1.000000e+09 : f32
    %50 = vector.broadcast %cst_33 : f32 to vector<8x8xf32>
    %51 = vector.broadcast %cst_34 : f32 to vector<8x8xf32>
    %52 = arith.select %49, %50, %51 : vector<8x8xi1>, vector<8x8xf32>
    %53 = vector.extract_strided_slice %40 {offsets = [0, 0], sizes = [8, 32], strides = [1, 1]} : vector<16x32xf32> to vector<8x32xf32>
    %54 = vector.shape_cast %53 : vector<8x32xf32> to vector<8x4x8xf32>
    %55 = tpu.transpose %54, [1, 0, 2] : vector<8x4x8xf32> -> vector<4x8x8xf32>
    %56 = vector.extract_strided_slice %43 {offsets = [0, 0], sizes = [8, 32], strides = [1, 1]} : vector<16x32xf32> to vector<8x32xf32>
    %57 = vector.shape_cast %56 : vector<8x32xf32> to vector<8x4x8xf32>
    %58 = tpu.transpose %57, [1, 0, 2] : vector<8x4x8xf32> -> vector<4x8x8xf32>
    %59 = vector.extract_strided_slice %46 {offsets = [0, 0], sizes = [8, 32], strides = [1, 1]} : vector<16x32xf32> to vector<8x32xf32>
    %60 = vector.shape_cast %59 : vector<8x32xf32> to vector<8x4x8xf32>
    %61 = tpu.transpose %60, [1, 0, 2] : vector<8x4x8xf32> -> vector<4x8x8xf32>
    %62 = arith.truncf %55 : vector<4x8x8xf32> to vector<4x8x8xbf16>
    %63 = arith.truncf %58 : vector<4x8x8xf32> to vector<4x8x8xbf16>
    "tpu.trace_start"() <{level = 10 : i32, message = "hqd,hkd->hqk"}> : () -> ()
    %cst_35 = arith.constant dense<0.000000e+00> : vector<4x8x8xf32>
    %64 = tpu.matmul %62, %63, %cst_35 {dimension_numbers = #tpu.dot_dimension_numbers<[2], [2], [1], [1], [0, 0, 0, 1, 1, 1], [0], [0]>} : vector<4x8x8xbf16>, vector<4x8x8xbf16>, vector<4x8x8xf32> -> vector<4x8x8xf32>
    "tpu.trace_stop"() : () -> ()
    %65 = vector.shape_cast %52 : vector<8x8xf32> to vector<1x8x8xf32>
    %66 = vector.broadcast %65 : vector<1x8x8xf32> to vector<4x8x8xf32>
    %67 = arith.addf %64, %66 : vector<4x8x8xf32>
    %cst_36 = arith.constant dense<0xFF800000> : vector<4x8xf32>
    %68 = vector.multi_reduction <maximumf>, %67, %cst_36 [2] : vector<4x8x8xf32> to vector<4x8xf32>
    %69 = vector.shape_cast %68 : vector<4x8xf32> to vector<4x8x1xf32>
    %70 = vector.broadcast %69 : vector<4x8x1xf32> to vector<4x8x8xf32>
    %71 = arith.subf %67, %70 : vector<4x8x8xf32>
    %72 = math.exp %71 : vector<4x8x8xf32>
    %cst_37 = arith.constant dense<0.000000e+00> : vector<4x8xf32>
    %73 = vector.multi_reduction <add>, %72, %cst_37 [2] : vector<4x8x8xf32> to vector<4x8xf32>
    %74 = vector.shape_cast %73 : vector<4x8xf32> to vector<4x8x1xf32>
    %75 = arith.truncf %72 : vector<4x8x8xf32> to vector<4x8x8xbf16>
    %76 = arith.truncf %61 : vector<4x8x8xf32> to vector<4x8x8xbf16>
    "tpu.trace_start"() <{level = 10 : i32, message = "hqk,hkd->hqd"}> : () -> ()
    %cst_38 = arith.constant dense<0.000000e+00> : vector<4x8x8xf32>
    %77 = tpu.matmul %75, %76, %cst_38 {dimension_numbers = #tpu.dot_dimension_numbers<[2], [1], [1], [2], [0, 0, 0, 1, 1, 2], [0], [0]>} : vector<4x8x8xbf16>, vector<4x8x8xbf16>, vector<4x8x8xf32> -> vector<4x8x8xf32>
    "tpu.trace_stop"() : () -> ()
    %78 = tpu.reciprocal %74 {approx = true} : vector<4x8x1xf32> -> vector<4x8x1xf32>
    %79 = vector.broadcast %78 : vector<4x8x1xf32> to vector<4x8x8xf32>
    %80 = arith.mulf %77, %79 : vector<4x8x8xf32>
    %81 = tpu.transpose %80, [1, 0, 2] : vector<4x8x8xf32> -> vector<8x4x8xf32>
    %82 = vector.shape_cast %81 : vector<8x4x8xf32> to vector<8x32xf32>
    %83 = vector.extract_strided_slice %40 {offsets = [8, 0], sizes = [8, 32], strides = [1, 1]} : vector<16x32xf32> to vector<8x32xf32>
    %84 = vector.shape_cast %83 : vector<8x32xf32> to vector<8x4x8xf32>
    %85 = tpu.transpose %84, [1, 0, 2] : vector<8x4x8xf32> -> vector<4x8x8xf32>
    %86 = vector.extract_strided_slice %43 {offsets = [8, 0], sizes = [8, 32], strides = [1, 1]} : vector<16x32xf32> to vector<8x32xf32>
    %87 = vector.shape_cast %86 : vector<8x32xf32> to vector<8x4x8xf32>
    %88 = tpu.transpose %87, [1, 0, 2] : vector<8x4x8xf32> -> vector<4x8x8xf32>
    %89 = vector.extract_strided_slice %46 {offsets = [8, 0], sizes = [8, 32], strides = [1, 1]} : vector<16x32xf32> to vector<8x32xf32>
    %90 = vector.shape_cast %89 : vector<8x32xf32> to vector<8x4x8xf32>
    %91 = tpu.transpose %90, [1, 0, 2] : vector<8x4x8xf32> -> vector<4x8x8xf32>
    %92 = arith.truncf %85 : vector<4x8x8xf32> to vector<4x8x8xbf16>
    %93 = arith.truncf %88 : vector<4x8x8xf32> to vector<4x8x8xbf16>
    "tpu.trace_start"() <{level = 10 : i32, message = "hqd,hkd->hqk"}> : () -> ()
    %cst_39 = arith.constant dense<0.000000e+00> : vector<4x8x8xf32>
    %94 = tpu.matmul %92, %93, %cst_39 {dimension_numbers = #tpu.dot_dimension_numbers<[2], [2], [1], [1], [0, 0, 0, 1, 1, 1], [0], [0]>} : vector<4x8x8xbf16>, vector<4x8x8xbf16>, vector<4x8x8xf32> -> vector<4x8x8xf32>
    "tpu.trace_stop"() : () -> ()
    %95 = vector.shape_cast %52 : vector<8x8xf32> to vector<1x8x8xf32>
    %96 = vector.broadcast %95 : vector<1x8x8xf32> to vector<4x8x8xf32>
    %97 = arith.addf %94, %96 : vector<4x8x8xf32>
    %cst_40 = arith.constant dense<0xFF800000> : vector<4x8xf32>
    %98 = vector.multi_reduction <maximumf>, %97, %cst_40 [2] : vector<4x8x8xf32> to vector<4x8xf32>
    %99 = vector.shape_cast %98 : vector<4x8xf32> to vector<4x8x1xf32>
    %100 = vector.broadcast %99 : vector<4x8x1xf32> to vector<4x8x8xf32>
    %101 = arith.subf %97, %100 : vector<4x8x8xf32>
    %102 = math.exp %101 : vector<4x8x8xf32>
    %cst_41 = arith.constant dense<0.000000e+00> : vector<4x8xf32>
    %103 = vector.multi_reduction <add>, %102, %cst_41 [2] : vector<4x8x8xf32> to vector<4x8xf32>
    %104 = vector.shape_cast %103 : vector<4x8xf32> to vector<4x8x1xf32>
    %105 = arith.truncf %102 : vector<4x8x8xf32> to vector<4x8x8xbf16>
    %106 = arith.truncf %91 : vector<4x8x8xf32> to vector<4x8x8xbf16>
    "tpu.trace_start"() <{level = 10 : i32, message = "hqk,hkd->hqd"}> : () -> ()
    %cst_42 = arith.constant dense<0.000000e+00> : vector<4x8x8xf32>
    %107 = tpu.matmul %105, %106, %cst_42 {dimension_numbers = #tpu.dot_dimension_numbers<[2], [1], [1], [2], [0, 0, 0, 1, 1, 2], [0], [0]>} : vector<4x8x8xbf16>, vector<4x8x8xbf16>, vector<4x8x8xf32> -> vector<4x8x8xf32>
    "tpu.trace_stop"() : () -> ()
    %108 = tpu.reciprocal %104 {approx = true} : vector<4x8x1xf32> -> vector<4x8x1xf32>
    %109 = vector.broadcast %108 : vector<4x8x1xf32> to vector<4x8x8xf32>
    %110 = arith.mulf %107, %109 : vector<4x8x8xf32>
    %111 = tpu.transpose %110, [1, 0, 2] : vector<4x8x8xf32> -> vector<8x4x8xf32>
    %112 = vector.shape_cast %111 : vector<8x4x8xf32> to vector<8x32xf32>
    %113 = tpu.concatenate %82, %112 in 0 : vector<8x32xf32>, vector<8x32xf32> -> vector<16x32xf32>
    %114 = arith.truncf %113 : vector<16x32xf32> to vector<16x32xbf16>
    %cst_43 = arith.constant dense<0.000000e+00> : vector<16x32xf32>
    %115 = tpu.matmul %114, %32, %cst_43 {dimension_numbers = #tpu.dot_dimension_numbers<[1], [0], [0], [1], [0, 0, 1, 1], [], []>} : vector<16x32xbf16>, vector<32x32xbf16>, vector<16x32xf32> -> vector<16x32xf32>
    %116 = vector.broadcast %33 : vector<1x32xf32> to vector<16x32xf32>
    %117 = arith.addf %115, %116 : vector<16x32xf32>
    %118 = arith.addf %2, %117 : vector<16x32xf32>
    %c0_44 = arith.constant 0 : index
    %c0_45 = arith.constant 0 : index
    %119 = vector.load %arg13[%c0_44, %c0_45] : memref<1x32xf32, #tpu.memory_space<vmem>>, vector<1x32xf32>
    %c0_46 = arith.constant 0 : index
    %c0_47 = arith.constant 0 : index
    %120 = vector.load %arg14[%c0_46, %c0_47] : memref<1x32xf32, #tpu.memory_space<vmem>>, vector<1x32xf32>
    %cst_48 = arith.constant dense<0.000000e+00> : vector<16xf32>
    %121 = vector.multi_reduction <add>, %118, %cst_48 [1] : vector<16x32xf32> to vector<16xf32>
    %122 = vector.shape_cast %121 : vector<16xf32> to vector<16x1xf32>
    %cst_49 = arith.constant 3.200000e+01 : f32
    %123 = vector.broadcast %cst_49 : f32 to vector<16x1xf32>
    %124 = arith.divf %122, %123 : vector<16x1xf32>
    %125 = vector.broadcast %124 : vector<16x1xf32> to vector<16x32xf32>
    %126 = arith.subf %118, %125 : vector<16x32xf32>
    %127 = arith.mulf %126, %126 : vector<16x32xf32>
    %cst_50 = arith.constant dense<0.000000e+00> : vector<16xf32>
    %128 = vector.multi_reduction <add>, %127, %cst_50 [1] : vector<16x32xf32> to vector<16xf32>
    %129 = vector.shape_cast %128 : vector<16xf32> to vector<16x1xf32>
    %cst_51 = arith.constant 3.200000e+01 : f32
    %130 = vector.broadcast %cst_51 : f32 to vector<16x1xf32>
    %131 = arith.divf %129, %130 : vector<16x1xf32>
    %cst_52 = arith.constant 9.99999974E-6 : f32
    %132 = vector.broadcast %cst_52 : f32 to vector<16x1xf32>
    %133 = arith.addf %131, %132 : vector<16x1xf32>
    %134 = math.rsqrt %133 : vector<16x1xf32>
    %135 = vector.broadcast %134 : vector<16x1xf32> to vector<16x32xf32>
    %136 = arith.mulf %126, %135 : vector<16x32xf32>
    %137 = vector.broadcast %119 : vector<1x32xf32> to vector<16x32xf32>
    %138 = arith.mulf %136, %137 : vector<16x32xf32>
    %139 = vector.broadcast %120 : vector<1x32xf32> to vector<16x32xf32>
    %140 = arith.addf %138, %139 : vector<16x32xf32>
    %c0_53 = arith.constant 0 : index
    %c0_54 = arith.constant 0 : index
    %141 = vector.load %arg15[%c0_53, %c0_54] : memref<32x32xbf16, #tpu.memory_space<vmem>>, vector<32x32xbf16>
    %c0_55 = arith.constant 0 : index
    %c0_56 = arith.constant 0 : index
    %142 = vector.load %arg16[%c0_55, %c0_56] : memref<1x32xf32, #tpu.memory_space<vmem>>, vector<1x32xf32>
    %c0_57 = arith.constant 0 : index
    %c0_58 = arith.constant 0 : index
    %143 = vector.load %arg17[%c0_57, %c0_58] : memref<32x32xbf16, #tpu.memory_space<vmem>>, vector<32x32xbf16>
    %c0_59 = arith.constant 0 : index
    %c0_60 = arith.constant 0 : index
    %144 = vector.load %arg18[%c0_59, %c0_60] : memref<1x32xf32, #tpu.memory_space<vmem>>, vector<1x32xf32>
    %c0_61 = arith.constant 0 : index
    %c0_62 = arith.constant 0 : index
    %145 = vector.load %arg19[%c0_61, %c0_62] : memref<32x32xbf16, #tpu.memory_space<vmem>>, vector<32x32xbf16>
    %c0_63 = arith.constant 0 : index
    %c0_64 = arith.constant 0 : index
    %146 = vector.load %arg20[%c0_63, %c0_64] : memref<1x32xf32, #tpu.memory_space<vmem>>, vector<1x32xf32>
    %c0_65 = arith.constant 0 : index
    %c0_66 = arith.constant 0 : index
    %147 = vector.load %arg21[%c0_65, %c0_66] : memref<32x32xbf16, #tpu.memory_space<vmem>>, vector<32x32xbf16>
    %c0_67 = arith.constant 0 : index
    %c0_68 = arith.constant 0 : index
    %148 = vector.load %arg22[%c0_67, %c0_68] : memref<1x32xf32, #tpu.memory_space<vmem>>, vector<1x32xf32>
    %149 = arith.truncf %140 : vector<16x32xf32> to vector<16x32xbf16>
    %150 = arith.truncf %3 : vector<32x32xf32> to vector<32x32xbf16>
    %cst_69 = arith.constant dense<0.000000e+00> : vector<16x32xf32>
    %151 = tpu.matmul %149, %141, %cst_69 {dimension_numbers = #tpu.dot_dimension_numbers<[1], [0], [0], [1], [0, 0, 1, 1], [], []>} : vector<16x32xbf16>, vector<32x32xbf16>, vector<16x32xf32> -> vector<16x32xf32>
    %152 = vector.broadcast %142 : vector<1x32xf32> to vector<16x32xf32>
    %153 = arith.addf %151, %152 : vector<16x32xf32>
    %cst_70 = arith.constant 0.353553385 : f32
    %154 = vector.broadcast %cst_70 : f32 to vector<16x32xf32>
    %155 = arith.mulf %153, %154 : vector<16x32xf32>
    %cst_71 = arith.constant dense<0.000000e+00> : vector<32x32xf32>
    %156 = tpu.matmul %150, %143, %cst_71 {dimension_numbers = #tpu.dot_dimension_numbers<[1], [0], [0], [1], [0, 0, 1, 1], [], []>} : vector<32x32xbf16>, vector<32x32xbf16>, vector<32x32xf32> -> vector<32x32xf32>
    %157 = vector.broadcast %144 : vector<1x32xf32> to vector<32x32xf32>
    %158 = arith.addf %156, %157 : vector<32x32xf32>
    %cst_72 = arith.constant dense<0.000000e+00> : vector<32x32xf32>
    %159 = tpu.matmul %150, %145, %cst_72 {dimension_numbers = #tpu.dot_dimension_numbers<[1], [0], [0], [1], [0, 0, 1, 1], [], []>} : vector<32x32xbf16>, vector<32x32xbf16>, vector<32x32xf32> -> vector<32x32xf32>
    %160 = vector.broadcast %146 : vector<1x32xf32> to vector<32x32xf32>
    %161 = arith.addf %159, %160 : vector<32x32xf32>
    %162 = vector.extract_strided_slice %155 {offsets = [0, 0], sizes = [8, 32], strides = [1, 1]} : vector<16x32xf32> to vector<8x32xf32>
    %163 = vector.shape_cast %162 : vector<8x32xf32> to vector<8x4x8xf32>
    %164 = tpu.transpose %163, [1, 0, 2] : vector<8x4x8xf32> -> vector<4x8x8xf32>
    %165 = vector.extract_strided_slice %158 {offsets = [0, 0], sizes = [16, 32], strides = [1, 1]} : vector<32x32xf32> to vector<16x32xf32>
    %166 = vector.shape_cast %165 : vector<16x32xf32> to vector<16x4x8xf32>
    %167 = tpu.transpose %166, [1, 0, 2] : vector<16x4x8xf32> -> vector<4x16x8xf32>
    %168 = vector.extract_strided_slice %161 {offsets = [0, 0], sizes = [16, 32], strides = [1, 1]} : vector<32x32xf32> to vector<16x32xf32>
    %169 = vector.shape_cast %168 : vector<16x32xf32> to vector<16x4x8xf32>
    %170 = tpu.transpose %169, [1, 0, 2] : vector<16x4x8xf32> -> vector<4x16x8xf32>
    %171 = arith.truncf %164 : vector<4x8x8xf32> to vector<4x8x8xbf16>
    %172 = arith.truncf %167 : vector<4x16x8xf32> to vector<4x16x8xbf16>
    "tpu.trace_start"() <{level = 10 : i32, message = "hqd,hkd->hqk"}> : () -> ()
    %cst_73 = arith.constant dense<0.000000e+00> : vector<4x8x16xf32>
    %173 = tpu.matmul %171, %172, %cst_73 {dimension_numbers = #tpu.dot_dimension_numbers<[2], [2], [1], [1], [0, 0, 0, 1, 1, 1], [0], [0]>} : vector<4x8x8xbf16>, vector<4x16x8xbf16>, vector<4x8x16xf32> -> vector<4x8x16xf32>
    "tpu.trace_stop"() : () -> ()
    %cst_74 = arith.constant dense<0xFF800000> : vector<4x8xf32>
    %174 = vector.multi_reduction <maximumf>, %173, %cst_74 [2] : vector<4x8x16xf32> to vector<4x8xf32>
    %175 = vector.shape_cast %174 : vector<4x8xf32> to vector<4x8x1xf32>
    %176 = vector.broadcast %175 : vector<4x8x1xf32> to vector<4x8x16xf32>
    %177 = arith.subf %173, %176 : vector<4x8x16xf32>
    %178 = math.exp %177 : vector<4x8x16xf32>
    %cst_75 = arith.constant dense<0.000000e+00> : vector<4x8xf32>
    %179 = vector.multi_reduction <add>, %178, %cst_75 [2] : vector<4x8x16xf32> to vector<4x8xf32>
    %180 = vector.shape_cast %179 : vector<4x8xf32> to vector<4x8x1xf32>
    %181 = arith.truncf %178 : vector<4x8x16xf32> to vector<4x8x16xbf16>
    %182 = arith.truncf %170 : vector<4x16x8xf32> to vector<4x16x8xbf16>
    "tpu.trace_start"() <{level = 10 : i32, message = "hqk,hkd->hqd"}> : () -> ()
    %cst_76 = arith.constant dense<0.000000e+00> : vector<4x8x8xf32>
    %183 = tpu.matmul %181, %182, %cst_76 {dimension_numbers = #tpu.dot_dimension_numbers<[2], [1], [1], [2], [0, 0, 0, 1, 1, 2], [0], [0]>} : vector<4x8x16xbf16>, vector<4x16x8xbf16>, vector<4x8x8xf32> -> vector<4x8x8xf32>
    "tpu.trace_stop"() : () -> ()
    %184 = tpu.reciprocal %180 {approx = true} : vector<4x8x1xf32> -> vector<4x8x1xf32>
    %185 = vector.broadcast %184 : vector<4x8x1xf32> to vector<4x8x8xf32>
    %186 = arith.mulf %183, %185 : vector<4x8x8xf32>
    %187 = tpu.transpose %186, [1, 0, 2] : vector<4x8x8xf32> -> vector<8x4x8xf32>
    %188 = vector.shape_cast %187 : vector<8x4x8xf32> to vector<8x32xf32>
    %189 = vector.extract_strided_slice %155 {offsets = [8, 0], sizes = [8, 32], strides = [1, 1]} : vector<16x32xf32> to vector<8x32xf32>
    %190 = vector.shape_cast %189 : vector<8x32xf32> to vector<8x4x8xf32>
    %191 = tpu.transpose %190, [1, 0, 2] : vector<8x4x8xf32> -> vector<4x8x8xf32>
    %192 = vector.extract_strided_slice %158 {offsets = [16, 0], sizes = [16, 32], strides = [1, 1]} : vector<32x32xf32> to vector<16x32xf32>
    %193 = vector.shape_cast %192 : vector<16x32xf32> to vector<16x4x8xf32>
    %194 = tpu.transpose %193, [1, 0, 2] : vector<16x4x8xf32> -> vector<4x16x8xf32>
    %195 = vector.extract_strided_slice %161 {offsets = [16, 0], sizes = [16, 32], strides = [1, 1]} : vector<32x32xf32> to vector<16x32xf32>
    %196 = vector.shape_cast %195 : vector<16x32xf32> to vector<16x4x8xf32>
    %197 = tpu.transpose %196, [1, 0, 2] : vector<16x4x8xf32> -> vector<4x16x8xf32>
    %198 = arith.truncf %191 : vector<4x8x8xf32> to vector<4x8x8xbf16>
    %199 = arith.truncf %194 : vector<4x16x8xf32> to vector<4x16x8xbf16>
    "tpu.trace_start"() <{level = 10 : i32, message = "hqd,hkd->hqk"}> : () -> ()
    %cst_77 = arith.constant dense<0.000000e+00> : vector<4x8x16xf32>
    %200 = tpu.matmul %198, %199, %cst_77 {dimension_numbers = #tpu.dot_dimension_numbers<[2], [2], [1], [1], [0, 0, 0, 1, 1, 1], [0], [0]>} : vector<4x8x8xbf16>, vector<4x16x8xbf16>, vector<4x8x16xf32> -> vector<4x8x16xf32>
    "tpu.trace_stop"() : () -> ()
    %cst_78 = arith.constant dense<0xFF800000> : vector<4x8xf32>
    %201 = vector.multi_reduction <maximumf>, %200, %cst_78 [2] : vector<4x8x16xf32> to vector<4x8xf32>
    %202 = vector.shape_cast %201 : vector<4x8xf32> to vector<4x8x1xf32>
    %203 = vector.broadcast %202 : vector<4x8x1xf32> to vector<4x8x16xf32>
    %204 = arith.subf %200, %203 : vector<4x8x16xf32>
    %205 = math.exp %204 : vector<4x8x16xf32>
    %cst_79 = arith.constant dense<0.000000e+00> : vector<4x8xf32>
    %206 = vector.multi_reduction <add>, %205, %cst_79 [2] : vector<4x8x16xf32> to vector<4x8xf32>
    %207 = vector.shape_cast %206 : vector<4x8xf32> to vector<4x8x1xf32>
    %208 = arith.truncf %205 : vector<4x8x16xf32> to vector<4x8x16xbf16>
    %209 = arith.truncf %197 : vector<4x16x8xf32> to vector<4x16x8xbf16>
    "tpu.trace_start"() <{level = 10 : i32, message = "hqk,hkd->hqd"}> : () -> ()
    %cst_80 = arith.constant dense<0.000000e+00> : vector<4x8x8xf32>
    %210 = tpu.matmul %208, %209, %cst_80 {dimension_numbers = #tpu.dot_dimension_numbers<[2], [1], [1], [2], [0, 0, 0, 1, 1, 2], [0], [0]>} : vector<4x8x16xbf16>, vector<4x16x8xbf16>, vector<4x8x8xf32> -> vector<4x8x8xf32>
    "tpu.trace_stop"() : () -> ()
    %211 = tpu.reciprocal %207 {approx = true} : vector<4x8x1xf32> -> vector<4x8x1xf32>
    %212 = vector.broadcast %211 : vector<4x8x1xf32> to vector<4x8x8xf32>
    %213 = arith.mulf %210, %212 : vector<4x8x8xf32>
    %214 = tpu.transpose %213, [1, 0, 2] : vector<4x8x8xf32> -> vector<8x4x8xf32>
    %215 = vector.shape_cast %214 : vector<8x4x8xf32> to vector<8x32xf32>
    %216 = tpu.concatenate %188, %215 in 0 : vector<8x32xf32>, vector<8x32xf32> -> vector<16x32xf32>
    %217 = arith.truncf %216 : vector<16x32xf32> to vector<16x32xbf16>
    %cst_81 = arith.constant dense<0.000000e+00> : vector<16x32xf32>
    %218 = tpu.matmul %217, %147, %cst_81 {dimension_numbers = #tpu.dot_dimension_numbers<[1], [0], [0], [1], [0, 0, 1, 1], [], []>} : vector<16x32xbf16>, vector<32x32xbf16>, vector<16x32xf32> -> vector<16x32xf32>
    %219 = vector.broadcast %148 : vector<1x32xf32> to vector<16x32xf32>
    %220 = arith.addf %218, %219 : vector<16x32xf32>
    %221 = arith.addf %118, %220 : vector<16x32xf32>
    %c0_82 = arith.constant 0 : index
    %c0_83 = arith.constant 0 : index
    %222 = vector.load %arg23[%c0_82, %c0_83] : memref<1x32xf32, #tpu.memory_space<vmem>>, vector<1x32xf32>
    %c0_84 = arith.constant 0 : index
    %c0_85 = arith.constant 0 : index
    %223 = vector.load %arg24[%c0_84, %c0_85] : memref<1x32xf32, #tpu.memory_space<vmem>>, vector<1x32xf32>
    %cst_86 = arith.constant dense<0.000000e+00> : vector<16xf32>
    %224 = vector.multi_reduction <add>, %221, %cst_86 [1] : vector<16x32xf32> to vector<16xf32>
    %225 = vector.shape_cast %224 : vector<16xf32> to vector<16x1xf32>
    %cst_87 = arith.constant 3.200000e+01 : f32
    %226 = vector.broadcast %cst_87 : f32 to vector<16x1xf32>
    %227 = arith.divf %225, %226 : vector<16x1xf32>
    %228 = vector.broadcast %227 : vector<16x1xf32> to vector<16x32xf32>
    %229 = arith.subf %221, %228 : vector<16x32xf32>
    %230 = arith.mulf %229, %229 : vector<16x32xf32>
    %cst_88 = arith.constant dense<0.000000e+00> : vector<16xf32>
    %231 = vector.multi_reduction <add>, %230, %cst_88 [1] : vector<16x32xf32> to vector<16xf32>
    %232 = vector.shape_cast %231 : vector<16xf32> to vector<16x1xf32>
    %cst_89 = arith.constant 3.200000e+01 : f32
    %233 = vector.broadcast %cst_89 : f32 to vector<16x1xf32>
    %234 = arith.divf %232, %233 : vector<16x1xf32>
    %cst_90 = arith.constant 9.99999974E-6 : f32
    %235 = vector.broadcast %cst_90 : f32 to vector<16x1xf32>
    %236 = arith.addf %234, %235 : vector<16x1xf32>
    %237 = math.rsqrt %236 : vector<16x1xf32>
    %238 = vector.broadcast %237 : vector<16x1xf32> to vector<16x32xf32>
    %239 = arith.mulf %229, %238 : vector<16x32xf32>
    %240 = vector.broadcast %222 : vector<1x32xf32> to vector<16x32xf32>
    %241 = arith.mulf %239, %240 : vector<16x32xf32>
    %242 = vector.broadcast %223 : vector<1x32xf32> to vector<16x32xf32>
    %243 = arith.addf %241, %242 : vector<16x32xf32>
    %244 = arith.truncf %243 : vector<16x32xf32> to vector<16x32xbf16>
    %c0_91 = arith.constant 0 : index
    %c0_92 = arith.constant 0 : index
    %245 = vector.load %arg25[%c0_91, %c0_92] : memref<32x64xbf16, #tpu.memory_space<vmem>>, vector<32x64xbf16>
    %cst_93 = arith.constant dense<0.000000e+00> : vector<16x64xf32>
    %246 = tpu.matmul %244, %245, %cst_93 {dimension_numbers = #tpu.dot_dimension_numbers<[1], [0], [0], [1], [0, 0, 1, 1], [], []>} : vector<16x32xbf16>, vector<32x64xbf16>, vector<16x64xf32> -> vector<16x64xf32>
    %c0_94 = arith.constant 0 : index
    %c0_95 = arith.constant 0 : index
    %247 = vector.load %arg26[%c0_94, %c0_95] : memref<1x64xf32, #tpu.memory_space<vmem>>, vector<1x64xf32>
    %248 = vector.broadcast %247 : vector<1x64xf32> to vector<16x64xf32>
    %249 = arith.addf %246, %248 : vector<16x64xf32>
    %cst_96 = arith.constant 0.000000e+00 : f32
    %250 = vector.broadcast %cst_96 : f32 to vector<16x64xf32>
    %251 = arith.maximumf %249, %250 : vector<16x64xf32>
    %252 = arith.truncf %251 : vector<16x64xf32> to vector<16x64xbf16>
    %c0_97 = arith.constant 0 : index
    %c0_98 = arith.constant 0 : index
    %253 = vector.load %arg27[%c0_97, %c0_98] : memref<64x32xbf16, #tpu.memory_space<vmem>>, vector<64x32xbf16>
    %cst_99 = arith.constant dense<0.000000e+00> : vector<16x32xf32>
    %254 = tpu.matmul %252, %253, %cst_99 {dimension_numbers = #tpu.dot_dimension_numbers<[1], [0], [0], [1], [0, 0, 1, 1], [], []>} : vector<16x64xbf16>, vector<64x32xbf16>, vector<16x32xf32> -> vector<16x32xf32>
    %255 = arith.addf %221, %254 : vector<16x32xf32>
    %c0_100 = arith.constant 0 : index
    %c0_101 = arith.constant 0 : index
    %256 = vector.load %arg28[%c0_100, %c0_101] : memref<1x32xf32, #tpu.memory_space<vmem>>, vector<1x32xf32>
    %257 = vector.broadcast %256 : vector<1x32xf32> to vector<16x32xf32>
    %258 = arith.addf %255, %257 : vector<16x32xf32>
    %259 = vector.shape_cast %258 : vector<16x32xf32> to vector<2x8x32xf32>
    %c0_102 = arith.constant 0 : index
    %c0_103 = arith.constant 0 : index
    %c0_104 = arith.constant 0 : index
    %260 = vector.load %arg29[%c0_102, %c0_103, %c0_104] : memref<2x8x32xf32, #tpu.memory_space<vmem>>, vector<2x8x32xf32>
    tpu.vector_store %arg29[%c0_102, %c0_103, %c0_104], %259 {strides = array<i32>} : memref<2x8x32xf32, #tpu.memory_space<vmem>>, vector<2x8x32xf32>,
    return
  }
  func.func @transform_0(%arg0: i32) -> (i32, i32, i32) {
    %c0_i32 = arith.constant 0 : i32
    %c0_i32_0 = arith.constant 0 : i32
    %c0_i32_1 = arith.constant 0 : i32
    return %arg0, %c0_i32, %c0_i32_0 : i32, i32, i32
  }
  func.func @transform_1(%arg0: i32) -> (i32, i32, i32) {
    %c0_i32 = arith.constant 0 : i32
    %c0_i32_0 = arith.constant 0 : i32
    %c0_i32_1 = arith.constant 0 : i32
    return %arg0, %c0_i32, %c0_i32_0 : i32, i32, i32
  }
  func.func @transform_2(%arg0: i32) -> (i32, i32) {
    %c0_i32 = arith.constant 0 : i32
    %c0_i32_0 = arith.constant 0 : i32
    %c0_i32_1 = arith.constant 0 : i32
    return %c0_i32, %c0_i32_0 : i32, i32
  }
  func.func @transform_3(%arg0: i32) -> (i32, i32) {
    %c0_i32 = arith.constant 0 : i32
    %c0_i32_0 = arith.constant 0 : i32
    %c0_i32_1 = arith.constant 0 : i32
    return %c0_i32, %c0_i32_0 : i32, i32
  }
  func.func @transform_4(%arg0: i32) -> (i32, i32) {
    %c0_i32 = arith.constant 0 : i32
    %c0_i32_0 = arith.constant 0 : i32
    %c0_i32_1 = arith.constant 0 : i32
    return %c0_i32, %c0_i32_0 : i32, i32
  }
  func.func @transform_5(%arg0: i32) -> (i32, i32) {
    %c0_i32 = arith.constant 0 : i32
    %c0_i32_0 = arith.constant 0 : i32
    %c0_i32_1 = arith.constant 0 : i32
    return %c0_i32, %c0_i32_0 : i32, i32
  }
  func.func @transform_6(%arg0: i32) -> (i32, i32) {
    %c0_i32 = arith.constant 0 : i32
    %c0_i32_0 = arith.constant 0 : i32
    %c0_i32_1 = arith.constant 0 : i32
    return %c0_i32, %c0_i32_0 : i32, i32
  }
  func.func @transform_7(%arg0: i32) -> (i32, i32) {
    %c0_i32 = arith.constant 0 : i32
    %c0_i32_0 = arith.constant 0 : i32
    %c0_i32_1 = arith.constant 0 : i32
    return %c0_i32, %c0_i32_0 : i32, i32
  }
  func.func @transform_8(%arg0: i32) -> (i32, i32) {
    %c0_i32 = arith.constant 0 : i32
    %c0_i32_0 = arith.constant 0 : i32
    %c0_i32_1 = arith.constant 0 : i32
    return %c0_i32, %c0_i32_0 : i32, i32
  }
  func.func @transform_9(%arg0: i32) -> (i32, i32) {
    %c0_i32 = arith.constant 0 : i32
    %c0_i32_0 = arith.constant 0 : i32
    %c0_i32_1 = arith.constant 0 : i32
    return %c0_i32, %c0_i32_0 : i32, i32
  }
  func.func @transform_10(%arg0: i32) -> (i32, i32) {
    %c0_i32 = arith.constant 0 : i32
    %c0_i32_0 = arith.constant 0 : i32
    %c0_i32_1 = arith.constant 0 : i32
    return %c0_i32, %c0_i32_0 : i32, i32
  }
  func.func @transform_11(%arg0: i32) -> (i32, i32) {
    %c0_i32 = arith.constant 0 : i32
    %c0_i32_0 = arith.constant 0 : i32
    %c0_i32_1 = arith.constant 0 : i32
    return %c0_i32, %c0_i32_0 : i32, i32
  }
  func.func @transform_12(%arg0: i32) -> (i32, i32) {
    %c0_i32 = arith.constant 0 : i32
    %c0_i32_0 = arith.constant 0 : i32
    %c0_i32_1 = arith.constant 0 : i32
    return %c0_i32, %c0_i32_0 : i32, i32
  }
  func.func @transform_13(%arg0: i32) -> (i32, i32) {
    %c0_i32 = arith.constant 0 : i32
    %c0_i32_0 = arith.constant 0 : i32
    %c0_i32_1 = arith.constant 0 : i32
    return %c0_i32, %c0_i32_0 : i32, i32
  }
  func.func @transform_14(%arg0: i32) -> (i32, i32) {
    %c0_i32 = arith.constant 0 : i32
    %c0_i32_0 = arith.constant 0 : i32
    %c0_i32_1 = arith.constant 0 : i32
    return %c0_i32, %c0_i32_0 : i32, i32
  }
  func.func @transform_15(%arg0: i32) -> (i32, i32) {
    %c0_i32 = arith.constant 0 : i32
    %c0_i32_0 = arith.constant 0 : i32
    %c0_i32_1 = arith.constant 0 : i32
    return %c0_i32, %c0_i32_0 : i32, i32
  }
  func.func @transform_16(%arg0: i32) -> (i32, i32) {
    %c0_i32 = arith.constant 0 : i32
    %c0_i32_0 = arith.constant 0 : i32
    %c0_i32_1 = arith.constant 0 : i32
    return %c0_i32, %c0_i32_0 : i32, i32
  }
  func.func @transform_17(%arg0: i32) -> (i32, i32) {
    %c0_i32 = arith.constant 0 : i32
    %c0_i32_0 = arith.constant 0 : i32
    %c0_i32_1 = arith.constant 0 : i32
    return %c0_i32, %c0_i32_0 : i32, i32
  }
  func.func @transform_18(%arg0: i32) -> (i32, i32) {
    %c0_i32 = arith.constant 0 : i32
    %c0_i32_0 = arith.constant 0 : i32
    %c0_i32_1 = arith.constant 0 : i32
    return %c0_i32, %c0_i32_0 : i32, i32
  }
  func.func @transform_19(%arg0: i32) -> (i32, i32) {
    %c0_i32 = arith.constant 0 : i32
    %c0_i32_0 = arith.constant 0 : i32
    %c0_i32_1 = arith.constant 0 : i32
    return %c0_i32, %c0_i32_0 : i32, i32
  }
  func.func @transform_20(%arg0: i32) -> (i32, i32) {
    %c0_i32 = arith.constant 0 : i32
    %c0_i32_0 = arith.constant 0 : i32
    %c0_i32_1 = arith.constant 0 : i32
    return %c0_i32, %c0_i32_0 : i32, i32
  }
  func.func @transform_21(%arg0: i32) -> (i32, i32) {
    %c0_i32 = arith.constant 0 : i32
    %c0_i32_0 = arith.constant 0 : i32
    %c0_i32_1 = arith.constant 0 : i32
    return %c0_i32, %c0_i32_0 : i32, i32
  }
  func.func @transform_22(%arg0: i32) -> (i32, i32) {
    %c0_i32 = arith.constant 0 : i32
    %c0_i32_0 = arith.constant 0 : i32
    %c0_i32_1 = arith.constant 0 : i32
    return %c0_i32, %c0_i32_0 : i32, i32
  }
  func.func @transform_23(%arg0: i32) -> (i32, i32) {
    %c0_i32 = arith.constant 0 : i32
    %c0_i32_0 = arith.constant 0 : i32
    %c0_i32_1 = arith.constant 0 : i32
    return %c0_i32, %c0_i32_0 : i32, i32
  }
  func.func @transform_24(%arg0: i32) -> (i32, i32) {
    %c0_i32 = arith.constant 0 : i32
    %c0_i32_0 = arith.constant 0 : i32
    %c0_i32_1 = arith.constant 0 : i32
    return %c0_i32, %c0_i32_0 : i32, i32
  }
  func.func @transform_25(%arg0: i32) -> (i32, i32) {
    %c0_i32 = arith.constant 0 : i32
    %c0_i32_0 = arith.constant 0 : i32
    %c0_i32_1 = arith.constant 0 : i32
    return %c0_i32, %c0_i32_0 : i32, i32
  }
  func.func @transform_26(%arg0: i32) -> (i32, i32) {
    %c0_i32 = arith.constant 0 : i32
    %c0_i32_0 = arith.constant 0 : i32
    %c0_i32_1 = arith.constant 0 : i32
    return %c0_i32, %c0_i32_0 : i32, i32
  }
  func.func @transform_27(%arg0: i32) -> (i32, i32) {
    %c0_i32 = arith.constant 0 : i32
    %c0_i32_0 = arith.constant 0 : i32
    %c0_i32_1 = arith.constant 0 : i32
    return %c0_i32, %c0_i32_0 : i32, i32
  }
  func.func @transform_28(%arg0: i32) -> (i32, i32, i32) {
    %c0_i32 = arith.constant 0 : i32
    %c0_i32_0 = arith.constant 0 : i32
    %c0_i32_1 = arith.constant 0 : i32
    return %arg0, %c0_i32, %c0_i32_0 : i32, i32, i32
  }
}

module attributes {stable_mosaic.version = 11 : i64} {
  func.func @decoder_layer_kernel(%arg0: i32, %arg1: memref<2x8x32xf32, #tpu.memory_space<vmem>>, %arg2: memref<2x16x32xf32, #tpu.memory_space<vmem>>, %arg3: memref<1x32xf32, #tpu.memory_space<vmem>>, %arg4: memref<1x32xf32, #tpu.memory_space<vmem>>, %arg5: memref<32x32xbf16, #tpu.memory_space<vmem>>, %arg6: memref<1x32xf32, #tpu.memory_space<vmem>>, %arg7: memref<32x32xbf16, #tpu.memory_space<vmem>>, %arg8: memref<1x32xf32, #tpu.memory_space<vmem>>, %arg9: memref<32x32xbf16, #tpu.memory_space<vmem>>, %arg10: memref<1x32xf32, #tpu.memory_space<vmem>>, %arg11: memref<32x32xbf16, #tpu.memory_space<vmem>>, %arg12: memref<1x32xf32, #tpu.memory_space<vmem>>, %arg13: memref<1x32xf32, #tpu.memory_space<vmem>>, %arg14: memref<1x32xf32, #tpu.memory_space<vmem>>, %arg15: memref<32x32xbf16, #tpu.memory_space<vmem>>, %arg16: memref<1x32xf32, #tpu.memory_space<vmem>>, %arg17: memref<32x32xbf16, #tpu.memory_space<vmem>>, %arg18: memref<1x32xf32, #tpu.memory_space<vmem>>, %arg19: memref<32x32xbf16, #tpu.memory_space<vmem>>, %arg20: memref<1x32xf32, #tpu.memory_space<vmem>>, %arg21: memref<32x32xbf16, #tpu.memory_space<vmem>>, %arg22: memref<1x32xf32, #tpu.memory_space<vmem>>, %arg23: memref<1x32xf32, #tpu.memory_space<vmem>>, %arg24: memref<1x32xf32, #tpu.memory_space<vmem>>, %arg25: memref<32x64xbf16, #tpu.memory_space<vmem>>, %arg26: memref<1x64xf32, #tpu.memory_space<vmem>>, %arg27: memref<64x32xbf16, #tpu.memory_space<vmem>>, %arg28: memref<1x32xf32, #tpu.memory_space<vmem>>, %arg29: memref<2x8x32xf32, #tpu.memory_space<vmem>>) attributes {dimension_semantics = [#tpu.dimension_semantics<parallel>], iteration_bounds = array<i64: 1>, scalar_prefetch = 0 : i64, scratch_operands = 0 : i64, tpu.core_type = #tpu.core_type<tc>, window_params = [{transform_indices = @transform_0, window_bounds = array<i64: 2, 8, 32>}, {transform_indices = @transform_1, window_bounds = array<i64: 2, 16, 32>}, {pipeline_mode = #tpu.pipeline_mode<synchronous>, transform_indices = @transform_2, window_bounds = array<i64: 1, 32>}, {pipeline_mode = #tpu.pipeline_mode<synchronous>, transform_indices = @transform_3, window_bounds = array<i64: 1, 32>}, {pipeline_mode = #tpu.pipeline_mode<synchronous>, transform_indices = @transform_4, window_bounds = array<i64: 32, 32>}, {pipeline_mode = #tpu.pipeline_mode<synchronous>, transform_indices = @transform_5, window_bounds = array<i64: 1, 32>}, {pipeline_mode = #tpu.pipeline_mode<synchronous>, transform_indices = @transform_6, window_bounds = array<i64: 32, 32>}, {pipeline_mode = #tpu.pipeline_mode<synchronous>, transform_indices = @transform_7, window_bounds = array<i64: 1, 32>}, {pipeline_mode = #tpu.pipeline_mode<synchronous>, transform_indices = @transform_8, window_bounds = array<i64: 32, 32>}, {pipeline_mode = #tpu.pipeline_mode<synchronous>, transform_indices = @transform_9, window_bounds = array<i64: 1, 32>}, {pipeline_mode = #tpu.pipeline_mode<synchronous>, transform_indices = @transform_10, window_bounds = array<i64: 32, 32>}, {pipeline_mode = #tpu.pipeline_mode<synchronous>, transform_indices = @transform_11, window_bounds = array<i64: 1, 32>}, {pipeline_mode = #tpu.pipeline_mode<synchronous>, transform_indices = @transform_12, window_bounds = array<i64: 1, 32>}, {pipeline_mode = #tpu.pipeline_mode<synchronous>, transform_indices = @transform_13, window_bounds = array<i64: 1, 32>}, {pipeline_mode = #tpu.pipeline_mode<synchronous>, transform_indices = @transform_14, window_bounds = array<i64: 32, 32>}, {pipeline_mode = #tpu.pipeline_mode<synchronous>, transform_indices = @transform_15, window_bounds = array<i64: 1, 32>}, {pipeline_mode = #tpu.pipeline_mode<synchronous>, transform_indices = @transform_16, window_bounds = array<i64: 32, 32>}, {pipeline_mode = #tpu.pipeline_mode<synchronous>, transform_indices = @transform_17, window_bounds = array<i64: 1, 32>}, {pipeline_mode = #tpu.pipeline_mode<synchronous>, transform_indices = @transform_18, window_bounds = array<i64: 32, 32>}, {pipeline_mode = #tpu.pipeline_mode<synchronous>, transform_indices = @transform_19, window_bounds = array<i64: 1, 32>}, {pipeline_mode = #tpu.pipeline_mode<synchronous>, transform_indices = @transform_20, window_bounds = array<i64: 32, 32>}, {pipeline_mode = #tpu.pipeline_mode<synchronous>, transform_indices = @transform_21, window_bounds = array<i64: 1, 32>}, {pipeline_mode = #tpu.pipeline_mode<synchronous>, transform_indices = @transform_22, window_bounds = array<i64: 1, 32>}, {pipeline_mode = #tpu.pipeline_mode<synchronous>, transform_indices = @transform_23, window_bounds = array<i64: 1, 32>}, {pipeline_mode = #tpu.pipeline_mode<synchronous>, transform_indices = @transform_24, window_bounds = array<i64: 32, 64>}, {pipeline_mode = #tpu.pipeline_mode<synchronous>, transform_indices = @transform_25, window_bounds = array<i64: 1, 64>}, {pipeline_mode = #tpu.pipeline_mode<synchronous>, transform_indices = @transform_26, window_bounds = array<i64: 64, 32>}, {pipeline_mode = #tpu.pipeline_mode<synchronous>, transform_indices = @transform_27, window_bounds = array<i64: 1, 32>}, {transform_indices = @transform_28, window_bounds = array<i64: 2, 8, 32>}]} {
    %c0 = arith.constant 0 : index
    %c0_0 = arith.constant 0 : index
    %c0_1 = arith.constant 0 : index
    %0 = vector.load %arg1[%c0, %c0_0, %c0_1] : memref<2x8x32xf32, #tpu.memory_space<vmem>>, vector<2x8x32xf32>
    %c0_2 = arith.constant 0 : index
    %c0_3 = arith.constant 0 : index
    %c0_4 = arith.constant 0 : index
    %1 = vector.load %arg2[%c0_2, %c0_3, %c0_4] : memref<2x16x32xf32, #tpu.memory_space<vmem>>, vector<2x16x32xf32>
    %2 = vector.shape_cast %0 : vector<2x8x32xf32> to vector<16x32xf32>
    %3 = vector.shape_cast %1 : vector<2x16x32xf32> to vector<32x32xf32>
    %c0_5 = arith.constant 0 : index
    %c0_6 = arith.constant 0 : index
    %4 = vector.load %arg3[%c0_5, %c0_6] : memref<1x32xf32, #tpu.memory_space<vmem>>, vector<1x32xf32>
    %c0_7 = arith.constant 0 : index
    %c0_8 = arith.constant 0 : index
    %5 = vector.load %arg4[%c0_7, %c0_8] : memref<1x32xf32, #tpu.memory_space<vmem>>, vector<1x32xf32>
    %cst = arith.constant dense<0.000000e+00> : vector<16xf32>
    %6 = vector.multi_reduction <add>, %2, %cst [1] : vector<16x32xf32> to vector<16xf32>
    %7 = vector.shape_cast %6 : vector<16xf32> to vector<16x1xf32>
    %cst_9 = arith.constant 3.200000e+01 : f32
    %8 = vector.broadcast %cst_9 : f32 to vector<16x1xf32>
    %9 = arith.divf %7, %8 : vector<16x1xf32>
    %10 = vector.broadcast %9 : vector<16x1xf32> to vector<16x32xf32>
    %11 = arith.subf %2, %10 : vector<16x32xf32>
    %12 = arith.mulf %11, %11 : vector<16x32xf32>
    %cst_10 = arith.constant dense<0.000000e+00> : vector<16xf32>
    %13 = vector.multi_reduction <add>, %12, %cst_10 [1] : vector<16x32xf32> to vector<16xf32>
    %14 = vector.shape_cast %13 : vector<16xf32> to vector<16x1xf32>
    %cst_11 = arith.constant 3.200000e+01 : f32
    %15 = vector.broadcast %cst_11 : f32 to vector<16x1xf32>
    %16 = arith.divf %14, %15 : vector<16x1xf32>
    %cst_12 = arith.constant 9.99999974E-6 : f32
    %17 = vector.broadcast %cst_12 : f32 to vector<16x1xf32>
    %18 = arith.addf %16, %17 : vector<16x1xf32>
    %19 = math.rsqrt %18 : vector<16x1xf32>
    %20 = vector.broadcast %19 : vector<16x1xf32> to vector<16x32xf32>
    %21 = arith.mulf %11, %20 : vector<16x32xf32>
    %22 = vector.broadcast %4 : vector<1x32xf32> to vector<16x32xf32>
    %23 = arith.mulf %21, %22 : vector<16x32xf32>
    %24 = vector.broadcast %5 : vector<1x32xf32> to vector<16x32xf32>
    %25 = arith.addf %23, %24 : vector<16x32xf32>
    %c0_13 = arith.constant 0 : index
    %c0_14 = arith.constant 0 : index
    %26 = vector.load %arg5[%c0_13, %c0_14] : memref<32x32xbf16, #tpu.memory_space<vmem>>, vector<32x32xbf16>
    %c0_15 = arith.constant 0 : index
    %c0_16 = arith.constant 0 : index
    %27 = vector.load %arg6[%c0_15, %c0_16] : memref<1x32xf32, #tpu.memory_space<vmem>>, vector<1x32xf32>
    %c0_17 = arith.constant 0 : index
    %c0_18 = arith.constant 0 : index
    %28 = vector.load %arg7[%c0_17, %c0_18] : memref<32x32xbf16, #tpu.memory_space<vmem>>, vector<32x32xbf16>
    %c0_19 = arith.constant 0 : index
    %c0_20 = arith.constant 0 : index
    %29 = vector.load %arg8[%c0_19, %c0_20] : memref<1x32xf32, #tpu.memory_space<vmem>>, vector<1x32xf32>
    %c0_21 = arith.constant 0 : index
    %c0_22 = arith.constant 0 : index
    %30 = vector.load %arg9[%c0_21, %c0_22] : memref<32x32xbf16, #tpu.memory_space<vmem>>, vector<32x32xbf16>
    %c0_23 = arith.constant 0 : index
    %c0_24 = arith.constant 0 : index
    %31 = vector.load %arg10[%c0_23, %c0_24] : memref<1x32xf32, #tpu.memory_space<vmem>>, vector<1x32xf32>
    %c0_25 = arith.constant 0 : index
    %c0_26 = arith.constant 0 : index
    %32 = vector.load %arg11[%c0_25, %c0_26] : memref<32x32xbf16, #tpu.memory_space<vmem>>, vector<32x32xbf16>
    %c0_27 = arith.constant 0 : index
    %c0_28 = arith.constant 0 : index
    %33 = vector.load %arg12[%c0_27, %c0_28] : memref<1x32xf32, #tpu.memory_space<vmem>>, vector<1x32xf32>
    %34 = arith.truncf %25 : vector<16x32xf32> to vector<16x32xbf16>
    %35 = arith.truncf %25 : vector<16x32xf32> to vector<16x32xbf16>
    %cst_29 = arith.constant dense<0.000000e+00> : vector<16x32xf32>
    %36 = tpu.matmul %34, %26, %cst_29 {dimension_numbers = #tpu.dot_dimension_numbers<[1], [0], [0], [1], [0, 0, 1, 1], [], []>} : vector<16x32xbf16>, vector<32x32xbf16>, vector<16x32xf32> -> vector<16x32xf32>
    %37 = vector.broadcast %27 : vector<1x32xf32> to vector<16x32xf32>
    %38 = arith.addf %36, %37 : vector<16x32xf32>
    %cst_30 = arith.constant 0.353553385 : f32
    %39 = vector.broadcast %cst_30 : f32 to vector<16x32xf32>
    %40 = arith.mulf %38, %39 : vector<16x32xf32>
    %cst_31 = arith.constant dense<0.000000e+00> : vector<16x32xf32>
    %41 = tpu.matmul %35, %28, %cst_31 {dimension_numbers = #tpu.dot_dimension_numbers<[1], [0], [0], [1], [0, 0, 1, 1], [], []>} : vector<16x32xbf16>, vector<32x32xbf16>, vector<16x32xf32> -> vector<16x32xf32>
    %42 = vector.broadcast %29 : vector<1x32xf32> to vector<16x32xf32>
    %43 = arith.addf %41, %42 : vector<16x32xf32>
    %cst_32 = arith.constant dense<0.000000e+00> : vector<16x32xf32>
    %44 = tpu.matmul %35, %30, %cst_32 {dimension_numbers = #tpu.dot_dimension_numbers<[1], [0], [0], [1], [0, 0, 1, 1], [], []>} : vector<16x32xbf16>, vector<32x32xbf16>, vector<16x32xf32> -> vector<16x32xf32>
    %45 = vector.broadcast %31 : vector<1x32xf32> to vector<16x32xf32>
    %46 = arith.addf %44, %45 : vector<16x32xf32>
    %47 = tpu.iota {dimensions = array<i32: 0>} : vector<8x8xi32>
    %48 = tpu.iota {dimensions = array<i32: 1>} : vector<8x8xi32>
    %49 = arith.cmpi sge, %47, %48 : vector<8x8xi32>
    %cst_33 = arith.constant 0.000000e+00 : f32
    %cst_34 = arith.constant -1.000000e+09 : f32
    %50 = vector.broadcast %cst_33 : f32 to vector<8x8xf32>
    %51 = vector.broadcast %cst_34 : f32 to vector<8x8xf32>
    %52 = arith.select %49, %50, %51 : vector<8x8xi1>, vector<8x8xf32>
    %53 = vector.extract_strided_slice %40 {offsets = [0, 0], sizes = [8, 32], strides = [1, 1]} : vector<16x32xf32> to vector<8x32xf32>
    %54 = vector.extract_strided_slice %53 {offsets = [0, 0], sizes = [8, 8], strides = [1, 1]} : vector<8x32xf32> to vector<8x8xf32>
    %55 = vector.extract_strided_slice %53 {offsets = [0, 8], sizes = [8, 8], strides = [1, 1]} : vector<8x32xf32> to vector<8x8xf32>
    %56 = vector.extract_strided_slice %53 {offsets = [0, 16], sizes = [8, 8], strides = [1, 1]} : vector<8x32xf32> to vector<8x8xf32>
    %57 = vector.extract_strided_slice %53 {offsets = [0, 24], sizes = [8, 8], strides = [1, 1]} : vector<8x32xf32> to vector<8x8xf32>
    %58 = vector.shape_cast %54 : vector<8x8xf32> to vector<1x8x8xf32>
    %59 = vector.shape_cast %55 : vector<8x8xf32> to vector<1x8x8xf32>
    %60 = vector.shape_cast %56 : vector<8x8xf32> to vector<1x8x8xf32>
    %61 = vector.shape_cast %57 : vector<8x8xf32> to vector<1x8x8xf32>
    %62 = tpu.concatenate %58, %59, %60, %61 in 0 : vector<1x8x8xf32>, vector<1x8x8xf32>, vector<1x8x8xf32>, vector<1x8x8xf32> -> vector<4x8x8xf32>
    %63 = vector.extract_strided_slice %43 {offsets = [0, 0], sizes = [8, 32], strides = [1, 1]} : vector<16x32xf32> to vector<8x32xf32>
    %64 = vector.extract_strided_slice %63 {offsets = [0, 0], sizes = [8, 8], strides = [1, 1]} : vector<8x32xf32> to vector<8x8xf32>
    %65 = vector.extract_strided_slice %63 {offsets = [0, 8], sizes = [8, 8], strides = [1, 1]} : vector<8x32xf32> to vector<8x8xf32>
    %66 = vector.extract_strided_slice %63 {offsets = [0, 16], sizes = [8, 8], strides = [1, 1]} : vector<8x32xf32> to vector<8x8xf32>
    %67 = vector.extract_strided_slice %63 {offsets = [0, 24], sizes = [8, 8], strides = [1, 1]} : vector<8x32xf32> to vector<8x8xf32>
    %68 = vector.shape_cast %64 : vector<8x8xf32> to vector<1x8x8xf32>
    %69 = vector.shape_cast %65 : vector<8x8xf32> to vector<1x8x8xf32>
    %70 = vector.shape_cast %66 : vector<8x8xf32> to vector<1x8x8xf32>
    %71 = vector.shape_cast %67 : vector<8x8xf32> to vector<1x8x8xf32>
    %72 = tpu.concatenate %68, %69, %70, %71 in 0 : vector<1x8x8xf32>, vector<1x8x8xf32>, vector<1x8x8xf32>, vector<1x8x8xf32> -> vector<4x8x8xf32>
    %73 = vector.extract_strided_slice %46 {offsets = [0, 0], sizes = [8, 32], strides = [1, 1]} : vector<16x32xf32> to vector<8x32xf32>
    %74 = vector.extract_strided_slice %73 {offsets = [0, 0], sizes = [8, 8], strides = [1, 1]} : vector<8x32xf32> to vector<8x8xf32>
    %75 = vector.extract_strided_slice %73 {offsets = [0, 8], sizes = [8, 8], strides = [1, 1]} : vector<8x32xf32> to vector<8x8xf32>
    %76 = vector.extract_strided_slice %73 {offsets = [0, 16], sizes = [8, 8], strides = [1, 1]} : vector<8x32xf32> to vector<8x8xf32>
    %77 = vector.extract_strided_slice %73 {offsets = [0, 24], sizes = [8, 8], strides = [1, 1]} : vector<8x32xf32> to vector<8x8xf32>
    %78 = vector.shape_cast %74 : vector<8x8xf32> to vector<1x8x8xf32>
    %79 = vector.shape_cast %75 : vector<8x8xf32> to vector<1x8x8xf32>
    %80 = vector.shape_cast %76 : vector<8x8xf32> to vector<1x8x8xf32>
    %81 = vector.shape_cast %77 : vector<8x8xf32> to vector<1x8x8xf32>
    %82 = tpu.concatenate %78, %79, %80, %81 in 0 : vector<1x8x8xf32>, vector<1x8x8xf32>, vector<1x8x8xf32>, vector<1x8x8xf32> -> vector<4x8x8xf32>
    %83 = arith.truncf %62 : vector<4x8x8xf32> to vector<4x8x8xbf16>
    %84 = arith.truncf %72 : vector<4x8x8xf32> to vector<4x8x8xbf16>
    "tpu.trace_start"() <{level = 10 : i32, message = "hqd,hkd->hqk"}> : () -> ()
    %cst_35 = arith.constant dense<0.000000e+00> : vector<4x8x8xf32>
    %85 = tpu.matmul %83, %84, %cst_35 {dimension_numbers = #tpu.dot_dimension_numbers<[2], [2], [1], [1], [0, 0, 0, 1, 1, 1], [0], [0]>} : vector<4x8x8xbf16>, vector<4x8x8xbf16>, vector<4x8x8xf32> -> vector<4x8x8xf32>
    "tpu.trace_stop"() : () -> ()
    %86 = vector.shape_cast %52 : vector<8x8xf32> to vector<1x8x8xf32>
    %87 = vector.broadcast %86 : vector<1x8x8xf32> to vector<4x8x8xf32>
    %88 = arith.addf %85, %87 : vector<4x8x8xf32>
    %cst_36 = arith.constant dense<0xFF800000> : vector<4x8xf32>
    %89 = vector.multi_reduction <maximumf>, %88, %cst_36 [2] : vector<4x8x8xf32> to vector<4x8xf32>
    %90 = vector.shape_cast %89 : vector<4x8xf32> to vector<4x8x1xf32>
    %91 = vector.broadcast %90 : vector<4x8x1xf32> to vector<4x8x8xf32>
    %92 = arith.subf %88, %91 : vector<4x8x8xf32>
    %93 = math.exp %92 : vector<4x8x8xf32>
    %cst_37 = arith.constant dense<0.000000e+00> : vector<4x8xf32>
    %94 = vector.multi_reduction <add>, %93, %cst_37 [2] : vector<4x8x8xf32> to vector<4x8xf32>
    %95 = vector.shape_cast %94 : vector<4x8xf32> to vector<4x8x1xf32>
    %96 = arith.truncf %93 : vector<4x8x8xf32> to vector<4x8x8xbf16>
    %97 = arith.truncf %82 : vector<4x8x8xf32> to vector<4x8x8xbf16>
    "tpu.trace_start"() <{level = 10 : i32, message = "hqk,hkd->hqd"}> : () -> ()
    %cst_38 = arith.constant dense<0.000000e+00> : vector<4x8x8xf32>
    %98 = tpu.matmul %96, %97, %cst_38 {dimension_numbers = #tpu.dot_dimension_numbers<[2], [1], [1], [2], [0, 0, 0, 1, 1, 2], [0], [0]>} : vector<4x8x8xbf16>, vector<4x8x8xbf16>, vector<4x8x8xf32> -> vector<4x8x8xf32>
    "tpu.trace_stop"() : () -> ()
    %99 = tpu.reciprocal %95 {approx = true} : vector<4x8x1xf32> -> vector<4x8x1xf32>
    %100 = vector.broadcast %99 : vector<4x8x1xf32> to vector<4x8x8xf32>
    %101 = arith.mulf %98, %100 : vector<4x8x8xf32>
    %102 = vector.extract_strided_slice %101 {offsets = [0, 0, 0], sizes = [1, 8, 8], strides = [1, 1, 1]} : vector<4x8x8xf32> to vector<1x8x8xf32>
    %103 = vector.shape_cast %102 : vector<1x8x8xf32> to vector<8x8xf32>
    %104 = vector.extract_strided_slice %101 {offsets = [1, 0, 0], sizes = [1, 8, 8], strides = [1, 1, 1]} : vector<4x8x8xf32> to vector<1x8x8xf32>
    %105 = vector.shape_cast %104 : vector<1x8x8xf32> to vector<8x8xf32>
    %106 = vector.extract_strided_slice %101 {offsets = [2, 0, 0], sizes = [1, 8, 8], strides = [1, 1, 1]} : vector<4x8x8xf32> to vector<1x8x8xf32>
    %107 = vector.shape_cast %106 : vector<1x8x8xf32> to vector<8x8xf32>
    %108 = vector.extract_strided_slice %101 {offsets = [3, 0, 0], sizes = [1, 8, 8], strides = [1, 1, 1]} : vector<4x8x8xf32> to vector<1x8x8xf32>
    %109 = vector.shape_cast %108 : vector<1x8x8xf32> to vector<8x8xf32>
    %110 = tpu.concatenate %103, %105, %107, %109 in 1 : vector<8x8xf32>, vector<8x8xf32>, vector<8x8xf32>, vector<8x8xf32> -> vector<8x32xf32>
    %111 = vector.extract_strided_slice %40 {offsets = [8, 0], sizes = [8, 32], strides = [1, 1]} : vector<16x32xf32> to vector<8x32xf32>
    %112 = vector.extract_strided_slice %111 {offsets = [0, 0], sizes = [8, 8], strides = [1, 1]} : vector<8x32xf32> to vector<8x8xf32>
    %113 = vector.extract_strided_slice %111 {offsets = [0, 8], sizes = [8, 8], strides = [1, 1]} : vector<8x32xf32> to vector<8x8xf32>
    %114 = vector.extract_strided_slice %111 {offsets = [0, 16], sizes = [8, 8], strides = [1, 1]} : vector<8x32xf32> to vector<8x8xf32>
    %115 = vector.extract_strided_slice %111 {offsets = [0, 24], sizes = [8, 8], strides = [1, 1]} : vector<8x32xf32> to vector<8x8xf32>
    %116 = vector.shape_cast %112 : vector<8x8xf32> to vector<1x8x8xf32>
    %117 = vector.shape_cast %113 : vector<8x8xf32> to vector<1x8x8xf32>
    %118 = vector.shape_cast %114 : vector<8x8xf32> to vector<1x8x8xf32>
    %119 = vector.shape_cast %115 : vector<8x8xf32> to vector<1x8x8xf32>
    %120 = tpu.concatenate %116, %117, %118, %119 in 0 : vector<1x8x8xf32>, vector<1x8x8xf32>, vector<1x8x8xf32>, vector<1x8x8xf32> -> vector<4x8x8xf32>
    %121 = vector.extract_strided_slice %43 {offsets = [8, 0], sizes = [8, 32], strides = [1, 1]} : vector<16x32xf32> to vector<8x32xf32>
    %122 = vector.extract_strided_slice %121 {offsets = [0, 0], sizes = [8, 8], strides = [1, 1]} : vector<8x32xf32> to vector<8x8xf32>
    %123 = vector.extract_strided_slice %121 {offsets = [0, 8], sizes = [8, 8], strides = [1, 1]} : vector<8x32xf32> to vector<8x8xf32>
    %124 = vector.extract_strided_slice %121 {offsets = [0, 16], sizes = [8, 8], strides = [1, 1]} : vector<8x32xf32> to vector<8x8xf32>
    %125 = vector.extract_strided_slice %121 {offsets = [0, 24], sizes = [8, 8], strides = [1, 1]} : vector<8x32xf32> to vector<8x8xf32>
    %126 = vector.shape_cast %122 : vector<8x8xf32> to vector<1x8x8xf32>
    %127 = vector.shape_cast %123 : vector<8x8xf32> to vector<1x8x8xf32>
    %128 = vector.shape_cast %124 : vector<8x8xf32> to vector<1x8x8xf32>
    %129 = vector.shape_cast %125 : vector<8x8xf32> to vector<1x8x8xf32>
    %130 = tpu.concatenate %126, %127, %128, %129 in 0 : vector<1x8x8xf32>, vector<1x8x8xf32>, vector<1x8x8xf32>, vector<1x8x8xf32> -> vector<4x8x8xf32>
    %131 = vector.extract_strided_slice %46 {offsets = [8, 0], sizes = [8, 32], strides = [1, 1]} : vector<16x32xf32> to vector<8x32xf32>
    %132 = vector.extract_strided_slice %131 {offsets = [0, 0], sizes = [8, 8], strides = [1, 1]} : vector<8x32xf32> to vector<8x8xf32>
    %133 = vector.extract_strided_slice %131 {offsets = [0, 8], sizes = [8, 8], strides = [1, 1]} : vector<8x32xf32> to vector<8x8xf32>
    %134 = vector.extract_strided_slice %131 {offsets = [0, 16], sizes = [8, 8], strides = [1, 1]} : vector<8x32xf32> to vector<8x8xf32>
    %135 = vector.extract_strided_slice %131 {offsets = [0, 24], sizes = [8, 8], strides = [1, 1]} : vector<8x32xf32> to vector<8x8xf32>
    %136 = vector.shape_cast %132 : vector<8x8xf32> to vector<1x8x8xf32>
    %137 = vector.shape_cast %133 : vector<8x8xf32> to vector<1x8x8xf32>
    %138 = vector.shape_cast %134 : vector<8x8xf32> to vector<1x8x8xf32>
    %139 = vector.shape_cast %135 : vector<8x8xf32> to vector<1x8x8xf32>
    %140 = tpu.concatenate %136, %137, %138, %139 in 0 : vector<1x8x8xf32>, vector<1x8x8xf32>, vector<1x8x8xf32>, vector<1x8x8xf32> -> vector<4x8x8xf32>
    %141 = arith.truncf %120 : vector<4x8x8xf32> to vector<4x8x8xbf16>
    %142 = arith.truncf %130 : vector<4x8x8xf32> to vector<4x8x8xbf16>
    "tpu.trace_start"() <{level = 10 : i32, message = "hqd,hkd->hqk"}> : () -> ()
    %cst_39 = arith.constant dense<0.000000e+00> : vector<4x8x8xf32>
    %143 = tpu.matmul %141, %142, %cst_39 {dimension_numbers = #tpu.dot_dimension_numbers<[2], [2], [1], [1], [0, 0, 0, 1, 1, 1], [0], [0]>} : vector<4x8x8xbf16>, vector<4x8x8xbf16>, vector<4x8x8xf32> -> vector<4x8x8xf32>
    "tpu.trace_stop"() : () -> ()
    %144 = vector.shape_cast %52 : vector<8x8xf32> to vector<1x8x8xf32>
    %145 = vector.broadcast %144 : vector<1x8x8xf32> to vector<4x8x8xf32>
    %146 = arith.addf %143, %145 : vector<4x8x8xf32>
    %cst_40 = arith.constant dense<0xFF800000> : vector<4x8xf32>
    %147 = vector.multi_reduction <maximumf>, %146, %cst_40 [2] : vector<4x8x8xf32> to vector<4x8xf32>
    %148 = vector.shape_cast %147 : vector<4x8xf32> to vector<4x8x1xf32>
    %149 = vector.broadcast %148 : vector<4x8x1xf32> to vector<4x8x8xf32>
    %150 = arith.subf %146, %149 : vector<4x8x8xf32>
    %151 = math.exp %150 : vector<4x8x8xf32>
    %cst_41 = arith.constant dense<0.000000e+00> : vector<4x8xf32>
    %152 = vector.multi_reduction <add>, %151, %cst_41 [2] : vector<4x8x8xf32> to vector<4x8xf32>
    %153 = vector.shape_cast %152 : vector<4x8xf32> to vector<4x8x1xf32>
    %154 = arith.truncf %151 : vector<4x8x8xf32> to vector<4x8x8xbf16>
    %155 = arith.truncf %140 : vector<4x8x8xf32> to vector<4x8x8xbf16>
    "tpu.trace_start"() <{level = 10 : i32, message = "hqk,hkd->hqd"}> : () -> ()
    %cst_42 = arith.constant dense<0.000000e+00> : vector<4x8x8xf32>
    %156 = tpu.matmul %154, %155, %cst_42 {dimension_numbers = #tpu.dot_dimension_numbers<[2], [1], [1], [2], [0, 0, 0, 1, 1, 2], [0], [0]>} : vector<4x8x8xbf16>, vector<4x8x8xbf16>, vector<4x8x8xf32> -> vector<4x8x8xf32>
    "tpu.trace_stop"() : () -> ()
    %157 = tpu.reciprocal %153 {approx = true} : vector<4x8x1xf32> -> vector<4x8x1xf32>
    %158 = vector.broadcast %157 : vector<4x8x1xf32> to vector<4x8x8xf32>
    %159 = arith.mulf %156, %158 : vector<4x8x8xf32>
    %160 = vector.extract_strided_slice %159 {offsets = [0, 0, 0], sizes = [1, 8, 8], strides = [1, 1, 1]} : vector<4x8x8xf32> to vector<1x8x8xf32>
    %161 = vector.shape_cast %160 : vector<1x8x8xf32> to vector<8x8xf32>
    %162 = vector.extract_strided_slice %159 {offsets = [1, 0, 0], sizes = [1, 8, 8], strides = [1, 1, 1]} : vector<4x8x8xf32> to vector<1x8x8xf32>
    %163 = vector.shape_cast %162 : vector<1x8x8xf32> to vector<8x8xf32>
    %164 = vector.extract_strided_slice %159 {offsets = [2, 0, 0], sizes = [1, 8, 8], strides = [1, 1, 1]} : vector<4x8x8xf32> to vector<1x8x8xf32>
    %165 = vector.shape_cast %164 : vector<1x8x8xf32> to vector<8x8xf32>
    %166 = vector.extract_strided_slice %159 {offsets = [3, 0, 0], sizes = [1, 8, 8], strides = [1, 1, 1]} : vector<4x8x8xf32> to vector<1x8x8xf32>
    %167 = vector.shape_cast %166 : vector<1x8x8xf32> to vector<8x8xf32>
    %168 = tpu.concatenate %161, %163, %165, %167 in 1 : vector<8x8xf32>, vector<8x8xf32>, vector<8x8xf32>, vector<8x8xf32> -> vector<8x32xf32>
    %169 = tpu.concatenate %110, %168 in 0 : vector<8x32xf32>, vector<8x32xf32> -> vector<16x32xf32>
    %170 = arith.truncf %169 : vector<16x32xf32> to vector<16x32xbf16>
    %cst_43 = arith.constant dense<0.000000e+00> : vector<16x32xf32>
    %171 = tpu.matmul %170, %32, %cst_43 {dimension_numbers = #tpu.dot_dimension_numbers<[1], [0], [0], [1], [0, 0, 1, 1], [], []>} : vector<16x32xbf16>, vector<32x32xbf16>, vector<16x32xf32> -> vector<16x32xf32>
    %172 = vector.broadcast %33 : vector<1x32xf32> to vector<16x32xf32>
    %173 = arith.addf %171, %172 : vector<16x32xf32>
    %174 = arith.addf %2, %173 : vector<16x32xf32>
    %c0_44 = arith.constant 0 : index
    %c0_45 = arith.constant 0 : index
    %175 = vector.load %arg13[%c0_44, %c0_45] : memref<1x32xf32, #tpu.memory_space<vmem>>, vector<1x32xf32>
    %c0_46 = arith.constant 0 : index
    %c0_47 = arith.constant 0 : index
    %176 = vector.load %arg14[%c0_46, %c0_47] : memref<1x32xf32, #tpu.memory_space<vmem>>, vector<1x32xf32>
    %cst_48 = arith.constant dense<0.000000e+00> : vector<16xf32>
    %177 = vector.multi_reduction <add>, %174, %cst_48 [1] : vector<16x32xf32> to vector<16xf32>
    %178 = vector.shape_cast %177 : vector<16xf32> to vector<16x1xf32>
    %cst_49 = arith.constant 3.200000e+01 : f32
    %179 = vector.broadcast %cst_49 : f32 to vector<16x1xf32>
    %180 = arith.divf %178, %179 : vector<16x1xf32>
    %181 = vector.broadcast %180 : vector<16x1xf32> to vector<16x32xf32>
    %182 = arith.subf %174, %181 : vector<16x32xf32>
    %183 = arith.mulf %182, %182 : vector<16x32xf32>
    %cst_50 = arith.constant dense<0.000000e+00> : vector<16xf32>
    %184 = vector.multi_reduction <add>, %183, %cst_50 [1] : vector<16x32xf32> to vector<16xf32>
    %185 = vector.shape_cast %184 : vector<16xf32> to vector<16x1xf32>
    %cst_51 = arith.constant 3.200000e+01 : f32
    %186 = vector.broadcast %cst_51 : f32 to vector<16x1xf32>
    %187 = arith.divf %185, %186 : vector<16x1xf32>
    %cst_52 = arith.constant 9.99999974E-6 : f32
    %188 = vector.broadcast %cst_52 : f32 to vector<16x1xf32>
    %189 = arith.addf %187, %188 : vector<16x1xf32>
    %190 = math.rsqrt %189 : vector<16x1xf32>
    %191 = vector.broadcast %190 : vector<16x1xf32> to vector<16x32xf32>
    %192 = arith.mulf %182, %191 : vector<16x32xf32>
    %193 = vector.broadcast %175 : vector<1x32xf32> to vector<16x32xf32>
    %194 = arith.mulf %192, %193 : vector<16x32xf32>
    %195 = vector.broadcast %176 : vector<1x32xf32> to vector<16x32xf32>
    %196 = arith.addf %194, %195 : vector<16x32xf32>
    %c0_53 = arith.constant 0 : index
    %c0_54 = arith.constant 0 : index
    %197 = vector.load %arg15[%c0_53, %c0_54] : memref<32x32xbf16, #tpu.memory_space<vmem>>, vector<32x32xbf16>
    %c0_55 = arith.constant 0 : index
    %c0_56 = arith.constant 0 : index
    %198 = vector.load %arg16[%c0_55, %c0_56] : memref<1x32xf32, #tpu.memory_space<vmem>>, vector<1x32xf32>
    %c0_57 = arith.constant 0 : index
    %c0_58 = arith.constant 0 : index
    %199 = vector.load %arg17[%c0_57, %c0_58] : memref<32x32xbf16, #tpu.memory_space<vmem>>, vector<32x32xbf16>
    %c0_59 = arith.constant 0 : index
    %c0_60 = arith.constant 0 : index
    %200 = vector.load %arg18[%c0_59, %c0_60] : memref<1x32xf32, #tpu.memory_space<vmem>>, vector<1x32xf32>
    %c0_61 = arith.constant 0 : index
    %c0_62 = arith.constant 0 : index
    %201 = vector.load %arg19[%c0_61, %c0_62] : memref<32x32xbf16, #tpu.memory_space<vmem>>, vector<32x32xbf16>
    %c0_63 = arith.constant 0 : index
    %c0_64 = arith.constant 0 : index
    %202 = vector.load %arg20[%c0_63, %c0_64] : memref<1x32xf32, #tpu.memory_space<vmem>>, vector<1x32xf32>
    %c0_65 = arith.constant 0 : index
    %c0_66 = arith.constant 0 : index
    %203 = vector.load %arg21[%c0_65, %c0_66] : memref<32x32xbf16, #tpu.memory_space<vmem>>, vector<32x32xbf16>
    %c0_67 = arith.constant 0 : index
    %c0_68 = arith.constant 0 : index
    %204 = vector.load %arg22[%c0_67, %c0_68] : memref<1x32xf32, #tpu.memory_space<vmem>>, vector<1x32xf32>
    %205 = arith.truncf %196 : vector<16x32xf32> to vector<16x32xbf16>
    %206 = arith.truncf %3 : vector<32x32xf32> to vector<32x32xbf16>
    %cst_69 = arith.constant dense<0.000000e+00> : vector<16x32xf32>
    %207 = tpu.matmul %205, %197, %cst_69 {dimension_numbers = #tpu.dot_dimension_numbers<[1], [0], [0], [1], [0, 0, 1, 1], [], []>} : vector<16x32xbf16>, vector<32x32xbf16>, vector<16x32xf32> -> vector<16x32xf32>
    %208 = vector.broadcast %198 : vector<1x32xf32> to vector<16x32xf32>
    %209 = arith.addf %207, %208 : vector<16x32xf32>
    %cst_70 = arith.constant 0.353553385 : f32
    %210 = vector.broadcast %cst_70 : f32 to vector<16x32xf32>
    %211 = arith.mulf %209, %210 : vector<16x32xf32>
    %cst_71 = arith.constant dense<0.000000e+00> : vector<32x32xf32>
    %212 = tpu.matmul %206, %199, %cst_71 {dimension_numbers = #tpu.dot_dimension_numbers<[1], [0], [0], [1], [0, 0, 1, 1], [], []>} : vector<32x32xbf16>, vector<32x32xbf16>, vector<32x32xf32> -> vector<32x32xf32>
    %213 = vector.broadcast %200 : vector<1x32xf32> to vector<32x32xf32>
    %214 = arith.addf %212, %213 : vector<32x32xf32>
    %cst_72 = arith.constant dense<0.000000e+00> : vector<32x32xf32>
    %215 = tpu.matmul %206, %201, %cst_72 {dimension_numbers = #tpu.dot_dimension_numbers<[1], [0], [0], [1], [0, 0, 1, 1], [], []>} : vector<32x32xbf16>, vector<32x32xbf16>, vector<32x32xf32> -> vector<32x32xf32>
    %216 = vector.broadcast %202 : vector<1x32xf32> to vector<32x32xf32>
    %217 = arith.addf %215, %216 : vector<32x32xf32>
    %218 = vector.extract_strided_slice %211 {offsets = [0, 0], sizes = [8, 32], strides = [1, 1]} : vector<16x32xf32> to vector<8x32xf32>
    %219 = vector.extract_strided_slice %218 {offsets = [0, 0], sizes = [8, 8], strides = [1, 1]} : vector<8x32xf32> to vector<8x8xf32>
    %220 = vector.extract_strided_slice %218 {offsets = [0, 8], sizes = [8, 8], strides = [1, 1]} : vector<8x32xf32> to vector<8x8xf32>
    %221 = vector.extract_strided_slice %218 {offsets = [0, 16], sizes = [8, 8], strides = [1, 1]} : vector<8x32xf32> to vector<8x8xf32>
    %222 = vector.extract_strided_slice %218 {offsets = [0, 24], sizes = [8, 8], strides = [1, 1]} : vector<8x32xf32> to vector<8x8xf32>
    %223 = vector.shape_cast %219 : vector<8x8xf32> to vector<1x8x8xf32>
    %224 = vector.shape_cast %220 : vector<8x8xf32> to vector<1x8x8xf32>
    %225 = vector.shape_cast %221 : vector<8x8xf32> to vector<1x8x8xf32>
    %226 = vector.shape_cast %222 : vector<8x8xf32> to vector<1x8x8xf32>
    %227 = tpu.concatenate %223, %224, %225, %226 in 0 : vector<1x8x8xf32>, vector<1x8x8xf32>, vector<1x8x8xf32>, vector<1x8x8xf32> -> vector<4x8x8xf32>
    %228 = vector.extract_strided_slice %214 {offsets = [0, 0], sizes = [16, 32], strides = [1, 1]} : vector<32x32xf32> to vector<16x32xf32>
    %229 = vector.extract_strided_slice %228 {offsets = [0, 0], sizes = [16, 8], strides = [1, 1]} : vector<16x32xf32> to vector<16x8xf32>
    %230 = vector.extract_strided_slice %228 {offsets = [0, 8], sizes = [16, 8], strides = [1, 1]} : vector<16x32xf32> to vector<16x8xf32>
    %231 = vector.extract_strided_slice %228 {offsets = [0, 16], sizes = [16, 8], strides = [1, 1]} : vector<16x32xf32> to vector<16x8xf32>
    %232 = vector.extract_strided_slice %228 {offsets = [0, 24], sizes = [16, 8], strides = [1, 1]} : vector<16x32xf32> to vector<16x8xf32>
    %233 = vector.shape_cast %229 : vector<16x8xf32> to vector<1x16x8xf32>
    %234 = vector.shape_cast %230 : vector<16x8xf32> to vector<1x16x8xf32>
    %235 = vector.shape_cast %231 : vector<16x8xf32> to vector<1x16x8xf32>
    %236 = vector.shape_cast %232 : vector<16x8xf32> to vector<1x16x8xf32>
    %237 = tpu.concatenate %233, %234, %235, %236 in 0 : vector<1x16x8xf32>, vector<1x16x8xf32>, vector<1x16x8xf32>, vector<1x16x8xf32> -> vector<4x16x8xf32>
    %238 = vector.extract_strided_slice %217 {offsets = [0, 0], sizes = [16, 32], strides = [1, 1]} : vector<32x32xf32> to vector<16x32xf32>
    %239 = vector.extract_strided_slice %238 {offsets = [0, 0], sizes = [16, 8], strides = [1, 1]} : vector<16x32xf32> to vector<16x8xf32>
    %240 = vector.extract_strided_slice %238 {offsets = [0, 8], sizes = [16, 8], strides = [1, 1]} : vector<16x32xf32> to vector<16x8xf32>
    %241 = vector.extract_strided_slice %238 {offsets = [0, 16], sizes = [16, 8], strides = [1, 1]} : vector<16x32xf32> to vector<16x8xf32>
    %242 = vector.extract_strided_slice %238 {offsets = [0, 24], sizes = [16, 8], strides = [1, 1]} : vector<16x32xf32> to vector<16x8xf32>
    %243 = vector.shape_cast %239 : vector<16x8xf32> to vector<1x16x8xf32>
    %244 = vector.shape_cast %240 : vector<16x8xf32> to vector<1x16x8xf32>
    %245 = vector.shape_cast %241 : vector<16x8xf32> to vector<1x16x8xf32>
    %246 = vector.shape_cast %242 : vector<16x8xf32> to vector<1x16x8xf32>
    %247 = tpu.concatenate %243, %244, %245, %246 in 0 : vector<1x16x8xf32>, vector<1x16x8xf32>, vector<1x16x8xf32>, vector<1x16x8xf32> -> vector<4x16x8xf32>
    %248 = arith.truncf %227 : vector<4x8x8xf32> to vector<4x8x8xbf16>
    %249 = arith.truncf %237 : vector<4x16x8xf32> to vector<4x16x8xbf16>
    "tpu.trace_start"() <{level = 10 : i32, message = "hqd,hkd->hqk"}> : () -> ()
    %cst_73 = arith.constant dense<0.000000e+00> : vector<4x8x16xf32>
    %250 = tpu.matmul %248, %249, %cst_73 {dimension_numbers = #tpu.dot_dimension_numbers<[2], [2], [1], [1], [0, 0, 0, 1, 1, 1], [0], [0]>} : vector<4x8x8xbf16>, vector<4x16x8xbf16>, vector<4x8x16xf32> -> vector<4x8x16xf32>
    "tpu.trace_stop"() : () -> ()
    %cst_74 = arith.constant dense<0xFF800000> : vector<4x8xf32>
    %251 = vector.multi_reduction <maximumf>, %250, %cst_74 [2] : vector<4x8x16xf32> to vector<4x8xf32>
    %252 = vector.shape_cast %251 : vector<4x8xf32> to vector<4x8x1xf32>
    %253 = vector.broadcast %252 : vector<4x8x1xf32> to vector<4x8x16xf32>
    %254 = arith.subf %250, %253 : vector<4x8x16xf32>
    %255 = math.exp %254 : vector<4x8x16xf32>
    %cst_75 = arith.constant dense<0.000000e+00> : vector<4x8xf32>
    %256 = vector.multi_reduction <add>, %255, %cst_75 [2] : vector<4x8x16xf32> to vector<4x8xf32>
    %257 = vector.shape_cast %256 : vector<4x8xf32> to vector<4x8x1xf32>
    %258 = arith.truncf %255 : vector<4x8x16xf32> to vector<4x8x16xbf16>
    %259 = arith.truncf %247 : vector<4x16x8xf32> to vector<4x16x8xbf16>
    "tpu.trace_start"() <{level = 10 : i32, message = "hqk,hkd->hqd"}> : () -> ()
    %cst_76 = arith.constant dense<0.000000e+00> : vector<4x8x8xf32>
    %260 = tpu.matmul %258, %259, %cst_76 {dimension_numbers = #tpu.dot_dimension_numbers<[2], [1], [1], [2], [0, 0, 0, 1, 1, 2], [0], [0]>} : vector<4x8x16xbf16>, vector<4x16x8xbf16>, vector<4x8x8xf32> -> vector<4x8x8xf32>
    "tpu.trace_stop"() : () -> ()
    %261 = tpu.reciprocal %257 {approx = true} : vector<4x8x1xf32> -> vector<4x8x1xf32>
    %262 = vector.broadcast %261 : vector<4x8x1xf32> to vector<4x8x8xf32>
    %263 = arith.mulf %260, %262 : vector<4x8x8xf32>
    %264 = vector.extract_strided_slice %263 {offsets = [0, 0, 0], sizes = [1, 8, 8], strides = [1, 1, 1]} : vector<4x8x8xf32> to vector<1x8x8xf32>
    %265 = vector.shape_cast %264 : vector<1x8x8xf32> to vector<8x8xf32>
    %266 = vector.extract_strided_slice %263 {offsets = [1, 0, 0], sizes = [1, 8, 8], strides = [1, 1, 1]} : vector<4x8x8xf32> to vector<1x8x8xf32>
    %267 = vector.shape_cast %266 : vector<1x8x8xf32> to vector<8x8xf32>
    %268 = vector.extract_strided_slice %263 {offsets = [2, 0, 0], sizes = [1, 8, 8], strides = [1, 1, 1]} : vector<4x8x8xf32> to vector<1x8x8xf32>
    %269 = vector.shape_cast %268 : vector<1x8x8xf32> to vector<8x8xf32>
    %270 = vector.extract_strided_slice %263 {offsets = [3, 0, 0], sizes = [1, 8, 8], strides = [1, 1, 1]} : vector<4x8x8xf32> to vector<1x8x8xf32>
    %271 = vector.shape_cast %270 : vector<1x8x8xf32> to vector<8x8xf32>
    %272 = tpu.concatenate %265, %267, %269, %271 in 1 : vector<8x8xf32>, vector<8x8xf32>, vector<8x8xf32>, vector<8x8xf32> -> vector<8x32xf32>
    %273 = vector.extract_strided_slice %211 {offsets = [8, 0], sizes = [8, 32], strides = [1, 1]} : vector<16x32xf32> to vector<8x32xf32>
    %274 = vector.extract_strided_slice %273 {offsets = [0, 0], sizes = [8, 8], strides = [1, 1]} : vector<8x32xf32> to vector<8x8xf32>
    %275 = vector.extract_strided_slice %273 {offsets = [0, 8], sizes = [8, 8], strides = [1, 1]} : vector<8x32xf32> to vector<8x8xf32>
    %276 = vector.extract_strided_slice %273 {offsets = [0, 16], sizes = [8, 8], strides = [1, 1]} : vector<8x32xf32> to vector<8x8xf32>
    %277 = vector.extract_strided_slice %273 {offsets = [0, 24], sizes = [8, 8], strides = [1, 1]} : vector<8x32xf32> to vector<8x8xf32>
    %278 = vector.shape_cast %274 : vector<8x8xf32> to vector<1x8x8xf32>
    %279 = vector.shape_cast %275 : vector<8x8xf32> to vector<1x8x8xf32>
    %280 = vector.shape_cast %276 : vector<8x8xf32> to vector<1x8x8xf32>
    %281 = vector.shape_cast %277 : vector<8x8xf32> to vector<1x8x8xf32>
    %282 = tpu.concatenate %278, %279, %280, %281 in 0 : vector<1x8x8xf32>, vector<1x8x8xf32>, vector<1x8x8xf32>, vector<1x8x8xf32> -> vector<4x8x8xf32>
    %283 = vector.extract_strided_slice %214 {offsets = [16, 0], sizes = [16, 32], strides = [1, 1]} : vector<32x32xf32> to vector<16x32xf32>
    %284 = vector.extract_strided_slice %283 {offsets = [0, 0], sizes = [16, 8], strides = [1, 1]} : vector<16x32xf32> to vector<16x8xf32>
    %285 = vector.extract_strided_slice %283 {offsets = [0, 8], sizes = [16, 8], strides = [1, 1]} : vector<16x32xf32> to vector<16x8xf32>
    %286 = vector.extract_strided_slice %283 {offsets = [0, 16], sizes = [16, 8], strides = [1, 1]} : vector<16x32xf32> to vector<16x8xf32>
    %287 = vector.extract_strided_slice %283 {offsets = [0, 24], sizes = [16, 8], strides = [1, 1]} : vector<16x32xf32> to vector<16x8xf32>
    %288 = vector.shape_cast %284 : vector<16x8xf32> to vector<1x16x8xf32>
    %289 = vector.shape_cast %285 : vector<16x8xf32> to vector<1x16x8xf32>
    %290 = vector.shape_cast %286 : vector<16x8xf32> to vector<1x16x8xf32>
    %291 = vector.shape_cast %287 : vector<16x8xf32> to vector<1x16x8xf32>
    %292 = tpu.concatenate %288, %289, %290, %291 in 0 : vector<1x16x8xf32>, vector<1x16x8xf32>, vector<1x16x8xf32>, vector<1x16x8xf32> -> vector<4x16x8xf32>
    %293 = vector.extract_strided_slice %217 {offsets = [16, 0], sizes = [16, 32], strides = [1, 1]} : vector<32x32xf32> to vector<16x32xf32>
    %294 = vector.extract_strided_slice %293 {offsets = [0, 0], sizes = [16, 8], strides = [1, 1]} : vector<16x32xf32> to vector<16x8xf32>
    %295 = vector.extract_strided_slice %293 {offsets = [0, 8], sizes = [16, 8], strides = [1, 1]} : vector<16x32xf32> to vector<16x8xf32>
    %296 = vector.extract_strided_slice %293 {offsets = [0, 16], sizes = [16, 8], strides = [1, 1]} : vector<16x32xf32> to vector<16x8xf32>
    %297 = vector.extract_strided_slice %293 {offsets = [0, 24], sizes = [16, 8], strides = [1, 1]} : vector<16x32xf32> to vector<16x8xf32>
    %298 = vector.shape_cast %294 : vector<16x8xf32> to vector<1x16x8xf32>
    %299 = vector.shape_cast %295 : vector<16x8xf32> to vector<1x16x8xf32>
    %300 = vector.shape_cast %296 : vector<16x8xf32> to vector<1x16x8xf32>
    %301 = vector.shape_cast %297 : vector<16x8xf32> to vector<1x16x8xf32>
    %302 = tpu.concatenate %298, %299, %300, %301 in 0 : vector<1x16x8xf32>, vector<1x16x8xf32>, vector<1x16x8xf32>, vector<1x16x8xf32> -> vector<4x16x8xf32>
    %303 = arith.truncf %282 : vector<4x8x8xf32> to vector<4x8x8xbf16>
    %304 = arith.truncf %292 : vector<4x16x8xf32> to vector<4x16x8xbf16>
    "tpu.trace_start"() <{level = 10 : i32, message = "hqd,hkd->hqk"}> : () -> ()
    %cst_77 = arith.constant dense<0.000000e+00> : vector<4x8x16xf32>
    %305 = tpu.matmul %303, %304, %cst_77 {dimension_numbers = #tpu.dot_dimension_numbers<[2], [2], [1], [1], [0, 0, 0, 1, 1, 1], [0], [0]>} : vector<4x8x8xbf16>, vector<4x16x8xbf16>, vector<4x8x16xf32> -> vector<4x8x16xf32>
    "tpu.trace_stop"() : () -> ()
    %cst_78 = arith.constant dense<0xFF800000> : vector<4x8xf32>
    %306 = vector.multi_reduction <maximumf>, %305, %cst_78 [2] : vector<4x8x16xf32> to vector<4x8xf32>
    %307 = vector.shape_cast %306 : vector<4x8xf32> to vector<4x8x1xf32>
    %308 = vector.broadcast %307 : vector<4x8x1xf32> to vector<4x8x16xf32>
    %309 = arith.subf %305, %308 : vector<4x8x16xf32>
    %310 = math.exp %309 : vector<4x8x16xf32>
    %cst_79 = arith.constant dense<0.000000e+00> : vector<4x8xf32>
    %311 = vector.multi_reduction <add>, %310, %cst_79 [2] : vector<4x8x16xf32> to vector<4x8xf32>
    %312 = vector.shape_cast %311 : vector<4x8xf32> to vector<4x8x1xf32>
    %313 = arith.truncf %310 : vector<4x8x16xf32> to vector<4x8x16xbf16>
    %314 = arith.truncf %302 : vector<4x16x8xf32> to vector<4x16x8xbf16>
    "tpu.trace_start"() <{level = 10 : i32, message = "hqk,hkd->hqd"}> : () -> ()
    %cst_80 = arith.constant dense<0.000000e+00> : vector<4x8x8xf32>
    %315 = tpu.matmul %313, %314, %cst_80 {dimension_numbers = #tpu.dot_dimension_numbers<[2], [1], [1], [2], [0, 0, 0, 1, 1, 2], [0], [0]>} : vector<4x8x16xbf16>, vector<4x16x8xbf16>, vector<4x8x8xf32> -> vector<4x8x8xf32>
    "tpu.trace_stop"() : () -> ()
    %316 = tpu.reciprocal %312 {approx = true} : vector<4x8x1xf32> -> vector<4x8x1xf32>
    %317 = vector.broadcast %316 : vector<4x8x1xf32> to vector<4x8x8xf32>
    %318 = arith.mulf %315, %317 : vector<4x8x8xf32>
    %319 = vector.extract_strided_slice %318 {offsets = [0, 0, 0], sizes = [1, 8, 8], strides = [1, 1, 1]} : vector<4x8x8xf32> to vector<1x8x8xf32>
    %320 = vector.shape_cast %319 : vector<1x8x8xf32> to vector<8x8xf32>
    %321 = vector.extract_strided_slice %318 {offsets = [1, 0, 0], sizes = [1, 8, 8], strides = [1, 1, 1]} : vector<4x8x8xf32> to vector<1x8x8xf32>
    %322 = vector.shape_cast %321 : vector<1x8x8xf32> to vector<8x8xf32>
    %323 = vector.extract_strided_slice %318 {offsets = [2, 0, 0], sizes = [1, 8, 8], strides = [1, 1, 1]} : vector<4x8x8xf32> to vector<1x8x8xf32>
    %324 = vector.shape_cast %323 : vector<1x8x8xf32> to vector<8x8xf32>
    %325 = vector.extract_strided_slice %318 {offsets = [3, 0, 0], sizes = [1, 8, 8], strides = [1, 1, 1]} : vector<4x8x8xf32> to vector<1x8x8xf32>
    %326 = vector.shape_cast %325 : vector<1x8x8xf32> to vector<8x8xf32>
    %327 = tpu.concatenate %320, %322, %324, %326 in 1 : vector<8x8xf32>, vector<8x8xf32>, vector<8x8xf32>, vector<8x8xf32> -> vector<8x32xf32>
    %328 = tpu.concatenate %272, %327 in 0 : vector<8x32xf32>, vector<8x32xf32> -> vector<16x32xf32>
    %329 = arith.truncf %328 : vector<16x32xf32> to vector<16x32xbf16>
    %cst_81 = arith.constant dense<0.000000e+00> : vector<16x32xf32>
    %330 = tpu.matmul %329, %203, %cst_81 {dimension_numbers = #tpu.dot_dimension_numbers<[1], [0], [0], [1], [0, 0, 1, 1], [], []>} : vector<16x32xbf16>, vector<32x32xbf16>, vector<16x32xf32> -> vector<16x32xf32>
    %331 = vector.broadcast %204 : vector<1x32xf32> to vector<16x32xf32>
    %332 = arith.addf %330, %331 : vector<16x32xf32>
    %333 = arith.addf %174, %332 : vector<16x32xf32>
    %c0_82 = arith.constant 0 : index
    %c0_83 = arith.constant 0 : index
    %334 = vector.load %arg23[%c0_82, %c0_83] : memref<1x32xf32, #tpu.memory_space<vmem>>, vector<1x32xf32>
    %c0_84 = arith.constant 0 : index
    %c0_85 = arith.constant 0 : index
    %335 = vector.load %arg24[%c0_84, %c0_85] : memref<1x32xf32, #tpu.memory_space<vmem>>, vector<1x32xf32>
    %cst_86 = arith.constant dense<0.000000e+00> : vector<16xf32>
    %336 = vector.multi_reduction <add>, %333, %cst_86 [1] : vector<16x32xf32> to vector<16xf32>
    %337 = vector.shape_cast %336 : vector<16xf32> to vector<16x1xf32>
    %cst_87 = arith.constant 3.200000e+01 : f32
    %338 = vector.broadcast %cst_87 : f32 to vector<16x1xf32>
    %339 = arith.divf %337, %338 : vector<16x1xf32>
    %340 = vector.broadcast %339 : vector<16x1xf32> to vector<16x32xf32>
    %341 = arith.subf %333, %340 : vector<16x32xf32>
    %342 = arith.mulf %341, %341 : vector<16x32xf32>
    %cst_88 = arith.constant dense<0.000000e+00> : vector<16xf32>
    %343 = vector.multi_reduction <add>, %342, %cst_88 [1] : vector<16x32xf32> to vector<16xf32>
    %344 = vector.shape_cast %343 : vector<16xf32> to vector<16x1xf32>
    %cst_89 = arith.constant 3.200000e+01 : f32
    %345 = vector.broadcast %cst_89 : f32 to vector<16x1xf32>
    %346 = arith.divf %344, %345 : vector<16x1xf32>
    %cst_90 = arith.constant 9.99999974E-6 : f32
    %347 = vector.broadcast %cst_90 : f32 to vector<16x1xf32>
    %348 = arith.addf %346, %347 : vector<16x1xf32>
    %349 = math.rsqrt %348 : vector<16x1xf32>
    %350 = vector.broadcast %349 : vector<16x1xf32> to vector<16x32xf32>
    %351 = arith.mulf %341, %350 : vector<16x32xf32>
    %352 = vector.broadcast %334 : vector<1x32xf32> to vector<16x32xf32>
    %353 = arith.mulf %351, %352 : vector<16x32xf32>
    %354 = vector.broadcast %335 : vector<1x32xf32> to vector<16x32xf32>
    %355 = arith.addf %353, %354 : vector<16x32xf32>
    %356 = arith.truncf %355 : vector<16x32xf32> to vector<16x32xbf16>
    %c0_91 = arith.constant 0 : index
    %c0_92 = arith.constant 0 : index
    %357 = vector.load %arg25[%c0_91, %c0_92] : memref<32x64xbf16, #tpu.memory_space<vmem>>, vector<32x64xbf16>
    %cst_93 = arith.constant dense<0.000000e+00> : vector<16x64xf32>
    %358 = tpu.matmul %356, %357, %cst_93 {dimension_numbers = #tpu.dot_dimension_numbers<[1], [0], [0], [1], [0, 0, 1, 1], [], []>} : vector<16x32xbf16>, vector<32x64xbf16>, vector<16x64xf32> -> vector<16x64xf32>
    %c0_94 = arith.constant 0 : index
    %c0_95 = arith.constant 0 : index
    %359 = vector.load %arg26[%c0_94, %c0_95] : memref<1x64xf32, #tpu.memory_space<vmem>>, vector<1x64xf32>
    %360 = vector.broadcast %359 : vector<1x64xf32> to vector<16x64xf32>
    %361 = arith.addf %358, %360 : vector<16x64xf32>
    %cst_96 = arith.constant 0.000000e+00 : f32
    %362 = vector.broadcast %cst_96 : f32 to vector<16x64xf32>
    %363 = arith.maximumf %361, %362 : vector<16x64xf32>
    %364 = arith.truncf %363 : vector<16x64xf32> to vector<16x64xbf16>
    %c0_97 = arith.constant 0 : index
    %c0_98 = arith.constant 0 : index
    %365 = vector.load %arg27[%c0_97, %c0_98] : memref<64x32xbf16, #tpu.memory_space<vmem>>, vector<64x32xbf16>
    %cst_99 = arith.constant dense<0.000000e+00> : vector<16x32xf32>
    %366 = tpu.matmul %364, %365, %cst_99 {dimension_numbers = #tpu.dot_dimension_numbers<[1], [0], [0], [1], [0, 0, 1, 1], [], []>} : vector<16x64xbf16>, vector<64x32xbf16>, vector<16x32xf32> -> vector<16x32xf32>
    %367 = arith.addf %333, %366 : vector<16x32xf32>
    %c0_100 = arith.constant 0 : index
    %c0_101 = arith.constant 0 : index
    %368 = vector.load %arg28[%c0_100, %c0_101] : memref<1x32xf32, #tpu.memory_space<vmem>>, vector<1x32xf32>
    %369 = vector.broadcast %368 : vector<1x32xf32> to vector<16x32xf32>
    %370 = arith.addf %367, %369 : vector<16x32xf32>
    %371 = vector.shape_cast %370 : vector<16x32xf32> to vector<2x8x32xf32>
    %c0_102 = arith.constant 0 : index
    %c0_103 = arith.constant 0 : index
    %c0_104 = arith.constant 0 : index
    %372 = vector.load %arg29[%c0_102, %c0_103, %c0_104] : memref<2x8x32xf32, #tpu.memory_space<vmem>>, vector<2x8x32xf32>
    tpu.vector_store %arg29[%c0_102, %c0_103, %c0_104], %371 {strides = array<i32>} : memref<2x8x32xf32, #tpu.memory_space<vmem>>, vector<2x8x32xf32>,
    return
  }
  func.func @transform_0(%arg0: i32) -> (i32, i32, i32) {
    %c0_i32 = arith.constant 0 : i32
    %c0_i32_0 = arith.constant 0 : i32
    %c0_i32_1 = arith.constant 0 : i32
    return %arg0, %c0_i32, %c0_i32_0 : i32, i32, i32
  }
  func.func @transform_1(%arg0: i32) -> (i32, i32, i32) {
    %c0_i32 = arith.constant 0 : i32
    %c0_i32_0 = arith.constant 0 : i32
    %c0_i32_1 = arith.constant 0 : i32
    return %arg0, %c0_i32, %c0_i32_0 : i32, i32, i32
  }
  func.func @transform_2(%arg0: i32) -> (i32, i32) {
    %c0_i32 = arith.constant 0 : i32
    %c0_i32_0 = arith.constant 0 : i32
    %c0_i32_1 = arith.constant 0 : i32
    return %c0_i32, %c0_i32_0 : i32, i32
  }
  func.func @transform_3(%arg0: i32) -> (i32, i32) {
    %c0_i32 = arith.constant 0 : i32
    %c0_i32_0 = arith.constant 0 : i32
    %c0_i32_1 = arith.constant 0 : i32
    return %c0_i32, %c0_i32_0 : i32, i32
  }
  func.func @transform_4(%arg0: i32) -> (i32, i32) {
    %c0_i32 = arith.constant 0 : i32
    %c0_i32_0 = arith.constant 0 : i32
    %c0_i32_1 = arith.constant 0 : i32
    return %c0_i32, %c0_i32_0 : i32, i32
  }
  func.func @transform_5(%arg0: i32) -> (i32, i32) {
    %c0_i32 = arith.constant 0 : i32
    %c0_i32_0 = arith.constant 0 : i32
    %c0_i32_1 = arith.constant 0 : i32
    return %c0_i32, %c0_i32_0 : i32, i32
  }
  func.func @transform_6(%arg0: i32) -> (i32, i32) {
    %c0_i32 = arith.constant 0 : i32
    %c0_i32_0 = arith.constant 0 : i32
    %c0_i32_1 = arith.constant 0 : i32
    return %c0_i32, %c0_i32_0 : i32, i32
  }
  func.func @transform_7(%arg0: i32) -> (i32, i32) {
    %c0_i32 = arith.constant 0 : i32
    %c0_i32_0 = arith.constant 0 : i32
    %c0_i32_1 = arith.constant 0 : i32
    return %c0_i32, %c0_i32_0 : i32, i32
  }
  func.func @transform_8(%arg0: i32) -> (i32, i32) {
    %c0_i32 = arith.constant 0 : i32
    %c0_i32_0 = arith.constant 0 : i32
    %c0_i32_1 = arith.constant 0 : i32
    return %c0_i32, %c0_i32_0 : i32, i32
  }
  func.func @transform_9(%arg0: i32) -> (i32, i32) {
    %c0_i32 = arith.constant 0 : i32
    %c0_i32_0 = arith.constant 0 : i32
    %c0_i32_1 = arith.constant 0 : i32
    return %c0_i32, %c0_i32_0 : i32, i32
  }
  func.func @transform_10(%arg0: i32) -> (i32, i32) {
    %c0_i32 = arith.constant 0 : i32
    %c0_i32_0 = arith.constant 0 : i32
    %c0_i32_1 = arith.constant 0 : i32
    return %c0_i32, %c0_i32_0 : i32, i32
  }
  func.func @transform_11(%arg0: i32) -> (i32, i32) {
    %c0_i32 = arith.constant 0 : i32
    %c0_i32_0 = arith.constant 0 : i32
    %c0_i32_1 = arith.constant 0 : i32
    return %c0_i32, %c0_i32_0 : i32, i32
  }
  func.func @transform_12(%arg0: i32) -> (i32, i32) {
    %c0_i32 = arith.constant 0 : i32
    %c0_i32_0 = arith.constant 0 : i32
    %c0_i32_1 = arith.constant 0 : i32
    return %c0_i32, %c0_i32_0 : i32, i32
  }
  func.func @transform_13(%arg0: i32) -> (i32, i32) {
    %c0_i32 = arith.constant 0 : i32
    %c0_i32_0 = arith.constant 0 : i32
    %c0_i32_1 = arith.constant 0 : i32
    return %c0_i32, %c0_i32_0 : i32, i32
  }
  func.func @transform_14(%arg0: i32) -> (i32, i32) {
    %c0_i32 = arith.constant 0 : i32
    %c0_i32_0 = arith.constant 0 : i32
    %c0_i32_1 = arith.constant 0 : i32
    return %c0_i32, %c0_i32_0 : i32, i32
  }
  func.func @transform_15(%arg0: i32) -> (i32, i32) {
    %c0_i32 = arith.constant 0 : i32
    %c0_i32_0 = arith.constant 0 : i32
    %c0_i32_1 = arith.constant 0 : i32
    return %c0_i32, %c0_i32_0 : i32, i32
  }
  func.func @transform_16(%arg0: i32) -> (i32, i32) {
    %c0_i32 = arith.constant 0 : i32
    %c0_i32_0 = arith.constant 0 : i32
    %c0_i32_1 = arith.constant 0 : i32
    return %c0_i32, %c0_i32_0 : i32, i32
  }
  func.func @transform_17(%arg0: i32) -> (i32, i32) {
    %c0_i32 = arith.constant 0 : i32
    %c0_i32_0 = arith.constant 0 : i32
    %c0_i32_1 = arith.constant 0 : i32
    return %c0_i32, %c0_i32_0 : i32, i32
  }
  func.func @transform_18(%arg0: i32) -> (i32, i32) {
    %c0_i32 = arith.constant 0 : i32
    %c0_i32_0 = arith.constant 0 : i32
    %c0_i32_1 = arith.constant 0 : i32
    return %c0_i32, %c0_i32_0 : i32, i32
  }
  func.func @transform_19(%arg0: i32) -> (i32, i32) {
    %c0_i32 = arith.constant 0 : i32
    %c0_i32_0 = arith.constant 0 : i32
    %c0_i32_1 = arith.constant 0 : i32
    return %c0_i32, %c0_i32_0 : i32, i32
  }
  func.func @transform_20(%arg0: i32) -> (i32, i32) {
    %c0_i32 = arith.constant 0 : i32
    %c0_i32_0 = arith.constant 0 : i32
    %c0_i32_1 = arith.constant 0 : i32
    return %c0_i32, %c0_i32_0 : i32, i32
  }
  func.func @transform_21(%arg0: i32) -> (i32, i32) {
    %c0_i32 = arith.constant 0 : i32
    %c0_i32_0 = arith.constant 0 : i32
    %c0_i32_1 = arith.constant 0 : i32
    return %c0_i32, %c0_i32_0 : i32, i32
  }
  func.func @transform_22(%arg0: i32) -> (i32, i32) {
    %c0_i32 = arith.constant 0 : i32
    %c0_i32_0 = arith.constant 0 : i32
    %c0_i32_1 = arith.constant 0 : i32
    return %c0_i32, %c0_i32_0 : i32, i32
  }
  func.func @transform_23(%arg0: i32) -> (i32, i32) {
    %c0_i32 = arith.constant 0 : i32
    %c0_i32_0 = arith.constant 0 : i32
    %c0_i32_1 = arith.constant 0 : i32
    return %c0_i32, %c0_i32_0 : i32, i32
  }
  func.func @transform_24(%arg0: i32) -> (i32, i32) {
    %c0_i32 = arith.constant 0 : i32
    %c0_i32_0 = arith.constant 0 : i32
    %c0_i32_1 = arith.constant 0 : i32
    return %c0_i32, %c0_i32_0 : i32, i32
  }
  func.func @transform_25(%arg0: i32) -> (i32, i32) {
    %c0_i32 = arith.constant 0 : i32
    %c0_i32_0 = arith.constant 0 : i32
    %c0_i32_1 = arith.constant 0 : i32
    return %c0_i32, %c0_i32_0 : i32, i32
  }
  func.func @transform_26(%arg0: i32) -> (i32, i32) {
    %c0_i32 = arith.constant 0 : i32
    %c0_i32_0 = arith.constant 0 : i32
    %c0_i32_1 = arith.constant 0 : i32
    return %c0_i32, %c0_i32_0 : i32, i32
  }
  func.func @transform_27(%arg0: i32) -> (i32, i32) {
    %c0_i32 = arith.constant 0 : i32
    %c0_i32_0 = arith.constant 0 : i32
    %c0_i32_1 = arith.constant 0 : i32
    return %c0_i32, %c0_i32_0 : i32, i32
  }
  func.func @transform_28(%arg0: i32) -> (i32, i32, i32) {
    %c0_i32 = arith.constant 0 : i32
    %c0_i32_0 = arith.constant 0 : i32
    %c0_i32_1 = arith.constant 0 : i32
    return %arg0, %c0_i32, %c0_i32_0 : i32, i32, i32
  }
}

</mosaic_0001>

<llo_original>
// kernel: tpu_custom_call.1
$region0: #{tpu_custom_call.1}
  #allocation0 [shape = 'u32[]', space=smem, size = 0x4, offset = 0x4, fixed_abs, tag = 'smem constant byte address 0x4 - core index']
  #allocation1 [shape = 'u32[144,128]{1,0:T(1,128)}', space=vmem, size = 0x12000, scoped, tag = 'internal scratch']
  %s0 = inlined_call_operand.vmem [shape: f32[2,8,32], index: 0, kind: input, shape index: {}]
  %s1 = inlined_call_operand.vmem [shape: f32[2,16,32], index: 1, kind: input, shape index: {}]
  %s2 = inlined_call_operand.hbm [shape: f32[1,32], index: 2, kind: input, shape index: {}]
  %s3 = inlined_call_operand.hbm [shape: f32[1,32], index: 3, kind: input, shape index: {}]
  %s4 = inlined_call_operand.hbm [shape: bf16[32,32], index: 4, kind: input, shape index: {}]
  %s5 = inlined_call_operand.hbm [shape: f32[1,32], index: 5, kind: input, shape index: {}]
  %s6 = inlined_call_operand.hbm [shape: bf16[32,32], index: 6, kind: input, shape index: {}]
  %s7 = inlined_call_operand.hbm [shape: f32[1,32], index: 7, kind: input, shape index: {}]
  %s8 = inlined_call_operand.hbm [shape: bf16[32,32], index: 8, kind: input, shape index: {}]
  %s9 = inlined_call_operand.hbm [shape: f32[1,32], index: 9, kind: input, shape index: {}]
  %s10 = inlined_call_operand.vmem [shape: bf16[32,32], index: 10, kind: input, shape index: {}]
  %s11 = inlined_call_operand.hbm [shape: f32[1,32], index: 11, kind: input, shape index: {}]
  %s12 = inlined_call_operand.hbm [shape: f32[1,32], index: 12, kind: input, shape index: {}]
  %s13 = inlined_call_operand.hbm [shape: f32[1,32], index: 13, kind: input, shape index: {}]
  %s14 = inlined_call_operand.hbm [shape: bf16[32,32], index: 14, kind: input, shape index: {}]
  %s15 = inlined_call_operand.hbm [shape: f32[1,32], index: 15, kind: input, shape index: {}]
  %s16 = inlined_call_operand.hbm [shape: bf16[32,32], index: 16, kind: input, shape index: {}]
  %s17 = inlined_call_operand.hbm [shape: f32[1,32], index: 17, kind: input, shape index: {}]
  %s18 = inlined_call_operand.vmem [shape: bf16[32,32], index: 18, kind: input, shape index: {}]
  %s19 = inlined_call_operand.vmem [shape: f32[1,32], index: 19, kind: input, shape index: {}]
  %s20 = inlined_call_operand.hbm [shape: bf16[32,32], index: 20, kind: input, shape index: {}]
  %s21 = inlined_call_operand.vmem [shape: f32[1,32], index: 21, kind: input, shape index: {}]
  %s22 = inlined_call_operand.vmem [shape: f32[1,32], index: 22, kind: input, shape index: {}]
  %s23 = inlined_call_operand.vmem [shape: f32[1,32], index: 23, kind: input, shape index: {}]
  %s24 = inlined_call_operand.hbm [shape: bf16[32,64], index: 24, kind: input, shape index: {}]
  %s25 = inlined_call_operand.vmem [shape: f32[1,64], index: 25, kind: input, shape index: {}]
  %s26 = inlined_call_operand.vmem [shape: bf16[64,32], index: 26, kind: input, shape index: {}]
  %s27 = inlined_call_operand.vmem [shape: f32[1,32], index: 27, kind: input, shape index: {}]
  %s28 = inlined_call_operand.hbm [shape: f32[2,8,32], index: 28, kind: output, shape index: {}]
  %s29 = sld [smem:[#allocation0]]
  $region190: #{tpu_custom_call.1} parent=0
    _
  %s31 = ssub.s32 1, %s29
  %s32 = scalar_select 0, %s31, %s29
  $region1: #{tpu_custom_call.1} parent=0
    #allocation2 [shape = 'u8[512]{0}', space=vmem, size = 0x400, scoped, tag = 'input window, operand 2, single buffered']
    #allocation3 [shape = 's32[1]{0}', space=sflag, size = 0x4, scoped, tag = 'scoped memory for tpu_custom_call.1']
    #allocation4 [shape = 's32[1]{0}', space=sflag, size = 0x4, scoped, tag = 'scoped memory for tpu_custom_call.1']
    #allocation5 [shape = 'u8[512]{0}', space=vmem, size = 0x400, scoped, tag = 'input window, operand 3, single buffered']
    #allocation6 [shape = 's32[1]{0}', space=sflag, size = 0x4, scoped, tag = 'scoped memory for tpu_custom_call.1']
    #allocation7 [shape = 'u8[8192]{0}', space=vmem, size = 0x2000, scoped, tag = 'input window, operand 4, single buffered']
    #allocation8 [shape = 'u8[512]{0}', space=vmem, size = 0x400, scoped, tag = 'input window, operand 5, single buffered']
    #allocation9 [shape = 's32[1]{0}', space=sflag, size = 0x4, scoped, tag = 'scoped memory for tpu_custom_call.1']
    #allocation10 [shape = 'u8[8192]{0}', space=vmem, size = 0x2000, scoped, tag = 'input window, operand 6, single buffered']
    #allocation11 [shape = 'u8[512]{0}', space=vmem, size = 0x400, scoped, tag = 'input window, operand 7, single buffered']
    #allocation12 [shape = 's32[1]{0}', space=sflag, size = 0x4, scoped, tag = 'scoped memory for tpu_custom_call.1']
    #allocation13 [shape = 'u8[8192]{0}', space=vmem, size = 0x2000, scoped, tag = 'input window, operand 8, single buffered']
    #allocation14 [shape = 'u8[512]{0}', space=vmem, size = 0x400, scoped, tag = 'input window, operand 9, single buffered']
    #allocation15 [shape = 's32[1]{0}', space=sflag, size = 0x4, scoped, tag = 'scoped memory for tpu_custom_call.1']
    #allocation16 [shape = 'u8[512]{0}', space=vmem, size = 0x400, scoped, tag = 'input window, operand 11, single buffered']
    #allocation17 [shape = 'u8[512]{0}', space=vmem, size = 0x400, scoped, tag = 'input window, operand 12, single buffered']
    #allocation18 [shape = 's32[1]{0}', space=sflag, size = 0x4, scoped, tag = 'scoped memory for tpu_custom_call.1']
    #allocation19 [shape = 'u8[512]{0}', space=vmem, size = 0x400, scoped, tag = 'input window, operand 13, single buffered']
    #allocation20 [shape = 'u8[8192]{0}', space=vmem, size = 0x2000, scoped, tag = 'input window, operand 14, single buffered']
    #allocation21 [shape = 's32[1]{0}', space=sflag, size = 0x4, scoped, tag = 'scoped memory for tpu_custom_call.1']
    #allocation22 [shape = 'u8[512]{0}', space=vmem, size = 0x400, scoped, tag = 'input window, operand 15, single buffered']
    #allocation23 [shape = 'u8[8192]{0}', space=vmem, size = 0x2000, scoped, tag = 'input window, operand 16, single buffered']
    #allocation24 [shape = 's32[1]{0}', space=sflag, size = 0x4, scoped, tag = 'scoped memory for tpu_custom_call.1']
    #allocation25 [shape = 'u8[512]{0}', space=vmem, size = 0x400, scoped, tag = 'input window, operand 17, single buffered']
    #allocation26 [shape = 'u8[8192]{0}', space=vmem, size = 0x2000, scoped, tag = 'input window, operand 20, single buffered']
    #allocation27 [shape = 's32[1]{0}', space=sflag, size = 0x4, scoped, tag = 'scoped memory for tpu_custom_call.1']
    #allocation28 [shape = 'u8[8192]{0}', space=vmem, size = 0x2000, scoped, tag = 'input window, operand 24, single buffered']
    #allocation29 [shape = 'u8[8192]{0}', space=vmem, size = 0x2000, scoped, tag = 'output window, operand 0, single buffered']
    %33 = vsyncpa [#allocation3], 0
    %34 = vsyncpa [#allocation6], 0
    %35 = vsyncpa [#allocation9], 0
    %36 = vsyncpa [#allocation12], 0
    %37 = vsyncpa [#allocation15], 0
    %38 = vsyncpa [#allocation18], 0
    %39 = vsyncpa [#allocation21], 0
    %40 = vsyncpa [#allocation24], 0
    %41 = vsyncpa [#allocation27], 0
    %42 = vsyncpa [#allocation4], 0
    // Predicated region
    $region2: #{tpu_custom_call.1} parent=1 // pred_check
      _
    $region3: #{tpu_custom_call.1} parent=1 // pred_check_branch
      %44 = sbr.rel (0) target = $region5
    $region4: #{tpu_custom_call.1} parent=1 // pred_region
      _
    $region5: #{tpu_custom_call.1} parent=1 // pred_fallthru
      _
    // Predicated region
    $region6: #{tpu_custom_call.1} parent=1 // pred_check
      _
    $region7: #{tpu_custom_call.1} parent=1 // pred_check_branch
      %46 = sbr.rel (0) target = $region9
    $region8: #{tpu_custom_call.1} parent=1 // pred_region
      _
    $region9: #{tpu_custom_call.1} parent=1 // pred_fallthru
      _
    // Predicated region
    $region10: #{tpu_custom_call.1} parent=1 // pred_check
      _
    $region11: #{tpu_custom_call.1} parent=1 // pred_check_branch
      %48 = sbr.rel (0) target = $region13
    $region12: #{tpu_custom_call.1} parent=1 // pred_region
      %s50 = ssub.s32 16, 16
      %51 = vsyncadd [#allocation3], %s50
      %s53 = sshll.u32 [#allocation2], 4
      %s54 = int_to_ptr.vmem [resolvable:$true] %s53
      %56 = dma.hbm_to_vmem [thread:$0]  %s2, 16, %s54, [#allocation3]
    $region13: #{tpu_custom_call.1} parent=1 // pred_fallthru
      _
    // Predicated region
    $region14: #{tpu_custom_call.1} parent=1 // pred_check
      _
    $region15: #{tpu_custom_call.1} parent=1 // pred_check_branch
      %58 = sbr.rel (0) target = $region17
    $region16: #{tpu_custom_call.1} parent=1 // pred_region
      %s60 = ssub.s32 16, 16
      %61 = vsyncadd [#allocation6], %s60
      %s63 = sshll.u32 [#allocation5], 4
      %s64 = int_to_ptr.vmem [resolvable:$true] %s63
      %66 = dma.hbm_to_vmem [thread:$0]  %s3, 16, %s64, [#allocation6]
    $region17: #{tpu_custom_call.1} parent=1 // pred_fallthru
      _
    // Predicated region
    $region18: #{tpu_custom_call.1} parent=1 // pred_check
      _
    $region19: #{tpu_custom_call.1} parent=1 // pred_check_branch
      %68 = sbr.rel (0) target = $region21
    $region20: #{tpu_custom_call.1} parent=1 // pred_region
      %s70 = ssub.s32 256, 256
      %71 = vsyncadd [#allocation6], %s70
      %s72 = sshll.u32 [#allocation7], 4
      %s73 = int_to_ptr.vmem [resolvable:$true] %s72
      %78 = dma.hbm_to_vmem [thread:$0]  %s4, 256, %s73, [#allocation6], 64, 64, 4
    $region21: #{tpu_custom_call.1} parent=1 // pred_fallthru
      _
    // Predicated region
    $region22: #{tpu_custom_call.1} parent=1 // pred_check
      _
    $region23: #{tpu_custom_call.1} parent=1 // pred_check_branch
      %80 = sbr.rel (0) target = $region25
    $region24: #{tpu_custom_call.1} parent=1 // pred_region
      %s82 = ssub.s32 16, 16
      %83 = vsyncadd [#allocation9], %s82
      %s85 = sshll.u32 [#allocation8], 4
      %s86 = int_to_ptr.vmem [resolvable:$true] %s85
      %88 = dma.hbm_to_vmem [thread:$0]  %s5, 16, %s86, [#allocation9]
    $region25: #{tpu_custom_call.1} parent=1 // pred_fallthru
      _
    // Predicated region
    $region26: #{tpu_custom_call.1} parent=1 // pred_check
      _
    $region27: #{tpu_custom_call.1} parent=1 // pred_check_branch
      %90 = sbr.rel (0) target = $region29
    $region28: #{tpu_custom_call.1} parent=1 // pred_region
      %s92 = ssub.s32 256, 256
      %93 = vsyncadd [#allocation9], %s92
      %s94 = sshll.u32 [#allocation10], 4
      %s95 = int_to_ptr.vmem [resolvable:$true] %s94
      %100 = dma.hbm_to_vmem [thread:$0]  %s6, 256, %s95, [#allocation9], 64, 64, 4
    $region29: #{tpu_custom_call.1} parent=1 // pred_fallthru
      _
    // Predicated region
    $region30: #{tpu_custom_call.1} parent=1 // pred_check
      _
    $region31: #{tpu_custom_call.1} parent=1 // pred_check_branch
      %102 = sbr.rel (0) target = $region33
    $region32: #{tpu_custom_call.1} parent=1 // pred_region
      %s104 = ssub.s32 16, 16
      %105 = vsyncadd [#allocation12], %s104
      %s107 = sshll.u32 [#allocation11], 4
      %s108 = int_to_ptr.vmem [resolvable:$true] %s107
      %110 = dma.hbm_to_vmem [thread:$0]  %s7, 16, %s108, [#allocation12]
    $region33: #{tpu_custom_call.1} parent=1 // pred_fallthru
      _
    // Predicated region
    $region34: #{tpu_custom_call.1} parent=1 // pred_check
      _
    $region35: #{tpu_custom_call.1} parent=1 // pred_check_branch
      %112 = sbr.rel (0) target = $region37
    $region36: #{tpu_custom_call.1} parent=1 // pred_region
      %s114 = ssub.s32 256, 256
      %115 = vsyncadd [#allocation12], %s114
      %s116 = sshll.u32 [#allocation13], 4
      %s117 = int_to_ptr.vmem [resolvable:$true] %s116
      %122 = dma.hbm_to_vmem [thread:$0]  %s8, 256, %s117, [#allocation12], 64, 64, 4
    $region37: #{tpu_custom_call.1} parent=1 // pred_fallthru
      _
    // Predicated region
    $region38: #{tpu_custom_call.1} parent=1 // pred_check
      _
    $region39: #{tpu_custom_call.1} parent=1 // pred_check_branch
      %124 = sbr.rel (0) target = $region41
    $region40: #{tpu_custom_call.1} parent=1 // pred_region
      %s126 = ssub.s32 16, 16
      %127 = vsyncadd [#allocation15], %s126
      %s129 = sshll.u32 [#allocation14], 4
      %s130 = int_to_ptr.vmem [resolvable:$true] %s129
      %132 = dma.hbm_to_vmem [thread:$0]  %s9, 16, %s130, [#allocation15]
    $region41: #{tpu_custom_call.1} parent=1 // pred_fallthru
      _
    // Predicated region
    $region42: #{tpu_custom_call.1} parent=1 // pred_check
      _
    $region43: #{tpu_custom_call.1} parent=1 // pred_check_branch
      %134 = sbr.rel (0) target = $region45
    $region44: #{tpu_custom_call.1} parent=1 // pred_region
      _
    $region45: #{tpu_custom_call.1} parent=1 // pred_fallthru
      _
    // Predicated region
    $region46: #{tpu_custom_call.1} parent=1 // pred_check
      _
    $region47: #{tpu_custom_call.1} parent=1 // pred_check_branch
      %136 = sbr.rel (0) target = $region49
    $region48: #{tpu_custom_call.1} parent=1 // pred_region
      %s138 = ssub.s32 16, 16
      %139 = vsyncadd [#allocation15], %s138
      %s141 = sshll.u32 [#allocation16], 4
      %s142 = int_to_ptr.vmem [resolvable:$true] %s141
      %144 = dma.hbm_to_vmem [thread:$0]  %s11, 16, %s142, [#allocation15]
    $region49: #{tpu_custom_call.1} parent=1 // pred_fallthru
      _
    // Predicated region
    $region50: #{tpu_custom_call.1} parent=1 // pred_check
      _
    $region51: #{tpu_custom_call.1} parent=1 // pred_check_branch
      %146 = sbr.rel (0) target = $region53
    $region52: #{tpu_custom_call.1} parent=1 // pred_region
      %s148 = ssub.s32 16, 16
      %149 = vsyncadd [#allocation18], %s148
      %s151 = sshll.u32 [#allocation17], 4
      %s152 = int_to_ptr.vmem [resolvable:$true] %s151
      %154 = dma.hbm_to_vmem [thread:$0]  %s12, 16, %s152, [#allocation18]
    $region53: #{tpu_custom_call.1} parent=1 // pred_fallthru
      _
    // Predicated region
    $region54: #{tpu_custom_call.1} parent=1 // pred_check
      _
    $region55: #{tpu_custom_call.1} parent=1 // pred_check_branch
      %156 = sbr.rel (0) target = $region57
    $region56: #{tpu_custom_call.1} parent=1 // pred_region
      %s158 = ssub.s32 16, 16
      %159 = vsyncadd [#allocation18], %s158
      %s161 = sshll.u32 [#allocation19], 4
      %s162 = int_to_ptr.vmem [resolvable:$true] %s161
      %164 = dma.hbm_to_vmem [thread:$0]  %s13, 16, %s162, [#allocation18]
    $region57: #{tpu_custom_call.1} parent=1 // pred_fallthru
      _
    // Predicated region
    $region58: #{tpu_custom_call.1} parent=1 // pred_check
      _
    $region59: #{tpu_custom_call.1} parent=1 // pred_check_branch
      %166 = sbr.rel (0) target = $region61
    $region60: #{tpu_custom_call.1} parent=1 // pred_region
      %s168 = ssub.s32 256, 256
      %169 = vsyncadd [#allocation21], %s168
      %s170 = sshll.u32 [#allocation20], 4
      %s171 = int_to_ptr.vmem [resolvable:$true] %s170
      %176 = dma.hbm_to_vmem [thread:$0]  %s14, 256, %s171, [#allocation21], 64, 64, 4
    $region61: #{tpu_custom_call.1} parent=1 // pred_fallthru
      _
    // Predicated region
    $region62: #{tpu_custom_call.1} parent=1 // pred_check
      _
    $region63: #{tpu_custom_call.1} parent=1 // pred_check_branch
      %178 = sbr.rel (0) target = $region65
    $region64: #{tpu_custom_call.1} parent=1 // pred_region
      %s180 = ssub.s32 16, 16
      %181 = vsyncadd [#allocation21], %s180
      %s183 = sshll.u32 [#allocation22], 4
      %s184 = int_to_ptr.vmem [resolvable:$true] %s183
      %186 = dma.hbm_to_vmem [thread:$0]  %s15, 16, %s184, [#allocation21]
    $region65: #{tpu_custom_call.1} parent=1 // pred_fallthru
      _
    // Predicated region
    $region66: #{tpu_custom_call.1} parent=1 // pred_check
      _
    $region67: #{tpu_custom_call.1} parent=1 // pred_check_branch
      %188 = sbr.rel (0) target = $region69
    $region68: #{tpu_custom_call.1} parent=1 // pred_region
      %s190 = ssub.s32 256, 256
      %191 = vsyncadd [#allocation24], %s190
      %s192 = sshll.u32 [#allocation23], 4
      %s193 = int_to_ptr.vmem [resolvable:$true] %s192
      %198 = dma.hbm_to_vmem [thread:$0]  %s16, 256, %s193, [#allocation24], 64, 64, 4
    $region69: #{tpu_custom_call.1} parent=1 // pred_fallthru
      _
    // Predicated region
    $region70: #{tpu_custom_call.1} parent=1 // pred_check
      _
    $region71: #{tpu_custom_call.1} parent=1 // pred_check_branch
      %200 = sbr.rel (0) target = $region73
    $region72: #{tpu_custom_call.1} parent=1 // pred_region
      %s202 = ssub.s32 16, 16
      %203 = vsyncadd [#allocation24], %s202
      %s205 = sshll.u32 [#allocation25], 4
      %s206 = int_to_ptr.vmem [resolvable:$true] %s205
      %208 = dma.hbm_to_vmem [thread:$0]  %s17, 16, %s206, [#allocation24]
    $region73: #{tpu_custom_call.1} parent=1 // pred_fallthru
      _
    // Predicated region
    $region74: #{tpu_custom_call.1} parent=1 // pred_check
      _
    $region75: #{tpu_custom_call.1} parent=1 // pred_check_branch
      %210 = sbr.rel (0) target = $region77
    $region76: #{tpu_custom_call.1} parent=1 // pred_region
      _
    $region77: #{tpu_custom_call.1} parent=1 // pred_fallthru
      _
    // Predicated region
    $region78: #{tpu_custom_call.1} parent=1 // pred_check
      _
    $region79: #{tpu_custom_call.1} parent=1 // pred_check_branch
      %212 = sbr.rel (0) target = $region81
    $region80: #{tpu_custom_call.1} parent=1 // pred_region
      _
    $region81: #{tpu_custom_call.1} parent=1 // pred_fallthru
      _
    // Predicated region
    $region82: #{tpu_custom_call.1} parent=1 // pred_check
      _
    $region83: #{tpu_custom_call.1} parent=1 // pred_check_branch
      %214 = sbr.rel (0) target = $region85
    $region84: #{tpu_custom_call.1} parent=1 // pred_region
      %s216 = ssub.s32 256, 256
      %217 = vsyncadd [#allocation27], %s216
      %s218 = sshll.u32 [#allocation26], 4
      %s219 = int_to_ptr.vmem [resolvable:$true] %s218
      %224 = dma.hbm_to_vmem [thread:$0]  %s20, 256, %s219, [#allocation27], 64, 64, 4
    $region85: #{tpu_custom_call.1} parent=1 // pred_fallthru
      _
    // Predicated region
    $region86: #{tpu_custom_call.1} parent=1 // pred_check
      _
    $region87: #{tpu_custom_call.1} parent=1 // pred_check_branch
      %226 = sbr.rel (0) target = $region89
    $region88: #{tpu_custom_call.1} parent=1 // pred_region
      _
    $region89: #{tpu_custom_call.1} parent=1 // pred_fallthru
      _
    // Predicated region
    $region90: #{tpu_custom_call.1} parent=1 // pred_check
      _
    $region91: #{tpu_custom_call.1} parent=1 // pred_check_branch
      %228 = sbr.rel (0) target = $region93
    $region92: #{tpu_custom_call.1} parent=1 // pred_region
      _
    $region93: #{tpu_custom_call.1} parent=1 // pred_fallthru
      _
    // Predicated region
    $region94: #{tpu_custom_call.1} parent=1 // pred_check
      _
    $region95: #{tpu_custom_call.1} parent=1 // pred_check_branch
      %230 = sbr.rel (0) target = $region97
    $region96: #{tpu_custom_call.1} parent=1 // pred_region
      _
    $region97: #{tpu_custom_call.1} parent=1 // pred_fallthru
      _
    // Predicated region
    $region98: #{tpu_custom_call.1} parent=1 // pred_check
      _
    $region99: #{tpu_custom_call.1} parent=1 // pred_check_branch
      %232 = sbr.rel (0) target = $region101
    $region100: #{tpu_custom_call.1} parent=1 // pred_region
      %s234 = ssub.s32 256, 256
      %235 = vsyncadd [#allocation27], %s234
      %s236 = sshll.u32 [#allocation28], 4
      %s237 = int_to_ptr.vmem [resolvable:$true] %s236
      %242 = dma.hbm_to_vmem [thread:$0]  %s24, 256, %s237, [#allocation27], 64, 64, 4
    $region101: #{tpu_custom_call.1} parent=1 // pred_fallthru
      _
    // Predicated region
    $region102: #{tpu_custom_call.1} parent=1 // pred_check
      _
    $region103: #{tpu_custom_call.1} parent=1 // pred_check_branch
      %244 = sbr.rel (0) target = $region105
    $region104: #{tpu_custom_call.1} parent=1 // pred_region
      _
    $region105: #{tpu_custom_call.1} parent=1 // pred_fallthru
      _
    // Predicated region
    $region106: #{tpu_custom_call.1} parent=1 // pred_check
      _
    $region107: #{tpu_custom_call.1} parent=1 // pred_check_branch
      %246 = sbr.rel (0) target = $region109
    $region108: #{tpu_custom_call.1} parent=1 // pred_region
      _
    $region109: #{tpu_custom_call.1} parent=1 // pred_fallthru
      _
    // Predicated region
    $region110: #{tpu_custom_call.1} parent=1 // pred_check
      _
    $region111: #{tpu_custom_call.1} parent=1 // pred_check_branch
      %248 = sbr.rel (0) target = $region113
    $region112: #{tpu_custom_call.1} parent=1 // pred_region
      _
    $region113: #{tpu_custom_call.1} parent=1 // pred_fallthru
      _
    // Predicated region
    $region114: #{tpu_custom_call.1} parent=1 // pred_check
      _
    $region115: #{tpu_custom_call.1} parent=1 // pred_check_branch
      %250 = sbr.rel (0) target = $region117
    $region116: #{tpu_custom_call.1} parent=1 // pred_region
      %251 = dma.done [#allocation3], 16
    $region117: #{tpu_custom_call.1} parent=1 // pred_fallthru
      _
    // Predicated region
    $region118: #{tpu_custom_call.1} parent=1 // pred_check
      _
    $region119: #{tpu_custom_call.1} parent=1 // pred_check_branch
      %253 = sbr.rel (0) target = $region121
    $region120: #{tpu_custom_call.1} parent=1 // pred_region
      %254 = dma.done [#allocation6], 16
    $region121: #{tpu_custom_call.1} parent=1 // pred_fallthru
      _
    // Predicated region
    $region122: #{tpu_custom_call.1} parent=1 // pred_check
      _
    $region123: #{tpu_custom_call.1} parent=1 // pred_check_branch
      %256 = sbr.rel (0) target = $region125
    $region124: #{tpu_custom_call.1} parent=1 // pred_region
      %257 = dma.done [#allocation6], 256
    $region125: #{tpu_custom_call.1} parent=1 // pred_fallthru
      _
    // Predicated region
    $region126: #{tpu_custom_call.1} parent=1 // pred_check
      _
    $region127: #{tpu_custom_call.1} parent=1 // pred_check_branch
      %259 = sbr.rel (0) target = $region129
    $region128: #{tpu_custom_call.1} parent=1 // pred_region
      %260 = dma.done [#allocation9], 16
    $region129: #{tpu_custom_call.1} parent=1 // pred_fallthru
      _
    // Predicated region
    $region130: #{tpu_custom_call.1} parent=1 // pred_check
      _
    $region131: #{tpu_custom_call.1} parent=1 // pred_check_branch
      %262 = sbr.rel (0) target = $region133
    $region132: #{tpu_custom_call.1} parent=1 // pred_region
      %263 = dma.done [#allocation9], 256
    $region133: #{tpu_custom_call.1} parent=1 // pred_fallthru
      _
    // Predicated region
    $region134: #{tpu_custom_call.1} parent=1 // pred_check
      _
    $region135: #{tpu_custom_call.1} parent=1 // pred_check_branch
      %265 = sbr.rel (0) target = $region137
    $region136: #{tpu_custom_call.1} parent=1 // pred_region
      %266 = dma.done [#allocation12], 16
    $region137: #{tpu_custom_call.1} parent=1 // pred_fallthru
      _
    // Predicated region
    $region138: #{tpu_custom_call.1} parent=1 // pred_check
      _
    $region139: #{tpu_custom_call.1} parent=1 // pred_check_branch
      %268 = sbr.rel (0) target = $region141
    $region140: #{tpu_custom_call.1} parent=1 // pred_region
      %269 = dma.done [#allocation12], 256
    $region141: #{tpu_custom_call.1} parent=1 // pred_fallthru
      _
    // Predicated region
    $region142: #{tpu_custom_call.1} parent=1 // pred_check
      _
    $region143: #{tpu_custom_call.1} parent=1 // pred_check_branch
      %271 = sbr.rel (0) target = $region145
    $region144: #{tpu_custom_call.1} parent=1 // pred_region
      %272 = dma.done [#allocation15], 16
    $region145: #{tpu_custom_call.1} parent=1 // pred_fallthru
      _
    // Predicated region
    $region146: #{tpu_custom_call.1} parent=1 // pred_check
      _
    $region147: #{tpu_custom_call.1} parent=1 // pred_check_branch
      %274 = sbr.rel (0) target = $region149
    $region148: #{tpu_custom_call.1} parent=1 // pred_region
      %275 = dma.done [#allocation15], 16
    $region149: #{tpu_custom_call.1} parent=1 // pred_fallthru
      _
    // Predicated region
    $region150: #{tpu_custom_call.1} parent=1 // pred_check
      _
    $region151: #{tpu_custom_call.1} parent=1 // pred_check_branch
      %277 = sbr.rel (0) target = $region153
    $region152: #{tpu_custom_call.1} parent=1 // pred_region
      %278 = dma.done [#allocation18], 16
    $region153: #{tpu_custom_call.1} parent=1 // pred_fallthru
      _
    // Predicated region
    $region154: #{tpu_custom_call.1} parent=1 // pred_check
      _
    $region155: #{tpu_custom_call.1} parent=1 // pred_check_branch
      %280 = sbr.rel (0) target = $region157
    $region156: #{tpu_custom_call.1} parent=1 // pred_region
      %281 = dma.done [#allocation18], 16
    $region157: #{tpu_custom_call.1} parent=1 // pred_fallthru
      _
    // Predicated region
    $region158: #{tpu_custom_call.1} parent=1 // pred_check
      _
    $region159: #{tpu_custom_call.1} parent=1 // pred_check_branch
      %283 = sbr.rel (0) target = $region161
    $region160: #{tpu_custom_call.1} parent=1 // pred_region
      %284 = dma.done [#allocation21], 256
    $region161: #{tpu_custom_call.1} parent=1 // pred_fallthru
      _
    // Predicated region
    $region162: #{tpu_custom_call.1} parent=1 // pred_check
      _
    $region163: #{tpu_custom_call.1} parent=1 // pred_check_branch
      %286 = sbr.rel (0) target = $region165
    $region164: #{tpu_custom_call.1} parent=1 // pred_region
      %287 = dma.done [#allocation21], 16
    $region165: #{tpu_custom_call.1} parent=1 // pred_fallthru
      _
    // Predicated region
    $region166: #{tpu_custom_call.1} parent=1 // pred_check
      _
    $region167: #{tpu_custom_call.1} parent=1 // pred_check_branch
      %289 = sbr.rel (0) target = $region169
    $region168: #{tpu_custom_call.1} parent=1 // pred_region
      %290 = dma.done [#allocation24], 256
    $region169: #{tpu_custom_call.1} parent=1 // pred_fallthru
      _
    // Predicated region
    $region170: #{tpu_custom_call.1} parent=1 // pred_check
      _
    $region171: #{tpu_custom_call.1} parent=1 // pred_check_branch
      %292 = sbr.rel (0) target = $region173
    $region172: #{tpu_custom_call.1} parent=1 // pred_region
      %293 = dma.done [#allocation24], 16
    $region173: #{tpu_custom_call.1} parent=1 // pred_fallthru
      _
    // Predicated region
    $region174: #{tpu_custom_call.1} parent=1 // pred_check
      _
    $region175: #{tpu_custom_call.1} parent=1 // pred_check_branch
      %295 = sbr.rel (0) target = $region177
    $region176: #{tpu_custom_call.1} parent=1 // pred_region
      %296 = dma.done [#allocation27], 256
    $region177: #{tpu_custom_call.1} parent=1 // pred_fallthru
      _
    // Predicated region
    $region178: #{tpu_custom_call.1} parent=1 // pred_check
      _
    $region179: #{tpu_custom_call.1} parent=1 // pred_check_branch
      %298 = sbr.rel (0) target = $region181
    $region180: #{tpu_custom_call.1} parent=1 // pred_region
      %299 = dma.done [#allocation27], 256
    $region181: #{tpu_custom_call.1} parent=1 // pred_fallthru
      _
    %v301 = vld [vmem:[%s0] sm:$0xff]
    %v302 = vld [vmem:[%s0 + $0x8] sm:$0xff]
    %v303 = vld [vmem:[%s1] sm:$0xff]
    %v304 = vld [vmem:[%s1 + $0x8] sm:$0xff]
    %v305 = vld [vmem:[%s1 + $0x10] sm:$0xff]
    %v306 = vld [vmem:[%s1 + $0x18] sm:$0xff]
    %v307 = vld [vmem:[#allocation2] sm:$0x1]
    %v308 = vld [vmem:[#allocation5] sm:$0x1]
    %vm309 = vcmask 261120
    %v310 = vsel %vm309, %v301, 0.0
    %311 = vadd.xlane.f32.xlu0 %v310
    %v312 = vpop.xlane.xlu0 %311
    %v313 = vsel %vm309, %v302, 0.0
    %314 = vadd.xlane.f32.xlu0 %v313
    %v315 = vpop.xlane.xlu0 %314
    %v316 = vrcp.pop 32.0
    %v317 = vmul.f32 %v312, %v316
    %v318 = vmul.f32 %v315, %v316
    %v319 = vsub.f32 %v301, %v317
    %v320 = vsub.f32 %v302, %v318
    %v321 = vmul.f32 %v319, %v319
    %v322 = vmul.f32 %v320, %v320
    %v323 = vsel %vm309, %v321, 0.0
    %324 = vadd.xlane.f32.xlu0 %v323
    %v325 = vpop.xlane.xlu0 %324
    %v326 = vsel %vm309, %v322, 0.0
    %327 = vadd.xlane.f32.xlu0 %v326
    %v328 = vpop.xlane.xlu0 %327
    %v329 = vmul.f32 %v325, %v316
    %v330 = vmul.f32 %v328, %v316
    %v331 = vadd.f32 %v329, 1e-05
    %v332 = vadd.f32 %v330, 1e-05
    %v333 = vrsqrt.pop %v331
    %v334 = vrsqrt.pop %v332
    %v335 = vmul.f32 %v319, %v333
    %v336 = vmul.f32 %v320, %v334
    %v338 = vlaneseq
    %v339 = vshrl.u32 %v338, 7
    %v340 = vsub.s32 0, %v339
    %v341 = vrot.slane %v307, %v340
    %v343 = vmul.f32 %v335, %v341
    %v344 = vmul.f32 %v336, %v341
    %v346 = vlaneseq
    %v347 = vshrl.u32 %v346, 7
    %v348 = vsub.s32 0, %v347
    %v349 = vrot.slane %v308, %v348
    %v351 = vadd.f32 %v343, %v349
    %v352 = vadd.f32 %v344, %v349
    %v353 = vld [vmem:[#allocation7] sm:$0xf]
    %v354 = vld [vmem:[#allocation7 + $0x4] sm:$0xf]
    %v355 = vld [vmem:[#allocation7 + $0x8] sm:$0xf]
    %v356 = vld [vmem:[#allocation7 + $0xc] sm:$0xf]
    %v357 = vld [vmem:[#allocation8] sm:$0x1]
    %v358 = vld [vmem:[#allocation10] sm:$0xf]
    %v359 = vld [vmem:[#allocation10 + $0x4] sm:$0xf]
    %v360 = vld [vmem:[#allocation10 + $0x8] sm:$0xf]
    %v361 = vld [vmem:[#allocation10 + $0xc] sm:$0xf]
    %v362 = vld [vmem:[#allocation11] sm:$0x1]
    %v363 = vld [vmem:[#allocation13] sm:$0xf]
    %v364 = vld [vmem:[#allocation13 + $0x4] sm:$0xf]
    %v365 = vld [vmem:[#allocation13 + $0x8] sm:$0xf]
    %v366 = vld [vmem:[#allocation13 + $0xc] sm:$0xf]
    %v367 = vld [vmem:[#allocation14] sm:$0x1]
    %v368 = vld [vmem:[%s10] sm:$0xf]
    %v369 = vld [vmem:[%s10 + $0x4] sm:$0xf]
    %v370 = vld [vmem:[%s10 + $0x8] sm:$0xf]
    %v371 = vld [vmem:[%s10 + $0xc] sm:$0xf]
    %v372 = vld [vmem:[#allocation16] sm:$0x1]
    %v373 = vpack.c.bf16 %v352, %v351
    %v375 = vlaneseq
    %v376 = vshrl.u32 %v375, 7
    %v377 = vsub.s32 0, %v376
    %v378 = vrot.slane %v357, %v377
    %v384 = vunpack.c.l.b16 %v353
    %v385 = vunpack.c.l.b16 %v354
    %v386 = vunpack.c.l.b16 %v355
    %v387 = vunpack.c.l.b16 %v356
    %v388 = vpack.c.b16 %v385, %v384
    %v389 = vpack.c.b16 %v387, %v386
    %v393 = vsel %vm309, %v373, 0
    %395 = vmatprep.subr.bf16.mxu0 0
    %396 = vmatpush1.bf16.msra.mxu0 0
    %397 = vmatprep.subr.bf16.mxu0 0
    %398 = vmatpush1.bf16.msra.mxu0 0
    %399 = vmatprep.subr.bf16.mxu0 0
    %400 = vmatpush1.bf16.msra.mxu0 0
    %401 = vmatprep.subr.bf16.mxu0 0
    %402 = vmatpush1.bf16.msra.mxu0 0
    %403 = vmatprep.subr.bf16.mxu0 0
    %404 = vmatpush1.bf16.msra.mxu0 0
    %405 = vmatprep.subr.bf16.mxu0 0
    %406 = vmatpush1.bf16.msra.mxu0 0
    %407 = vmatprep.subr.bf16.mxu0 0
    %408 = vmatpush1.bf16.msra.mxu0 %v389
    %409 = vmatprep.subr.bf16.mxu0 0
    %410 = vmatpush1.bf16.msra.mxu0 %v388
    %411 = vmatprep.subr.bf16.mxu0 0
    %412 = vmatpush2.bf16.msra.mxu0 0
    %413 = vmatprep.subr.bf16.mxu0 0
    %414 = vmatpush2.bf16.msra.mxu0 0
    %415 = vmatprep.subr.bf16.mxu0 0
    %416 = vmatpush2.bf16.msra.mxu0 0
    %417 = vmatprep.subr.bf16.mxu0 0
    %418 = vmatpush2.bf16.msra.mxu0 0
    %419 = vmatprep.subr.bf16.mxu0 0
    %420 = vmatpush2.bf16.msra.mxu0 0
    %421 = vmatprep.subr.bf16.mxu0 0
    %422 = vmatpush2.bf16.msra.mxu0 0
    %423 = vmatprep.subr.bf16.mxu0 0
    %424 = vmatpush2.bf16.msra.mxu0 0
    %425 = vmatprep.subr.bf16.mxu0 0
    %426 = vmatpush2.bf16.msra.mxu0 0
    %427 = vmatprep.mubr.bf16.mxu0 0
    %428 = vmatmul.mubr.bf16.gmra.mxu0 %v393
    %v429 = vpop.f32.mrf.mxu0
    %v430 = vadd.f32 %v378, %v429
    %v431 = vpop.f32.mrf.mxu0
    %v432 = vpop.f32.mrf.mxu0
    %v433 = vadd.f32 %v378, %v432
    %v434 = vpop.f32.mrf.mxu0
    %435 = vdwg.mxu0
    %v436 = vmul.f32 %v430, 0.35355338
    %v437 = vmul.f32 %v433, 0.35355338
    %v439 = vlaneseq
    %v440 = vshrl.u32 %v439, 7
    %v441 = vsub.s32 0, %v440
    %v442 = vrot.slane %v362, %v441
    %v448 = vunpack.c.l.b16 %v358
    %v449 = vunpack.c.l.b16 %v359
    %v450 = vunpack.c.l.b16 %v360
    %v451 = vunpack.c.l.b16 %v361
    %v452 = vpack.c.b16 %v449, %v448
    %v453 = vpack.c.b16 %v451, %v450
    %456 = vmatprep.subr.bf16.mxu0 0
    %457 = vmatpush1.bf16.msra.mxu0 0
    %458 = vmatprep.subr.bf16.mxu0 0
    %459 = vmatpush1.bf16.msra.mxu0 0
    %460 = vmatprep.subr.bf16.mxu0 0
    %461 = vmatpush1.bf16.msra.mxu0 0
    %462 = vmatprep.subr.bf16.mxu0 0
    %463 = vmatpush1.bf16.msra.mxu0 0
    %464 = vmatprep.subr.bf16.mxu0 0
    %465 = vmatpush1.bf16.msra.mxu0 0
    %466 = vmatprep.subr.bf16.mxu0 0
    %467 = vmatpush1.bf16.msra.mxu0 0
    %468 = vmatprep.subr.bf16.mxu0 0
    %469 = vmatpush1.bf16.msra.mxu0 %v453
    %470 = vmatprep.subr.bf16.mxu0 0
    %471 = vmatpush1.bf16.msra.mxu0 %v452
    %472 = vmatprep.subr.bf16.mxu0 0
    %473 = vmatpush2.bf16.msra.mxu0 0
    %474 = vmatprep.subr.bf16.mxu0 0
    %475 = vmatpush2.bf16.msra.mxu0 0
    %476 = vmatprep.subr.bf16.mxu0 0
    %477 = vmatpush2.bf16.msra.mxu0 0
    %478 = vmatprep.subr.bf16.mxu0 0
    %479 = vmatpush2.bf16.msra.mxu0 0
    %480 = vmatprep.subr.bf16.mxu0 0
    %481 = vmatpush2.bf16.msra.mxu0 0
    %482 = vmatprep.subr.bf16.mxu0 0
    %483 = vmatpush2.bf16.msra.mxu0 0
    %484 = vmatprep.subr.bf16.mxu0 0
    %485 = vmatpush2.bf16.msra.mxu0 0
    %486 = vmatprep.subr.bf16.mxu0 0
    %487 = vmatpush2.bf16.msra.mxu0 0
    %488 = vmatprep.mubr.bf16.mxu0 0
    %489 = vmatmul.mubr.bf16.gmra.mxu0 %v393
    %v490 = vpop.f32.mrf.mxu0
    %v491 = vadd.f32 %v442, %v490
    %v492 = vpop.f32.mrf.mxu0
    %v493 = vpop.f32.mrf.mxu0
    %v494 = vadd.f32 %v442, %v493
    %v495 = vpop.f32.mrf.mxu0
    %496 = vdwg.mxu0
    %v498 = vlaneseq
    %v499 = vshrl.u32 %v498, 7
    %v500 = vsub.s32 0, %v499
    %v501 = vrot.slane %v367, %v500
    %v507 = vunpack.c.l.b16 %v363
    %v508 = vunpack.c.l.b16 %v364
    %v509 = vunpack.c.l.b16 %v365
    %v510 = vunpack.c.l.b16 %v366
    %v511 = vpack.c.b16 %v508, %v507
    %v512 = vpack.c.b16 %v510, %v509
    %515 = vmatprep.subr.bf16.mxu0 0
    %516 = vmatpush1.bf16.msra.mxu0 0
    %517 = vmatprep.subr.bf16.mxu0 0
    %518 = vmatpush1.bf16.msra.mxu0 0
    %519 = vmatprep.subr.bf16.mxu0 0
    %520 = vmatpush1.bf16.msra.mxu0 0
    %521 = vmatprep.subr.bf16.mxu0 0
    %522 = vmatpush1.bf16.msra.mxu0 0
    %523 = vmatprep.subr.bf16.mxu0 0
    %524 = vmatpush1.bf16.msra.mxu0 0
    %525 = vmatprep.subr.bf16.mxu0 0
    %526 = vmatpush1.bf16.msra.mxu0 0
    %527 = vmatprep.subr.bf16.mxu0 0
    %528 = vmatpush1.bf16.msra.mxu0 %v512
    %529 = vmatprep.subr.bf16.mxu0 0
    %530 = vmatpush1.bf16.msra.mxu0 %v511
    %531 = vmatprep.subr.bf16.mxu0 0
    %532 = vmatpush2.bf16.msra.mxu0 0
    %533 = vmatprep.subr.bf16.mxu0 0
    %534 = vmatpush2.bf16.msra.mxu0 0
    %535 = vmatprep.subr.bf16.mxu0 0
    %536 = vmatpush2.bf16.msra.mxu0 0
    %537 = vmatprep.subr.bf16.mxu0 0
    %538 = vmatpush2.bf16.msra.mxu0 0
    %539 = vmatprep.subr.bf16.mxu0 0
    %540 = vmatpush2.bf16.msra.mxu0 0
    %541 = vmatprep.subr.bf16.mxu0 0
    %542 = vmatpush2.bf16.msra.mxu0 0
    %543 = vmatprep.subr.bf16.mxu0 0
    %544 = vmatpush2.bf16.msra.mxu0 0
    %545 = vmatprep.subr.bf16.mxu0 0
    %546 = vmatpush2.bf16.msra.mxu0 0
    %547 = vmatprep.mubr.bf16.mxu0 0
    %548 = vmatmul.mubr.bf16.gmra.mxu0 %v393
    %v549 = vpop.f32.mrf.mxu0
    %v550 = vadd.f32 %v501, %v549
    %v551 = vpop.f32.mrf.mxu0
    %v552 = vpop.f32.mrf.mxu0
    %v553 = vadd.f32 %v501, %v552
    %v554 = vpop.f32.mrf.mxu0
    %555 = vdwg.mxu0
    %v556 = vlaneseq
    %v557 = vshrl.u32 %v556, 7
    %v558 = vlaneseq
    %v559 = vand.u32 %v558, 127
    %vm560 = vcmp.ge.s32.totalorder %v557, %v559
    %v561 = vsel %vm560, 0.0, -1e+09
    %563 = vrot.lane.b32.xlu0 %v436, 120
    %v564 = vpop.permute.xlu0 %563
    %566 = vrot.lane.b32.xlu0 %v436, 112
    %v567 = vpop.permute.xlu0 %566
    %569 = vrot.lane.b32.xlu0 %v436, 104
    %v570 = vpop.permute.xlu0 %569
    %v572 = vcombine.low %v436, %v567
    %v573 = vcombine.high %v436, %v567
    %v575 = vunpack.c.l.s4 1983009808
    %v576 = vunpack.c.0.s8 %v575
    %v577 = vlaneseq
    %v578 = vshrl.u32 %v577, 7
    %v579 = vsub.s32 %v576, %v578
    %v580 = vrot.slane %v572, %v579
    %v582 = vunpack.c.l.s4 1983009808
    %v583 = vunpack.c.0.s8 %v582
    %v584 = vlaneseq
    %v585 = vshrl.u32 %v584, 7
    %v586 = vsub.s32 %v583, %v585
    %v587 = vrot.slane %v573, %v586
    %v588 = vcombine.low %v564, %v570
    %v589 = vcombine.high %v564, %v570
    %v591 = vunpack.c.l.s4 1983009808
    %v592 = vunpack.c.0.s8 %v591
    %v593 = vlaneseq
    %v594 = vshrl.u32 %v593, 7
    %v595 = vsub.s32 %v592, %v594
    %v596 = vrot.slane %v588, %v595
    %v598 = vunpack.c.l.s4 1983009808
    %v599 = vunpack.c.0.s8 %v598
    %v600 = vlaneseq
    %v601 = vshrl.u32 %v600, 7
    %v602 = vsub.s32 %v599, %v601
    %v603 = vrot.slane %v589, %v602
    %v604 = vcombine.low %v580, %v596
    %v605 = vcombine.high %v580, %v596
    %v607 = vunpack.c.l.s4 1934713408
    %v608 = vunpack.c.0.s8 %v607
    %v609 = vlaneseq
    %v610 = vshrl.u32 %v609, 7
    %v611 = vsub.s32 %v608, %v610
    %v612 = vrot.slane %v604, %v611
    %v614 = vunpack.c.l.s4 1934713408
    %v615 = vunpack.c.0.s8 %v614
    %v616 = vlaneseq
    %v617 = vshrl.u32 %v616, 7
    %v618 = vsub.s32 %v615, %v617
    %v619 = vrot.slane %v605, %v618
    %v620 = vcombine.low %v587, %v603
    %v621 = vcombine.high %v587, %v603
    %v623 = vunpack.c.l.s4 1934713408
    %v624 = vunpack.c.0.s8 %v623
    %v625 = vlaneseq
    %v626 = vshrl.u32 %v625, 7
    %v627 = vsub.s32 %v624, %v626
    %v628 = vrot.slane %v620, %v627
    %v630 = vunpack.c.l.s4 1934713408
    %v631 = vunpack.c.0.s8 %v630
    %v632 = vlaneseq
    %v633 = vshrl.u32 %v632, 7
    %v634 = vsub.s32 %v631, %v633
    %v635 = vrot.slane %v621, %v634
    %v636 = vcombine.high %v612, 0.0
    %v637 = vcombine.high %v619, 0.0
    %v638 = vcombine.high %v628, 0.0
    %v639 = vcombine.high %v635, 0.0
    %v640 = vcombine.low %v612, %v619
    %v642 = vunpack.c.l.s4 1983009808
    %v643 = vunpack.c.0.s8 %v642
    %v644 = vlaneseq
    %v645 = vshrl.u32 %v644, 7
    %v646 = vsub.s32 %v643, %v645
    %v647 = vrot.slane %v640, %v646
    %v648 = vcombine.low %v636, %v637
    %v650 = vunpack.c.l.s4 1983009808
    %v651 = vunpack.c.0.s8 %v650
    %v652 = vlaneseq
    %v653 = vshrl.u32 %v652, 7
    %v654 = vsub.s32 %v651, %v653
    %v655 = vrot.slane %v648, %v654
    %v656 = vcombine.low %v628, %v635
    %v658 = vunpack.c.l.s4 1983009808
    %v659 = vunpack.c.0.s8 %v658
    %v660 = vlaneseq
    %v661 = vshrl.u32 %v660, 7
    %v662 = vsub.s32 %v659, %v661
    %v663 = vrot.slane %v656, %v662
    %v664 = vcombine.low %v638, %v639
    %v666 = vunpack.c.l.s4 1983009808
    %v667 = vunpack.c.0.s8 %v666
    %v668 = vlaneseq
    %v669 = vshrl.u32 %v668, 7
    %v670 = vsub.s32 %v667, %v669
    %v671 = vrot.slane %v664, %v670
    %v672 = vcombine.low %v647, %v655
    %v673 = vcombine.high %v647, %v655
    %v675 = vunpack.c.l.s4 1934713408
    %v676 = vunpack.c.0.s8 %v675
    %v677 = vlaneseq
    %v678 = vshrl.u32 %v677, 7
    %v679 = vsub.s32 %v676, %v678
    %v680 = vrot.slane %v672, %v679
    %v682 = vunpack.c.l.s4 1934713408
    %v683 = vunpack.c.0.s8 %v682
    %v684 = vlaneseq
    %v685 = vshrl.u32 %v684, 7
    %v686 = vsub.s32 %v683, %v685
    %v687 = vrot.slane %v673, %v686
    %v688 = vcombine.low %v663, %v671
    %v689 = vcombine.high %v663, %v671
    %v691 = vunpack.c.l.s4 1934713408
    %v692 = vunpack.c.0.s8 %v691
    %v693 = vlaneseq
    %v694 = vshrl.u32 %v693, 7
    %v695 = vsub.s32 %v692, %v694
    %v696 = vrot.slane %v688, %v695
    %v698 = vunpack.c.l.s4 1934713408
    %v699 = vunpack.c.0.s8 %v698
    %v700 = vlaneseq
    %v701 = vshrl.u32 %v700, 7
    %v702 = vsub.s32 %v699, %v701
    %v703 = vrot.slane %v689, %v702
    %v704 = vcombine.low %v680, %v696
    %v705 = vcombine.high %v680, %v696
    %v706 = vcombine.low %v687, %v703
    %v707 = vcombine.high %v687, %v703
    %709 = vrot.lane.b32.xlu0 %v491, 120
    %v710 = vpop.permute.xlu0 %709
    %712 = vrot.lane.b32.xlu0 %v491, 112
    %v713 = vpop.permute.xlu0 %712
    %715 = vrot.lane.b32.xlu0 %v491, 104
    %v716 = vpop.permute.xlu0 %715
    %v718 = vcombine.low %v491, %v713
    %v719 = vcombine.high %v491, %v713
    %v721 = vunpack.c.l.s4 1983009808
    %v722 = vunpack.c.0.s8 %v721
    %v723 = vlaneseq
    %v724 = vshrl.u32 %v723, 7
    %v725 = vsub.s32 %v722, %v724
    %v726 = vrot.slane %v718, %v725
    %v728 = vunpack.c.l.s4 1983009808
    %v729 = vunpack.c.0.s8 %v728
    %v730 = vlaneseq
    %v731 = vshrl.u32 %v730, 7
    %v732 = vsub.s32 %v729, %v731
    %v733 = vrot.slane %v719, %v732
    %v734 = vcombine.low %v710, %v716
    %v735 = vcombine.high %v710, %v716
    %v737 = vunpack.c.l.s4 1983009808
    %v738 = vunpack.c.0.s8 %v737
    %v739 = vlaneseq
    %v740 = vshrl.u32 %v739, 7
    %v741 = vsub.s32 %v738, %v740
    %v742 = vrot.slane %v734, %v741
    %v744 = vunpack.c.l.s4 1983009808
    %v745 = vunpack.c.0.s8 %v744
    %v746 = vlaneseq
    %v747 = vshrl.u32 %v746, 7
    %v748 = vsub.s32 %v745, %v747
    %v749 = vrot.slane %v735, %v748
    %v750 = vcombine.low %v726, %v742
    %v751 = vcombine.high %v726, %v742
    %v753 = vunpack.c.l.s4 1934713408
    %v754 = vunpack.c.0.s8 %v753
    %v755 = vlaneseq
    %v756 = vshrl.u32 %v755, 7
    %v757 = vsub.s32 %v754, %v756
    %v758 = vrot.slane %v750, %v757
    %v760 = vunpack.c.l.s4 1934713408
    %v761 = vunpack.c.0.s8 %v760
    %v762 = vlaneseq
    %v763 = vshrl.u32 %v762, 7
    %v764 = vsub.s32 %v761, %v763
    %v765 = vrot.slane %v751, %v764
    %v766 = vcombine.low %v733, %v749
    %v767 = vcombine.high %v733, %v749
    %v769 = vunpack.c.l.s4 1934713408
    %v770 = vunpack.c.0.s8 %v769
    %v771 = vlaneseq
    %v772 = vshrl.u32 %v771, 7
    %v773 = vsub.s32 %v770, %v772
    %v774 = vrot.slane %v766, %v773
    %v776 = vunpack.c.l.s4 1934713408
    %v777 = vunpack.c.0.s8 %v776
    %v778 = vlaneseq
    %v779 = vshrl.u32 %v778, 7
    %v780 = vsub.s32 %v777, %v779
    %v781 = vrot.slane %v767, %v780
    %v782 = vcombine.high %v758, 0.0
    %v783 = vcombine.high %v765, 0.0
    %v784 = vcombine.high %v774, 0.0
    %v785 = vcombine.high %v781, 0.0
    %v786 = vcombine.low %v758, %v765
    %v788 = vunpack.c.l.s4 1983009808
    %v789 = vunpack.c.0.s8 %v788
    %v790 = vlaneseq
    %v791 = vshrl.u32 %v790, 7
    %v792 = vsub.s32 %v789, %v791
    %v793 = vrot.slane %v786, %v792
    %v794 = vcombine.low %v782, %v783
    %v796 = vunpack.c.l.s4 1983009808
    %v797 = vunpack.c.0.s8 %v796
    %v798 = vlaneseq
    %v799 = vshrl.u32 %v798, 7
    %v800 = vsub.s32 %v797, %v799
    %v801 = vrot.slane %v794, %v800
    %v802 = vcombine.low %v774, %v781
    %v804 = vunpack.c.l.s4 1983009808
    %v805 = vunpack.c.0.s8 %v804
    %v806 = vlaneseq
    %v807 = vshrl.u32 %v806, 7
    %v808 = vsub.s32 %v805, %v807
    %v809 = vrot.slane %v802, %v808
    %v810 = vcombine.low %v784, %v785
    %v812 = vunpack.c.l.s4 1983009808
    %v813 = vunpack.c.0.s8 %v812
    %v814 = vlaneseq
    %v815 = vshrl.u32 %v814, 7
    %v816 = vsub.s32 %v813, %v815
    %v817 = vrot.slane %v810, %v816
    %v818 = vcombine.low %v793, %v801
    %v819 = vcombine.high %v793, %v801
    %v821 = vunpack.c.l.s4 1934713408
    %v822 = vunpack.c.0.s8 %v821
    %v823 = vlaneseq
    %v824 = vshrl.u32 %v823, 7
    %v825 = vsub.s32 %v822, %v824
    %v826 = vrot.slane %v818, %v825
    %v828 = vunpack.c.l.s4 1934713408
    %v829 = vunpack.c.0.s8 %v828
    %v830 = vlaneseq
    %v831 = vshrl.u32 %v830, 7
    %v832 = vsub.s32 %v829, %v831
    %v833 = vrot.slane %v819, %v832
    %v834 = vcombine.low %v809, %v817
    %v835 = vcombine.high %v809, %v817
    %v837 = vunpack.c.l.s4 1934713408
    %v838 = vunpack.c.0.s8 %v837
    %v839 = vlaneseq
    %v840 = vshrl.u32 %v839, 7
    %v841 = vsub.s32 %v838, %v840
    %v842 = vrot.slane %v834, %v841
    %v844 = vunpack.c.l.s4 1934713408
    %v845 = vunpack.c.0.s8 %v844
    %v846 = vlaneseq
    %v847 = vshrl.u32 %v846, 7
    %v848 = vsub.s32 %v845, %v847
    %v849 = vrot.slane %v835, %v848
    %v850 = vcombine.low %v826, %v842
    %v851 = vcombine.high %v826, %v842
    %v852 = vcombine.low %v833, %v849
    %v853 = vcombine.high %v833, %v849
    %855 = vrot.lane.b32.xlu0 %v550, 120
    %v856 = vpop.permute.xlu0 %855
    %858 = vrot.lane.b32.xlu0 %v550, 112
    %v859 = vpop.permute.xlu0 %858
    %861 = vrot.lane.b32.xlu0 %v550, 104
    %v862 = vpop.permute.xlu0 %861
    %v864 = vcombine.low %v550, %v859
    %v865 = vcombine.high %v550, %v859
    %v867 = vunpack.c.l.s4 1983009808
    %v868 = vunpack.c.0.s8 %v867
    %v869 = vlaneseq
    %v870 = vshrl.u32 %v869, 7
    %v871 = vsub.s32 %v868, %v870
    %v872 = vrot.slane %v864, %v871
    %v874 = vunpack.c.l.s4 1983009808
    %v875 = vunpack.c.0.s8 %v874
    %v876 = vlaneseq
    %v877 = vshrl.u32 %v876, 7
    %v878 = vsub.s32 %v875, %v877
    %v879 = vrot.slane %v865, %v878
    %v880 = vcombine.low %v856, %v862
    %v881 = vcombine.high %v856, %v862
    %v883 = vunpack.c.l.s4 1983009808
    %v884 = vunpack.c.0.s8 %v883
    %v885 = vlaneseq
    %v886 = vshrl.u32 %v885, 7
    %v887 = vsub.s32 %v884, %v886
    %v888 = vrot.slane %v880, %v887
    %v890 = vunpack.c.l.s4 1983009808
    %v891 = vunpack.c.0.s8 %v890
    %v892 = vlaneseq
    %v893 = vshrl.u32 %v892, 7
    %v894 = vsub.s32 %v891, %v893
    %v895 = vrot.slane %v881, %v894
    %v896 = vcombine.low %v872, %v888
    %v897 = vcombine.high %v872, %v888
    %v899 = vunpack.c.l.s4 1934713408
    %v900 = vunpack.c.0.s8 %v899
    %v901 = vlaneseq
    %v902 = vshrl.u32 %v901, 7
    %v903 = vsub.s32 %v900, %v902
    %v904 = vrot.slane %v896, %v903
    %v906 = vunpack.c.l.s4 1934713408
    %v907 = vunpack.c.0.s8 %v906
    %v908 = vlaneseq
    %v909 = vshrl.u32 %v908, 7
    %v910 = vsub.s32 %v907, %v909
    %v911 = vrot.slane %v897, %v910
    %v912 = vcombine.low %v879, %v895
    %v913 = vcombine.high %v879, %v895
    %v915 = vunpack.c.l.s4 1934713408
    %v916 = vunpack.c.0.s8 %v915
    %v917 = vlaneseq
    %v918 = vshrl.u32 %v917, 7
    %v919 = vsub.s32 %v916, %v918
    %v920 = vrot.slane %v912, %v919
    %v922 = vunpack.c.l.s4 1934713408
    %v923 = vunpack.c.0.s8 %v922
    %v924 = vlaneseq
    %v925 = vshrl.u32 %v924, 7
    %v926 = vsub.s32 %v923, %v925
    %v927 = vrot.slane %v913, %v926
    %v928 = vcombine.high %v904, 0.0
    %v929 = vcombine.high %v911, 0.0
    %v930 = vcombine.high %v920, 0.0
    %v931 = vcombine.high %v927, 0.0
    %v932 = vcombine.low %v904, %v911
    %v934 = vunpack.c.l.s4 1983009808
    %v935 = vunpack.c.0.s8 %v934
    %v936 = vlaneseq
    %v937 = vshrl.u32 %v936, 7
    %v938 = vsub.s32 %v935, %v937
    %v939 = vrot.slane %v932, %v938
    %v940 = vcombine.low %v928, %v929
    %v942 = vunpack.c.l.s4 1983009808
    %v943 = vunpack.c.0.s8 %v942
    %v944 = vlaneseq
    %v945 = vshrl.u32 %v944, 7
    %v946 = vsub.s32 %v943, %v945
    %v947 = vrot.slane %v940, %v946
    %v948 = vcombine.low %v920, %v927
    %v950 = vunpack.c.l.s4 1983009808
    %v951 = vunpack.c.0.s8 %v950
    %v952 = vlaneseq
    %v953 = vshrl.u32 %v952, 7
    %v954 = vsub.s32 %v951, %v953
    %v955 = vrot.slane %v948, %v954
    %v956 = vcombine.low %v930, %v931
    %v958 = vunpack.c.l.s4 1983009808
    %v959 = vunpack.c.0.s8 %v958
    %v960 = vlaneseq
    %v961 = vshrl.u32 %v960, 7
    %v962 = vsub.s32 %v959, %v961
    %v963 = vrot.slane %v956, %v962
    %v964 = vcombine.low %v939, %v947
    %v965 = vcombine.high %v939, %v947
    %v967 = vunpack.c.l.s4 1934713408
    %v968 = vunpack.c.0.s8 %v967
    %v969 = vlaneseq
    %v970 = vshrl.u32 %v969, 7
    %v971 = vsub.s32 %v968, %v970
    %v972 = vrot.slane %v964, %v971
    %v974 = vunpack.c.l.s4 1934713408
    %v975 = vunpack.c.0.s8 %v974
    %v976 = vlaneseq
    %v977 = vshrl.u32 %v976, 7
    %v978 = vsub.s32 %v975, %v977
    %v979 = vrot.slane %v965, %v978
    %v980 = vcombine.low %v955, %v963
    %v981 = vcombine.high %v955, %v963
    %v983 = vunpack.c.l.s4 1934713408
    %v984 = vunpack.c.0.s8 %v983
    %v985 = vlaneseq
    %v986 = vshrl.u32 %v985, 7
    %v987 = vsub.s32 %v984, %v986
    %v988 = vrot.slane %v980, %v987
    %v990 = vunpack.c.l.s4 1934713408
    %v991 = vunpack.c.0.s8 %v990
    %v992 = vlaneseq
    %v993 = vshrl.u32 %v992, 7
    %v994 = vsub.s32 %v991, %v993
    %v995 = vrot.slane %v981, %v994
    %v996 = vcombine.low %v972, %v988
    %v997 = vcombine.high %v972, %v988
    %v998 = vcombine.low %v979, %v995
    %v999 = vcombine.high %v979, %v995
    %v1000 = vpack.c.bf16 %v704, %v704
    %v1001 = vpack.c.bf16 %v705, %v705
    %v1002 = vpack.c.bf16 %v706, %v706
    %v1003 = vpack.c.bf16 %v707, %v707
    %v1004 = vpack.c.bf16 %v850, %v850
    %v1005 = vpack.c.bf16 %v851, %v851
    %v1006 = vpack.c.bf16 %v852, %v852
    %v1007 = vpack.c.bf16 %v853, %v853
    %vm1008 = vcmask 64512
    %v1010 = vsel %vm1008, %v1000, 0
    %v1013 = vsel %vm1008, %v1004, 0
    %1015 = vmatprep.subr.bf16.mxu0 0
    %1016 = vmatpush1.bf16.xpose.msra.mxu0 0
    %1017 = vmatprep.subr.bf16.mxu0 0
    %1018 = vmatpush1.bf16.xpose.msra.mxu0 0
    %1019 = vmatprep.subr.bf16.mxu0 0
    %1020 = vmatpush1.bf16.xpose.msra.mxu0 0
    %1021 = vmatprep.subr.bf16.mxu0 0
    %1022 = vmatpush1.bf16.xpose.msra.mxu0 0
    %1023 = vmatprep.subr.bf16.mxu0 0
    %1024 = vmatpush1.bf16.xpose.msra.mxu0 0
    %1025 = vmatprep.subr.bf16.mxu0 0
    %1026 = vmatpush1.bf16.xpose.msra.mxu0 0
    %1027 = vmatprep.subr.bf16.mxu0 0
    %1028 = vmatpush1.bf16.xpose.msra.mxu0 0
    %1029 = vmatprep.subr.bf16.mxu0 0
    %1030 = vmatpush1.bf16.xpose.msra.mxu0 %v1013
    %1031 = vmatprep.subr.bf16.mxu0 0
    %1032 = vmatpush2.bf16.xpose.msra.mxu0 0
    %1033 = vmatprep.subr.bf16.mxu0 0
    %1034 = vmatpush2.bf16.xpose.msra.mxu0 0
    %1035 = vmatprep.subr.bf16.mxu0 0
    %1036 = vmatpush2.bf16.xpose.msra.mxu0 0
    %1037 = vmatprep.subr.bf16.mxu0 0
    %1038 = vmatpush2.bf16.xpose.msra.mxu0 0
    %1039 = vmatprep.subr.bf16.mxu0 0
    %1040 = vmatpush2.bf16.xpose.msra.mxu0 0
    %1041 = vmatprep.subr.bf16.mxu0 0
    %1042 = vmatpush2.bf16.xpose.msra.mxu0 0
    %1043 = vmatprep.subr.bf16.mxu0 0
    %1044 = vmatpush2.bf16.xpose.msra.mxu0 0
    %1045 = vmatprep.subr.bf16.mxu0 0
    %1046 = vmatpush2.bf16.xpose.msra.mxu0 0
    %1047 = vmatprep.mubr.bf16.mxu0 0
    %1048 = vmatmul.mubr.bf16.gmra.mxu0 %v1010
    %v1049 = vpop.f32.mrf.mxu0
    %v1050 = vadd.f32 %v561, %v1049
    %v1051 = vpop.f32.mrf.mxu0
    %v1052 = vpop.f32.mrf.mxu0
    %v1053 = vpop.f32.mrf.mxu0
    %1054 = vdwg.mxu0
    %v1056 = vsel %vm1008, %v1001, 0
    %v1059 = vsel %vm1008, %v1005, 0
    %1061 = vmatprep.subr.bf16.mxu0 0
    %1062 = vmatpush1.bf16.xpose.msra.mxu0 0
    %1063 = vmatprep.subr.bf16.mxu0 0
    %1064 = vmatpush1.bf16.xpose.msra.mxu0 0
    %1065 = vmatprep.subr.bf16.mxu0 0
    %1066 = vmatpush1.bf16.xpose.msra.mxu0 0
    %1067 = vmatprep.subr.bf16.mxu0 0
    %1068 = vmatpush1.bf16.xpose.msra.mxu0 0
    %1069 = vmatprep.subr.bf16.mxu0 0
    %1070 = vmatpush1.bf16.xpose.msra.mxu0 0
    %1071 = vmatprep.subr.bf16.mxu0 0
    %1072 = vmatpush1.bf16.xpose.msra.mxu0 0
    %1073 = vmatprep.subr.bf16.mxu0 0
    %1074 = vmatpush1.bf16.xpose.msra.mxu0 0
    %1075 = vmatprep.subr.bf16.mxu0 0
    %1076 = vmatpush1.bf16.xpose.msra.mxu0 %v1059
    %1077 = vmatprep.subr.bf16.mxu0 0
    %1078 = vmatpush2.bf16.xpose.msra.mxu0 0
    %1079 = vmatprep.subr.bf16.mxu0 0
    %1080 = vmatpush2.bf16.xpose.msra.mxu0 0
    %1081 = vmatprep.subr.bf16.mxu0 0
    %1082 = vmatpush2.bf16.xpose.msra.mxu0 0
    %1083 = vmatprep.subr.bf16.mxu0 0
    %1084 = vmatpush2.bf16.xpose.msra.mxu0 0
    %1085 = vmatprep.subr.bf16.mxu0 0
    %1086 = vmatpush2.bf16.xpose.msra.mxu0 0
    %1087 = vmatprep.subr.bf16.mxu0 0
    %1088 = vmatpush2.bf16.xpose.msra.mxu0 0
    %1089 = vmatprep.subr.bf16.mxu0 0
    %1090 = vmatpush2.bf16.xpose.msra.mxu0 0
    %1091 = vmatprep.subr.bf16.mxu0 0
    %1092 = vmatpush2.bf16.xpose.msra.mxu0 0
    %1093 = vmatprep.mubr.bf16.mxu0 0
    %1094 = vmatmul.mubr.bf16.gmra.mxu0 %v1056
    %v1095 = vpop.f32.mrf.mxu0
    %v1096 = vadd.f32 %v561, %v1095
    %v1097 = vpop.f32.mrf.mxu0
    %v1098 = vpop.f32.mrf.mxu0
    %v1099 = vpop.f32.mrf.mxu0
    %1100 = vdwg.mxu0
    %v1102 = vsel %vm1008, %v1002, 0
    %v1105 = vsel %vm1008, %v1006, 0
    %1107 = vmatprep.subr.bf16.mxu0 0
    %1108 = vmatpush1.bf16.xpose.msra.mxu0 0
    %1109 = vmatprep.subr.bf16.mxu0 0
    %1110 = vmatpush1.bf16.xpose.msra.mxu0 0
    %1111 = vmatprep.subr.bf16.mxu0 0
    %1112 = vmatpush1.bf16.xpose.msra.mxu0 0
    %1113 = vmatprep.subr.bf16.mxu0 0
    %1114 = vmatpush1.bf16.xpose.msra.mxu0 0
    %1115 = vmatprep.subr.bf16.mxu0 0
    %1116 = vmatpush1.bf16.xpose.msra.mxu0 0
    %1117 = vmatprep.subr.bf16.mxu0 0
    %1118 = vmatpush1.bf16.xpose.msra.mxu0 0
    %1119 = vmatprep.subr.bf16.mxu0 0
    %1120 = vmatpush1.bf16.xpose.msra.mxu0 0
    %1121 = vmatprep.subr.bf16.mxu0 0
    %1122 = vmatpush1.bf16.xpose.msra.mxu0 %v1105
    %1123 = vmatprep.subr.bf16.mxu0 0
    %1124 = vmatpush2.bf16.xpose.msra.mxu0 0
    %1125 = vmatprep.subr.bf16.mxu0 0
    %1126 = vmatpush2.bf16.xpose.msra.mxu0 0
    %1127 = vmatprep.subr.bf16.mxu0 0
    %1128 = vmatpush2.bf16.xpose.msra.mxu0 0
    %1129 = vmatprep.subr.bf16.mxu0 0
    %1130 = vmatpush2.bf16.xpose.msra.mxu0 0
    %1131 = vmatprep.subr.bf16.mxu0 0
    %1132 = vmatpush2.bf16.xpose.msra.mxu0 0
    %1133 = vmatprep.subr.bf16.mxu0 0
    %1134 = vmatpush2.bf16.xpose.msra.mxu0 0
    %1135 = vmatprep.subr.bf16.mxu0 0
    %1136 = vmatpush2.bf16.xpose.msra.mxu0 0
    %1137 = vmatprep.subr.bf16.mxu0 0
    %1138 = vmatpush2.bf16.xpose.msra.mxu0 0
    %1139 = vmatprep.mubr.bf16.mxu0 0
    %1140 = vmatmul.mubr.bf16.gmra.mxu0 %v1102
    %v1141 = vpop.f32.mrf.mxu0
    %v1142 = vadd.f32 %v561, %v1141
    %v1143 = vpop.f32.mrf.mxu0
    %v1144 = vpop.f32.mrf.mxu0
    %v1145 = vpop.f32.mrf.mxu0
    %1146 = vdwg.mxu0
    %v1148 = vsel %vm1008, %v1003, 0
    %v1151 = vsel %vm1008, %v1007, 0
    %1153 = vmatprep.subr.bf16.mxu0 0
    %1154 = vmatpush1.bf16.xpose.msra.mxu0 0
    %1155 = vmatprep.subr.bf16.mxu0 0
    %1156 = vmatpush1.bf16.xpose.msra.mxu0 0
    %1157 = vmatprep.subr.bf16.mxu0 0
    %1158 = vmatpush1.bf16.xpose.msra.mxu0 0
    %1159 = vmatprep.subr.bf16.mxu0 0
    %1160 = vmatpush1.bf16.xpose.msra.mxu0 0
    %1161 = vmatprep.subr.bf16.mxu0 0
    %1162 = vmatpush1.bf16.xpose.msra.mxu0 0
    %1163 = vmatprep.subr.bf16.mxu0 0
    %1164 = vmatpush1.bf16.xpose.msra.mxu0 0
    %1165 = vmatprep.subr.bf16.mxu0 0
    %1166 = vmatpush1.bf16.xpose.msra.mxu0 0
    %1167 = vmatprep.subr.bf16.mxu0 0
    %1168 = vmatpush1.bf16.xpose.msra.mxu0 %v1151
    %1169 = vmatprep.subr.bf16.mxu0 0
    %1170 = vmatpush2.bf16.xpose.msra.mxu0 0
    %1171 = vmatprep.subr.bf16.mxu0 0
    %1172 = vmatpush2.bf16.xpose.msra.mxu0 0
    %1173 = vmatprep.subr.bf16.mxu0 0
    %1174 = vmatpush2.bf16.xpose.msra.mxu0 0
    %1175 = vmatprep.subr.bf16.mxu0 0
    %1176 = vmatpush2.bf16.xpose.msra.mxu0 0
    %1177 = vmatprep.subr.bf16.mxu0 0
    %1178 = vmatpush2.bf16.xpose.msra.mxu0 0
    %1179 = vmatprep.subr.bf16.mxu0 0
    %1180 = vmatpush2.bf16.xpose.msra.mxu0 0
    %1181 = vmatprep.subr.bf16.mxu0 0
    %1182 = vmatpush2.bf16.xpose.msra.mxu0 0
    %1183 = vmatprep.subr.bf16.mxu0 0
    %1184 = vmatpush2.bf16.xpose.msra.mxu0 0
    %1185 = vmatprep.mubr.bf16.mxu0 0
    %1186 = vmatmul.mubr.bf16.gmra.mxu0 %v1148
    %v1187 = vpop.f32.mrf.mxu0
    %v1188 = vadd.f32 %v561, %v1187
    %v1189 = vpop.f32.mrf.mxu0
    %v1190 = vpop.f32.mrf.mxu0
    %v1191 = vpop.f32.mrf.mxu0
    %1192 = vdwg.mxu0
    %v1193 = vsel %vm1008, %v1050, -inf
    %1194 = vmax.xlane.f32.xlu0 %v1193
    %v1195 = vpop.xlane.xlu0 %1194
    %v1196 = vsel %vm1008, %v1096, -inf
    %1197 = vmax.xlane.f32.xlu0 %v1196
    %v1198 = vpop.xlane.xlu0 %1197
    %v1199 = vsel %vm1008, %v1142, -inf
    %1200 = vmax.xlane.f32.xlu0 %v1199
    %v1201 = vpop.xlane.xlu0 %1200
    %v1202 = vsel %vm1008, %v1188, -inf
    %1203 = vmax.xlane.f32.xlu0 %v1202
    %v1204 = vpop.xlane.xlu0 %1203
    %v1205 = vsub.f32 %v1050, %v1195
    %v1206 = vsub.f32 %v1096, %v1198
    %v1207 = vsub.f32 %v1142, %v1201
    %v1208 = vsub.f32 %v1188, %v1204
    %v1209 = vmul.f32 %v1205, 1.442695
    %v1210 = vpow.pop %v1209
    %v1211 = vmul.f32 %v1206, 1.442695
    %v1212 = vpow.pop %v1211
    %v1213 = vmul.f32 %v1207, 1.442695
    %v1214 = vpow.pop %v1213
    %v1215 = vmul.f32 %v1208, 1.442695
    %v1216 = vpow.pop %v1215
    %v1217 = vsel %vm1008, %v1210, 0.0
    %1218 = vadd.xlane.f32.xlu0 %v1217
    %v1219 = vpop.xlane.xlu0 %1218
    %v1220 = vsel %vm1008, %v1212, 0.0
    %1221 = vadd.xlane.f32.xlu0 %v1220
    %v1222 = vpop.xlane.xlu0 %1221
    %v1223 = vsel %vm1008, %v1214, 0.0
    %1224 = vadd.xlane.f32.xlu0 %v1223
    %v1225 = vpop.xlane.xlu0 %1224
    %v1226 = vsel %vm1008, %v1216, 0.0
    %1227 = vadd.xlane.f32.xlu0 %v1226
    %v1228 = vpop.xlane.xlu0 %1227
    %v1229 = vpack.c.bf16 %v1210, %v1210
    %v1230 = vpack.c.bf16 %v1212, %v1212
    %v1231 = vpack.c.bf16 %v1214, %v1214
    %v1232 = vpack.c.bf16 %v1216, %v1216
    %v1233 = vpack.c.bf16 %v996, %v996
    %v1234 = vpack.c.bf16 %v997, %v997
    %v1235 = vpack.c.bf16 %v998, %v998
    %v1236 = vpack.c.bf16 %v999, %v999
    %v1238 = vsel %vm1008, %v1229, 0
    %vm1240 = vcmask 1043456
    %v1242 = vsel %vm1240, %v1233, 0
    %1244 = vmatprep.subr.bf16.mxu0 0
    %1245 = vmatpush1.bf16.msra.mxu0 0
    %1246 = vmatprep.subr.bf16.mxu0 0
    %1247 = vmatpush1.bf16.msra.mxu0 0
    %1248 = vmatprep.subr.bf16.mxu0 0
    %1249 = vmatpush1.bf16.msra.mxu0 0
    %1250 = vmatprep.subr.bf16.mxu0 0
    %1251 = vmatpush1.bf16.msra.mxu0 0
    %1252 = vmatprep.subr.bf16.mxu0 0
    %1253 = vmatpush1.bf16.msra.mxu0 0
    %1254 = vmatprep.subr.bf16.mxu0 0
    %1255 = vmatpush1.bf16.msra.mxu0 0
    %1256 = vmatprep.subr.bf16.mxu0 0
    %1257 = vmatpush1.bf16.msra.mxu0 0
    %1258 = vmatprep.subr.bf16.mxu0 0
    %1259 = vmatpush1.bf16.msra.mxu0 %v1242
    %1260 = vmatprep.subr.bf16.mxu0 0
    %1261 = vmatpush2.bf16.msra.mxu0 0
    %1262 = vmatprep.subr.bf16.mxu0 0
    %1263 = vmatpush2.bf16.msra.mxu0 0
    %1264 = vmatprep.subr.bf16.mxu0 0
    %1265 = vmatpush2.bf16.msra.mxu0 0
    %1266 = vmatprep.subr.bf16.mxu0 0
    %1267 = vmatpush2.bf16.msra.mxu0 0
    %1268 = vmatprep.subr.bf16.mxu0 0
    %1269 = vmatpush2.bf16.msra.mxu0 0
    %1270 = vmatprep.subr.bf16.mxu0 0
    %1271 = vmatpush2.bf16.msra.mxu0 0
    %1272 = vmatprep.subr.bf16.mxu0 0
    %1273 = vmatpush2.bf16.msra.mxu0 0
    %1274 = vmatprep.subr.bf16.mxu0 0
    %1275 = vmatpush2.bf16.msra.mxu0 0
    %1276 = vmatprep.mubr.bf16.mxu0 0
    %1277 = vmatmul.mubr.bf16.gmra.mxu0 %v1238
    %v1278 = vpop.f32.mrf.mxu0
    %v1279 = vadd.f32 0.0, %v1278
    %v1280 = vpop.f32.mrf.mxu0
    %v1281 = vpop.f32.mrf.mxu0
    %v1282 = vpop.f32.mrf.mxu0
    %1283 = vdwg.mxu0
    %v1285 = vsel %vm1008, %v1230, 0
    %v1288 = vsel %vm1240, %v1234, 0
    %1290 = vmatprep.subr.bf16.mxu0 0
    %1291 = vmatpush1.bf16.msra.mxu0 0
    %1292 = vmatprep.subr.bf16.mxu0 0
    %1293 = vmatpush1.bf16.msra.mxu0 0
    %1294 = vmatprep.subr.bf16.mxu0 0
    %1295 = vmatpush1.bf16.msra.mxu0 0
    %1296 = vmatprep.subr.bf16.mxu0 0
    %1297 = vmatpush1.bf16.msra.mxu0 0
    %1298 = vmatprep.subr.bf16.mxu0 0
    %1299 = vmatpush1.bf16.msra.mxu0 0
    %1300 = vmatprep.subr.bf16.mxu0 0
    %1301 = vmatpush1.bf16.msra.mxu0 0
    %1302 = vmatprep.subr.bf16.mxu0 0
    %1303 = vmatpush1.bf16.msra.mxu0 0
    %1304 = vmatprep.subr.bf16.mxu0 0
    %1305 = vmatpush1.bf16.msra.mxu0 %v1288
    %1306 = vmatprep.subr.bf16.mxu0 0
    %1307 = vmatpush2.bf16.msra.mxu0 0
    %1308 = vmatprep.subr.bf16.mxu0 0
    %1309 = vmatpush2.bf16.msra.mxu0 0
    %1310 = vmatprep.subr.bf16.mxu0 0
    %1311 = vmatpush2.bf16.msra.mxu0 0
    %1312 = vmatprep.subr.bf16.mxu0 0
    %1313 = vmatpush2.bf16.msra.mxu0 0
    %1314 = vmatprep.subr.bf16.mxu0 0
    %1315 = vmatpush2.bf16.msra.mxu0 0
    %1316 = vmatprep.subr.bf16.mxu0 0
    %1317 = vmatpush2.bf16.msra.mxu0 0
    %1318 = vmatprep.subr.bf16.mxu0 0
    %1319 = vmatpush2.bf16.msra.mxu0 0
    %1320 = vmatprep.subr.bf16.mxu0 0
    %1321 = vmatpush2.bf16.msra.mxu0 0
    %1322 = vmatprep.mubr.bf16.mxu0 0
    %1323 = vmatmul.mubr.bf16.gmra.mxu0 %v1285
    %v1324 = vpop.f32.mrf.mxu0
    %v1325 = vadd.f32 0.0, %v1324
    %v1326 = vpop.f32.mrf.mxu0
    %v1327 = vpop.f32.mrf.mxu0
    %v1328 = vpop.f32.mrf.mxu0
    %1329 = vdwg.mxu0
    %v1331 = vsel %vm1008, %v1231, 0
    %v1334 = vsel %vm1240, %v1235, 0
    %1336 = vmatprep.subr.bf16.mxu0 0
    %1337 = vmatpush1.bf16.msra.mxu0 0
    %1338 = vmatprep.subr.bf16.mxu0 0
    %1339 = vmatpush1.bf16.msra.mxu0 0
    %1340 = vmatprep.subr.bf16.mxu0 0
    %1341 = vmatpush1.bf16.msra.mxu0 0
    %1342 = vmatprep.subr.bf16.mxu0 0
    %1343 = vmatpush1.bf16.msra.mxu0 0
    %1344 = vmatprep.subr.bf16.mxu0 0
    %1345 = vmatpush1.bf16.msra.mxu0 0
    %1346 = vmatprep.subr.bf16.mxu0 0
    %1347 = vmatpush1.bf16.msra.mxu0 0
    %1348 = vmatprep.subr.bf16.mxu0 0
    %1349 = vmatpush1.bf16.msra.mxu0 0
    %1350 = vmatprep.subr.bf16.mxu0 0
    %1351 = vmatpush1.bf16.msra.mxu0 %v1334
    %1352 = vmatprep.subr.bf16.mxu0 0
    %1353 = vmatpush2.bf16.msra.mxu0 0
    %1354 = vmatprep.subr.bf16.mxu0 0
    %1355 = vmatpush2.bf16.msra.mxu0 0
    %1356 = vmatprep.subr.bf16.mxu0 0
    %1357 = vmatpush2.bf16.msra.mxu0 0
    %1358 = vmatprep.subr.bf16.mxu0 0
    %1359 = vmatpush2.bf16.msra.mxu0 0
    %1360 = vmatprep.subr.bf16.mxu0 0
    %1361 = vmatpush2.bf16.msra.mxu0 0
    %1362 = vmatprep.subr.bf16.mxu0 0
    %1363 = vmatpush2.bf16.msra.mxu0 0
    %1364 = vmatprep.subr.bf16.mxu0 0
    %1365 = vmatpush2.bf16.msra.mxu0 0
    %1366 = vmatprep.subr.bf16.mxu0 0
    %1367 = vmatpush2.bf16.msra.mxu0 0
    %1368 = vmatprep.mubr.bf16.mxu0 0
    %1369 = vmatmul.mubr.bf16.gmra.mxu0 %v1331
    %v1370 = vpop.f32.mrf.mxu0
    %v1371 = vadd.f32 0.0, %v1370
    %v1372 = vpop.f32.mrf.mxu0
    %v1373 = vpop.f32.mrf.mxu0
    %v1374 = vpop.f32.mrf.mxu0
    %1375 = vdwg.mxu0
    %v1377 = vsel %vm1008, %v1232, 0
    %v1380 = vsel %vm1240, %v1236, 0
    %1382 = vmatprep.subr.bf16.mxu0 0
    %1383 = vmatpush1.bf16.msra.mxu0 0
    %1384 = vmatprep.subr.bf16.mxu0 0
    %1385 = vmatpush1.bf16.msra.mxu0 0
    %1386 = vmatprep.subr.bf16.mxu0 0
    %1387 = vmatpush1.bf16.msra.mxu0 0
    %1388 = vmatprep.subr.bf16.mxu0 0
    %1389 = vmatpush1.bf16.msra.mxu0 0
    %1390 = vmatprep.subr.bf16.mxu0 0
    %1391 = vmatpush1.bf16.msra.mxu0 0
    %1392 = vmatprep.subr.bf16.mxu0 0
    %1393 = vmatpush1.bf16.msra.mxu0 0
    %1394 = vmatprep.subr.bf16.mxu0 0
    %1395 = vmatpush1.bf16.msra.mxu0 0
    %1396 = vmatprep.subr.bf16.mxu0 0
    %1397 = vmatpush1.bf16.msra.mxu0 %v1380
    %1398 = vmatprep.subr.bf16.mxu0 0
    %1399 = vmatpush2.bf16.msra.mxu0 0
    %1400 = vmatprep.subr.bf16.mxu0 0
    %1401 = vmatpush2.bf16.msra.mxu0 0
    %1402 = vmatprep.subr.bf16.mxu0 0
    %1403 = vmatpush2.bf16.msra.mxu0 0
    %1404 = vmatprep.subr.bf16.mxu0 0
    %1405 = vmatpush2.bf16.msra.mxu0 0
    %1406 = vmatprep.subr.bf16.mxu0 0
    %1407 = vmatpush2.bf16.msra.mxu0 0
    %1408 = vmatprep.subr.bf16.mxu0 0
    %1409 = vmatpush2.bf16.msra.mxu0 0
    %1410 = vmatprep.subr.bf16.mxu0 0
    %1411 = vmatpush2.bf16.msra.mxu0 0
    %1412 = vmatprep.subr.bf16.mxu0 0
    %1413 = vmatpush2.bf16.msra.mxu0 0
    %1414 = vmatprep.mubr.bf16.mxu0 0
    %1415 = vmatmul.mubr.bf16.gmra.mxu0 %v1377
    %v1416 = vpop.f32.mrf.mxu0
    %v1417 = vadd.f32 0.0, %v1416
    %v1418 = vpop.f32.mrf.mxu0
    %v1419 = vpop.f32.mrf.mxu0
    %v1420 = vpop.f32.mrf.mxu0
    %1421 = vdwg.mxu0
    %v1422 = vrcp.pop %v1219
    %v1423 = vrcp.pop %v1222
    %v1424 = vrcp.pop %v1225
    %v1425 = vrcp.pop %v1228
    %v1426 = vmul.f32 %v1279, %v1422
    %v1427 = vmul.f32 %v1325, %v1423
    %v1428 = vmul.f32 %v1371, %v1424
    %v1429 = vmul.f32 %v1417, %v1425
    %v1430 = vcombine.low %v1426, %v1428
    %v1431 = vcombine.high %v1426, %v1428
    %v1433 = vunpack.c.l.s4 1983009808
    %v1434 = vunpack.c.0.s8 %v1433
    %v1435 = vlaneseq
    %v1436 = vshrl.u32 %v1435, 7
    %v1437 = vsub.s32 %v1434, %v1436
    %v1438 = vrot.slane %v1430, %v1437
    %v1440 = vunpack.c.l.s4 1983009808
    %v1441 = vunpack.c.0.s8 %v1440
    %v1442 = vlaneseq
    %v1443 = vshrl.u32 %v1442, 7
    %v1444 = vsub.s32 %v1441, %v1443
    %v1445 = vrot.slane %v1431, %v1444
    %v1446 = vcombine.low %v1427, %v1429
    %v1447 = vcombine.high %v1427, %v1429
    %v1449 = vunpack.c.l.s4 1983009808
    %v1450 = vunpack.c.0.s8 %v1449
    %v1451 = vlaneseq
    %v1452 = vshrl.u32 %v1451, 7
    %v1453 = vsub.s32 %v1450, %v1452
    %v1454 = vrot.slane %v1446, %v1453
    %v1456 = vunpack.c.l.s4 1983009808
    %v1457 = vunpack.c.0.s8 %v1456
    %v1458 = vlaneseq
    %v1459 = vshrl.u32 %v1458, 7
    %v1460 = vsub.s32 %v1457, %v1459
    %v1461 = vrot.slane %v1447, %v1460
    %v1462 = vcombine.low %v1438, %v1454
    %v1463 = vcombine.high %v1438, %v1454
    %v1465 = vunpack.c.l.s4 1934713408
    %v1466 = vunpack.c.0.s8 %v1465
    %v1467 = vlaneseq
    %v1468 = vshrl.u32 %v1467, 7
    %v1469 = vsub.s32 %v1466, %v1468
    %v1470 = vrot.slane %v1462, %v1469
    %v1472 = vunpack.c.l.s4 1934713408
    %v1473 = vunpack.c.0.s8 %v1472
    %v1474 = vlaneseq
    %v1475 = vshrl.u32 %v1474, 7
    %v1476 = vsub.s32 %v1473, %v1475
    %v1477 = vrot.slane %v1463, %v1476
    %v1478 = vcombine.low %v1445, %v1461
    %v1479 = vcombine.high %v1445, %v1461
    %v1481 = vunpack.c.l.s4 1934713408
    %v1482 = vunpack.c.0.s8 %v1481
    %v1483 = vlaneseq
    %v1484 = vshrl.u32 %v1483, 7
    %v1485 = vsub.s32 %v1482, %v1484
    %v1486 = vrot.slane %v1478, %v1485
    %v1488 = vunpack.c.l.s4 1934713408
    %v1489 = vunpack.c.0.s8 %v1488
    %v1490 = vlaneseq
    %v1491 = vshrl.u32 %v1490, 7
    %v1492 = vsub.s32 %v1489, %v1491
    %v1493 = vrot.slane %v1479, %v1492
    %v1494 = vcombine.high %v1470, 0.0
    %v1495 = vcombine.high %v1477, 0.0
    %v1496 = vcombine.high %v1486, 0.0
    %v1497 = vcombine.high %v1493, 0.0
    %v1498 = vcombine.low %v1470, %v1477
    %v1500 = vunpack.c.l.s4 1983009808
    %v1501 = vunpack.c.0.s8 %v1500
    %v1502 = vlaneseq
    %v1503 = vshrl.u32 %v1502, 7
    %v1504 = vsub.s32 %v1501, %v1503
    %v1505 = vrot.slane %v1498, %v1504
    %v1506 = vcombine.low %v1494, %v1495
    %v1508 = vunpack.c.l.s4 1983009808
    %v1509 = vunpack.c.0.s8 %v1508
    %v1510 = vlaneseq
    %v1511 = vshrl.u32 %v1510, 7
    %v1512 = vsub.s32 %v1509, %v1511
    %v1513 = vrot.slane %v1506, %v1512
    %v1514 = vcombine.low %v1486, %v1493
    %v1516 = vunpack.c.l.s4 1983009808
    %v1517 = vunpack.c.0.s8 %v1516
    %v1518 = vlaneseq
    %v1519 = vshrl.u32 %v1518, 7
    %v1520 = vsub.s32 %v1517, %v1519
    %v1521 = vrot.slane %v1514, %v1520
    %v1522 = vcombine.low %v1496, %v1497
    %v1524 = vunpack.c.l.s4 1983009808
    %v1525 = vunpack.c.0.s8 %v1524
    %v1526 = vlaneseq
    %v1527 = vshrl.u32 %v1526, 7
    %v1528 = vsub.s32 %v1525, %v1527
    %v1529 = vrot.slane %v1522, %v1528
    %v1530 = vcombine.low %v1505, %v1513
    %v1531 = vcombine.high %v1505, %v1513
    %v1533 = vunpack.c.l.s4 1934713408
    %v1534 = vunpack.c.0.s8 %v1533
    %v1535 = vlaneseq
    %v1536 = vshrl.u32 %v1535, 7
    %v1537 = vsub.s32 %v1534, %v1536
    %v1538 = vrot.slane %v1530, %v1537
    %v1540 = vunpack.c.l.s4 1934713408
    %v1541 = vunpack.c.0.s8 %v1540
    %v1542 = vlaneseq
    %v1543 = vshrl.u32 %v1542, 7
    %v1544 = vsub.s32 %v1541, %v1543
    %v1545 = vrot.slane %v1531, %v1544
    %v1546 = vcombine.low %v1521, %v1529
    %v1547 = vcombine.high %v1521, %v1529
    %v1549 = vunpack.c.l.s4 1934713408
    %v1550 = vunpack.c.0.s8 %v1549
    %v1551 = vlaneseq
    %v1552 = vshrl.u32 %v1551, 7
    %v1553 = vsub.s32 %v1550, %v1552
    %v1554 = vrot.slane %v1546, %v1553
    %v1556 = vunpack.c.l.s4 1934713408
    %v1557 = vunpack.c.0.s8 %v1556
    %v1558 = vlaneseq
    %v1559 = vshrl.u32 %v1558, 7
    %v1560 = vsub.s32 %v1557, %v1559
    %v1561 = vrot.slane %v1547, %v1560
    %v1562 = vcombine.low %v1538, %v1554
    %v1563 = vcombine.high %v1538, %v1554
    %v1564 = vcombine.low %v1545, %v1561
    %v1565 = vcombine.high %v1545, %v1561
    %1567 = vrot.lane.b32.xlu0 %v1563, 8
    %v1568 = vpop.permute.xlu0 %1567
    %1571 = vrot.lane.b32.xlu0 %v1564, 16
    %v1572 = vpop.permute.xlu0 %1571
    %1575 = vrot.lane.b32.xlu0 %v1565, 24
    %v1576 = vpop.permute.xlu0 %1575
    %v1578 = vsel %vm1008, %v1562, %v1568
    %vm1579 = vcmask 130048
    %v1580 = vsel %vm1579, %v1578, %v1572
    %vm1581 = vcmask 195584
    %v1582 = vsel %vm1581, %v1580, %v1576
    %1584 = vrot.lane.b32.xlu0 %v437, 120
    %v1585 = vpop.permute.xlu0 %1584
    %1587 = vrot.lane.b32.xlu0 %v437, 112
    %v1588 = vpop.permute.xlu0 %1587
    %1590 = vrot.lane.b32.xlu0 %v437, 104
    %v1591 = vpop.permute.xlu0 %1590
    %v1593 = vcombine.low %v437, %v1588
    %v1594 = vcombine.high %v437, %v1588
    %v1596 = vunpack.c.l.s4 1983009808
    %v1597 = vunpack.c.0.s8 %v1596
    %v1598 = vlaneseq
    %v1599 = vshrl.u32 %v1598, 7
    %v1600 = vsub.s32 %v1597, %v1599
    %v1601 = vrot.slane %v1593, %v1600
    %v1603 = vunpack.c.l.s4 1983009808
    %v1604 = vunpack.c.0.s8 %v1603
    %v1605 = vlaneseq
    %v1606 = vshrl.u32 %v1605, 7
    %v1607 = vsub.s32 %v1604, %v1606
    %v1608 = vrot.slane %v1594, %v1607
    %v1609 = vcombine.low %v1585, %v1591
    %v1610 = vcombine.high %v1585, %v1591
    %v1612 = vunpack.c.l.s4 1983009808
    %v1613 = vunpack.c.0.s8 %v1612
    %v1614 = vlaneseq
    %v1615 = vshrl.u32 %v1614, 7
    %v1616 = vsub.s32 %v1613, %v1615
    %v1617 = vrot.slane %v1609, %v1616
    %v1619 = vunpack.c.l.s4 1983009808
    %v1620 = vunpack.c.0.s8 %v1619
    %v1621 = vlaneseq
    %v1622 = vshrl.u32 %v1621, 7
    %v1623 = vsub.s32 %v1620, %v1622
    %v1624 = vrot.slane %v1610, %v1623
    %v1625 = vcombine.low %v1601, %v1617
    %v1626 = vcombine.high %v1601, %v1617
    %v1628 = vunpack.c.l.s4 1934713408
    %v1629 = vunpack.c.0.s8 %v1628
    %v1630 = vlaneseq
    %v1631 = vshrl.u32 %v1630, 7
    %v1632 = vsub.s32 %v1629, %v1631
    %v1633 = vrot.slane %v1625, %v1632
    %v1635 = vunpack.c.l.s4 1934713408
    %v1636 = vunpack.c.0.s8 %v1635
    %v1637 = vlaneseq
    %v1638 = vshrl.u32 %v1637, 7
    %v1639 = vsub.s32 %v1636, %v1638
    %v1640 = vrot.slane %v1626, %v1639
    %v1641 = vcombine.low %v1608, %v1624
    %v1642 = vcombine.high %v1608, %v1624
    %v1644 = vunpack.c.l.s4 1934713408
    %v1645 = vunpack.c.0.s8 %v1644
    %v1646 = vlaneseq
    %v1647 = vshrl.u32 %v1646, 7
    %v1648 = vsub.s32 %v1645, %v1647
    %v1649 = vrot.slane %v1641, %v1648
    %v1651 = vunpack.c.l.s4 1934713408
    %v1652 = vunpack.c.0.s8 %v1651
    %v1653 = vlaneseq
    %v1654 = vshrl.u32 %v1653, 7
    %v1655 = vsub.s32 %v1652, %v1654
    %v1656 = vrot.slane %v1642, %v1655
    %v1657 = vcombine.high %v1633, 0.0
    %v1658 = vcombine.high %v1640, 0.0
    %v1659 = vcombine.high %v1649, 0.0
    %v1660 = vcombine.high %v1656, 0.0
    %v1661 = vcombine.low %v1633, %v1640
    %v1663 = vunpack.c.l.s4 1983009808
    %v1664 = vunpack.c.0.s8 %v1663
    %v1665 = vlaneseq
    %v1666 = vshrl.u32 %v1665, 7
    %v1667 = vsub.s32 %v1664, %v1666
    %v1668 = vrot.slane %v1661, %v1667
    %v1669 = vcombine.low %v1657, %v1658
    %v1671 = vunpack.c.l.s4 1983009808
    %v1672 = vunpack.c.0.s8 %v1671
    %v1673 = vlaneseq
    %v1674 = vshrl.u32 %v1673, 7
    %v1675 = vsub.s32 %v1672, %v1674
    %v1676 = vrot.slane %v1669, %v1675
    %v1677 = vcombine.low %v1649, %v1656
    %v1679 = vunpack.c.l.s4 1983009808
    %v1680 = vunpack.c.0.s8 %v1679
    %v1681 = vlaneseq
    %v1682 = vshrl.u32 %v1681, 7
    %v1683 = vsub.s32 %v1680, %v1682
    %v1684 = vrot.slane %v1677, %v1683
    %v1685 = vcombine.low %v1659, %v1660
    %v1687 = vunpack.c.l.s4 1983009808
    %v1688 = vunpack.c.0.s8 %v1687
    %v1689 = vlaneseq
    %v1690 = vshrl.u32 %v1689, 7
    %v1691 = vsub.s32 %v1688, %v1690
    %v1692 = vrot.slane %v1685, %v1691
    %v1693 = vcombine.low %v1668, %v1676
    %v1694 = vcombine.high %v1668, %v1676
    %v1696 = vunpack.c.l.s4 1934713408
    %v1697 = vunpack.c.0.s8 %v1696
    %v1698 = vlaneseq
    %v1699 = vshrl.u32 %v1698, 7
    %v1700 = vsub.s32 %v1697, %v1699
    %v1701 = vrot.slane %v1693, %v1700
    %v1703 = vunpack.c.l.s4 1934713408
    %v1704 = vunpack.c.0.s8 %v1703
    %v1705 = vlaneseq
    %v1706 = vshrl.u32 %v1705, 7
    %v1707 = vsub.s32 %v1704, %v1706
    %v1708 = vrot.slane %v1694, %v1707
    %v1709 = vcombine.low %v1684, %v1692
    %v1710 = vcombine.high %v1684, %v1692
    %v1712 = vunpack.c.l.s4 1934713408
    %v1713 = vunpack.c.0.s8 %v1712
    %v1714 = vlaneseq
    %v1715 = vshrl.u32 %v1714, 7
    %v1716 = vsub.s32 %v1713, %v1715
    %v1717 = vrot.slane %v1709, %v1716
    %v1719 = vunpack.c.l.s4 1934713408
    %v1720 = vunpack.c.0.s8 %v1719
    %v1721 = vlaneseq
    %v1722 = vshrl.u32 %v1721, 7
    %v1723 = vsub.s32 %v1720, %v1722
    %v1724 = vrot.slane %v1710, %v1723
    %v1725 = vcombine.low %v1701, %v1717
    %v1726 = vcombine.high %v1701, %v1717
    %v1727 = vcombine.low %v1708, %v1724
    %v1728 = vcombine.high %v1708, %v1724
    %1730 = vrot.lane.b32.xlu0 %v494, 120
    %v1731 = vpop.permute.xlu0 %1730
    %1733 = vrot.lane.b32.xlu0 %v494, 112
    %v1734 = vpop.permute.xlu0 %1733
    %1736 = vrot.lane.b32.xlu0 %v494, 104
    %v1737 = vpop.permute.xlu0 %1736
    %v1739 = vcombine.low %v494, %v1734
    %v1740 = vcombine.high %v494, %v1734
    %v1742 = vunpack.c.l.s4 1983009808
    %v1743 = vunpack.c.0.s8 %v1742
    %v1744 = vlaneseq
    %v1745 = vshrl.u32 %v1744, 7
    %v1746 = vsub.s32 %v1743, %v1745
    %v1747 = vrot.slane %v1739, %v1746
    %v1749 = vunpack.c.l.s4 1983009808
    %v1750 = vunpack.c.0.s8 %v1749
    %v1751 = vlaneseq
    %v1752 = vshrl.u32 %v1751, 7
    %v1753 = vsub.s32 %v1750, %v1752
    %v1754 = vrot.slane %v1740, %v1753
    %v1755 = vcombine.low %v1731, %v1737
    %v1756 = vcombine.high %v1731, %v1737
    %v1758 = vunpack.c.l.s4 1983009808
    %v1759 = vunpack.c.0.s8 %v1758
    %v1760 = vlaneseq
    %v1761 = vshrl.u32 %v1760, 7
    %v1762 = vsub.s32 %v1759, %v1761
    %v1763 = vrot.slane %v1755, %v1762
    %v1765 = vunpack.c.l.s4 1983009808
    %v1766 = vunpack.c.0.s8 %v1765
    %v1767 = vlaneseq
    %v1768 = vshrl.u32 %v1767, 7
    %v1769 = vsub.s32 %v1766, %v1768
    %v1770 = vrot.slane %v1756, %v1769
    %v1771 = vcombine.low %v1747, %v1763
    %v1772 = vcombine.high %v1747, %v1763
    %v1774 = vunpack.c.l.s4 1934713408
    %v1775 = vunpack.c.0.s8 %v1774
    %v1776 = vlaneseq
    %v1777 = vshrl.u32 %v1776, 7
    %v1778 = vsub.s32 %v1775, %v1777
    %v1779 = vrot.slane %v1771, %v1778
    %v1781 = vunpack.c.l.s4 1934713408
    %v1782 = vunpack.c.0.s8 %v1781
    %v1783 = vlaneseq
    %v1784 = vshrl.u32 %v1783, 7
    %v1785 = vsub.s32 %v1782, %v1784
    %v1786 = vrot.slane %v1772, %v1785
    %v1787 = vcombine.low %v1754, %v1770
    %v1788 = vcombine.high %v1754, %v1770
    %v1790 = vunpack.c.l.s4 1934713408
    %v1791 = vunpack.c.0.s8 %v1790
    %v1792 = vlaneseq
    %v1793 = vshrl.u32 %v1792, 7
    %v1794 = vsub.s32 %v1791, %v1793
    %v1795 = vrot.slane %v1787, %v1794
    %v1797 = vunpack.c.l.s4 1934713408
    %v1798 = vunpack.c.0.s8 %v1797
    %v1799 = vlaneseq
    %v1800 = vshrl.u32 %v1799, 7
    %v1801 = vsub.s32 %v1798, %v1800
    %v1802 = vrot.slane %v1788, %v1801
    %v1803 = vcombine.high %v1779, 0.0
    %v1804 = vcombine.high %v1786, 0.0
    %v1805 = vcombine.high %v1795, 0.0
    %v1806 = vcombine.high %v1802, 0.0
    %v1807 = vcombine.low %v1779, %v1786
    %v1809 = vunpack.c.l.s4 1983009808
    %v1810 = vunpack.c.0.s8 %v1809
    %v1811 = vlaneseq
    %v1812 = vshrl.u32 %v1811, 7
    %v1813 = vsub.s32 %v1810, %v1812
    %v1814 = vrot.slane %v1807, %v1813
    %v1815 = vcombine.low %v1803, %v1804
    %v1817 = vunpack.c.l.s4 1983009808
    %v1818 = vunpack.c.0.s8 %v1817
    %v1819 = vlaneseq
    %v1820 = vshrl.u32 %v1819, 7
    %v1821 = vsub.s32 %v1818, %v1820
    %v1822 = vrot.slane %v1815, %v1821
    %v1823 = vcombine.low %v1795, %v1802
    %v1825 = vunpack.c.l.s4 1983009808
    %v1826 = vunpack.c.0.s8 %v1825
    %v1827 = vlaneseq
    %v1828 = vshrl.u32 %v1827, 7
    %v1829 = vsub.s32 %v1826, %v1828
    %v1830 = vrot.slane %v1823, %v1829
    %v1831 = vcombine.low %v1805, %v1806
    %v1833 = vunpack.c.l.s4 1983009808
    %v1834 = vunpack.c.0.s8 %v1833
    %v1835 = vlaneseq
    %v1836 = vshrl.u32 %v1835, 7
    %v1837 = vsub.s32 %v1834, %v1836
    %v1838 = vrot.slane %v1831, %v1837
    %v1839 = vcombine.low %v1814, %v1822
    %v1840 = vcombine.high %v1814, %v1822
    %v1842 = vunpack.c.l.s4 1934713408
    %v1843 = vunpack.c.0.s8 %v1842
    %v1844 = vlaneseq
    %v1845 = vshrl.u32 %v1844, 7
    %v1846 = vsub.s32 %v1843, %v1845
    %v1847 = vrot.slane %v1839, %v1846
    %v1849 = vunpack.c.l.s4 1934713408
    %v1850 = vunpack.c.0.s8 %v1849
    %v1851 = vlaneseq
    %v1852 = vshrl.u32 %v1851, 7
    %v1853 = vsub.s32 %v1850, %v1852
    %v1854 = vrot.slane %v1840, %v1853
    %v1855 = vcombine.low %v1830, %v1838
    %v1856 = vcombine.high %v1830, %v1838
    %v1858 = vunpack.c.l.s4 1934713408
    %v1859 = vunpack.c.0.s8 %v1858
    %v1860 = vlaneseq
    %v1861 = vshrl.u32 %v1860, 7
    %v1862 = vsub.s32 %v1859, %v1861
    %v1863 = vrot.slane %v1855, %v1862
    %v1865 = vunpack.c.l.s4 1934713408
    %v1866 = vunpack.c.0.s8 %v1865
    %v1867 = vlaneseq
    %v1868 = vshrl.u32 %v1867, 7
    %v1869 = vsub.s32 %v1866, %v1868
    %v1870 = vrot.slane %v1856, %v1869
    %v1871 = vcombine.low %v1847, %v1863
    %v1872 = vcombine.high %v1847, %v1863
    %v1873 = vcombine.low %v1854, %v1870
    %v1874 = vcombine.high %v1854, %v1870
    %1876 = vrot.lane.b32.xlu0 %v553, 120
    %v1877 = vpop.permute.xlu0 %1876
    %1879 = vrot.lane.b32.xlu0 %v553, 112
    %v1880 = vpop.permute.xlu0 %1879
    %1882 = vrot.lane.b32.xlu0 %v553, 104
    %v1883 = vpop.permute.xlu0 %1882
    %v1885 = vcombine.low %v553, %v1880
    %v1886 = vcombine.high %v553, %v1880
    %v1888 = vunpack.c.l.s4 1983009808
    %v1889 = vunpack.c.0.s8 %v1888
    %v1890 = vlaneseq
    %v1891 = vshrl.u32 %v1890, 7
    %v1892 = vsub.s32 %v1889, %v1891
    %v1893 = vrot.slane %v1885, %v1892
    %v1895 = vunpack.c.l.s4 1983009808
    %v1896 = vunpack.c.0.s8 %v1895
    %v1897 = vlaneseq
    %v1898 = vshrl.u32 %v1897, 7
    %v1899 = vsub.s32 %v1896, %v1898
    %v1900 = vrot.slane %v1886, %v1899
    %v1901 = vcombine.low %v1877, %v1883
    %v1902 = vcombine.high %v1877, %v1883
    %v1904 = vunpack.c.l.s4 1983009808
    %v1905 = vunpack.c.0.s8 %v1904
    %v1906 = vlaneseq
    %v1907 = vshrl.u32 %v1906, 7
    %v1908 = vsub.s32 %v1905, %v1907
    %v1909 = vrot.slane %v1901, %v1908
    %v1911 = vunpack.c.l.s4 1983009808
    %v1912 = vunpack.c.0.s8 %v1911
    %v1913 = vlaneseq
    %v1914 = vshrl.u32 %v1913, 7
    %v1915 = vsub.s32 %v1912, %v1914
    %v1916 = vrot.slane %v1902, %v1915
    %v1917 = vcombine.low %v1893, %v1909
    %v1918 = vcombine.high %v1893, %v1909
    %v1920 = vunpack.c.l.s4 1934713408
    %v1921 = vunpack.c.0.s8 %v1920
    %v1922 = vlaneseq
    %v1923 = vshrl.u32 %v1922, 7
    %v1924 = vsub.s32 %v1921, %v1923
    %v1925 = vrot.slane %v1917, %v1924
    %v1927 = vunpack.c.l.s4 1934713408
    %v1928 = vunpack.c.0.s8 %v1927
    %v1929 = vlaneseq
    %v1930 = vshrl.u32 %v1929, 7
    %v1931 = vsub.s32 %v1928, %v1930
    %v1932 = vrot.slane %v1918, %v1931
    %v1933 = vcombine.low %v1900, %v1916
    %v1934 = vcombine.high %v1900, %v1916
    %v1936 = vunpack.c.l.s4 1934713408
    %v1937 = vunpack.c.0.s8 %v1936
    %v1938 = vlaneseq
    %v1939 = vshrl.u32 %v1938, 7
    %v1940 = vsub.s32 %v1937, %v1939
    %v1941 = vrot.slane %v1933, %v1940
    %v1943 = vunpack.c.l.s4 1934713408
    %v1944 = vunpack.c.0.s8 %v1943
    %v1945 = vlaneseq
    %v1946 = vshrl.u32 %v1945, 7
    %v1947 = vsub.s32 %v1944, %v1946
    %v1948 = vrot.slane %v1934, %v1947
    %v1949 = vcombine.high %v1925, 0.0
    %v1950 = vcombine.high %v1932, 0.0
    %v1951 = vcombine.high %v1941, 0.0
    %v1952 = vcombine.high %v1948, 0.0
    %v1953 = vcombine.low %v1925, %v1932
    %v1955 = vunpack.c.l.s4 1983009808
    %v1956 = vunpack.c.0.s8 %v1955
    %v1957 = vlaneseq
    %v1958 = vshrl.u32 %v1957, 7
    %v1959 = vsub.s32 %v1956, %v1958
    %v1960 = vrot.slane %v1953, %v1959
    %v1961 = vcombine.low %v1949, %v1950
    %v1963 = vunpack.c.l.s4 1983009808
    %v1964 = vunpack.c.0.s8 %v1963
    %v1965 = vlaneseq
    %v1966 = vshrl.u32 %v1965, 7
    %v1967 = vsub.s32 %v1964, %v1966
    %v1968 = vrot.slane %v1961, %v1967
    %v1969 = vcombine.low %v1941, %v1948
    %v1971 = vunpack.c.l.s4 1983009808
    %v1972 = vunpack.c.0.s8 %v1971
    %v1973 = vlaneseq
    %v1974 = vshrl.u32 %v1973, 7
    %v1975 = vsub.s32 %v1972, %v1974
    %v1976 = vrot.slane %v1969, %v1975
    %v1977 = vcombine.low %v1951, %v1952
    %v1979 = vunpack.c.l.s4 1983009808
    %v1980 = vunpack.c.0.s8 %v1979
    %v1981 = vlaneseq
    %v1982 = vshrl.u32 %v1981, 7
    %v1983 = vsub.s32 %v1980, %v1982
    %v1984 = vrot.slane %v1977, %v1983
    %v1985 = vcombine.low %v1960, %v1968
    %v1986 = vcombine.high %v1960, %v1968
    %v1988 = vunpack.c.l.s4 1934713408
    %v1989 = vunpack.c.0.s8 %v1988
    %v1990 = vlaneseq
    %v1991 = vshrl.u32 %v1990, 7
    %v1992 = vsub.s32 %v1989, %v1991
    %v1993 = vrot.slane %v1985, %v1992
    %v1995 = vunpack.c.l.s4 1934713408
    %v1996 = vunpack.c.0.s8 %v1995
    %v1997 = vlaneseq
    %v1998 = vshrl.u32 %v1997, 7
    %v1999 = vsub.s32 %v1996, %v1998
    %v2000 = vrot.slane %v1986, %v1999
    %v2001 = vcombine.low %v1976, %v1984
    %v2002 = vcombine.high %v1976, %v1984
    %v2004 = vunpack.c.l.s4 1934713408
    %v2005 = vunpack.c.0.s8 %v2004
    %v2006 = vlaneseq
    %v2007 = vshrl.u32 %v2006, 7
    %v2008 = vsub.s32 %v2005, %v2007
    %v2009 = vrot.slane %v2001, %v2008
    %v2011 = vunpack.c.l.s4 1934713408
    %v2012 = vunpack.c.0.s8 %v2011
    %v2013 = vlaneseq
    %v2014 = vshrl.u32 %v2013, 7
    %v2015 = vsub.s32 %v2012, %v2014
    %v2016 = vrot.slane %v2002, %v2015
    %v2017 = vcombine.low %v1993, %v2009
    %v2018 = vcombine.high %v1993, %v2009
    %v2019 = vcombine.low %v2000, %v2016
    %v2020 = vcombine.high %v2000, %v2016
    %v2021 = vpack.c.bf16 %v1725, %v1725
    %v2022 = vpack.c.bf16 %v1726, %v1726
    %v2023 = vpack.c.bf16 %v1727, %v1727
    %v2024 = vpack.c.bf16 %v1728, %v1728
    %v2025 = vpack.c.bf16 %v1871, %v1871
    %v2026 = vpack.c.bf16 %v1872, %v1872
    %v2027 = vpack.c.bf16 %v1873, %v1873
    %v2028 = vpack.c.bf16 %v1874, %v1874
    %v2030 = vsel %vm1008, %v2021, 0
    %v2033 = vsel %vm1008, %v2025, 0
    %2035 = vmatprep.subr.bf16.mxu0 0
    %2036 = vmatpush1.bf16.xpose.msra.mxu0 0
    %2037 = vmatprep.subr.bf16.mxu0 0
    %2038 = vmatpush1.bf16.xpose.msra.mxu0 0
    %2039 = vmatprep.subr.bf16.mxu0 0
    %2040 = vmatpush1.bf16.xpose.msra.mxu0 0
    %2041 = vmatprep.subr.bf16.mxu0 0
    %2042 = vmatpush1.bf16.xpose.msra.mxu0 0
    %2043 = vmatprep.subr.bf16.mxu0 0
    %2044 = vmatpush1.bf16.xpose.msra.mxu0 0
    %2045 = vmatprep.subr.bf16.mxu0 0
    %2046 = vmatpush1.bf16.xpose.msra.mxu0 0
    %2047 = vmatprep.subr.bf16.mxu0 0
    %2048 = vmatpush1.bf16.xpose.msra.mxu0 0
    %2049 = vmatprep.subr.bf16.mxu0 0
    %2050 = vmatpush1.bf16.xpose.msra.mxu0 %v2033
    %2051 = vmatprep.subr.bf16.mxu0 0
    %2052 = vmatpush2.bf16.xpose.msra.mxu0 0
    %2053 = vmatprep.subr.bf16.mxu0 0
    %2054 = vmatpush2.bf16.xpose.msra.mxu0 0
    %2055 = vmatprep.subr.bf16.mxu0 0
    %2056 = vmatpush2.bf16.xpose.msra.mxu0 0
    %2057 = vmatprep.subr.bf16.mxu0 0
    %2058 = vmatpush2.bf16.xpose.msra.mxu0 0
    %2059 = vmatprep.subr.bf16.mxu0 0
    %2060 = vmatpush2.bf16.xpose.msra.mxu0 0
    %2061 = vmatprep.subr.bf16.mxu0 0
    %2062 = vmatpush2.bf16.xpose.msra.mxu0 0
    %2063 = vmatprep.subr.bf16.mxu0 0
    %2064 = vmatpush2.bf16.xpose.msra.mxu0 0
    %2065 = vmatprep.subr.bf16.mxu0 0
    %2066 = vmatpush2.bf16.xpose.msra.mxu0 0
    %2067 = vmatprep.mubr.bf16.mxu0 0
    %2068 = vmatmul.mubr.bf16.gmra.mxu0 %v2030
    %v2069 = vpop.f32.mrf.mxu0
    %v2070 = vadd.f32 %v561, %v2069
    %v2071 = vpop.f32.mrf.mxu0
    %v2072 = vpop.f32.mrf.mxu0
    %v2073 = vpop.f32.mrf.mxu0
    %2074 = vdwg.mxu0
    %v2076 = vsel %vm1008, %v2022, 0
    %v2079 = vsel %vm1008, %v2026, 0
    %2081 = vmatprep.subr.bf16.mxu0 0
    %2082 = vmatpush1.bf16.xpose.msra.mxu0 0
    %2083 = vmatprep.subr.bf16.mxu0 0
    %2084 = vmatpush1.bf16.xpose.msra.mxu0 0
    %2085 = vmatprep.subr.bf16.mxu0 0
    %2086 = vmatpush1.bf16.xpose.msra.mxu0 0
    %2087 = vmatprep.subr.bf16.mxu0 0
    %2088 = vmatpush1.bf16.xpose.msra.mxu0 0
    %2089 = vmatprep.subr.bf16.mxu0 0
    %2090 = vmatpush1.bf16.xpose.msra.mxu0 0
    %2091 = vmatprep.subr.bf16.mxu0 0
    %2092 = vmatpush1.bf16.xpose.msra.mxu0 0
    %2093 = vmatprep.subr.bf16.mxu0 0
    %2094 = vmatpush1.bf16.xpose.msra.mxu0 0
    %2095 = vmatprep.subr.bf16.mxu0 0
    %2096 = vmatpush1.bf16.xpose.msra.mxu0 %v2079
    %2097 = vmatprep.subr.bf16.mxu0 0
    %2098 = vmatpush2.bf16.xpose.msra.mxu0 0
    %2099 = vmatprep.subr.bf16.mxu0 0
    %2100 = vmatpush2.bf16.xpose.msra.mxu0 0
    %2101 = vmatprep.subr.bf16.mxu0 0
    %2102 = vmatpush2.bf16.xpose.msra.mxu0 0
    %2103 = vmatprep.subr.bf16.mxu0 0
    %2104 = vmatpush2.bf16.xpose.msra.mxu0 0
    %2105 = vmatprep.subr.bf16.mxu0 0
    %2106 = vmatpush2.bf16.xpose.msra.mxu0 0
    %2107 = vmatprep.subr.bf16.mxu0 0
    %2108 = vmatpush2.bf16.xpose.msra.mxu0 0
    %2109 = vmatprep.subr.bf16.mxu0 0
    %2110 = vmatpush2.bf16.xpose.msra.mxu0 0
    %2111 = vmatprep.subr.bf16.mxu0 0
    %2112 = vmatpush2.bf16.xpose.msra.mxu0 0
    %2113 = vmatprep.mubr.bf16.mxu0 0
    %2114 = vmatmul.mubr.bf16.gmra.mxu0 %v2076
    %v2115 = vpop.f32.mrf.mxu0
    %v2116 = vadd.f32 %v561, %v2115
    %v2117 = vpop.f32.mrf.mxu0
    %v2118 = vpop.f32.mrf.mxu0
    %v2119 = vpop.f32.mrf.mxu0
    %2120 = vdwg.mxu0
    %v2122 = vsel %vm1008, %v2023, 0
    %v2125 = vsel %vm1008, %v2027, 0
    %2127 = vmatprep.subr.bf16.mxu0 0
    %2128 = vmatpush1.bf16.xpose.msra.mxu0 0
    %2129 = vmatprep.subr.bf16.mxu0 0
    %2130 = vmatpush1.bf16.xpose.msra.mxu0 0
    %2131 = vmatprep.subr.bf16.mxu0 0
    %2132 = vmatpush1.bf16.xpose.msra.mxu0 0
    %2133 = vmatprep.subr.bf16.mxu0 0
    %2134 = vmatpush1.bf16.xpose.msra.mxu0 0
    %2135 = vmatprep.subr.bf16.mxu0 0
    %2136 = vmatpush1.bf16.xpose.msra.mxu0 0
    %2137 = vmatprep.subr.bf16.mxu0 0
    %2138 = vmatpush1.bf16.xpose.msra.mxu0 0
    %2139 = vmatprep.subr.bf16.mxu0 0
    %2140 = vmatpush1.bf16.xpose.msra.mxu0 0
    %2141 = vmatprep.subr.bf16.mxu0 0
    %2142 = vmatpush1.bf16.xpose.msra.mxu0 %v2125
    %2143 = vmatprep.subr.bf16.mxu0 0
    %2144 = vmatpush2.bf16.xpose.msra.mxu0 0
    %2145 = vmatprep.subr.bf16.mxu0 0
    %2146 = vmatpush2.bf16.xpose.msra.mxu0 0
    %2147 = vmatprep.subr.bf16.mxu0 0
    %2148 = vmatpush2.bf16.xpose.msra.mxu0 0
    %2149 = vmatprep.subr.bf16.mxu0 0
    %2150 = vmatpush2.bf16.xpose.msra.mxu0 0
    %2151 = vmatprep.subr.bf16.mxu0 0
    %2152 = vmatpush2.bf16.xpose.msra.mxu0 0
    %2153 = vmatprep.subr.bf16.mxu0 0
    %2154 = vmatpush2.bf16.xpose.msra.mxu0 0
    %2155 = vmatprep.subr.bf16.mxu0 0
    %2156 = vmatpush2.bf16.xpose.msra.mxu0 0
    %2157 = vmatprep.subr.bf16.mxu0 0
    %2158 = vmatpush2.bf16.xpose.msra.mxu0 0
    %2159 = vmatprep.mubr.bf16.mxu0 0
    %2160 = vmatmul.mubr.bf16.gmra.mxu0 %v2122
    %v2161 = vpop.f32.mrf.mxu0
    %v2162 = vadd.f32 %v561, %v2161
    %v2163 = vpop.f32.mrf.mxu0
    %v2164 = vpop.f32.mrf.mxu0
    %v2165 = vpop.f32.mrf.mxu0
    %2166 = vdwg.mxu0
    %v2168 = vsel %vm1008, %v2024, 0
    %v2171 = vsel %vm1008, %v2028, 0
    %2173 = vmatprep.subr.bf16.mxu0 0
    %2174 = vmatpush1.bf16.xpose.msra.mxu0 0
    %2175 = vmatprep.subr.bf16.mxu0 0
    %2176 = vmatpush1.bf16.xpose.msra.mxu0 0
    %2177 = vmatprep.subr.bf16.mxu0 0
    %2178 = vmatpush1.bf16.xpose.msra.mxu0 0
    %2179 = vmatprep.subr.bf16.mxu0 0
    %2180 = vmatpush1.bf16.xpose.msra.mxu0 0
    %2181 = vmatprep.subr.bf16.mxu0 0
    %2182 = vmatpush1.bf16.xpose.msra.mxu0 0
    %2183 = vmatprep.subr.bf16.mxu0 0
    %2184 = vmatpush1.bf16.xpose.msra.mxu0 0
    %2185 = vmatprep.subr.bf16.mxu0 0
    %2186 = vmatpush1.bf16.xpose.msra.mxu0 0
    %2187 = vmatprep.subr.bf16.mxu0 0
    %2188 = vmatpush1.bf16.xpose.msra.mxu0 %v2171
    %2189 = vmatprep.subr.bf16.mxu0 0
    %2190 = vmatpush2.bf16.xpose.msra.mxu0 0
    %2191 = vmatprep.subr.bf16.mxu0 0
    %2192 = vmatpush2.bf16.xpose.msra.mxu0 0
    %2193 = vmatprep.subr.bf16.mxu0 0
    %2194 = vmatpush2.bf16.xpose.msra.mxu0 0
    %2195 = vmatprep.subr.bf16.mxu0 0
    %2196 = vmatpush2.bf16.xpose.msra.mxu0 0
    %2197 = vmatprep.subr.bf16.mxu0 0
    %2198 = vmatpush2.bf16.xpose.msra.mxu0 0
    %2199 = vmatprep.subr.bf16.mxu0 0
    %2200 = vmatpush2.bf16.xpose.msra.mxu0 0
    %2201 = vmatprep.subr.bf16.mxu0 0
    %2202 = vmatpush2.bf16.xpose.msra.mxu0 0
    %2203 = vmatprep.subr.bf16.mxu0 0
    %2204 = vmatpush2.bf16.xpose.msra.mxu0 0
    %2205 = vmatprep.mubr.bf16.mxu0 0
    %2206 = vmatmul.mubr.bf16.gmra.mxu0 %v2168
    %v2207 = vpop.f32.mrf.mxu0
    %v2208 = vadd.f32 %v561, %v2207
    %v2209 = vpop.f32.mrf.mxu0
    %v2210 = vpop.f32.mrf.mxu0
    %v2211 = vpop.f32.mrf.mxu0
    %2212 = vdwg.mxu0
    %v2213 = vsel %vm1008, %v2070, -inf
    %2214 = vmax.xlane.f32.xlu0 %v2213
    %v2215 = vpop.xlane.xlu0 %2214
    %v2216 = vsel %vm1008, %v2116, -inf
    %2217 = vmax.xlane.f32.xlu0 %v2216
    %v2218 = vpop.xlane.xlu0 %2217
    %v2219 = vsel %vm1008, %v2162, -inf
    %2220 = vmax.xlane.f32.xlu0 %v2219
    %v2221 = vpop.xlane.xlu0 %2220
    %v2222 = vsel %vm1008, %v2208, -inf
    %2223 = vmax.xlane.f32.xlu0 %v2222
    %v2224 = vpop.xlane.xlu0 %2223
    %v2225 = vsub.f32 %v2070, %v2215
    %v2226 = vsub.f32 %v2116, %v2218
    %v2227 = vsub.f32 %v2162, %v2221
    %v2228 = vsub.f32 %v2208, %v2224
    %v2229 = vmul.f32 %v2225, 1.442695
    %v2230 = vpow.pop %v2229
    %v2231 = vmul.f32 %v2226, 1.442695
    %v2232 = vpow.pop %v2231
    %v2233 = vmul.f32 %v2227, 1.442695
    %v2234 = vpow.pop %v2233
    %v2235 = vmul.f32 %v2228, 1.442695
    %v2236 = vpow.pop %v2235
    %v2237 = vsel %vm1008, %v2230, 0.0
    %2238 = vadd.xlane.f32.xlu0 %v2237
    %v2239 = vpop.xlane.xlu0 %2238
    %v2240 = vsel %vm1008, %v2232, 0.0
    %2241 = vadd.xlane.f32.xlu0 %v2240
    %v2242 = vpop.xlane.xlu0 %2241
    %v2243 = vsel %vm1008, %v2234, 0.0
    %2244 = vadd.xlane.f32.xlu0 %v2243
    %v2245 = vpop.xlane.xlu0 %2244
    %v2246 = vsel %vm1008, %v2236, 0.0
    %2247 = vadd.xlane.f32.xlu0 %v2246
    %v2248 = vpop.xlane.xlu0 %2247
    %v2249 = vpack.c.bf16 %v2230, %v2230
    %v2250 = vpack.c.bf16 %v2232, %v2232
    %v2251 = vpack.c.bf16 %v2234, %v2234
    %v2252 = vpack.c.bf16 %v2236, %v2236
    %v2253 = vpack.c.bf16 %v2017, %v2017
    %v2254 = vpack.c.bf16 %v2018, %v2018
    %v2255 = vpack.c.bf16 %v2019, %v2019
    %v2256 = vpack.c.bf16 %v2020, %v2020
    %v2258 = vsel %vm1008, %v2249, 0
    %v2261 = vsel %vm1240, %v2253, 0
    %2263 = vmatprep.subr.bf16.mxu0 0
    %2264 = vmatpush1.bf16.msra.mxu0 0
    %2265 = vmatprep.subr.bf16.mxu0 0
    %2266 = vmatpush1.bf16.msra.mxu0 0
    %2267 = vmatprep.subr.bf16.mxu0 0
    %2268 = vmatpush1.bf16.msra.mxu0 0
    %2269 = vmatprep.subr.bf16.mxu0 0
    %2270 = vmatpush1.bf16.msra.mxu0 0
    %2271 = vmatprep.subr.bf16.mxu0 0
    %2272 = vmatpush1.bf16.msra.mxu0 0
    %2273 = vmatprep.subr.bf16.mxu0 0
    %2274 = vmatpush1.bf16.msra.mxu0 0
    %2275 = vmatprep.subr.bf16.mxu0 0
    %2276 = vmatpush1.bf16.msra.mxu0 0
    %2277 = vmatprep.subr.bf16.mxu0 0
    %2278 = vmatpush1.bf16.msra.mxu0 %v2261
    %2279 = vmatprep.subr.bf16.mxu0 0
    %2280 = vmatpush2.bf16.msra.mxu0 0
    %2281 = vmatprep.subr.bf16.mxu0 0
    %2282 = vmatpush2.bf16.msra.mxu0 0
    %2283 = vmatprep.subr.bf16.mxu0 0
    %2284 = vmatpush2.bf16.msra.mxu0 0
    %2285 = vmatprep.subr.bf16.mxu0 0
    %2286 = vmatpush2.bf16.msra.mxu0 0
    %2287 = vmatprep.subr.bf16.mxu0 0
    %2288 = vmatpush2.bf16.msra.mxu0 0
    %2289 = vmatprep.subr.bf16.mxu0 0
    %2290 = vmatpush2.bf16.msra.mxu0 0
    %2291 = vmatprep.subr.bf16.mxu0 0
    %2292 = vmatpush2.bf16.msra.mxu0 0
    %2293 = vmatprep.subr.bf16.mxu0 0
    %2294 = vmatpush2.bf16.msra.mxu0 0
    %2295 = vmatprep.mubr.bf16.mxu0 0
    %2296 = vmatmul.mubr.bf16.gmra.mxu0 %v2258
    %v2297 = vpop.f32.mrf.mxu0
    %v2298 = vadd.f32 0.0, %v2297
    %v2299 = vpop.f32.mrf.mxu0
    %v2300 = vpop.f32.mrf.mxu0
    %v2301 = vpop.f32.mrf.mxu0
    %2302 = vdwg.mxu0
    %v2304 = vsel %vm1008, %v2250, 0
    %v2307 = vsel %vm1240, %v2254, 0
    %2309 = vmatprep.subr.bf16.mxu0 0
    %2310 = vmatpush1.bf16.msra.mxu0 0
    %2311 = vmatprep.subr.bf16.mxu0 0
    %2312 = vmatpush1.bf16.msra.mxu0 0
    %2313 = vmatprep.subr.bf16.mxu0 0
    %2314 = vmatpush1.bf16.msra.mxu0 0
    %2315 = vmatprep.subr.bf16.mxu0 0
    %2316 = vmatpush1.bf16.msra.mxu0 0
    %2317 = vmatprep.subr.bf16.mxu0 0
    %2318 = vmatpush1.bf16.msra.mxu0 0
    %2319 = vmatprep.subr.bf16.mxu0 0
    %2320 = vmatpush1.bf16.msra.mxu0 0
    %2321 = vmatprep.subr.bf16.mxu0 0
    %2322 = vmatpush1.bf16.msra.mxu0 0
    %2323 = vmatprep.subr.bf16.mxu0 0
    %2324 = vmatpush1.bf16.msra.mxu0 %v2307
    %2325 = vmatprep.subr.bf16.mxu0 0
    %2326 = vmatpush2.bf16.msra.mxu0 0
    %2327 = vmatprep.subr.bf16.mxu0 0
    %2328 = vmatpush2.bf16.msra.mxu0 0
    %2329 = vmatprep.subr.bf16.mxu0 0
    %2330 = vmatpush2.bf16.msra.mxu0 0
    %2331 = vmatprep.subr.bf16.mxu0 0
    %2332 = vmatpush2.bf16.msra.mxu0 0
    %2333 = vmatprep.subr.bf16.mxu0 0
    %2334 = vmatpush2.bf16.msra.mxu0 0
    %2335 = vmatprep.subr.bf16.mxu0 0
    %2336 = vmatpush2.bf16.msra.mxu0 0
    %2337 = vmatprep.subr.bf16.mxu0 0
    %2338 = vmatpush2.bf16.msra.mxu0 0
    %2339 = vmatprep.subr.bf16.mxu0 0
    %2340 = vmatpush2.bf16.msra.mxu0 0
    %2341 = vmatprep.mubr.bf16.mxu0 0
    %2342 = vmatmul.mubr.bf16.gmra.mxu0 %v2304
    %v2343 = vpop.f32.mrf.mxu0
    %v2344 = vadd.f32 0.0, %v2343
    %v2345 = vpop.f32.mrf.mxu0
    %v2346 = vpop.f32.mrf.mxu0
    %v2347 = vpop.f32.mrf.mxu0
    %2348 = vdwg.mxu0
    %v2350 = vsel %vm1008, %v2251, 0
    %v2353 = vsel %vm1240, %v2255, 0
    %2355 = vmatprep.subr.bf16.mxu0 0
    %2356 = vmatpush1.bf16.msra.mxu0 0
    %2357 = vmatprep.subr.bf16.mxu0 0
    %2358 = vmatpush1.bf16.msra.mxu0 0
    %2359 = vmatprep.subr.bf16.mxu0 0
    %2360 = vmatpush1.bf16.msra.mxu0 0
    %2361 = vmatprep.subr.bf16.mxu0 0
    %2362 = vmatpush1.bf16.msra.mxu0 0
    %2363 = vmatprep.subr.bf16.mxu0 0
    %2364 = vmatpush1.bf16.msra.mxu0 0
    %2365 = vmatprep.subr.bf16.mxu0 0
    %2366 = vmatpush1.bf16.msra.mxu0 0
    %2367 = vmatprep.subr.bf16.mxu0 0
    %2368 = vmatpush1.bf16.msra.mxu0 0
    %2369 = vmatprep.subr.bf16.mxu0 0
    %2370 = vmatpush1.bf16.msra.mxu0 %v2353
    %2371 = vmatprep.subr.bf16.mxu0 0
    %2372 = vmatpush2.bf16.msra.mxu0 0
    %2373 = vmatprep.subr.bf16.mxu0 0
    %2374 = vmatpush2.bf16.msra.mxu0 0
    %2375 = vmatprep.subr.bf16.mxu0 0
    %2376 = vmatpush2.bf16.msra.mxu0 0
    %2377 = vmatprep.subr.bf16.mxu0 0
    %2378 = vmatpush2.bf16.msra.mxu0 0
    %2379 = vmatprep.subr.bf16.mxu0 0
    %2380 = vmatpush2.bf16.msra.mxu0 0
    %2381 = vmatprep.subr.bf16.mxu0 0
    %2382 = vmatpush2.bf16.msra.mxu0 0
    %2383 = vmatprep.subr.bf16.mxu0 0
    %2384 = vmatpush2.bf16.msra.mxu0 0
    %2385 = vmatprep.subr.bf16.mxu0 0
    %2386 = vmatpush2.bf16.msra.mxu0 0
    %2387 = vmatprep.mubr.bf16.mxu0 0
    %2388 = vmatmul.mubr.bf16.gmra.mxu0 %v2350
    %v2389 = vpop.f32.mrf.mxu0
    %v2390 = vadd.f32 0.0, %v2389
    %v2391 = vpop.f32.mrf.mxu0
    %v2392 = vpop.f32.mrf.mxu0
    %v2393 = vpop.f32.mrf.mxu0
    %2394 = vdwg.mxu0
    %v2396 = vsel %vm1008, %v2252, 0
    %v2399 = vsel %vm1240, %v2256, 0
    %2401 = vmatprep.subr.bf16.mxu0 0
    %2402 = vmatpush1.bf16.msra.mxu0 0
    %2403 = vmatprep.subr.bf16.mxu0 0
    %2404 = vmatpush1.bf16.msra.mxu0 0
    %2405 = vmatprep.subr.bf16.mxu0 0
    %2406 = vmatpush1.bf16.msra.mxu0 0
    %2407 = vmatprep.subr.bf16.mxu0 0
    %2408 = vmatpush1.bf16.msra.mxu0 0
    %2409 = vmatprep.subr.bf16.mxu0 0
    %2410 = vmatpush1.bf16.msra.mxu0 0
    %2411 = vmatprep.subr.bf16.mxu0 0
    %2412 = vmatpush1.bf16.msra.mxu0 0
    %2413 = vmatprep.subr.bf16.mxu0 0
    %2414 = vmatpush1.bf16.msra.mxu0 0
    %2415 = vmatprep.subr.bf16.mxu0 0
    %2416 = vmatpush1.bf16.msra.mxu0 %v2399
    %2417 = vmatprep.subr.bf16.mxu0 0
    %2418 = vmatpush2.bf16.msra.mxu0 0
    %2419 = vmatprep.subr.bf16.mxu0 0
    %2420 = vmatpush2.bf16.msra.mxu0 0
    %2421 = vmatprep.subr.bf16.mxu0 0
    %2422 = vmatpush2.bf16.msra.mxu0 0
    %2423 = vmatprep.subr.bf16.mxu0 0
    %2424 = vmatpush2.bf16.msra.mxu0 0
    %2425 = vmatprep.subr.bf16.mxu0 0
    %2426 = vmatpush2.bf16.msra.mxu0 0
    %2427 = vmatprep.subr.bf16.mxu0 0
    %2428 = vmatpush2.bf16.msra.mxu0 0
    %2429 = vmatprep.subr.bf16.mxu0 0
    %2430 = vmatpush2.bf16.msra.mxu0 0
    %2431 = vmatprep.subr.bf16.mxu0 0
    %2432 = vmatpush2.bf16.msra.mxu0 0
    %2433 = vmatprep.mubr.bf16.mxu0 0
    %2434 = vmatmul.mubr.bf16.gmra.mxu0 %v2396
    %v2435 = vpop.f32.mrf.mxu0
    %v2436 = vadd.f32 0.0, %v2435
    %v2437 = vpop.f32.mrf.mxu0
    %v2438 = vpop.f32.mrf.mxu0
    %v2439 = vpop.f32.mrf.mxu0
    %2440 = vdwg.mxu0
    %v2441 = vrcp.pop %v2239
    %v2442 = vrcp.pop %v2242
    %v2443 = vrcp.pop %v2245
    %v2444 = vrcp.pop %v2248
    %v2445 = vmul.f32 %v2298, %v2441
    %v2446 = vmul.f32 %v2344, %v2442
    %v2447 = vmul.f32 %v2390, %v2443
    %v2448 = vmul.f32 %v2436, %v2444
    %v2449 = vcombine.low %v2445, %v2447
    %v2450 = vcombine.high %v2445, %v2447
    %v2452 = vunpack.c.l.s4 1983009808
    %v2453 = vunpack.c.0.s8 %v2452
    %v2454 = vlaneseq
    %v2455 = vshrl.u32 %v2454, 7
    %v2456 = vsub.s32 %v2453, %v2455
    %v2457 = vrot.slane %v2449, %v2456
    %v2459 = vunpack.c.l.s4 1983009808
    %v2460 = vunpack.c.0.s8 %v2459
    %v2461 = vlaneseq
    %v2462 = vshrl.u32 %v2461, 7
    %v2463 = vsub.s32 %v2460, %v2462
    %v2464 = vrot.slane %v2450, %v2463
    %v2465 = vcombine.low %v2446, %v2448
    %v2466 = vcombine.high %v2446, %v2448
    %v2468 = vunpack.c.l.s4 1983009808
    %v2469 = vunpack.c.0.s8 %v2468
    %v2470 = vlaneseq
    %v2471 = vshrl.u32 %v2470, 7
    %v2472 = vsub.s32 %v2469, %v2471
    %v2473 = vrot.slane %v2465, %v2472
    %v2475 = vunpack.c.l.s4 1983009808
    %v2476 = vunpack.c.0.s8 %v2475
    %v2477 = vlaneseq
    %v2478 = vshrl.u32 %v2477, 7
    %v2479 = vsub.s32 %v2476, %v2478
    %v2480 = vrot.slane %v2466, %v2479
    %v2481 = vcombine.low %v2457, %v2473
    %v2482 = vcombine.high %v2457, %v2473
    %v2484 = vunpack.c.l.s4 1934713408
    %v2485 = vunpack.c.0.s8 %v2484
    %v2486 = vlaneseq
    %v2487 = vshrl.u32 %v2486, 7
    %v2488 = vsub.s32 %v2485, %v2487
    %v2489 = vrot.slane %v2481, %v2488
    %v2491 = vunpack.c.l.s4 1934713408
    %v2492 = vunpack.c.0.s8 %v2491
    %v2493 = vlaneseq
    %v2494 = vshrl.u32 %v2493, 7
    %v2495 = vsub.s32 %v2492, %v2494
    %v2496 = vrot.slane %v2482, %v2495
    %v2497 = vcombine.low %v2464, %v2480
    %v2498 = vcombine.high %v2464, %v2480
    %v2500 = vunpack.c.l.s4 1934713408
    %v2501 = vunpack.c.0.s8 %v2500
    %v2502 = vlaneseq
    %v2503 = vshrl.u32 %v2502, 7
    %v2504 = vsub.s32 %v2501, %v2503
    %v2505 = vrot.slane %v2497, %v2504
    %v2507 = vunpack.c.l.s4 1934713408
    %v2508 = vunpack.c.0.s8 %v2507
    %v2509 = vlaneseq
    %v2510 = vshrl.u32 %v2509, 7
    %v2511 = vsub.s32 %v2508, %v2510
    %v2512 = vrot.slane %v2498, %v2511
    %v2513 = vcombine.high %v2489, 0.0
    %v2514 = vcombine.high %v2496, 0.0
    %v2515 = vcombine.high %v2505, 0.0
    %v2516 = vcombine.high %v2512, 0.0
    %v2517 = vcombine.low %v2489, %v2496
    %v2519 = vunpack.c.l.s4 1983009808
    %v2520 = vunpack.c.0.s8 %v2519
    %v2521 = vlaneseq
    %v2522 = vshrl.u32 %v2521, 7
    %v2523 = vsub.s32 %v2520, %v2522
    %v2524 = vrot.slane %v2517, %v2523
    %v2525 = vcombine.low %v2513, %v2514
    %v2527 = vunpack.c.l.s4 1983009808
    %v2528 = vunpack.c.0.s8 %v2527
    %v2529 = vlaneseq
    %v2530 = vshrl.u32 %v2529, 7
    %v2531 = vsub.s32 %v2528, %v2530
    %v2532 = vrot.slane %v2525, %v2531
    %v2533 = vcombine.low %v2505, %v2512
    %v2535 = vunpack.c.l.s4 1983009808
    %v2536 = vunpack.c.0.s8 %v2535
    %v2537 = vlaneseq
    %v2538 = vshrl.u32 %v2537, 7
    %v2539 = vsub.s32 %v2536, %v2538
    %v2540 = vrot.slane %v2533, %v2539
    %v2541 = vcombine.low %v2515, %v2516
    %v2543 = vunpack.c.l.s4 1983009808
    %v2544 = vunpack.c.0.s8 %v2543
    %v2545 = vlaneseq
    %v2546 = vshrl.u32 %v2545, 7
    %v2547 = vsub.s32 %v2544, %v2546
    %v2548 = vrot.slane %v2541, %v2547
    %v2549 = vcombine.low %v2524, %v2532
    %v2550 = vcombine.high %v2524, %v2532
    %v2552 = vunpack.c.l.s4 1934713408
    %v2553 = vunpack.c.0.s8 %v2552
    %v2554 = vlaneseq
    %v2555 = vshrl.u32 %v2554, 7
    %v2556 = vsub.s32 %v2553, %v2555
    %v2557 = vrot.slane %v2549, %v2556
    %v2559 = vunpack.c.l.s4 1934713408
    %v2560 = vunpack.c.0.s8 %v2559
    %v2561 = vlaneseq
    %v2562 = vshrl.u32 %v2561, 7
    %v2563 = vsub.s32 %v2560, %v2562
    %v2564 = vrot.slane %v2550, %v2563
    %v2565 = vcombine.low %v2540, %v2548
    %v2566 = vcombine.high %v2540, %v2548
    %v2568 = vunpack.c.l.s4 1934713408
    %v2569 = vunpack.c.0.s8 %v2568
    %v2570 = vlaneseq
    %v2571 = vshrl.u32 %v2570, 7
    %v2572 = vsub.s32 %v2569, %v2571
    %v2573 = vrot.slane %v2565, %v2572
    %v2575 = vunpack.c.l.s4 1934713408
    %v2576 = vunpack.c.0.s8 %v2575
    %v2577 = vlaneseq
    %v2578 = vshrl.u32 %v2577, 7
    %v2579 = vsub.s32 %v2576, %v2578
    %v2580 = vrot.slane %v2566, %v2579
    %v2581 = vcombine.low %v2557, %v2573
    %v2582 = vcombine.high %v2557, %v2573
    %v2583 = vcombine.low %v2564, %v2580
    %v2584 = vcombine.high %v2564, %v2580
    %2586 = vrot.lane.b32.xlu0 %v2582, 8
    %v2587 = vpop.permute.xlu0 %2586
    %2590 = vrot.lane.b32.xlu0 %v2583, 16
    %v2591 = vpop.permute.xlu0 %2590
    %2594 = vrot.lane.b32.xlu0 %v2584, 24
    %v2595 = vpop.permute.xlu0 %2594
    %v2597 = vsel %vm1008, %v2581, %v2587
    %v2598 = vsel %vm1579, %v2597, %v2591
    %v2599 = vsel %vm1581, %v2598, %v2595
    %v2600 = vpack.c.bf16 %v2599, %v1582
    %v2602 = vlaneseq
    %v2603 = vshrl.u32 %v2602, 7
    %v2604 = vsub.s32 0, %v2603
    %v2605 = vrot.slane %v372, %v2604
    %v2611 = vunpack.c.l.b16 %v368
    %v2612 = vunpack.c.l.b16 %v369
    %v2613 = vunpack.c.l.b16 %v370
    %v2614 = vunpack.c.l.b16 %v371
    %v2615 = vpack.c.b16 %v2612, %v2611
    %v2616 = vpack.c.b16 %v2614, %v2613
    %v2620 = vsel %vm309, %v2600, 0
    %2622 = vmatprep.subr.bf16.mxu0 0
    %2623 = vmatpush1.bf16.msra.mxu0 0
    %2624 = vmatprep.subr.bf16.mxu0 0
    %2625 = vmatpush1.bf16.msra.mxu0 0
    %2626 = vmatprep.subr.bf16.mxu0 0
    %2627 = vmatpush1.bf16.msra.mxu0 0
    %2628 = vmatprep.subr.bf16.mxu0 0
    %2629 = vmatpush1.bf16.msra.mxu0 0
    %2630 = vmatprep.subr.bf16.mxu0 0
    %2631 = vmatpush1.bf16.msra.mxu0 0
    %2632 = vmatprep.subr.bf16.mxu0 0
    %2633 = vmatpush1.bf16.msra.mxu0 0
    %2634 = vmatprep.subr.bf16.mxu0 0
    %2635 = vmatpush1.bf16.msra.mxu0 %v2616
    %2636 = vmatprep.subr.bf16.mxu0 0
    %2637 = vmatpush1.bf16.msra.mxu0 %v2615
    %2638 = vmatprep.subr.bf16.mxu0 0
    %2639 = vmatpush2.bf16.msra.mxu0 0
    %2640 = vmatprep.subr.bf16.mxu0 0
    %2641 = vmatpush2.bf16.msra.mxu0 0
    %2642 = vmatprep.subr.bf16.mxu0 0
    %2643 = vmatpush2.bf16.msra.mxu0 0
    %2644 = vmatprep.subr.bf16.mxu0 0
    %2645 = vmatpush2.bf16.msra.mxu0 0
    %2646 = vmatprep.subr.bf16.mxu0 0
    %2647 = vmatpush2.bf16.msra.mxu0 0
    %2648 = vmatprep.subr.bf16.mxu0 0
    %2649 = vmatpush2.bf16.msra.mxu0 0
    %2650 = vmatprep.subr.bf16.mxu0 0
    %2651 = vmatpush2.bf16.msra.mxu0 0
    %2652 = vmatprep.subr.bf16.mxu0 0
    %2653 = vmatpush2.bf16.msra.mxu0 0
    %2654 = vmatprep.mubr.bf16.mxu0 0
    %2655 = vmatmul.mubr.bf16.gmra.mxu0 %v2620
    %v2656 = vpop.f32.mrf.mxu0
    %v2657 = vadd.f32 %v2605, %v2656
    %v2658 = vpop.f32.mrf.mxu0
    %v2659 = vpop.f32.mrf.mxu0
    %v2660 = vadd.f32 %v2605, %v2659
    %v2661 = vpop.f32.mrf.mxu0
    %2662 = vdwg.mxu0
    %v2663 = vadd.f32 %v301, %v2657
    %v2664 = vadd.f32 %v302, %v2660
    %v2665 = vld [vmem:[#allocation17] sm:$0x1]
    %v2666 = vld [vmem:[#allocation19] sm:$0x1]
    %v2667 = vsel %vm309, %v2663, 0.0
    %2668 = vadd.xlane.f32.xlu0 %v2667
    %v2669 = vpop.xlane.xlu0 %2668
    %v2670 = vsel %vm309, %v2664, 0.0
    %2671 = vadd.xlane.f32.xlu0 %v2670
    %v2672 = vpop.xlane.xlu0 %2671
    %v2673 = vmul.f32 %v2669, %v316
    %v2674 = vmul.f32 %v2672, %v316
    %v2675 = vsub.f32 %v2663, %v2673
    %v2676 = vsub.f32 %v2664, %v2674
    %v2677 = vmul.f32 %v2675, %v2675
    %v2678 = vmul.f32 %v2676, %v2676
    %v2679 = vsel %vm309, %v2677, 0.0
    %2680 = vadd.xlane.f32.xlu0 %v2679
    %v2681 = vpop.xlane.xlu0 %2680
    %v2682 = vsel %vm309, %v2678, 0.0
    %2683 = vadd.xlane.f32.xlu0 %v2682
    %v2684 = vpop.xlane.xlu0 %2683
    %v2685 = vmul.f32 %v2681, %v316
    %v2686 = vmul.f32 %v2684, %v316
    %v2687 = vadd.f32 %v2685, 1e-05
    %v2688 = vadd.f32 %v2686, 1e-05
    %v2689 = vrsqrt.pop %v2687
    %v2690 = vrsqrt.pop %v2688
    %v2691 = vmul.f32 %v2675, %v2689
    %v2692 = vmul.f32 %v2676, %v2690
    %v2694 = vlaneseq
    %v2695 = vshrl.u32 %v2694, 7
    %v2696 = vsub.s32 0, %v2695
    %v2697 = vrot.slane %v2665, %v2696
    %v2699 = vmul.f32 %v2691, %v2697
    %v2700 = vmul.f32 %v2692, %v2697
    %v2702 = vlaneseq
    %v2703 = vshrl.u32 %v2702, 7
    %v2704 = vsub.s32 0, %v2703
    %v2705 = vrot.slane %v2666, %v2704
    %v2707 = vadd.f32 %v2699, %v2705
    %v2708 = vadd.f32 %v2700, %v2705
    %v2709 = vld [vmem:[#allocation20] sm:$0xf]
    %v2710 = vld [vmem:[#allocation20 + $0x4] sm:$0xf]
    %v2711 = vld [vmem:[#allocation20 + $0x8] sm:$0xf]
    %v2712 = vld [vmem:[#allocation20 + $0xc] sm:$0xf]
    %v2713 = vld [vmem:[#allocation22] sm:$0x1]
    %v2714 = vld [vmem:[#allocation23] sm:$0xf]
    %v2715 = vld [vmem:[#allocation23 + $0x4] sm:$0xf]
    %v2716 = vld [vmem:[#allocation23 + $0x8] sm:$0xf]
    %v2717 = vld [vmem:[#allocation23 + $0xc] sm:$0xf]
    %v2718 = vld [vmem:[#allocation25] sm:$0x1]
    %v2719 = vld [vmem:[%s18] sm:$0xf]
    %v2720 = vld [vmem:[%s18 + $0x4] sm:$0xf]
    %v2721 = vld [vmem:[%s18 + $0x8] sm:$0xf]
    %v2722 = vld [vmem:[%s18 + $0xc] sm:$0xf]
    %v2723 = vld [vmem:[%s19] sm:$0x1]
    %v2724 = vld [vmem:[#allocation26] sm:$0xf]
    %v2725 = vld [vmem:[#allocation26 + $0x4] sm:$0xf]
    %v2726 = vld [vmem:[#allocation26 + $0x8] sm:$0xf]
    %v2727 = vld [vmem:[#allocation26 + $0xc] sm:$0xf]
    %v2728 = vld [vmem:[%s21] sm:$0x1]
    %v2729 = vpack.c.bf16 %v2708, %v2707
    %v2730 = vpack.c.bf16 %v304, %v303
    %v2731 = vpack.c.bf16 %v306, %v305
    %v2733 = vlaneseq
    %v2734 = vshrl.u32 %v2733, 7
    %v2735 = vsub.s32 0, %v2734
    %v2736 = vrot.slane %v2713, %v2735
    %v2742 = vunpack.c.l.b16 %v2709
    %v2743 = vunpack.c.l.b16 %v2710
    %v2744 = vunpack.c.l.b16 %v2711
    %v2745 = vunpack.c.l.b16 %v2712
    %v2746 = vpack.c.b16 %v2743, %v2742
    %v2747 = vpack.c.b16 %v2745, %v2744
    %v2751 = vsel %vm309, %v2729, 0
    %2753 = vmatprep.subr.bf16.mxu0 0
    %2754 = vmatpush1.bf16.msra.mxu0 0
    %2755 = vmatprep.subr.bf16.mxu0 0
    %2756 = vmatpush1.bf16.msra.mxu0 0
    %2757 = vmatprep.subr.bf16.mxu0 0
    %2758 = vmatpush1.bf16.msra.mxu0 0
    %2759 = vmatprep.subr.bf16.mxu0 0
    %2760 = vmatpush1.bf16.msra.mxu0 0
    %2761 = vmatprep.subr.bf16.mxu0 0
    %2762 = vmatpush1.bf16.msra.mxu0 0
    %2763 = vmatprep.subr.bf16.mxu0 0
    %2764 = vmatpush1.bf16.msra.mxu0 0
    %2765 = vmatprep.subr.bf16.mxu0 0
    %2766 = vmatpush1.bf16.msra.mxu0 %v2747
    %2767 = vmatprep.subr.bf16.mxu0 0
    %2768 = vmatpush1.bf16.msra.mxu0 %v2746
    %2769 = vmatprep.subr.bf16.mxu0 0
    %2770 = vmatpush2.bf16.msra.mxu0 0
    %2771 = vmatprep.subr.bf16.mxu0 0
    %2772 = vmatpush2.bf16.msra.mxu0 0
    %2773 = vmatprep.subr.bf16.mxu0 0
    %2774 = vmatpush2.bf16.msra.mxu0 0
    %2775 = vmatprep.subr.bf16.mxu0 0
    %2776 = vmatpush2.bf16.msra.mxu0 0
    %2777 = vmatprep.subr.bf16.mxu0 0
    %2778 = vmatpush2.bf16.msra.mxu0 0
    %2779 = vmatprep.subr.bf16.mxu0 0
    %2780 = vmatpush2.bf16.msra.mxu0 0
    %2781 = vmatprep.subr.bf16.mxu0 0
    %2782 = vmatpush2.bf16.msra.mxu0 0
    %2783 = vmatprep.subr.bf16.mxu0 0
    %2784 = vmatpush2.bf16.msra.mxu0 0
    %2785 = vmatprep.mubr.bf16.mxu0 0
    %2786 = vmatmul.mubr.bf16.gmra.mxu0 %v2751
    %v2787 = vpop.f32.mrf.mxu0
    %v2788 = vadd.f32 %v2736, %v2787
    %v2789 = vpop.f32.mrf.mxu0
    %v2790 = vpop.f32.mrf.mxu0
    %v2791 = vadd.f32 %v2736, %v2790
    %v2792 = vpop.f32.mrf.mxu0
    %2793 = vdwg.mxu0
    %v2794 = vmul.f32 %v2788, 0.35355338
    %v2795 = vmul.f32 %v2791, 0.35355338
    %v2797 = vlaneseq
    %v2798 = vshrl.u32 %v2797, 7
    %v2799 = vsub.s32 0, %v2798
    %v2800 = vrot.slane %v2718, %v2799
    %v2806 = vunpack.c.l.b16 %v2714
    %v2807 = vunpack.c.l.b16 %v2715
    %v2808 = vunpack.c.l.b16 %v2716
    %v2809 = vunpack.c.l.b16 %v2717
    %v2810 = vpack.c.b16 %v2807, %v2806
    %v2811 = vpack.c.b16 %v2809, %v2808
    %v2815 = vsel %vm309, %v2730, 0
    %v2818 = vsel %vm309, %v2731, 0
    %2820 = vmatprep.subr.bf16.mxu0 0
    %2821 = vmatpush1.bf16.msra.mxu0 0
    %2822 = vmatprep.subr.bf16.mxu0 0
    %2823 = vmatpush1.bf16.msra.mxu0 0
    %2824 = vmatprep.subr.bf16.mxu0 0
    %2825 = vmatpush1.bf16.msra.mxu0 0
    %2826 = vmatprep.subr.bf16.mxu0 0
    %2827 = vmatpush1.bf16.msra.mxu0 0
    %2828 = vmatprep.subr.bf16.mxu0 0
    %2829 = vmatpush1.bf16.msra.mxu0 0
    %2830 = vmatprep.subr.bf16.mxu0 0
    %2831 = vmatpush1.bf16.msra.mxu0 0
    %2832 = vmatprep.subr.bf16.mxu0 0
    %2833 = vmatpush1.bf16.msra.mxu0 %v2811
    %2834 = vmatprep.subr.bf16.mxu0 0
    %2835 = vmatpush1.bf16.msra.mxu0 %v2810
    %2836 = vmatprep.subr.bf16.mxu0 0
    %2837 = vmatpush2.bf16.msra.mxu0 0
    %2838 = vmatprep.subr.bf16.mxu0 0
    %2839 = vmatpush2.bf16.msra.mxu0 0
    %2840 = vmatprep.subr.bf16.mxu0 0
    %2841 = vmatpush2.bf16.msra.mxu0 0
    %2842 = vmatprep.subr.bf16.mxu0 0
    %2843 = vmatpush2.bf16.msra.mxu0 0
    %2844 = vmatprep.subr.bf16.mxu0 0
    %2845 = vmatpush2.bf16.msra.mxu0 0
    %2846 = vmatprep.subr.bf16.mxu0 0
    %2847 = vmatpush2.bf16.msra.mxu0 0
    %2848 = vmatprep.subr.bf16.mxu0 0
    %2849 = vmatpush2.bf16.msra.mxu0 0
    %2850 = vmatprep.subr.bf16.mxu0 0
    %2851 = vmatpush2.bf16.msra.mxu0 0
    %2852 = vmatprep.mubr.bf16.mxu0 0
    %2853 = vmatmul.mubr.bf16.gmra.mxu0 %v2815
    %v2854 = vpop.f32.mrf.mxu0
    %v2855 = vadd.f32 %v2800, %v2854
    %v2856 = vpop.f32.mrf.mxu0
    %v2857 = vpop.f32.mrf.mxu0
    %v2858 = vadd.f32 %v2800, %v2857
    %v2859 = vpop.f32.mrf.mxu0
    %2860 = vmatprep.mubr.bf16.mxu0 0
    %2861 = vmatmul.mubr.bf16.gmra.mxu0 %v2818
    %v2862 = vpop.f32.mrf.mxu0
    %v2863 = vadd.f32 %v2800, %v2862
    %v2864 = vpop.f32.mrf.mxu0
    %v2865 = vpop.f32.mrf.mxu0
    %v2866 = vadd.f32 %v2800, %v2865
    %v2867 = vpop.f32.mrf.mxu0
    %2868 = vdwg.mxu0
    %v2870 = vlaneseq
    %v2871 = vshrl.u32 %v2870, 7
    %v2872 = vsub.s32 0, %v2871
    %v2873 = vrot.slane %v2723, %v2872
    %v2879 = vunpack.c.l.b16 %v2719
    %v2880 = vunpack.c.l.b16 %v2720
    %v2881 = vunpack.c.l.b16 %v2721
    %v2882 = vunpack.c.l.b16 %v2722
    %v2883 = vpack.c.b16 %v2880, %v2879
    %v2884 = vpack.c.b16 %v2882, %v2881
    %2887 = vmatprep.subr.bf16.mxu0 0
    %2888 = vmatpush1.bf16.msra.mxu0 0
    %2889 = vmatprep.subr.bf16.mxu0 0
    %2890 = vmatpush1.bf16.msra.mxu0 0
    %2891 = vmatprep.subr.bf16.mxu0 0
    %2892 = vmatpush1.bf16.msra.mxu0 0
    %2893 = vmatprep.subr.bf16.mxu0 0
    %2894 = vmatpush1.bf16.msra.mxu0 0
    %2895 = vmatprep.subr.bf16.mxu0 0
    %2896 = vmatpush1.bf16.msra.mxu0 0
    %2897 = vmatprep.subr.bf16.mxu0 0
    %2898 = vmatpush1.bf16.msra.mxu0 0
    %2899 = vmatprep.subr.bf16.mxu0 0
    %2900 = vmatpush1.bf16.msra.mxu0 %v2884
    %2901 = vmatprep.subr.bf16.mxu0 0
    %2902 = vmatpush1.bf16.msra.mxu0 %v2883
    %2903 = vmatprep.subr.bf16.mxu0 0
    %2904 = vmatpush2.bf16.msra.mxu0 0
    %2905 = vmatprep.subr.bf16.mxu0 0
    %2906 = vmatpush2.bf16.msra.mxu0 0
    %2907 = vmatprep.subr.bf16.mxu0 0
    %2908 = vmatpush2.bf16.msra.mxu0 0
    %2909 = vmatprep.subr.bf16.mxu0 0
    %2910 = vmatpush2.bf16.msra.mxu0 0
    %2911 = vmatprep.subr.bf16.mxu0 0
    %2912 = vmatpush2.bf16.msra.mxu0 0
    %2913 = vmatprep.subr.bf16.mxu0 0
    %2914 = vmatpush2.bf16.msra.mxu0 0
    %2915 = vmatprep.subr.bf16.mxu0 0
    %2916 = vmatpush2.bf16.msra.mxu0 0
    %2917 = vmatprep.subr.bf16.mxu0 0
    %2918 = vmatpush2.bf16.msra.mxu0 0
    %2919 = vmatprep.mubr.bf16.mxu0 0
    %2920 = vmatmul.mubr.bf16.gmra.mxu0 %v2815
    %v2921 = vpop.f32.mrf.mxu0
    %v2922 = vadd.f32 %v2873, %v2921
    %v2923 = vpop.f32.mrf.mxu0
    %v2924 = vpop.f32.mrf.mxu0
    %v2925 = vadd.f32 %v2873, %v2924
    %v2926 = vpop.f32.mrf.mxu0
    %2927 = vmatprep.mubr.bf16.mxu0 0
    %2928 = vmatmul.mubr.bf16.gmra.mxu0 %v2818
    %v2929 = vpop.f32.mrf.mxu0
    %v2930 = vadd.f32 %v2873, %v2929
    %v2931 = vpop.f32.mrf.mxu0
    %v2932 = vpop.f32.mrf.mxu0
    %v2933 = vadd.f32 %v2873, %v2932
    %v2934 = vpop.f32.mrf.mxu0
    %2935 = vdwg.mxu0
    %2937 = vrot.lane.b32.xlu0 %v2794, 120
    %v2938 = vpop.permute.xlu0 %2937
    %2940 = vrot.lane.b32.xlu0 %v2794, 112
    %v2941 = vpop.permute.xlu0 %2940
    %2943 = vrot.lane.b32.xlu0 %v2794, 104
    %v2944 = vpop.permute.xlu0 %2943
    %v2946 = vcombine.low %v2794, %v2941
    %v2947 = vcombine.high %v2794, %v2941
    %v2949 = vunpack.c.l.s4 1983009808
    %v2950 = vunpack.c.0.s8 %v2949
    %v2951 = vlaneseq
    %v2952 = vshrl.u32 %v2951, 7
    %v2953 = vsub.s32 %v2950, %v2952
    %v2954 = vrot.slane %v2946, %v2953
    %v2956 = vunpack.c.l.s4 1983009808
    %v2957 = vunpack.c.0.s8 %v2956
    %v2958 = vlaneseq
    %v2959 = vshrl.u32 %v2958, 7
    %v2960 = vsub.s32 %v2957, %v2959
    %v2961 = vrot.slane %v2947, %v2960
    %v2962 = vcombine.low %v2938, %v2944
    %v2963 = vcombine.high %v2938, %v2944
    %v2965 = vunpack.c.l.s4 1983009808
    %v2966 = vunpack.c.0.s8 %v2965
    %v2967 = vlaneseq
    %v2968 = vshrl.u32 %v2967, 7
    %v2969 = vsub.s32 %v2966, %v2968
    %v2970 = vrot.slane %v2962, %v2969
    %v2972 = vunpack.c.l.s4 1983009808
    %v2973 = vunpack.c.0.s8 %v2972
    %v2974 = vlaneseq
    %v2975 = vshrl.u32 %v2974, 7
    %v2976 = vsub.s32 %v2973, %v2975
    %v2977 = vrot.slane %v2963, %v2976
    %v2978 = vcombine.low %v2954, %v2970
    %v2979 = vcombine.high %v2954, %v2970
    %v2981 = vunpack.c.l.s4 1934713408
    %v2982 = vunpack.c.0.s8 %v2981
    %v2983 = vlaneseq
    %v2984 = vshrl.u32 %v2983, 7
    %v2985 = vsub.s32 %v2982, %v2984
    %v2986 = vrot.slane %v2978, %v2985
    %v2988 = vunpack.c.l.s4 1934713408
    %v2989 = vunpack.c.0.s8 %v2988
    %v2990 = vlaneseq
    %v2991 = vshrl.u32 %v2990, 7
    %v2992 = vsub.s32 %v2989, %v2991
    %v2993 = vrot.slane %v2979, %v2992
    %v2994 = vcombine.low %v2961, %v2977
    %v2995 = vcombine.high %v2961, %v2977
    %v2997 = vunpack.c.l.s4 1934713408
    %v2998 = vunpack.c.0.s8 %v2997
    %v2999 = vlaneseq
    %v3000 = vshrl.u32 %v2999, 7
    %v3001 = vsub.s32 %v2998, %v3000
    %v3002 = vrot.slane %v2994, %v3001
    %v3004 = vunpack.c.l.s4 1934713408
    %v3005 = vunpack.c.0.s8 %v3004
    %v3006 = vlaneseq
    %v3007 = vshrl.u32 %v3006, 7
    %v3008 = vsub.s32 %v3005, %v3007
    %v3009 = vrot.slane %v2995, %v3008
    %v3010 = vcombine.high %v2986, 0.0
    %v3011 = vcombine.high %v2993, 0.0
    %v3012 = vcombine.high %v3002, 0.0
    %v3013 = vcombine.high %v3009, 0.0
    %v3014 = vcombine.low %v2986, %v2993
    %v3016 = vunpack.c.l.s4 1983009808
    %v3017 = vunpack.c.0.s8 %v3016
    %v3018 = vlaneseq
    %v3019 = vshrl.u32 %v3018, 7
    %v3020 = vsub.s32 %v3017, %v3019
    %v3021 = vrot.slane %v3014, %v3020
    %v3022 = vcombine.low %v3010, %v3011
    %v3024 = vunpack.c.l.s4 1983009808
    %v3025 = vunpack.c.0.s8 %v3024
    %v3026 = vlaneseq
    %v3027 = vshrl.u32 %v3026, 7
    %v3028 = vsub.s32 %v3025, %v3027
    %v3029 = vrot.slane %v3022, %v3028
    %v3030 = vcombine.low %v3002, %v3009
    %v3032 = vunpack.c.l.s4 1983009808
    %v3033 = vunpack.c.0.s8 %v3032
    %v3034 = vlaneseq
    %v3035 = vshrl.u32 %v3034, 7
    %v3036 = vsub.s32 %v3033, %v3035
    %v3037 = vrot.slane %v3030, %v3036
    %v3038 = vcombine.low %v3012, %v3013
    %v3040 = vunpack.c.l.s4 1983009808
    %v3041 = vunpack.c.0.s8 %v3040
    %v3042 = vlaneseq
    %v3043 = vshrl.u32 %v3042, 7
    %v3044 = vsub.s32 %v3041, %v3043
    %v3045 = vrot.slane %v3038, %v3044
    %v3046 = vcombine.low %v3021, %v3029
    %v3047 = vcombine.high %v3021, %v3029
    %v3049 = vunpack.c.l.s4 1934713408
    %v3050 = vunpack.c.0.s8 %v3049
    %v3051 = vlaneseq
    %v3052 = vshrl.u32 %v3051, 7
    %v3053 = vsub.s32 %v3050, %v3052
    %v3054 = vrot.slane %v3046, %v3053
    %v3056 = vunpack.c.l.s4 1934713408
    %v3057 = vunpack.c.0.s8 %v3056
    %v3058 = vlaneseq
    %v3059 = vshrl.u32 %v3058, 7
    %v3060 = vsub.s32 %v3057, %v3059
    %v3061 = vrot.slane %v3047, %v3060
    %v3062 = vcombine.low %v3037, %v3045
    %v3063 = vcombine.high %v3037, %v3045
    %v3065 = vunpack.c.l.s4 1934713408
    %v3066 = vunpack.c.0.s8 %v3065
    %v3067 = vlaneseq
    %v3068 = vshrl.u32 %v3067, 7
    %v3069 = vsub.s32 %v3066, %v3068
    %v3070 = vrot.slane %v3062, %v3069
    %v3072 = vunpack.c.l.s4 1934713408
    %v3073 = vunpack.c.0.s8 %v3072
    %v3074 = vlaneseq
    %v3075 = vshrl.u32 %v3074, 7
    %v3076 = vsub.s32 %v3073, %v3075
    %v3077 = vrot.slane %v3063, %v3076
    %v3078 = vcombine.low %v3054, %v3070
    %v3079 = vcombine.high %v3054, %v3070
    %v3080 = vcombine.low %v3061, %v3077
    %v3081 = vcombine.high %v3061, %v3077
    %3084 = vrot.lane.b32.xlu0 %v2855, 120
    %v3085 = vpop.permute.xlu0 %3084
    %3086 = vrot.lane.b32.xlu0 %v2858, 120
    %v3087 = vpop.permute.xlu0 %3086
    %3090 = vrot.lane.b32.xlu0 %v2855, 112
    %v3091 = vpop.permute.xlu0 %3090
    %3092 = vrot.lane.b32.xlu0 %v2858, 112
    %v3093 = vpop.permute.xlu0 %3092
    %3096 = vrot.lane.b32.xlu0 %v2855, 104
    %v3097 = vpop.permute.xlu0 %3096
    %3098 = vrot.lane.b32.xlu0 %v2858, 104
    %v3099 = vpop.permute.xlu0 %3098
    %v3102 = vcombine.low %v2855, %v3091
    %v3103 = vcombine.high %v2855, %v3091
    %v3105 = vunpack.c.l.s4 1983009808
    %v3106 = vunpack.c.0.s8 %v3105
    %v3107 = vlaneseq
    %v3108 = vshrl.u32 %v3107, 7
    %v3109 = vsub.s32 %v3106, %v3108
    %v3110 = vrot.slane %v3102, %v3109
    %v3112 = vunpack.c.l.s4 1983009808
    %v3113 = vunpack.c.0.s8 %v3112
    %v3114 = vlaneseq
    %v3115 = vshrl.u32 %v3114, 7
    %v3116 = vsub.s32 %v3113, %v3115
    %v3117 = vrot.slane %v3103, %v3116
    %v3118 = vcombine.low %v3085, %v3097
    %v3119 = vcombine.high %v3085, %v3097
    %v3121 = vunpack.c.l.s4 1983009808
    %v3122 = vunpack.c.0.s8 %v3121
    %v3123 = vlaneseq
    %v3124 = vshrl.u32 %v3123, 7
    %v3125 = vsub.s32 %v3122, %v3124
    %v3126 = vrot.slane %v3118, %v3125
    %v3128 = vunpack.c.l.s4 1983009808
    %v3129 = vunpack.c.0.s8 %v3128
    %v3130 = vlaneseq
    %v3131 = vshrl.u32 %v3130, 7
    %v3132 = vsub.s32 %v3129, %v3131
    %v3133 = vrot.slane %v3119, %v3132
    %v3134 = vcombine.low %v3110, %v3126
    %v3135 = vcombine.high %v3110, %v3126
    %v3137 = vunpack.c.l.s4 1934713408
    %v3138 = vunpack.c.0.s8 %v3137
    %v3139 = vlaneseq
    %v3140 = vshrl.u32 %v3139, 7
    %v3141 = vsub.s32 %v3138, %v3140
    %v3142 = vrot.slane %v3134, %v3141
    %v3144 = vunpack.c.l.s4 1934713408
    %v3145 = vunpack.c.0.s8 %v3144
    %v3146 = vlaneseq
    %v3147 = vshrl.u32 %v3146, 7
    %v3148 = vsub.s32 %v3145, %v3147
    %v3149 = vrot.slane %v3135, %v3148
    %v3150 = vcombine.low %v3117, %v3133
    %v3151 = vcombine.high %v3117, %v3133
    %v3153 = vunpack.c.l.s4 1934713408
    %v3154 = vunpack.c.0.s8 %v3153
    %v3155 = vlaneseq
    %v3156 = vshrl.u32 %v3155, 7
    %v3157 = vsub.s32 %v3154, %v3156
    %v3158 = vrot.slane %v3150, %v3157
    %v3160 = vunpack.c.l.s4 1934713408
    %v3161 = vunpack.c.0.s8 %v3160
    %v3162 = vlaneseq
    %v3163 = vshrl.u32 %v3162, 7
    %v3164 = vsub.s32 %v3161, %v3163
    %v3165 = vrot.slane %v3151, %v3164
    %v3166 = vcombine.high %v3142, 0.0
    %v3167 = vcombine.high %v3149, 0.0
    %v3168 = vcombine.high %v3158, 0.0
    %v3169 = vcombine.high %v3165, 0.0
    %v3170 = vcombine.low %v2858, %v3093
    %v3171 = vcombine.high %v2858, %v3093
    %v3173 = vunpack.c.l.s4 1983009808
    %v3174 = vunpack.c.0.s8 %v3173
    %v3175 = vlaneseq
    %v3176 = vshrl.u32 %v3175, 7
    %v3177 = vsub.s32 %v3174, %v3176
    %v3178 = vrot.slane %v3170, %v3177
    %v3180 = vunpack.c.l.s4 1983009808
    %v3181 = vunpack.c.0.s8 %v3180
    %v3182 = vlaneseq
    %v3183 = vshrl.u32 %v3182, 7
    %v3184 = vsub.s32 %v3181, %v3183
    %v3185 = vrot.slane %v3171, %v3184
    %v3186 = vcombine.low %v3087, %v3099
    %v3187 = vcombine.high %v3087, %v3099
    %v3189 = vunpack.c.l.s4 1983009808
    %v3190 = vunpack.c.0.s8 %v3189
    %v3191 = vlaneseq
    %v3192 = vshrl.u32 %v3191, 7
    %v3193 = vsub.s32 %v3190, %v3192
    %v3194 = vrot.slane %v3186, %v3193
    %v3196 = vunpack.c.l.s4 1983009808
    %v3197 = vunpack.c.0.s8 %v3196
    %v3198 = vlaneseq
    %v3199 = vshrl.u32 %v3198, 7
    %v3200 = vsub.s32 %v3197, %v3199
    %v3201 = vrot.slane %v3187, %v3200
    %v3202 = vcombine.low %v3178, %v3194
    %v3203 = vcombine.high %v3178, %v3194
    %v3205 = vunpack.c.l.s4 1934713408
    %v3206 = vunpack.c.0.s8 %v3205
    %v3207 = vlaneseq
    %v3208 = vshrl.u32 %v3207, 7
    %v3209 = vsub.s32 %v3206, %v3208
    %v3210 = vrot.slane %v3202, %v3209
    %v3212 = vunpack.c.l.s4 1934713408
    %v3213 = vunpack.c.0.s8 %v3212
    %v3214 = vlaneseq
    %v3215 = vshrl.u32 %v3214, 7
    %v3216 = vsub.s32 %v3213, %v3215
    %v3217 = vrot.slane %v3203, %v3216
    %v3218 = vcombine.low %v3185, %v3201
    %v3219 = vcombine.high %v3185, %v3201
    %v3221 = vunpack.c.l.s4 1934713408
    %v3222 = vunpack.c.0.s8 %v3221
    %v3223 = vlaneseq
    %v3224 = vshrl.u32 %v3223, 7
    %v3225 = vsub.s32 %v3222, %v3224
    %v3226 = vrot.slane %v3218, %v3225
    %v3228 = vunpack.c.l.s4 1934713408
    %v3229 = vunpack.c.0.s8 %v3228
    %v3230 = vlaneseq
    %v3231 = vshrl.u32 %v3230, 7
    %v3232 = vsub.s32 %v3229, %v3231
    %v3233 = vrot.slane %v3219, %v3232
    %v3234 = vcombine.high %v3210, 0.0
    %v3235 = vcombine.high %v3217, 0.0
    %v3236 = vcombine.high %v3226, 0.0
    %v3237 = vcombine.high %v3233, 0.0
    %v3238 = vcombine.low %v3142, %v3149
    %v3240 = vunpack.c.l.s4 1983009808
    %v3241 = vunpack.c.0.s8 %v3240
    %v3242 = vlaneseq
    %v3243 = vshrl.u32 %v3242, 7
    %v3244 = vsub.s32 %v3241, %v3243
    %v3245 = vrot.slane %v3238, %v3244
    %v3246 = vcombine.low %v3166, %v3167
    %v3248 = vunpack.c.l.s4 1983009808
    %v3249 = vunpack.c.0.s8 %v3248
    %v3250 = vlaneseq
    %v3251 = vshrl.u32 %v3250, 7
    %v3252 = vsub.s32 %v3249, %v3251
    %v3253 = vrot.slane %v3246, %v3252
    %v3254 = vcombine.low %v3158, %v3165
    %v3256 = vunpack.c.l.s4 1983009808
    %v3257 = vunpack.c.0.s8 %v3256
    %v3258 = vlaneseq
    %v3259 = vshrl.u32 %v3258, 7
    %v3260 = vsub.s32 %v3257, %v3259
    %v3261 = vrot.slane %v3254, %v3260
    %v3262 = vcombine.low %v3168, %v3169
    %v3264 = vunpack.c.l.s4 1983009808
    %v3265 = vunpack.c.0.s8 %v3264
    %v3266 = vlaneseq
    %v3267 = vshrl.u32 %v3266, 7
    %v3268 = vsub.s32 %v3265, %v3267
    %v3269 = vrot.slane %v3262, %v3268
    %v3270 = vcombine.low %v3245, %v3253
    %v3271 = vcombine.high %v3245, %v3253
    %v3273 = vunpack.c.l.s4 1934713408
    %v3274 = vunpack.c.0.s8 %v3273
    %v3275 = vlaneseq
    %v3276 = vshrl.u32 %v3275, 7
    %v3277 = vsub.s32 %v3274, %v3276
    %v3278 = vrot.slane %v3270, %v3277
    %v3280 = vunpack.c.l.s4 1934713408
    %v3281 = vunpack.c.0.s8 %v3280
    %v3282 = vlaneseq
    %v3283 = vshrl.u32 %v3282, 7
    %v3284 = vsub.s32 %v3281, %v3283
    %v3285 = vrot.slane %v3271, %v3284
    %v3286 = vcombine.low %v3261, %v3269
    %v3287 = vcombine.high %v3261, %v3269
    %v3289 = vunpack.c.l.s4 1934713408
    %v3290 = vunpack.c.0.s8 %v3289
    %v3291 = vlaneseq
    %v3292 = vshrl.u32 %v3291, 7
    %v3293 = vsub.s32 %v3290, %v3292
    %v3294 = vrot.slane %v3286, %v3293
    %v3296 = vunpack.c.l.s4 1934713408
    %v3297 = vunpack.c.0.s8 %v3296
    %v3298 = vlaneseq
    %v3299 = vshrl.u32 %v3298, 7
    %v3300 = vsub.s32 %v3297, %v3299
    %v3301 = vrot.slane %v3287, %v3300
    %v3302 = vcombine.low %v3278, %v3294
    %v3303 = vcombine.high %v3278, %v3294
    %v3304 = vcombine.low %v3285, %v3301
    %v3305 = vcombine.high %v3285, %v3301
    %v3306 = vcombine.low %v3210, %v3217
    %v3308 = vunpack.c.l.s4 1983009808
    %v3309 = vunpack.c.0.s8 %v3308
    %v3310 = vlaneseq
    %v3311 = vshrl.u32 %v3310, 7
    %v3312 = vsub.s32 %v3309, %v3311
    %v3313 = vrot.slane %v3306, %v3312
    %v3314 = vcombine.low %v3234, %v3235
    %v3316 = vunpack.c.l.s4 1983009808
    %v3317 = vunpack.c.0.s8 %v3316
    %v3318 = vlaneseq
    %v3319 = vshrl.u32 %v3318, 7
    %v3320 = vsub.s32 %v3317, %v3319
    %v3321 = vrot.slane %v3314, %v3320
    %v3322 = vcombine.low %v3226, %v3233
    %v3324 = vunpack.c.l.s4 1983009808
    %v3325 = vunpack.c.0.s8 %v3324
    %v3326 = vlaneseq
    %v3327 = vshrl.u32 %v3326, 7
    %v3328 = vsub.s32 %v3325, %v3327
    %v3329 = vrot.slane %v3322, %v3328
    %v3330 = vcombine.low %v3236, %v3237
    %v3332 = vunpack.c.l.s4 1983009808
    %v3333 = vunpack.c.0.s8 %v3332
    %v3334 = vlaneseq
    %v3335 = vshrl.u32 %v3334, 7
    %v3336 = vsub.s32 %v3333, %v3335
    %v3337 = vrot.slane %v3330, %v3336
    %v3338 = vcombine.low %v3313, %v3321
    %v3339 = vcombine.high %v3313, %v3321
    %v3341 = vunpack.c.l.s4 1934713408
    %v3342 = vunpack.c.0.s8 %v3341
    %v3343 = vlaneseq
    %v3344 = vshrl.u32 %v3343, 7
    %v3345 = vsub.s32 %v3342, %v3344
    %v3346 = vrot.slane %v3338, %v3345
    %v3348 = vunpack.c.l.s4 1934713408
    %v3349 = vunpack.c.0.s8 %v3348
    %v3350 = vlaneseq
    %v3351 = vshrl.u32 %v3350, 7
    %v3352 = vsub.s32 %v3349, %v3351
    %v3353 = vrot.slane %v3339, %v3352
    %v3354 = vcombine.low %v3329, %v3337
    %v3355 = vcombine.high %v3329, %v3337
    %v3357 = vunpack.c.l.s4 1934713408
    %v3358 = vunpack.c.0.s8 %v3357
    %v3359 = vlaneseq
    %v3360 = vshrl.u32 %v3359, 7
    %v3361 = vsub.s32 %v3358, %v3360
    %v3362 = vrot.slane %v3354, %v3361
    %v3364 = vunpack.c.l.s4 1934713408
    %v3365 = vunpack.c.0.s8 %v3364
    %v3366 = vlaneseq
    %v3367 = vshrl.u32 %v3366, 7
    %v3368 = vsub.s32 %v3365, %v3367
    %v3369 = vrot.slane %v3355, %v3368
    %v3370 = vcombine.low %v3346, %v3362
    %v3371 = vcombine.high %v3346, %v3362
    %v3372 = vcombine.low %v3353, %v3369
    %v3373 = vcombine.high %v3353, %v3369
    %3376 = vrot.lane.b32.xlu0 %v2922, 120
    %v3377 = vpop.permute.xlu0 %3376
    %3378 = vrot.lane.b32.xlu0 %v2925, 120
    %v3379 = vpop.permute.xlu0 %3378
    %3382 = vrot.lane.b32.xlu0 %v2922, 112
    %v3383 = vpop.permute.xlu0 %3382
    %3384 = vrot.lane.b32.xlu0 %v2925, 112
    %v3385 = vpop.permute.xlu0 %3384
    %3388 = vrot.lane.b32.xlu0 %v2922, 104
    %v3389 = vpop.permute.xlu0 %3388
    %3390 = vrot.lane.b32.xlu0 %v2925, 104
    %v3391 = vpop.permute.xlu0 %3390
    %v3394 = vcombine.low %v2922, %v3383
    %v3395 = vcombine.high %v2922, %v3383
    %v3397 = vunpack.c.l.s4 1983009808
    %v3398 = vunpack.c.0.s8 %v3397
    %v3399 = vlaneseq
    %v3400 = vshrl.u32 %v3399, 7
    %v3401 = vsub.s32 %v3398, %v3400
    %v3402 = vrot.slane %v3394, %v3401
    %v3404 = vunpack.c.l.s4 1983009808
    %v3405 = vunpack.c.0.s8 %v3404
    %v3406 = vlaneseq
    %v3407 = vshrl.u32 %v3406, 7
    %v3408 = vsub.s32 %v3405, %v3407
    %v3409 = vrot.slane %v3395, %v3408
    %v3410 = vcombine.low %v3377, %v3389
    %v3411 = vcombine.high %v3377, %v3389
    %v3413 = vunpack.c.l.s4 1983009808
    %v3414 = vunpack.c.0.s8 %v3413
    %v3415 = vlaneseq
    %v3416 = vshrl.u32 %v3415, 7
    %v3417 = vsub.s32 %v3414, %v3416
    %v3418 = vrot.slane %v3410, %v3417
    %v3420 = vunpack.c.l.s4 1983009808
    %v3421 = vunpack.c.0.s8 %v3420
    %v3422 = vlaneseq
    %v3423 = vshrl.u32 %v3422, 7
    %v3424 = vsub.s32 %v3421, %v3423
    %v3425 = vrot.slane %v3411, %v3424
    %v3426 = vcombine.low %v3402, %v3418
    %v3427 = vcombine.high %v3402, %v3418
    %v3429 = vunpack.c.l.s4 1934713408
    %v3430 = vunpack.c.0.s8 %v3429
    %v3431 = vlaneseq
    %v3432 = vshrl.u32 %v3431, 7
    %v3433 = vsub.s32 %v3430, %v3432
    %v3434 = vrot.slane %v3426, %v3433
    %v3436 = vunpack.c.l.s4 1934713408
    %v3437 = vunpack.c.0.s8 %v3436
    %v3438 = vlaneseq
    %v3439 = vshrl.u32 %v3438, 7
    %v3440 = vsub.s32 %v3437, %v3439
    %v3441 = vrot.slane %v3427, %v3440
    %v3442 = vcombine.low %v3409, %v3425
    %v3443 = vcombine.high %v3409, %v3425
    %v3445 = vunpack.c.l.s4 1934713408
    %v3446 = vunpack.c.0.s8 %v3445
    %v3447 = vlaneseq
    %v3448 = vshrl.u32 %v3447, 7
    %v3449 = vsub.s32 %v3446, %v3448
    %v3450 = vrot.slane %v3442, %v3449
    %v3452 = vunpack.c.l.s4 1934713408
    %v3453 = vunpack.c.0.s8 %v3452
    %v3454 = vlaneseq
    %v3455 = vshrl.u32 %v3454, 7
    %v3456 = vsub.s32 %v3453, %v3455
    %v3457 = vrot.slane %v3443, %v3456
    %v3458 = vcombine.high %v3434, 0.0
    %v3459 = vcombine.high %v3441, 0.0
    %v3460 = vcombine.high %v3450, 0.0
    %v3461 = vcombine.high %v3457, 0.0
    %v3462 = vcombine.low %v2925, %v3385
    %v3463 = vcombine.high %v2925, %v3385
    %v3465 = vunpack.c.l.s4 1983009808
    %v3466 = vunpack.c.0.s8 %v3465
    %v3467 = vlaneseq
    %v3468 = vshrl.u32 %v3467, 7
    %v3469 = vsub.s32 %v3466, %v3468
    %v3470 = vrot.slane %v3462, %v3469
    %v3472 = vunpack.c.l.s4 1983009808
    %v3473 = vunpack.c.0.s8 %v3472
    %v3474 = vlaneseq
    %v3475 = vshrl.u32 %v3474, 7
    %v3476 = vsub.s32 %v3473, %v3475
    %v3477 = vrot.slane %v3463, %v3476
    %v3478 = vcombine.low %v3379, %v3391
    %v3479 = vcombine.high %v3379, %v3391
    %v3481 = vunpack.c.l.s4 1983009808
    %v3482 = vunpack.c.0.s8 %v3481
    %v3483 = vlaneseq
    %v3484 = vshrl.u32 %v3483, 7
    %v3485 = vsub.s32 %v3482, %v3484
    %v3486 = vrot.slane %v3478, %v3485
    %v3488 = vunpack.c.l.s4 1983009808
    %v3489 = vunpack.c.0.s8 %v3488
    %v3490 = vlaneseq
    %v3491 = vshrl.u32 %v3490, 7
    %v3492 = vsub.s32 %v3489, %v3491
    %v3493 = vrot.slane %v3479, %v3492
    %v3494 = vcombine.low %v3470, %v3486
    %v3495 = vcombine.high %v3470, %v3486
    %v3497 = vunpack.c.l.s4 1934713408
    %v3498 = vunpack.c.0.s8 %v3497
    %v3499 = vlaneseq
    %v3500 = vshrl.u32 %v3499, 7
    %v3501 = vsub.s32 %v3498, %v3500
    %v3502 = vrot.slane %v3494, %v3501
    %v3504 = vunpack.c.l.s4 1934713408
    %v3505 = vunpack.c.0.s8 %v3504
    %v3506 = vlaneseq
    %v3507 = vshrl.u32 %v3506, 7
    %v3508 = vsub.s32 %v3505, %v3507
    %v3509 = vrot.slane %v3495, %v3508
    %v3510 = vcombine.low %v3477, %v3493
    %v3511 = vcombine.high %v3477, %v3493
    %v3513 = vunpack.c.l.s4 1934713408
    %v3514 = vunpack.c.0.s8 %v3513
    %v3515 = vlaneseq
    %v3516 = vshrl.u32 %v3515, 7
    %v3517 = vsub.s32 %v3514, %v3516
    %v3518 = vrot.slane %v3510, %v3517
    %v3520 = vunpack.c.l.s4 1934713408
    %v3521 = vunpack.c.0.s8 %v3520
    %v3522 = vlaneseq
    %v3523 = vshrl.u32 %v3522, 7
    %v3524 = vsub.s32 %v3521, %v3523
    %v3525 = vrot.slane %v3511, %v3524
    %v3526 = vcombine.high %v3502, 0.0
    %v3527 = vcombine.high %v3509, 0.0
    %v3528 = vcombine.high %v3518, 0.0
    %v3529 = vcombine.high %v3525, 0.0
    %v3530 = vcombine.low %v3434, %v3441
    %v3532 = vunpack.c.l.s4 1983009808
    %v3533 = vunpack.c.0.s8 %v3532
    %v3534 = vlaneseq
    %v3535 = vshrl.u32 %v3534, 7
    %v3536 = vsub.s32 %v3533, %v3535
    %v3537 = vrot.slane %v3530, %v3536
    %v3538 = vcombine.low %v3458, %v3459
    %v3540 = vunpack.c.l.s4 1983009808
    %v3541 = vunpack.c.0.s8 %v3540
    %v3542 = vlaneseq
    %v3543 = vshrl.u32 %v3542, 7
    %v3544 = vsub.s32 %v3541, %v3543
    %v3545 = vrot.slane %v3538, %v3544
    %v3546 = vcombine.low %v3450, %v3457
    %v3548 = vunpack.c.l.s4 1983009808
    %v3549 = vunpack.c.0.s8 %v3548
    %v3550 = vlaneseq
    %v3551 = vshrl.u32 %v3550, 7
    %v3552 = vsub.s32 %v3549, %v3551
    %v3553 = vrot.slane %v3546, %v3552
    %v3554 = vcombine.low %v3460, %v3461
    %v3556 = vunpack.c.l.s4 1983009808
    %v3557 = vunpack.c.0.s8 %v3556
    %v3558 = vlaneseq
    %v3559 = vshrl.u32 %v3558, 7
    %v3560 = vsub.s32 %v3557, %v3559
    %v3561 = vrot.slane %v3554, %v3560
    %v3562 = vcombine.low %v3537, %v3545
    %v3563 = vcombine.high %v3537, %v3545
    %v3565 = vunpack.c.l.s4 1934713408
    %v3566 = vunpack.c.0.s8 %v3565
    %v3567 = vlaneseq
    %v3568 = vshrl.u32 %v3567, 7
    %v3569 = vsub.s32 %v3566, %v3568
    %v3570 = vrot.slane %v3562, %v3569
    %v3572 = vunpack.c.l.s4 1934713408
    %v3573 = vunpack.c.0.s8 %v3572
    %v3574 = vlaneseq
    %v3575 = vshrl.u32 %v3574, 7
    %v3576 = vsub.s32 %v3573, %v3575
    %v3577 = vrot.slane %v3563, %v3576
    %v3578 = vcombine.low %v3553, %v3561
    %v3579 = vcombine.high %v3553, %v3561
    %v3581 = vunpack.c.l.s4 1934713408
    %v3582 = vunpack.c.0.s8 %v3581
    %v3583 = vlaneseq
    %v3584 = vshrl.u32 %v3583, 7
    %v3585 = vsub.s32 %v3582, %v3584
    %v3586 = vrot.slane %v3578, %v3585
    %v3588 = vunpack.c.l.s4 1934713408
    %v3589 = vunpack.c.0.s8 %v3588
    %v3590 = vlaneseq
    %v3591 = vshrl.u32 %v3590, 7
    %v3592 = vsub.s32 %v3589, %v3591
    %v3593 = vrot.slane %v3579, %v3592
    %v3594 = vcombine.low %v3570, %v3586
    %v3595 = vcombine.high %v3570, %v3586
    %v3596 = vcombine.low %v3577, %v3593
    %v3597 = vcombine.high %v3577, %v3593
    %v3598 = vcombine.low %v3502, %v3509
    %v3600 = vunpack.c.l.s4 1983009808
    %v3601 = vunpack.c.0.s8 %v3600
    %v3602 = vlaneseq
    %v3603 = vshrl.u32 %v3602, 7
    %v3604 = vsub.s32 %v3601, %v3603
    %v3605 = vrot.slane %v3598, %v3604
    %v3606 = vcombine.low %v3526, %v3527
    %v3608 = vunpack.c.l.s4 1983009808
    %v3609 = vunpack.c.0.s8 %v3608
    %v3610 = vlaneseq
    %v3611 = vshrl.u32 %v3610, 7
    %v3612 = vsub.s32 %v3609, %v3611
    %v3613 = vrot.slane %v3606, %v3612
    %v3614 = vcombine.low %v3518, %v3525
    %v3616 = vunpack.c.l.s4 1983009808
    %v3617 = vunpack.c.0.s8 %v3616
    %v3618 = vlaneseq
    %v3619 = vshrl.u32 %v3618, 7
    %v3620 = vsub.s32 %v3617, %v3619
    %v3621 = vrot.slane %v3614, %v3620
    %v3622 = vcombine.low %v3528, %v3529
    %v3624 = vunpack.c.l.s4 1983009808
    %v3625 = vunpack.c.0.s8 %v3624
    %v3626 = vlaneseq
    %v3627 = vshrl.u32 %v3626, 7
    %v3628 = vsub.s32 %v3625, %v3627
    %v3629 = vrot.slane %v3622, %v3628
    %v3630 = vcombine.low %v3605, %v3613
    %v3631 = vcombine.high %v3605, %v3613
    %v3633 = vunpack.c.l.s4 1934713408
    %v3634 = vunpack.c.0.s8 %v3633
    %v3635 = vlaneseq
    %v3636 = vshrl.u32 %v3635, 7
    %v3637 = vsub.s32 %v3634, %v3636
    %v3638 = vrot.slane %v3630, %v3637
    %v3640 = vunpack.c.l.s4 1934713408
    %v3641 = vunpack.c.0.s8 %v3640
    %v3642 = vlaneseq
    %v3643 = vshrl.u32 %v3642, 7
    %v3644 = vsub.s32 %v3641, %v3643
    %v3645 = vrot.slane %v3631, %v3644
    %v3646 = vcombine.low %v3621, %v3629
    %v3647 = vcombine.high %v3621, %v3629
    %v3649 = vunpack.c.l.s4 1934713408
    %v3650 = vunpack.c.0.s8 %v3649
    %v3651 = vlaneseq
    %v3652 = vshrl.u32 %v3651, 7
    %v3653 = vsub.s32 %v3650, %v3652
    %v3654 = vrot.slane %v3646, %v3653
    %v3656 = vunpack.c.l.s4 1934713408
    %v3657 = vunpack.c.0.s8 %v3656
    %v3658 = vlaneseq
    %v3659 = vshrl.u32 %v3658, 7
    %v3660 = vsub.s32 %v3657, %v3659
    %v3661 = vrot.slane %v3647, %v3660
    %v3662 = vcombine.low %v3638, %v3654
    %v3663 = vcombine.high %v3638, %v3654
    %v3664 = vcombine.low %v3645, %v3661
    %v3665 = vcombine.high %v3645, %v3661
    %v3666 = vpack.c.bf16 %v3078, %v3078
    %v3667 = vpack.c.bf16 %v3079, %v3079
    %v3668 = vpack.c.bf16 %v3080, %v3080
    %v3669 = vpack.c.bf16 %v3081, %v3081
    %v3670 = vpack.c.bf16 %v3370, %v3302
    %v3671 = vpack.c.bf16 %v3371, %v3303
    %v3672 = vpack.c.bf16 %v3372, %v3304
    %v3673 = vpack.c.bf16 %v3373, %v3305
    %v3675 = vsel %vm1008, %v3666, 0
    %v3678 = vsel %vm1008, %v3670, 0
    %3680 = vmatprep.subr.bf16.mxu0 0
    %3681 = vmatpush1.bf16.xpose.msra.mxu0 0
    %3682 = vmatprep.subr.bf16.mxu0 0
    %3683 = vmatpush1.bf16.xpose.msra.mxu0 0
    %3684 = vmatprep.subr.bf16.mxu0 0
    %3685 = vmatpush1.bf16.xpose.msra.mxu0 0
    %3686 = vmatprep.subr.bf16.mxu0 0
    %3687 = vmatpush1.bf16.xpose.msra.mxu0 0
    %3688 = vmatprep.subr.bf16.mxu0 0
    %3689 = vmatpush1.bf16.xpose.msra.mxu0 0
    %3690 = vmatprep.subr.bf16.mxu0 0
    %3691 = vmatpush1.bf16.xpose.msra.mxu0 0
    %3692 = vmatprep.subr.bf16.mxu0 0
    %3693 = vmatpush1.bf16.xpose.msra.mxu0 0
    %3694 = vmatprep.subr.bf16.mxu0 0
    %3695 = vmatpush1.bf16.xpose.msra.mxu0 %v3678
    %3696 = vmatprep.subr.bf16.mxu0 0
    %3697 = vmatpush2.bf16.xpose.msra.mxu0 0
    %3698 = vmatprep.subr.bf16.mxu0 0
    %3699 = vmatpush2.bf16.xpose.msra.mxu0 0
    %3700 = vmatprep.subr.bf16.mxu0 0
    %3701 = vmatpush2.bf16.xpose.msra.mxu0 0
    %3702 = vmatprep.subr.bf16.mxu0 0
    %3703 = vmatpush2.bf16.xpose.msra.mxu0 0
    %3704 = vmatprep.subr.bf16.mxu0 0
    %3705 = vmatpush2.bf16.xpose.msra.mxu0 0
    %3706 = vmatprep.subr.bf16.mxu0 0
    %3707 = vmatpush2.bf16.xpose.msra.mxu0 0
    %3708 = vmatprep.subr.bf16.mxu0 0
    %3709 = vmatpush2.bf16.xpose.msra.mxu0 0
    %3710 = vmatprep.subr.bf16.mxu0 0
    %3711 = vmatpush2.bf16.xpose.msra.mxu0 0
    %3712 = vmatprep.mubr.bf16.mxu0 0
    %3713 = vmatmul.mubr.bf16.gmra.mxu0 %v3675
    %v3714 = vpop.f32.mrf.mxu0
    %v3715 = vadd.f32 0.0, %v3714
    %v3716 = vpop.f32.mrf.mxu0
    %v3717 = vpop.f32.mrf.mxu0
    %v3718 = vpop.f32.mrf.mxu0
    %3719 = vdwg.mxu0
    %v3721 = vsel %vm1008, %v3667, 0
    %v3724 = vsel %vm1008, %v3671, 0
    %3726 = vmatprep.subr.bf16.mxu0 0
    %3727 = vmatpush1.bf16.xpose.msra.mxu0 0
    %3728 = vmatprep.subr.bf16.mxu0 0
    %3729 = vmatpush1.bf16.xpose.msra.mxu0 0
    %3730 = vmatprep.subr.bf16.mxu0 0
    %3731 = vmatpush1.bf16.xpose.msra.mxu0 0
    %3732 = vmatprep.subr.bf16.mxu0 0
    %3733 = vmatpush1.bf16.xpose.msra.mxu0 0
    %3734 = vmatprep.subr.bf16.mxu0 0
    %3735 = vmatpush1.bf16.xpose.msra.mxu0 0
    %3736 = vmatprep.subr.bf16.mxu0 0
    %3737 = vmatpush1.bf16.xpose.msra.mxu0 0
    %3738 = vmatprep.subr.bf16.mxu0 0
    %3739 = vmatpush1.bf16.xpose.msra.mxu0 0
    %3740 = vmatprep.subr.bf16.mxu0 0
    %3741 = vmatpush1.bf16.xpose.msra.mxu0 %v3724
    %3742 = vmatprep.subr.bf16.mxu0 0
    %3743 = vmatpush2.bf16.xpose.msra.mxu0 0
    %3744 = vmatprep.subr.bf16.mxu0 0
    %3745 = vmatpush2.bf16.xpose.msra.mxu0 0
    %3746 = vmatprep.subr.bf16.mxu0 0
    %3747 = vmatpush2.bf16.xpose.msra.mxu0 0
    %3748 = vmatprep.subr.bf16.mxu0 0
    %3749 = vmatpush2.bf16.xpose.msra.mxu0 0
    %3750 = vmatprep.subr.bf16.mxu0 0
    %3751 = vmatpush2.bf16.xpose.msra.mxu0 0
    %3752 = vmatprep.subr.bf16.mxu0 0
    %3753 = vmatpush2.bf16.xpose.msra.mxu0 0
    %3754 = vmatprep.subr.bf16.mxu0 0
    %3755 = vmatpush2.bf16.xpose.msra.mxu0 0
    %3756 = vmatprep.subr.bf16.mxu0 0
    %3757 = vmatpush2.bf16.xpose.msra.mxu0 0
    %3758 = vmatprep.mubr.bf16.mxu0 0
    %3759 = vmatmul.mubr.bf16.gmra.mxu0 %v3721
    %v3760 = vpop.f32.mrf.mxu0
    %v3761 = vadd.f32 0.0, %v3760
    %v3762 = vpop.f32.mrf.mxu0
    %v3763 = vpop.f32.mrf.mxu0
    %v3764 = vpop.f32.mrf.mxu0
    %3765 = vdwg.mxu0
    %v3767 = vsel %vm1008, %v3668, 0
    %v3770 = vsel %vm1008, %v3672, 0
    %3772 = vmatprep.subr.bf16.mxu0 0
    %3773 = vmatpush1.bf16.xpose.msra.mxu0 0
    %3774 = vmatprep.subr.bf16.mxu0 0
    %3775 = vmatpush1.bf16.xpose.msra.mxu0 0
    %3776 = vmatprep.subr.bf16.mxu0 0
    %3777 = vmatpush1.bf16.xpose.msra.mxu0 0
    %3778 = vmatprep.subr.bf16.mxu0 0
    %3779 = vmatpush1.bf16.xpose.msra.mxu0 0
    %3780 = vmatprep.subr.bf16.mxu0 0
    %3781 = vmatpush1.bf16.xpose.msra.mxu0 0
    %3782 = vmatprep.subr.bf16.mxu0 0
    %3783 = vmatpush1.bf16.xpose.msra.mxu0 0
    %3784 = vmatprep.subr.bf16.mxu0 0
    %3785 = vmatpush1.bf16.xpose.msra.mxu0 0
    %3786 = vmatprep.subr.bf16.mxu0 0
    %3787 = vmatpush1.bf16.xpose.msra.mxu0 %v3770
    %3788 = vmatprep.subr.bf16.mxu0 0
    %3789 = vmatpush2.bf16.xpose.msra.mxu0 0
    %3790 = vmatprep.subr.bf16.mxu0 0
    %3791 = vmatpush2.bf16.xpose.msra.mxu0 0
    %3792 = vmatprep.subr.bf16.mxu0 0
    %3793 = vmatpush2.bf16.xpose.msra.mxu0 0
    %3794 = vmatprep.subr.bf16.mxu0 0
    %3795 = vmatpush2.bf16.xpose.msra.mxu0 0
    %3796 = vmatprep.subr.bf16.mxu0 0
    %3797 = vmatpush2.bf16.xpose.msra.mxu0 0
    %3798 = vmatprep.subr.bf16.mxu0 0
    %3799 = vmatpush2.bf16.xpose.msra.mxu0 0
    %3800 = vmatprep.subr.bf16.mxu0 0
    %3801 = vmatpush2.bf16.xpose.msra.mxu0 0
    %3802 = vmatprep.subr.bf16.mxu0 0
    %3803 = vmatpush2.bf16.xpose.msra.mxu0 0
    %3804 = vmatprep.mubr.bf16.mxu0 0
    %3805 = vmatmul.mubr.bf16.gmra.mxu0 %v3767
    %v3806 = vpop.f32.mrf.mxu0
    %v3807 = vadd.f32 0.0, %v3806
    %v3808 = vpop.f32.mrf.mxu0
    %v3809 = vpop.f32.mrf.mxu0
    %v3810 = vpop.f32.mrf.mxu0
    %3811 = vdwg.mxu0
    %v3813 = vsel %vm1008, %v3669, 0
    %v3816 = vsel %vm1008, %v3673, 0
    %3818 = vmatprep.subr.bf16.mxu0 0
    %3819 = vmatpush1.bf16.xpose.msra.mxu0 0
    %3820 = vmatprep.subr.bf16.mxu0 0
    %3821 = vmatpush1.bf16.xpose.msra.mxu0 0
    %3822 = vmatprep.subr.bf16.mxu0 0
    %3823 = vmatpush1.bf16.xpose.msra.mxu0 0
    %3824 = vmatprep.subr.bf16.mxu0 0
    %3825 = vmatpush1.bf16.xpose.msra.mxu0 0
    %3826 = vmatprep.subr.bf16.mxu0 0
    %3827 = vmatpush1.bf16.xpose.msra.mxu0 0
    %3828 = vmatprep.subr.bf16.mxu0 0
    %3829 = vmatpush1.bf16.xpose.msra.mxu0 0
    %3830 = vmatprep.subr.bf16.mxu0 0
    %3831 = vmatpush1.bf16.xpose.msra.mxu0 0
    %3832 = vmatprep.subr.bf16.mxu0 0
    %3833 = vmatpush1.bf16.xpose.msra.mxu0 %v3816
    %3834 = vmatprep.subr.bf16.mxu0 0
    %3835 = vmatpush2.bf16.xpose.msra.mxu0 0
    %3836 = vmatprep.subr.bf16.mxu0 0
    %3837 = vmatpush2.bf16.xpose.msra.mxu0 0
    %3838 = vmatprep.subr.bf16.mxu0 0
    %3839 = vmatpush2.bf16.xpose.msra.mxu0 0
    %3840 = vmatprep.subr.bf16.mxu0 0
    %3841 = vmatpush2.bf16.xpose.msra.mxu0 0
    %3842 = vmatprep.subr.bf16.mxu0 0
    %3843 = vmatpush2.bf16.xpose.msra.mxu0 0
    %3844 = vmatprep.subr.bf16.mxu0 0
    %3845 = vmatpush2.bf16.xpose.msra.mxu0 0
    %3846 = vmatprep.subr.bf16.mxu0 0
    %3847 = vmatpush2.bf16.xpose.msra.mxu0 0
    %3848 = vmatprep.subr.bf16.mxu0 0
    %3849 = vmatpush2.bf16.xpose.msra.mxu0 0
    %3850 = vmatprep.mubr.bf16.mxu0 0
    %3851 = vmatmul.mubr.bf16.gmra.mxu0 %v3813
    %v3852 = vpop.f32.mrf.mxu0
    %v3853 = vadd.f32 0.0, %v3852
    %v3854 = vpop.f32.mrf.mxu0
    %v3855 = vpop.f32.mrf.mxu0
    %v3856 = vpop.f32.mrf.mxu0
    %3857 = vdwg.mxu0
    %v3858 = vsel %vm1579, %v3715, -inf
    %3859 = vmax.xlane.f32.xlu0 %v3858
    %v3860 = vpop.xlane.xlu0 %3859
    %v3861 = vsel %vm1579, %v3761, -inf
    %3862 = vmax.xlane.f32.xlu0 %v3861
    %v3863 = vpop.xlane.xlu0 %3862
    %v3864 = vsel %vm1579, %v3807, -inf
    %3865 = vmax.xlane.f32.xlu0 %v3864
    %v3866 = vpop.xlane.xlu0 %3865
    %v3867 = vsel %vm1579, %v3853, -inf
    %3868 = vmax.xlane.f32.xlu0 %v3867
    %v3869 = vpop.xlane.xlu0 %3868
    %v3870 = vsub.f32 %v3715, %v3860
    %v3871 = vsub.f32 %v3761, %v3863
    %v3872 = vsub.f32 %v3807, %v3866
    %v3873 = vsub.f32 %v3853, %v3869
    %v3874 = vmul.f32 %v3870, 1.442695
    %v3875 = vpow.pop %v3874
    %v3876 = vmul.f32 %v3871, 1.442695
    %v3877 = vpow.pop %v3876
    %v3878 = vmul.f32 %v3872, 1.442695
    %v3879 = vpow.pop %v3878
    %v3880 = vmul.f32 %v3873, 1.442695
    %v3881 = vpow.pop %v3880
    %v3882 = vsel %vm1579, %v3875, 0.0
    %3883 = vadd.xlane.f32.xlu0 %v3882
    %v3884 = vpop.xlane.xlu0 %3883
    %v3885 = vsel %vm1579, %v3877, 0.0
    %3886 = vadd.xlane.f32.xlu0 %v3885
    %v3887 = vpop.xlane.xlu0 %3886
    %v3888 = vsel %vm1579, %v3879, 0.0
    %3889 = vadd.xlane.f32.xlu0 %v3888
    %v3890 = vpop.xlane.xlu0 %3889
    %v3891 = vsel %vm1579, %v3881, 0.0
    %3892 = vadd.xlane.f32.xlu0 %v3891
    %v3893 = vpop.xlane.xlu0 %3892
    %v3894 = vpack.c.bf16 %v3875, %v3875
    %v3895 = vpack.c.bf16 %v3877, %v3877
    %v3896 = vpack.c.bf16 %v3879, %v3879
    %v3897 = vpack.c.bf16 %v3881, %v3881
    %v3898 = vpack.c.bf16 %v3662, %v3594
    %v3899 = vpack.c.bf16 %v3663, %v3595
    %v3900 = vpack.c.bf16 %v3664, %v3596
    %v3901 = vpack.c.bf16 %v3665, %v3597
    %v3903 = vsel %vm1579, %v3894, 0
    %3905 = vmatprep.subr.bf16.mxu0 0
    %3906 = vmatpush1.bf16.msra.mxu0 0
    %3907 = vmatprep.subr.bf16.mxu0 0
    %3908 = vmatpush1.bf16.msra.mxu0 0
    %3909 = vmatprep.subr.bf16.mxu0 0
    %3910 = vmatpush1.bf16.msra.mxu0 0
    %3911 = vmatprep.subr.bf16.mxu0 0
    %3912 = vmatpush1.bf16.msra.mxu0 0
    %3913 = vmatprep.subr.bf16.mxu0 0
    %3914 = vmatpush1.bf16.msra.mxu0 0
    %3915 = vmatprep.subr.bf16.mxu0 0
    %3916 = vmatpush1.bf16.msra.mxu0 0
    %3917 = vmatprep.subr.bf16.mxu0 0
    %3918 = vmatpush1.bf16.msra.mxu0 0
    %3919 = vmatprep.subr.bf16.mxu0 0
    %3920 = vmatpush1.bf16.msra.mxu0 %v3898
    %3921 = vmatprep.subr.bf16.mxu0 0
    %3922 = vmatpush2.bf16.msra.mxu0 0
    %3923 = vmatprep.subr.bf16.mxu0 0
    %3924 = vmatpush2.bf16.msra.mxu0 0
    %3925 = vmatprep.subr.bf16.mxu0 0
    %3926 = vmatpush2.bf16.msra.mxu0 0
    %3927 = vmatprep.subr.bf16.mxu0 0
    %3928 = vmatpush2.bf16.msra.mxu0 0
    %3929 = vmatprep.subr.bf16.mxu0 0
    %3930 = vmatpush2.bf16.msra.mxu0 0
    %3931 = vmatprep.subr.bf16.mxu0 0
    %3932 = vmatpush2.bf16.msra.mxu0 0
    %3933 = vmatprep.subr.bf16.mxu0 0
    %3934 = vmatpush2.bf16.msra.mxu0 0
    %3935 = vmatprep.subr.bf16.mxu0 0
    %3936 = vmatpush2.bf16.msra.mxu0 0
    %3937 = vmatprep.mubr.bf16.mxu0 0
    %3938 = vmatmul.mubr.bf16.gmra.mxu0 %v3903
    %v3939 = vpop.f32.mrf.mxu0
    %v3940 = vadd.f32 0.0, %v3939
    %v3941 = vpop.f32.mrf.mxu0
    %v3942 = vpop.f32.mrf.mxu0
    %v3943 = vpop.f32.mrf.mxu0
    %3944 = vdwg.mxu0
    %v3946 = vsel %vm1579, %v3895, 0
    %3948 = vmatprep.subr.bf16.mxu0 0
    %3949 = vmatpush1.bf16.msra.mxu0 0
    %3950 = vmatprep.subr.bf16.mxu0 0
    %3951 = vmatpush1.bf16.msra.mxu0 0
    %3952 = vmatprep.subr.bf16.mxu0 0
    %3953 = vmatpush1.bf16.msra.mxu0 0
    %3954 = vmatprep.subr.bf16.mxu0 0
    %3955 = vmatpush1.bf16.msra.mxu0 0
    %3956 = vmatprep.subr.bf16.mxu0 0
    %3957 = vmatpush1.bf16.msra.mxu0 0
    %3958 = vmatprep.subr.bf16.mxu0 0
    %3959 = vmatpush1.bf16.msra.mxu0 0
    %3960 = vmatprep.subr.bf16.mxu0 0
    %3961 = vmatpush1.bf16.msra.mxu0 0
    %3962 = vmatprep.subr.bf16.mxu0 0
    %3963 = vmatpush1.bf16.msra.mxu0 %v3899
    %3964 = vmatprep.subr.bf16.mxu0 0
    %3965 = vmatpush2.bf16.msra.mxu0 0
    %3966 = vmatprep.subr.bf16.mxu0 0
    %3967 = vmatpush2.bf16.msra.mxu0 0
    %3968 = vmatprep.subr.bf16.mxu0 0
    %3969 = vmatpush2.bf16.msra.mxu0 0
    %3970 = vmatprep.subr.bf16.mxu0 0
    %3971 = vmatpush2.bf16.msra.mxu0 0
    %3972 = vmatprep.subr.bf16.mxu0 0
    %3973 = vmatpush2.bf16.msra.mxu0 0
    %3974 = vmatprep.subr.bf16.mxu0 0
    %3975 = vmatpush2.bf16.msra.mxu0 0
    %3976 = vmatprep.subr.bf16.mxu0 0
    %3977 = vmatpush2.bf16.msra.mxu0 0
    %3978 = vmatprep.subr.bf16.mxu0 0
    %3979 = vmatpush2.bf16.msra.mxu0 0
    %3980 = vmatprep.mubr.bf16.mxu0 0
    %3981 = vmatmul.mubr.bf16.gmra.mxu0 %v3946
    %v3982 = vpop.f32.mrf.mxu0
    %v3983 = vadd.f32 0.0, %v3982
    %v3984 = vpop.f32.mrf.mxu0
    %v3985 = vpop.f32.mrf.mxu0
    %v3986 = vpop.f32.mrf.mxu0
    %3987 = vdwg.mxu0
    %v3989 = vsel %vm1579, %v3896, 0
    %3991 = vmatprep.subr.bf16.mxu0 0
    %3992 = vmatpush1.bf16.msra.mxu0 0
    %3993 = vmatprep.subr.bf16.mxu0 0
    %3994 = vmatpush1.bf16.msra.mxu0 0
    %3995 = vmatprep.subr.bf16.mxu0 0
    %3996 = vmatpush1.bf16.msra.mxu0 0
    %3997 = vmatprep.subr.bf16.mxu0 0
    %3998 = vmatpush1.bf16.msra.mxu0 0
    %3999 = vmatprep.subr.bf16.mxu0 0
    %4000 = vmatpush1.bf16.msra.mxu0 0
    %4001 = vmatprep.subr.bf16.mxu0 0
    %4002 = vmatpush1.bf16.msra.mxu0 0
    %4003 = vmatprep.subr.bf16.mxu0 0
    %4004 = vmatpush1.bf16.msra.mxu0 0
    %4005 = vmatprep.subr.bf16.mxu0 0
    %4006 = vmatpush1.bf16.msra.mxu0 %v3900
    %4007 = vmatprep.subr.bf16.mxu0 0
    %4008 = vmatpush2.bf16.msra.mxu0 0
    %4009 = vmatprep.subr.bf16.mxu0 0
    %4010 = vmatpush2.bf16.msra.mxu0 0
    %4011 = vmatprep.subr.bf16.mxu0 0
    %4012 = vmatpush2.bf16.msra.mxu0 0
    %4013 = vmatprep.subr.bf16.mxu0 0
    %4014 = vmatpush2.bf16.msra.mxu0 0
    %4015 = vmatprep.subr.bf16.mxu0 0
    %4016 = vmatpush2.bf16.msra.mxu0 0
    %4017 = vmatprep.subr.bf16.mxu0 0
    %4018 = vmatpush2.bf16.msra.mxu0 0
    %4019 = vmatprep.subr.bf16.mxu0 0
    %4020 = vmatpush2.bf16.msra.mxu0 0
    %4021 = vmatprep.subr.bf16.mxu0 0
    %4022 = vmatpush2.bf16.msra.mxu0 0
    %4023 = vmatprep.mubr.bf16.mxu0 0
    %4024 = vmatmul.mubr.bf16.gmra.mxu0 %v3989
    %v4025 = vpop.f32.mrf.mxu0
    %v4026 = vadd.f32 0.0, %v4025
    %v4027 = vpop.f32.mrf.mxu0
    %v4028 = vpop.f32.mrf.mxu0
    %v4029 = vpop.f32.mrf.mxu0
    %4030 = vdwg.mxu0
    %v4032 = vsel %vm1579, %v3897, 0
    %4034 = vmatprep.subr.bf16.mxu0 0
    %4035 = vmatpush1.bf16.msra.mxu0 0
    %4036 = vmatprep.subr.bf16.mxu0 0
    %4037 = vmatpush1.bf16.msra.mxu0 0
    %4038 = vmatprep.subr.bf16.mxu0 0
    %4039 = vmatpush1.bf16.msra.mxu0 0
    %4040 = vmatprep.subr.bf16.mxu0 0
    %4041 = vmatpush1.bf16.msra.mxu0 0
    %4042 = vmatprep.subr.bf16.mxu0 0
    %4043 = vmatpush1.bf16.msra.mxu0 0
    %4044 = vmatprep.subr.bf16.mxu0 0
    %4045 = vmatpush1.bf16.msra.mxu0 0
    %4046 = vmatprep.subr.bf16.mxu0 0
    %4047 = vmatpush1.bf16.msra.mxu0 0
    %4048 = vmatprep.subr.bf16.mxu0 0
    %4049 = vmatpush1.bf16.msra.mxu0 %v3901
    %4050 = vmatprep.subr.bf16.mxu0 0
    %4051 = vmatpush2.bf16.msra.mxu0 0
    %4052 = vmatprep.subr.bf16.mxu0 0
    %4053 = vmatpush2.bf16.msra.mxu0 0
    %4054 = vmatprep.subr.bf16.mxu0 0
    %4055 = vmatpush2.bf16.msra.mxu0 0
    %4056 = vmatprep.subr.bf16.mxu0 0
    %4057 = vmatpush2.bf16.msra.mxu0 0
    %4058 = vmatprep.subr.bf16.mxu0 0
    %4059 = vmatpush2.bf16.msra.mxu0 0
    %4060 = vmatprep.subr.bf16.mxu0 0
    %4061 = vmatpush2.bf16.msra.mxu0 0
    %4062 = vmatprep.subr.bf16.mxu0 0
    %4063 = vmatpush2.bf16.msra.mxu0 0
    %4064 = vmatprep.subr.bf16.mxu0 0
    %4065 = vmatpush2.bf16.msra.mxu0 0
    %4066 = vmatprep.mubr.bf16.mxu0 0
    %4067 = vmatmul.mubr.bf16.gmra.mxu0 %v4032
    %v4068 = vpop.f32.mrf.mxu0
    %v4069 = vadd.f32 0.0, %v4068
    %v4070 = vpop.f32.mrf.mxu0
    %v4071 = vpop.f32.mrf.mxu0
    %v4072 = vpop.f32.mrf.mxu0
    %4073 = vdwg.mxu0
    %v4074 = vrcp.pop %v3884
    %v4075 = vrcp.pop %v3887
    %v4076 = vrcp.pop %v3890
    %v4077 = vrcp.pop %v3893
    %v4078 = vmul.f32 %v3940, %v4074
    %v4079 = vmul.f32 %v3983, %v4075
    %v4080 = vmul.f32 %v4026, %v4076
    %v4081 = vmul.f32 %v4069, %v4077
    %v4082 = vcombine.low %v4078, %v4080
    %v4083 = vcombine.high %v4078, %v4080
    %v4085 = vunpack.c.l.s4 1983009808
    %v4086 = vunpack.c.0.s8 %v4085
    %v4087 = vlaneseq
    %v4088 = vshrl.u32 %v4087, 7
    %v4089 = vsub.s32 %v4086, %v4088
    %v4090 = vrot.slane %v4082, %v4089
    %v4092 = vunpack.c.l.s4 1983009808
    %v4093 = vunpack.c.0.s8 %v4092
    %v4094 = vlaneseq
    %v4095 = vshrl.u32 %v4094, 7
    %v4096 = vsub.s32 %v4093, %v4095
    %v4097 = vrot.slane %v4083, %v4096
    %v4098 = vcombine.low %v4079, %v4081
    %v4099 = vcombine.high %v4079, %v4081
    %v4101 = vunpack.c.l.s4 1983009808
    %v4102 = vunpack.c.0.s8 %v4101
    %v4103 = vlaneseq
    %v4104 = vshrl.u32 %v4103, 7
    %v4105 = vsub.s32 %v4102, %v4104
    %v4106 = vrot.slane %v4098, %v4105
    %v4108 = vunpack.c.l.s4 1983009808
    %v4109 = vunpack.c.0.s8 %v4108
    %v4110 = vlaneseq
    %v4111 = vshrl.u32 %v4110, 7
    %v4112 = vsub.s32 %v4109, %v4111
    %v4113 = vrot.slane %v4099, %v4112
    %v4114 = vcombine.low %v4090, %v4106
    %v4115 = vcombine.high %v4090, %v4106
    %v4117 = vunpack.c.l.s4 1934713408
    %v4118 = vunpack.c.0.s8 %v4117
    %v4119 = vlaneseq
    %v4120 = vshrl.u32 %v4119, 7
    %v4121 = vsub.s32 %v4118, %v4120
    %v4122 = vrot.slane %v4114, %v4121
    %v4124 = vunpack.c.l.s4 1934713408
    %v4125 = vunpack.c.0.s8 %v4124
    %v4126 = vlaneseq
    %v4127 = vshrl.u32 %v4126, 7
    %v4128 = vsub.s32 %v4125, %v4127
    %v4129 = vrot.slane %v4115, %v4128
    %v4130 = vcombine.low %v4097, %v4113
    %v4131 = vcombine.high %v4097, %v4113
    %v4133 = vunpack.c.l.s4 1934713408
    %v4134 = vunpack.c.0.s8 %v4133
    %v4135 = vlaneseq
    %v4136 = vshrl.u32 %v4135, 7
    %v4137 = vsub.s32 %v4134, %v4136
    %v4138 = vrot.slane %v4130, %v4137
    %v4140 = vunpack.c.l.s4 1934713408
    %v4141 = vunpack.c.0.s8 %v4140
    %v4142 = vlaneseq
    %v4143 = vshrl.u32 %v4142, 7
    %v4144 = vsub.s32 %v4141, %v4143
    %v4145 = vrot.slane %v4131, %v4144
    %v4146 = vcombine.high %v4122, 0.0
    %v4147 = vcombine.high %v4129, 0.0
    %v4148 = vcombine.high %v4138, 0.0
    %v4149 = vcombine.high %v4145, 0.0
    %v4150 = vcombine.low %v4122, %v4129
    %v4152 = vunpack.c.l.s4 1983009808
    %v4153 = vunpack.c.0.s8 %v4152
    %v4154 = vlaneseq
    %v4155 = vshrl.u32 %v4154, 7
    %v4156 = vsub.s32 %v4153, %v4155
    %v4157 = vrot.slane %v4150, %v4156
    %v4158 = vcombine.low %v4146, %v4147
    %v4160 = vunpack.c.l.s4 1983009808
    %v4161 = vunpack.c.0.s8 %v4160
    %v4162 = vlaneseq
    %v4163 = vshrl.u32 %v4162, 7
    %v4164 = vsub.s32 %v4161, %v4163
    %v4165 = vrot.slane %v4158, %v4164
    %v4166 = vcombine.low %v4138, %v4145
    %v4168 = vunpack.c.l.s4 1983009808
    %v4169 = vunpack.c.0.s8 %v4168
    %v4170 = vlaneseq
    %v4171 = vshrl.u32 %v4170, 7
    %v4172 = vsub.s32 %v4169, %v4171
    %v4173 = vrot.slane %v4166, %v4172
    %v4174 = vcombine.low %v4148, %v4149
    %v4176 = vunpack.c.l.s4 1983009808
    %v4177 = vunpack.c.0.s8 %v4176
    %v4178 = vlaneseq
    %v4179 = vshrl.u32 %v4178, 7
    %v4180 = vsub.s32 %v4177, %v4179
    %v4181 = vrot.slane %v4174, %v4180
    %v4182 = vcombine.low %v4157, %v4165
    %v4183 = vcombine.high %v4157, %v4165
    %v4185 = vunpack.c.l.s4 1934713408
    %v4186 = vunpack.c.0.s8 %v4185
    %v4187 = vlaneseq
    %v4188 = vshrl.u32 %v4187, 7
    %v4189 = vsub.s32 %v4186, %v4188
    %v4190 = vrot.slane %v4182, %v4189
    %v4192 = vunpack.c.l.s4 1934713408
    %v4193 = vunpack.c.0.s8 %v4192
    %v4194 = vlaneseq
    %v4195 = vshrl.u32 %v4194, 7
    %v4196 = vsub.s32 %v4193, %v4195
    %v4197 = vrot.slane %v4183, %v4196
    %v4198 = vcombine.low %v4173, %v4181
    %v4199 = vcombine.high %v4173, %v4181
    %v4201 = vunpack.c.l.s4 1934713408
    %v4202 = vunpack.c.0.s8 %v4201
    %v4203 = vlaneseq
    %v4204 = vshrl.u32 %v4203, 7
    %v4205 = vsub.s32 %v4202, %v4204
    %v4206 = vrot.slane %v4198, %v4205
    %v4208 = vunpack.c.l.s4 1934713408
    %v4209 = vunpack.c.0.s8 %v4208
    %v4210 = vlaneseq
    %v4211 = vshrl.u32 %v4210, 7
    %v4212 = vsub.s32 %v4209, %v4211
    %v4213 = vrot.slane %v4199, %v4212
    %v4214 = vcombine.low %v4190, %v4206
    %v4215 = vcombine.high %v4190, %v4206
    %v4216 = vcombine.low %v4197, %v4213
    %v4217 = vcombine.high %v4197, %v4213
    %4219 = vrot.lane.b32.xlu0 %v4215, 8
    %v4220 = vpop.permute.xlu0 %4219
    %4223 = vrot.lane.b32.xlu0 %v4216, 16
    %v4224 = vpop.permute.xlu0 %4223
    %4227 = vrot.lane.b32.xlu0 %v4217, 24
    %v4228 = vpop.permute.xlu0 %4227
    %v4230 = vsel %vm1008, %v4214, %v4220
    %v4231 = vsel %vm1579, %v4230, %v4224
    %v4232 = vsel %vm1581, %v4231, %v4228
    %4234 = vrot.lane.b32.xlu0 %v2795, 120
    %v4235 = vpop.permute.xlu0 %4234
    %4237 = vrot.lane.b32.xlu0 %v2795, 112
    %v4238 = vpop.permute.xlu0 %4237
    %4240 = vrot.lane.b32.xlu0 %v2795, 104
    %v4241 = vpop.permute.xlu0 %4240
    %v4243 = vcombine.low %v2795, %v4238
    %v4244 = vcombine.high %v2795, %v4238
    %v4246 = vunpack.c.l.s4 1983009808
    %v4247 = vunpack.c.0.s8 %v4246
    %v4248 = vlaneseq
    %v4249 = vshrl.u32 %v4248, 7
    %v4250 = vsub.s32 %v4247, %v4249
    %v4251 = vrot.slane %v4243, %v4250
    %v4253 = vunpack.c.l.s4 1983009808
    %v4254 = vunpack.c.0.s8 %v4253
    %v4255 = vlaneseq
    %v4256 = vshrl.u32 %v4255, 7
    %v4257 = vsub.s32 %v4254, %v4256
    %v4258 = vrot.slane %v4244, %v4257
    %v4259 = vcombine.low %v4235, %v4241
    %v4260 = vcombine.high %v4235, %v4241
    %v4262 = vunpack.c.l.s4 1983009808
    %v4263 = vunpack.c.0.s8 %v4262
    %v4264 = vlaneseq
    %v4265 = vshrl.u32 %v4264, 7
    %v4266 = vsub.s32 %v4263, %v4265
    %v4267 = vrot.slane %v4259, %v4266
    %v4269 = vunpack.c.l.s4 1983009808
    %v4270 = vunpack.c.0.s8 %v4269
    %v4271 = vlaneseq
    %v4272 = vshrl.u32 %v4271, 7
    %v4273 = vsub.s32 %v4270, %v4272
    %v4274 = vrot.slane %v4260, %v4273
    %v4275 = vcombine.low %v4251, %v4267
    %v4276 = vcombine.high %v4251, %v4267
    %v4278 = vunpack.c.l.s4 1934713408
    %v4279 = vunpack.c.0.s8 %v4278
    %v4280 = vlaneseq
    %v4281 = vshrl.u32 %v4280, 7
    %v4282 = vsub.s32 %v4279, %v4281
    %v4283 = vrot.slane %v4275, %v4282
    %v4285 = vunpack.c.l.s4 1934713408
    %v4286 = vunpack.c.0.s8 %v4285
    %v4287 = vlaneseq
    %v4288 = vshrl.u32 %v4287, 7
    %v4289 = vsub.s32 %v4286, %v4288
    %v4290 = vrot.slane %v4276, %v4289
    %v4291 = vcombine.low %v4258, %v4274
    %v4292 = vcombine.high %v4258, %v4274
    %v4294 = vunpack.c.l.s4 1934713408
    %v4295 = vunpack.c.0.s8 %v4294
    %v4296 = vlaneseq
    %v4297 = vshrl.u32 %v4296, 7
    %v4298 = vsub.s32 %v4295, %v4297
    %v4299 = vrot.slane %v4291, %v4298
    %v4301 = vunpack.c.l.s4 1934713408
    %v4302 = vunpack.c.0.s8 %v4301
    %v4303 = vlaneseq
    %v4304 = vshrl.u32 %v4303, 7
    %v4305 = vsub.s32 %v4302, %v4304
    %v4306 = vrot.slane %v4292, %v4305
    %v4307 = vcombine.high %v4283, 0.0
    %v4308 = vcombine.high %v4290, 0.0
    %v4309 = vcombine.high %v4299, 0.0
    %v4310 = vcombine.high %v4306, 0.0
    %v4311 = vcombine.low %v4283, %v4290
    %v4313 = vunpack.c.l.s4 1983009808
    %v4314 = vunpack.c.0.s8 %v4313
    %v4315 = vlaneseq
    %v4316 = vshrl.u32 %v4315, 7
    %v4317 = vsub.s32 %v4314, %v4316
    %v4318 = vrot.slane %v4311, %v4317
    %v4319 = vcombine.low %v4307, %v4308
    %v4321 = vunpack.c.l.s4 1983009808
    %v4322 = vunpack.c.0.s8 %v4321
    %v4323 = vlaneseq
    %v4324 = vshrl.u32 %v4323, 7
    %v4325 = vsub.s32 %v4322, %v4324
    %v4326 = vrot.slane %v4319, %v4325
    %v4327 = vcombine.low %v4299, %v4306
    %v4329 = vunpack.c.l.s4 1983009808
    %v4330 = vunpack.c.0.s8 %v4329
    %v4331 = vlaneseq
    %v4332 = vshrl.u32 %v4331, 7
    %v4333 = vsub.s32 %v4330, %v4332
    %v4334 = vrot.slane %v4327, %v4333
    %v4335 = vcombine.low %v4309, %v4310
    %v4337 = vunpack.c.l.s4 1983009808
    %v4338 = vunpack.c.0.s8 %v4337
    %v4339 = vlaneseq
    %v4340 = vshrl.u32 %v4339, 7
    %v4341 = vsub.s32 %v4338, %v4340
    %v4342 = vrot.slane %v4335, %v4341
    %v4343 = vcombine.low %v4318, %v4326
    %v4344 = vcombine.high %v4318, %v4326
    %v4346 = vunpack.c.l.s4 1934713408
    %v4347 = vunpack.c.0.s8 %v4346
    %v4348 = vlaneseq
    %v4349 = vshrl.u32 %v4348, 7
    %v4350 = vsub.s32 %v4347, %v4349
    %v4351 = vrot.slane %v4343, %v4350
    %v4353 = vunpack.c.l.s4 1934713408
    %v4354 = vunpack.c.0.s8 %v4353
    %v4355 = vlaneseq
    %v4356 = vshrl.u32 %v4355, 7
    %v4357 = vsub.s32 %v4354, %v4356
    %v4358 = vrot.slane %v4344, %v4357
    %v4359 = vcombine.low %v4334, %v4342
    %v4360 = vcombine.high %v4334, %v4342
    %v4362 = vunpack.c.l.s4 1934713408
    %v4363 = vunpack.c.0.s8 %v4362
    %v4364 = vlaneseq
    %v4365 = vshrl.u32 %v4364, 7
    %v4366 = vsub.s32 %v4363, %v4365
    %v4367 = vrot.slane %v4359, %v4366
    %v4369 = vunpack.c.l.s4 1934713408
    %v4370 = vunpack.c.0.s8 %v4369
    %v4371 = vlaneseq
    %v4372 = vshrl.u32 %v4371, 7
    %v4373 = vsub.s32 %v4370, %v4372
    %v4374 = vrot.slane %v4360, %v4373
    %v4375 = vcombine.low %v4351, %v4367
    %v4376 = vcombine.high %v4351, %v4367
    %v4377 = vcombine.low %v4358, %v4374
    %v4378 = vcombine.high %v4358, %v4374
    %4381 = vrot.lane.b32.xlu0 %v2863, 120
    %v4382 = vpop.permute.xlu0 %4381
    %4383 = vrot.lane.b32.xlu0 %v2866, 120
    %v4384 = vpop.permute.xlu0 %4383
    %4387 = vrot.lane.b32.xlu0 %v2863, 112
    %v4388 = vpop.permute.xlu0 %4387
    %4389 = vrot.lane.b32.xlu0 %v2866, 112
    %v4390 = vpop.permute.xlu0 %4389
    %4393 = vrot.lane.b32.xlu0 %v2863, 104
    %v4394 = vpop.permute.xlu0 %4393
    %4395 = vrot.lane.b32.xlu0 %v2866, 104
    %v4396 = vpop.permute.xlu0 %4395
    %v4399 = vcombine.low %v2863, %v4388
    %v4400 = vcombine.high %v2863, %v4388
    %v4402 = vunpack.c.l.s4 1983009808
    %v4403 = vunpack.c.0.s8 %v4402
    %v4404 = vlaneseq
    %v4405 = vshrl.u32 %v4404, 7
    %v4406 = vsub.s32 %v4403, %v4405
    %v4407 = vrot.slane %v4399, %v4406
    %v4409 = vunpack.c.l.s4 1983009808
    %v4410 = vunpack.c.0.s8 %v4409
    %v4411 = vlaneseq
    %v4412 = vshrl.u32 %v4411, 7
    %v4413 = vsub.s32 %v4410, %v4412
    %v4414 = vrot.slane %v4400, %v4413
    %v4415 = vcombine.low %v4382, %v4394
    %v4416 = vcombine.high %v4382, %v4394
    %v4418 = vunpack.c.l.s4 1983009808
    %v4419 = vunpack.c.0.s8 %v4418
    %v4420 = vlaneseq
    %v4421 = vshrl.u32 %v4420, 7
    %v4422 = vsub.s32 %v4419, %v4421
    %v4423 = vrot.slane %v4415, %v4422
    %v4425 = vunpack.c.l.s4 1983009808
    %v4426 = vunpack.c.0.s8 %v4425
    %v4427 = vlaneseq
    %v4428 = vshrl.u32 %v4427, 7
    %v4429 = vsub.s32 %v4426, %v4428
    %v4430 = vrot.slane %v4416, %v4429
    %v4431 = vcombine.low %v4407, %v4423
    %v4432 = vcombine.high %v4407, %v4423
    %v4434 = vunpack.c.l.s4 1934713408
    %v4435 = vunpack.c.0.s8 %v4434
    %v4436 = vlaneseq
    %v4437 = vshrl.u32 %v4436, 7
    %v4438 = vsub.s32 %v4435, %v4437
    %v4439 = vrot.slane %v4431, %v4438
    %v4441 = vunpack.c.l.s4 1934713408
    %v4442 = vunpack.c.0.s8 %v4441
    %v4443 = vlaneseq
    %v4444 = vshrl.u32 %v4443, 7
    %v4445 = vsub.s32 %v4442, %v4444
    %v4446 = vrot.slane %v4432, %v4445
    %v4447 = vcombine.low %v4414, %v4430
    %v4448 = vcombine.high %v4414, %v4430
    %v4450 = vunpack.c.l.s4 1934713408
    %v4451 = vunpack.c.0.s8 %v4450
    %v4452 = vlaneseq
    %v4453 = vshrl.u32 %v4452, 7
    %v4454 = vsub.s32 %v4451, %v4453
    %v4455 = vrot.slane %v4447, %v4454
    %v4457 = vunpack.c.l.s4 1934713408
    %v4458 = vunpack.c.0.s8 %v4457
    %v4459 = vlaneseq
    %v4460 = vshrl.u32 %v4459, 7
    %v4461 = vsub.s32 %v4458, %v4460
    %v4462 = vrot.slane %v4448, %v4461
    %v4463 = vcombine.high %v4439, 0.0
    %v4464 = vcombine.high %v4446, 0.0
    %v4465 = vcombine.high %v4455, 0.0
    %v4466 = vcombine.high %v4462, 0.0
    %v4467 = vcombine.low %v2866, %v4390
    %v4468 = vcombine.high %v2866, %v4390
    %v4470 = vunpack.c.l.s4 1983009808
    %v4471 = vunpack.c.0.s8 %v4470
    %v4472 = vlaneseq
    %v4473 = vshrl.u32 %v4472, 7
    %v4474 = vsub.s32 %v4471, %v4473
    %v4475 = vrot.slane %v4467, %v4474
    %v4477 = vunpack.c.l.s4 1983009808
    %v4478 = vunpack.c.0.s8 %v4477
    %v4479 = vlaneseq
    %v4480 = vshrl.u32 %v4479, 7
    %v4481 = vsub.s32 %v4478, %v4480
    %v4482 = vrot.slane %v4468, %v4481
    %v4483 = vcombine.low %v4384, %v4396
    %v4484 = vcombine.high %v4384, %v4396
    %v4486 = vunpack.c.l.s4 1983009808
    %v4487 = vunpack.c.0.s8 %v4486
    %v4488 = vlaneseq
    %v4489 = vshrl.u32 %v4488, 7
    %v4490 = vsub.s32 %v4487, %v4489
    %v4491 = vrot.slane %v4483, %v4490
    %v4493 = vunpack.c.l.s4 1983009808
    %v4494 = vunpack.c.0.s8 %v4493
    %v4495 = vlaneseq
    %v4496 = vshrl.u32 %v4495, 7
    %v4497 = vsub.s32 %v4494, %v4496
    %v4498 = vrot.slane %v4484, %v4497
    %v4499 = vcombine.low %v4475, %v4491
    %v4500 = vcombine.high %v4475, %v4491
    %v4502 = vunpack.c.l.s4 1934713408
    %v4503 = vunpack.c.0.s8 %v4502
    %v4504 = vlaneseq
    %v4505 = vshrl.u32 %v4504, 7
    %v4506 = vsub.s32 %v4503, %v4505
    %v4507 = vrot.slane %v4499, %v4506
    %v4509 = vunpack.c.l.s4 1934713408
    %v4510 = vunpack.c.0.s8 %v4509
    %v4511 = vlaneseq
    %v4512 = vshrl.u32 %v4511, 7
    %v4513 = vsub.s32 %v4510, %v4512
    %v4514 = vrot.slane %v4500, %v4513
    %v4515 = vcombine.low %v4482, %v4498
    %v4516 = vcombine.high %v4482, %v4498
    %v4518 = vunpack.c.l.s4 1934713408
    %v4519 = vunpack.c.0.s8 %v4518
    %v4520 = vlaneseq
    %v4521 = vshrl.u32 %v4520, 7
    %v4522 = vsub.s32 %v4519, %v4521
    %v4523 = vrot.slane %v4515, %v4522
    %v4525 = vunpack.c.l.s4 1934713408
    %v4526 = vunpack.c.0.s8 %v4525
    %v4527 = vlaneseq
    %v4528 = vshrl.u32 %v4527, 7
    %v4529 = vsub.s32 %v4526, %v4528
    %v4530 = vrot.slane %v4516, %v4529
    %v4531 = vcombine.high %v4507, 0.0
    %v4532 = vcombine.high %v4514, 0.0
    %v4533 = vcombine.high %v4523, 0.0
    %v4534 = vcombine.high %v4530, 0.0
    %v4535 = vcombine.low %v4439, %v4446
    %v4537 = vunpack.c.l.s4 1983009808
    %v4538 = vunpack.c.0.s8 %v4537
    %v4539 = vlaneseq
    %v4540 = vshrl.u32 %v4539, 7
    %v4541 = vsub.s32 %v4538, %v4540
    %v4542 = vrot.slane %v4535, %v4541
    %v4543 = vcombine.low %v4463, %v4464
    %v4545 = vunpack.c.l.s4 1983009808
    %v4546 = vunpack.c.0.s8 %v4545
    %v4547 = vlaneseq
    %v4548 = vshrl.u32 %v4547, 7
    %v4549 = vsub.s32 %v4546, %v4548
    %v4550 = vrot.slane %v4543, %v4549
    %v4551 = vcombine.low %v4455, %v4462
    %v4553 = vunpack.c.l.s4 1983009808
    %v4554 = vunpack.c.0.s8 %v4553
    %v4555 = vlaneseq
    %v4556 = vshrl.u32 %v4555, 7
    %v4557 = vsub.s32 %v4554, %v4556
    %v4558 = vrot.slane %v4551, %v4557
    %v4559 = vcombine.low %v4465, %v4466
    %v4561 = vunpack.c.l.s4 1983009808
    %v4562 = vunpack.c.0.s8 %v4561
    %v4563 = vlaneseq
    %v4564 = vshrl.u32 %v4563, 7
    %v4565 = vsub.s32 %v4562, %v4564
    %v4566 = vrot.slane %v4559, %v4565
    %v4567 = vcombine.low %v4542, %v4550
    %v4568 = vcombine.high %v4542, %v4550
    %v4570 = vunpack.c.l.s4 1934713408
    %v4571 = vunpack.c.0.s8 %v4570
    %v4572 = vlaneseq
    %v4573 = vshrl.u32 %v4572, 7
    %v4574 = vsub.s32 %v4571, %v4573
    %v4575 = vrot.slane %v4567, %v4574
    %v4577 = vunpack.c.l.s4 1934713408
    %v4578 = vunpack.c.0.s8 %v4577
    %v4579 = vlaneseq
    %v4580 = vshrl.u32 %v4579, 7
    %v4581 = vsub.s32 %v4578, %v4580
    %v4582 = vrot.slane %v4568, %v4581
    %v4583 = vcombine.low %v4558, %v4566
    %v4584 = vcombine.high %v4558, %v4566
    %v4586 = vunpack.c.l.s4 1934713408
    %v4587 = vunpack.c.0.s8 %v4586
    %v4588 = vlaneseq
    %v4589 = vshrl.u32 %v4588, 7
    %v4590 = vsub.s32 %v4587, %v4589
    %v4591 = vrot.slane %v4583, %v4590
    %v4593 = vunpack.c.l.s4 1934713408
    %v4594 = vunpack.c.0.s8 %v4593
    %v4595 = vlaneseq
    %v4596 = vshrl.u32 %v4595, 7
    %v4597 = vsub.s32 %v4594, %v4596
    %v4598 = vrot.slane %v4584, %v4597
    %v4599 = vcombine.low %v4575, %v4591
    %v4600 = vcombine.high %v4575, %v4591
    %v4601 = vcombine.low %v4582, %v4598
    %v4602 = vcombine.high %v4582, %v4598
    %v4603 = vcombine.low %v4507, %v4514
    %v4605 = vunpack.c.l.s4 1983009808
    %v4606 = vunpack.c.0.s8 %v4605
    %v4607 = vlaneseq
    %v4608 = vshrl.u32 %v4607, 7
    %v4609 = vsub.s32 %v4606, %v4608
    %v4610 = vrot.slane %v4603, %v4609
    %v4611 = vcombine.low %v4531, %v4532
    %v4613 = vunpack.c.l.s4 1983009808
    %v4614 = vunpack.c.0.s8 %v4613
    %v4615 = vlaneseq
    %v4616 = vshrl.u32 %v4615, 7
    %v4617 = vsub.s32 %v4614, %v4616
    %v4618 = vrot.slane %v4611, %v4617
    %v4619 = vcombine.low %v4523, %v4530
    %v4621 = vunpack.c.l.s4 1983009808
    %v4622 = vunpack.c.0.s8 %v4621
    %v4623 = vlaneseq
    %v4624 = vshrl.u32 %v4623, 7
    %v4625 = vsub.s32 %v4622, %v4624
    %v4626 = vrot.slane %v4619, %v4625
    %v4627 = vcombine.low %v4533, %v4534
    %v4629 = vunpack.c.l.s4 1983009808
    %v4630 = vunpack.c.0.s8 %v4629
    %v4631 = vlaneseq
    %v4632 = vshrl.u32 %v4631, 7
    %v4633 = vsub.s32 %v4630, %v4632
    %v4634 = vrot.slane %v4627, %v4633
    %v4635 = vcombine.low %v4610, %v4618
    %v4636 = vcombine.high %v4610, %v4618
    %v4638 = vunpack.c.l.s4 1934713408
    %v4639 = vunpack.c.0.s8 %v4638
    %v4640 = vlaneseq
    %v4641 = vshrl.u32 %v4640, 7
    %v4642 = vsub.s32 %v4639, %v4641
    %v4643 = vrot.slane %v4635, %v4642
    %v4645 = vunpack.c.l.s4 1934713408
    %v4646 = vunpack.c.0.s8 %v4645
    %v4647 = vlaneseq
    %v4648 = vshrl.u32 %v4647, 7
    %v4649 = vsub.s32 %v4646, %v4648
    %v4650 = vrot.slane %v4636, %v4649
    %v4651 = vcombine.low %v4626, %v4634
    %v4652 = vcombine.high %v4626, %v4634
    %v4654 = vunpack.c.l.s4 1934713408
    %v4655 = vunpack.c.0.s8 %v4654
    %v4656 = vlaneseq
    %v4657 = vshrl.u32 %v4656, 7
    %v4658 = vsub.s32 %v4655, %v4657
    %v4659 = vrot.slane %v4651, %v4658
    %v4661 = vunpack.c.l.s4 1934713408
    %v4662 = vunpack.c.0.s8 %v4661
    %v4663 = vlaneseq
    %v4664 = vshrl.u32 %v4663, 7
    %v4665 = vsub.s32 %v4662, %v4664
    %v4666 = vrot.slane %v4652, %v4665
    %v4667 = vcombine.low %v4643, %v4659
    %v4668 = vcombine.high %v4643, %v4659
    %v4669 = vcombine.low %v4650, %v4666
    %v4670 = vcombine.high %v4650, %v4666
    %4673 = vrot.lane.b32.xlu0 %v2930, 120
    %v4674 = vpop.permute.xlu0 %4673
    %4675 = vrot.lane.b32.xlu0 %v2933, 120
    %v4676 = vpop.permute.xlu0 %4675
    %4679 = vrot.lane.b32.xlu0 %v2930, 112
    %v4680 = vpop.permute.xlu0 %4679
    %4681 = vrot.lane.b32.xlu0 %v2933, 112
    %v4682 = vpop.permute.xlu0 %4681
    %4685 = vrot.lane.b32.xlu0 %v2930, 104
    %v4686 = vpop.permute.xlu0 %4685
    %4687 = vrot.lane.b32.xlu0 %v2933, 104
    %v4688 = vpop.permute.xlu0 %4687
    %v4691 = vcombine.low %v2930, %v4680
    %v4692 = vcombine.high %v2930, %v4680
    %v4694 = vunpack.c.l.s4 1983009808
    %v4695 = vunpack.c.0.s8 %v4694
    %v4696 = vlaneseq
    %v4697 = vshrl.u32 %v4696, 7
    %v4698 = vsub.s32 %v4695, %v4697
    %v4699 = vrot.slane %v4691, %v4698
    %v4701 = vunpack.c.l.s4 1983009808
    %v4702 = vunpack.c.0.s8 %v4701
    %v4703 = vlaneseq
    %v4704 = vshrl.u32 %v4703, 7
    %v4705 = vsub.s32 %v4702, %v4704
    %v4706 = vrot.slane %v4692, %v4705
    %v4707 = vcombine.low %v4674, %v4686
    %v4708 = vcombine.high %v4674, %v4686
    %v4710 = vunpack.c.l.s4 1983009808
    %v4711 = vunpack.c.0.s8 %v4710
    %v4712 = vlaneseq
    %v4713 = vshrl.u32 %v4712, 7
    %v4714 = vsub.s32 %v4711, %v4713
    %v4715 = vrot.slane %v4707, %v4714
    %v4717 = vunpack.c.l.s4 1983009808
    %v4718 = vunpack.c.0.s8 %v4717
    %v4719 = vlaneseq
    %v4720 = vshrl.u32 %v4719, 7
    %v4721 = vsub.s32 %v4718, %v4720
    %v4722 = vrot.slane %v4708, %v4721
    %v4723 = vcombine.low %v4699, %v4715
    %v4724 = vcombine.high %v4699, %v4715
    %v4726 = vunpack.c.l.s4 1934713408
    %v4727 = vunpack.c.0.s8 %v4726
    %v4728 = vlaneseq
    %v4729 = vshrl.u32 %v4728, 7
    %v4730 = vsub.s32 %v4727, %v4729
    %v4731 = vrot.slane %v4723, %v4730
    %v4733 = vunpack.c.l.s4 1934713408
    %v4734 = vunpack.c.0.s8 %v4733
    %v4735 = vlaneseq
    %v4736 = vshrl.u32 %v4735, 7
    %v4737 = vsub.s32 %v4734, %v4736
    %v4738 = vrot.slane %v4724, %v4737
    %v4739 = vcombine.low %v4706, %v4722
    %v4740 = vcombine.high %v4706, %v4722
    %v4742 = vunpack.c.l.s4 1934713408
    %v4743 = vunpack.c.0.s8 %v4742
    %v4744 = vlaneseq
    %v4745 = vshrl.u32 %v4744, 7
    %v4746 = vsub.s32 %v4743, %v4745
    %v4747 = vrot.slane %v4739, %v4746
    %v4749 = vunpack.c.l.s4 1934713408
    %v4750 = vunpack.c.0.s8 %v4749
    %v4751 = vlaneseq
    %v4752 = vshrl.u32 %v4751, 7
    %v4753 = vsub.s32 %v4750, %v4752
    %v4754 = vrot.slane %v4740, %v4753
    %v4755 = vcombine.high %v4731, 0.0
    %v4756 = vcombine.high %v4738, 0.0
    %v4757 = vcombine.high %v4747, 0.0
    %v4758 = vcombine.high %v4754, 0.0
    %v4759 = vcombine.low %v2933, %v4682
    %v4760 = vcombine.high %v2933, %v4682
    %v4762 = vunpack.c.l.s4 1983009808
    %v4763 = vunpack.c.0.s8 %v4762
    %v4764 = vlaneseq
    %v4765 = vshrl.u32 %v4764, 7
    %v4766 = vsub.s32 %v4763, %v4765
    %v4767 = vrot.slane %v4759, %v4766
    %v4769 = vunpack.c.l.s4 1983009808
    %v4770 = vunpack.c.0.s8 %v4769
    %v4771 = vlaneseq
    %v4772 = vshrl.u32 %v4771, 7
    %v4773 = vsub.s32 %v4770, %v4772
    %v4774 = vrot.slane %v4760, %v4773
    %v4775 = vcombine.low %v4676, %v4688
    %v4776 = vcombine.high %v4676, %v4688
    %v4778 = vunpack.c.l.s4 1983009808
    %v4779 = vunpack.c.0.s8 %v4778
    %v4780 = vlaneseq
    %v4781 = vshrl.u32 %v4780, 7
    %v4782 = vsub.s32 %v4779, %v4781
    %v4783 = vrot.slane %v4775, %v4782
    %v4785 = vunpack.c.l.s4 1983009808
    %v4786 = vunpack.c.0.s8 %v4785
    %v4787 = vlaneseq
    %v4788 = vshrl.u32 %v4787, 7
    %v4789 = vsub.s32 %v4786, %v4788
    %v4790 = vrot.slane %v4776, %v4789
    %v4791 = vcombine.low %v4767, %v4783
    %v4792 = vcombine.high %v4767, %v4783
    %v4794 = vunpack.c.l.s4 1934713408
    %v4795 = vunpack.c.0.s8 %v4794
    %v4796 = vlaneseq
    %v4797 = vshrl.u32 %v4796, 7
    %v4798 = vsub.s32 %v4795, %v4797
    %v4799 = vrot.slane %v4791, %v4798
    %v4801 = vunpack.c.l.s4 1934713408
    %v4802 = vunpack.c.0.s8 %v4801
    %v4803 = vlaneseq
    %v4804 = vshrl.u32 %v4803, 7
    %v4805 = vsub.s32 %v4802, %v4804
    %v4806 = vrot.slane %v4792, %v4805
    %v4807 = vcombine.low %v4774, %v4790
    %v4808 = vcombine.high %v4774, %v4790
    %v4810 = vunpack.c.l.s4 1934713408
    %v4811 = vunpack.c.0.s8 %v4810
    %v4812 = vlaneseq
    %v4813 = vshrl.u32 %v4812, 7
    %v4814 = vsub.s32 %v4811, %v4813
    %v4815 = vrot.slane %v4807, %v4814
    %v4817 = vunpack.c.l.s4 1934713408
    %v4818 = vunpack.c.0.s8 %v4817
    %v4819 = vlaneseq
    %v4820 = vshrl.u32 %v4819, 7
    %v4821 = vsub.s32 %v4818, %v4820
    %v4822 = vrot.slane %v4808, %v4821
    %v4823 = vcombine.high %v4799, 0.0
    %v4824 = vcombine.high %v4806, 0.0
    %v4825 = vcombine.high %v4815, 0.0
    %v4826 = vcombine.high %v4822, 0.0
    %v4827 = vcombine.low %v4731, %v4738
    %v4829 = vunpack.c.l.s4 1983009808
    %v4830 = vunpack.c.0.s8 %v4829
    %v4831 = vlaneseq
    %v4832 = vshrl.u32 %v4831, 7
    %v4833 = vsub.s32 %v4830, %v4832
    %v4834 = vrot.slane %v4827, %v4833
    %v4835 = vcombine.low %v4755, %v4756
    %v4837 = vunpack.c.l.s4 1983009808
    %v4838 = vunpack.c.0.s8 %v4837
    %v4839 = vlaneseq
    %v4840 = vshrl.u32 %v4839, 7
    %v4841 = vsub.s32 %v4838, %v4840
    %v4842 = vrot.slane %v4835, %v4841
    %v4843 = vcombine.low %v4747, %v4754
    %v4845 = vunpack.c.l.s4 1983009808
    %v4846 = vunpack.c.0.s8 %v4845
    %v4847 = vlaneseq
    %v4848 = vshrl.u32 %v4847, 7
    %v4849 = vsub.s32 %v4846, %v4848
    %v4850 = vrot.slane %v4843, %v4849
    %v4851 = vcombine.low %v4757, %v4758
    %v4853 = vunpack.c.l.s4 1983009808
    %v4854 = vunpack.c.0.s8 %v4853
    %v4855 = vlaneseq
    %v4856 = vshrl.u32 %v4855, 7
    %v4857 = vsub.s32 %v4854, %v4856
    %v4858 = vrot.slane %v4851, %v4857
    %v4859 = vcombine.low %v4834, %v4842
    %v4860 = vcombine.high %v4834, %v4842
    %v4862 = vunpack.c.l.s4 1934713408
    %v4863 = vunpack.c.0.s8 %v4862
    %v4864 = vlaneseq
    %v4865 = vshrl.u32 %v4864, 7
    %v4866 = vsub.s32 %v4863, %v4865
    %v4867 = vrot.slane %v4859, %v4866
    %v4869 = vunpack.c.l.s4 1934713408
    %v4870 = vunpack.c.0.s8 %v4869
    %v4871 = vlaneseq
    %v4872 = vshrl.u32 %v4871, 7
    %v4873 = vsub.s32 %v4870, %v4872
    %v4874 = vrot.slane %v4860, %v4873
    %v4875 = vcombine.low %v4850, %v4858
    %v4876 = vcombine.high %v4850, %v4858
    %v4878 = vunpack.c.l.s4 1934713408
    %v4879 = vunpack.c.0.s8 %v4878
    %v4880 = vlaneseq
    %v4881 = vshrl.u32 %v4880, 7
    %v4882 = vsub.s32 %v4879, %v4881
    %v4883 = vrot.slane %v4875, %v4882
    %v4885 = vunpack.c.l.s4 1934713408
    %v4886 = vunpack.c.0.s8 %v4885
    %v4887 = vlaneseq
    %v4888 = vshrl.u32 %v4887, 7
    %v4889 = vsub.s32 %v4886, %v4888
    %v4890 = vrot.slane %v4876, %v4889
    %v4891 = vcombine.low %v4867, %v4883
    %v4892 = vcombine.high %v4867, %v4883
    %v4893 = vcombine.low %v4874, %v4890
    %v4894 = vcombine.high %v4874, %v4890
    %v4895 = vcombine.low %v4799, %v4806
    %v4897 = vunpack.c.l.s4 1983009808
    %v4898 = vunpack.c.0.s8 %v4897
    %v4899 = vlaneseq
    %v4900 = vshrl.u32 %v4899, 7
    %v4901 = vsub.s32 %v4898, %v4900
    %v4902 = vrot.slane %v4895, %v4901
    %v4903 = vcombine.low %v4823, %v4824
    %v4905 = vunpack.c.l.s4 1983009808
    %v4906 = vunpack.c.0.s8 %v4905
    %v4907 = vlaneseq
    %v4908 = vshrl.u32 %v4907, 7
    %v4909 = vsub.s32 %v4906, %v4908
    %v4910 = vrot.slane %v4903, %v4909
    %v4911 = vcombine.low %v4815, %v4822
    %v4913 = vunpack.c.l.s4 1983009808
    %v4914 = vunpack.c.0.s8 %v4913
    %v4915 = vlaneseq
    %v4916 = vshrl.u32 %v4915, 7
    %v4917 = vsub.s32 %v4914, %v4916
    %v4918 = vrot.slane %v4911, %v4917
    %v4919 = vcombine.low %v4825, %v4826
    %v4921 = vunpack.c.l.s4 1983009808
    %v4922 = vunpack.c.0.s8 %v4921
    %v4923 = vlaneseq
    %v4924 = vshrl.u32 %v4923, 7
    %v4925 = vsub.s32 %v4922, %v4924
    %v4926 = vrot.slane %v4919, %v4925
    %v4927 = vcombine.low %v4902, %v4910
    %v4928 = vcombine.high %v4902, %v4910
    %v4930 = vunpack.c.l.s4 1934713408
    %v4931 = vunpack.c.0.s8 %v4930
    %v4932 = vlaneseq
    %v4933 = vshrl.u32 %v4932, 7
    %v4934 = vsub.s32 %v4931, %v4933
    %v4935 = vrot.slane %v4927, %v4934
    %v4937 = vunpack.c.l.s4 1934713408
    %v4938 = vunpack.c.0.s8 %v4937
    %v4939 = vlaneseq
    %v4940 = vshrl.u32 %v4939, 7
    %v4941 = vsub.s32 %v4938, %v4940
    %v4942 = vrot.slane %v4928, %v4941
    %v4943 = vcombine.low %v4918, %v4926
    %v4944 = vcombine.high %v4918, %v4926
    %v4946 = vunpack.c.l.s4 1934713408
    %v4947 = vunpack.c.0.s8 %v4946
    %v4948 = vlaneseq
    %v4949 = vshrl.u32 %v4948, 7
    %v4950 = vsub.s32 %v4947, %v4949
    %v4951 = vrot.slane %v4943, %v4950
    %v4953 = vunpack.c.l.s4 1934713408
    %v4954 = vunpack.c.0.s8 %v4953
    %v4955 = vlaneseq
    %v4956 = vshrl.u32 %v4955, 7
    %v4957 = vsub.s32 %v4954, %v4956
    %v4958 = vrot.slane %v4944, %v4957
    %v4959 = vcombine.low %v4935, %v4951
    %v4960 = vcombine.high %v4935, %v4951
    %v4961 = vcombine.low %v4942, %v4958
    %v4962 = vcombine.high %v4942, %v4958
    %v4963 = vpack.c.bf16 %v4375, %v4375
    %v4964 = vpack.c.bf16 %v4376, %v4376
    %v4965 = vpack.c.bf16 %v4377, %v4377
    %v4966 = vpack.c.bf16 %v4378, %v4378
    %v4967 = vpack.c.bf16 %v4667, %v4599
    %v4968 = vpack.c.bf16 %v4668, %v4600
    %v4969 = vpack.c.bf16 %v4669, %v4601
    %v4970 = vpack.c.bf16 %v4670, %v4602
    %v4972 = vsel %vm1008, %v4963, 0
    %v4975 = vsel %vm1008, %v4967, 0
    %4977 = vmatprep.subr.bf16.mxu0 0
    %4978 = vmatpush1.bf16.xpose.msra.mxu0 0
    %4979 = vmatprep.subr.bf16.mxu0 0
    %4980 = vmatpush1.bf16.xpose.msra.mxu0 0
    %4981 = vmatprep.subr.bf16.mxu0 0
    %4982 = vmatpush1.bf16.xpose.msra.mxu0 0
    %4983 = vmatprep.subr.bf16.mxu0 0
    %4984 = vmatpush1.bf16.xpose.msra.mxu0 0
    %4985 = vmatprep.subr.bf16.mxu0 0
    %4986 = vmatpush1.bf16.xpose.msra.mxu0 0
    %4987 = vmatprep.subr.bf16.mxu0 0
    %4988 = vmatpush1.bf16.xpose.msra.mxu0 0
    %4989 = vmatprep.subr.bf16.mxu0 0
    %4990 = vmatpush1.bf16.xpose.msra.mxu0 0
    %4991 = vmatprep.subr.bf16.mxu0 0
    %4992 = vmatpush1.bf16.xpose.msra.mxu0 %v4975
    %4993 = vmatprep.subr.bf16.mxu0 0
    %4994 = vmatpush2.bf16.xpose.msra.mxu0 0
    %4995 = vmatprep.subr.bf16.mxu0 0
    %4996 = vmatpush2.bf16.xpose.msra.mxu0 0
    %4997 = vmatprep.subr.bf16.mxu0 0
    %4998 = vmatpush2.bf16.xpose.msra.mxu0 0
    %4999 = vmatprep.subr.bf16.mxu0 0
    %5000 = vmatpush2.bf16.xpose.msra.mxu0 0
    %5001 = vmatprep.subr.bf16.mxu0 0
    %5002 = vmatpush2.bf16.xpose.msra.mxu0 0
    %5003 = vmatprep.subr.bf16.mxu0 0
    %5004 = vmatpush2.bf16.xpose.msra.mxu0 0
    %5005 = vmatprep.subr.bf16.mxu0 0
    %5006 = vmatpush2.bf16.xpose.msra.mxu0 0
    %5007 = vmatprep.subr.bf16.mxu0 0
    %5008 = vmatpush2.bf16.xpose.msra.mxu0 0
    %5009 = vmatprep.mubr.bf16.mxu0 0
    %5010 = vmatmul.mubr.bf16.gmra.mxu0 %v4972
    %v5011 = vpop.f32.mrf.mxu0
    %v5012 = vadd.f32 0.0, %v5011
    %v5013 = vpop.f32.mrf.mxu0
    %v5014 = vpop.f32.mrf.mxu0
    %v5015 = vpop.f32.mrf.mxu0
    %5016 = vdwg.mxu0
    %v5018 = vsel %vm1008, %v4964, 0
    %v5021 = vsel %vm1008, %v4968, 0
    %5023 = vmatprep.subr.bf16.mxu0 0
    %5024 = vmatpush1.bf16.xpose.msra.mxu0 0
    %5025 = vmatprep.subr.bf16.mxu0 0
    %5026 = vmatpush1.bf16.xpose.msra.mxu0 0
    %5027 = vmatprep.subr.bf16.mxu0 0
    %5028 = vmatpush1.bf16.xpose.msra.mxu0 0
    %5029 = vmatprep.subr.bf16.mxu0 0
    %5030 = vmatpush1.bf16.xpose.msra.mxu0 0
    %5031 = vmatprep.subr.bf16.mxu0 0
    %5032 = vmatpush1.bf16.xpose.msra.mxu0 0
    %5033 = vmatprep.subr.bf16.mxu0 0
    %5034 = vmatpush1.bf16.xpose.msra.mxu0 0
    %5035 = vmatprep.subr.bf16.mxu0 0
    %5036 = vmatpush1.bf16.xpose.msra.mxu0 0
    %5037 = vmatprep.subr.bf16.mxu0 0
    %5038 = vmatpush1.bf16.xpose.msra.mxu0 %v5021
    %5039 = vmatprep.subr.bf16.mxu0 0
    %5040 = vmatpush2.bf16.xpose.msra.mxu0 0
    %5041 = vmatprep.subr.bf16.mxu0 0
    %5042 = vmatpush2.bf16.xpose.msra.mxu0 0
    %5043 = vmatprep.subr.bf16.mxu0 0
    %5044 = vmatpush2.bf16.xpose.msra.mxu0 0
    %5045 = vmatprep.subr.bf16.mxu0 0
    %5046 = vmatpush2.bf16.xpose.msra.mxu0 0
    %5047 = vmatprep.subr.bf16.mxu0 0
    %5048 = vmatpush2.bf16.xpose.msra.mxu0 0
    %5049 = vmatprep.subr.bf16.mxu0 0
    %5050 = vmatpush2.bf16.xpose.msra.mxu0 0
    %5051 = vmatprep.subr.bf16.mxu0 0
    %5052 = vmatpush2.bf16.xpose.msra.mxu0 0
    %5053 = vmatprep.subr.bf16.mxu0 0
    %5054 = vmatpush2.bf16.xpose.msra.mxu0 0
    %5055 = vmatprep.mubr.bf16.mxu0 0
    %5056 = vmatmul.mubr.bf16.gmra.mxu0 %v5018
    %v5057 = vpop.f32.mrf.mxu0
    %v5058 = vadd.f32 0.0, %v5057
    %v5059 = vpop.f32.mrf.mxu0
    %v5060 = vpop.f32.mrf.mxu0
    %v5061 = vpop.f32.mrf.mxu0
    %5062 = vdwg.mxu0
    %v5064 = vsel %vm1008, %v4965, 0
    %v5067 = vsel %vm1008, %v4969, 0
    %5069 = vmatprep.subr.bf16.mxu0 0
    %5070 = vmatpush1.bf16.xpose.msra.mxu0 0
    %5071 = vmatprep.subr.bf16.mxu0 0
    %5072 = vmatpush1.bf16.xpose.msra.mxu0 0
    %5073 = vmatprep.subr.bf16.mxu0 0
    %5074 = vmatpush1.bf16.xpose.msra.mxu0 0
    %5075 = vmatprep.subr.bf16.mxu0 0
    %5076 = vmatpush1.bf16.xpose.msra.mxu0 0
    %5077 = vmatprep.subr.bf16.mxu0 0
    %5078 = vmatpush1.bf16.xpose.msra.mxu0 0
    %5079 = vmatprep.subr.bf16.mxu0 0
    %5080 = vmatpush1.bf16.xpose.msra.mxu0 0
    %5081 = vmatprep.subr.bf16.mxu0 0
    %5082 = vmatpush1.bf16.xpose.msra.mxu0 0
    %5083 = vmatprep.subr.bf16.mxu0 0
    %5084 = vmatpush1.bf16.xpose.msra.mxu0 %v5067
    %5085 = vmatprep.subr.bf16.mxu0 0
    %5086 = vmatpush2.bf16.xpose.msra.mxu0 0
    %5087 = vmatprep.subr.bf16.mxu0 0
    %5088 = vmatpush2.bf16.xpose.msra.mxu0 0
    %5089 = vmatprep.subr.bf16.mxu0 0
    %5090 = vmatpush2.bf16.xpose.msra.mxu0 0
    %5091 = vmatprep.subr.bf16.mxu0 0
    %5092 = vmatpush2.bf16.xpose.msra.mxu0 0
    %5093 = vmatprep.subr.bf16.mxu0 0
    %5094 = vmatpush2.bf16.xpose.msra.mxu0 0
    %5095 = vmatprep.subr.bf16.mxu0 0
    %5096 = vmatpush2.bf16.xpose.msra.mxu0 0
    %5097 = vmatprep.subr.bf16.mxu0 0
    %5098 = vmatpush2.bf16.xpose.msra.mxu0 0
    %5099 = vmatprep.subr.bf16.mxu0 0
    %5100 = vmatpush2.bf16.xpose.msra.mxu0 0
    %5101 = vmatprep.mubr.bf16.mxu0 0
    %5102 = vmatmul.mubr.bf16.gmra.mxu0 %v5064
    %v5103 = vpop.f32.mrf.mxu0
    %v5104 = vadd.f32 0.0, %v5103
    %v5105 = vpop.f32.mrf.mxu0
    %v5106 = vpop.f32.mrf.mxu0
    %v5107 = vpop.f32.mrf.mxu0
    %5108 = vdwg.mxu0
    %v5110 = vsel %vm1008, %v4966, 0
    %v5113 = vsel %vm1008, %v4970, 0
    %5115 = vmatprep.subr.bf16.mxu0 0
    %5116 = vmatpush1.bf16.xpose.msra.mxu0 0
    %5117 = vmatprep.subr.bf16.mxu0 0
    %5118 = vmatpush1.bf16.xpose.msra.mxu0 0
    %5119 = vmatprep.subr.bf16.mxu0 0
    %5120 = vmatpush1.bf16.xpose.msra.mxu0 0
    %5121 = vmatprep.subr.bf16.mxu0 0
    %5122 = vmatpush1.bf16.xpose.msra.mxu0 0
    %5123 = vmatprep.subr.bf16.mxu0 0
    %5124 = vmatpush1.bf16.xpose.msra.mxu0 0
    %5125 = vmatprep.subr.bf16.mxu0 0
    %5126 = vmatpush1.bf16.xpose.msra.mxu0 0
    %5127 = vmatprep.subr.bf16.mxu0 0
    %5128 = vmatpush1.bf16.xpose.msra.mxu0 0
    %5129 = vmatprep.subr.bf16.mxu0 0
    %5130 = vmatpush1.bf16.xpose.msra.mxu0 %v5113
    %5131 = vmatprep.subr.bf16.mxu0 0
    %5132 = vmatpush2.bf16.xpose.msra.mxu0 0
    %5133 = vmatprep.subr.bf16.mxu0 0
    %5134 = vmatpush2.bf16.xpose.msra.mxu0 0
    %5135 = vmatprep.subr.bf16.mxu0 0
    %5136 = vmatpush2.bf16.xpose.msra.mxu0 0
    %5137 = vmatprep.subr.bf16.mxu0 0
    %5138 = vmatpush2.bf16.xpose.msra.mxu0 0
    %5139 = vmatprep.subr.bf16.mxu0 0
    %5140 = vmatpush2.bf16.xpose.msra.mxu0 0
    %5141 = vmatprep.subr.bf16.mxu0 0
    %5142 = vmatpush2.bf16.xpose.msra.mxu0 0
    %5143 = vmatprep.subr.bf16.mxu0 0
    %5144 = vmatpush2.bf16.xpose.msra.mxu0 0
    %5145 = vmatprep.subr.bf16.mxu0 0
    %5146 = vmatpush2.bf16.xpose.msra.mxu0 0
    %5147 = vmatprep.mubr.bf16.mxu0 0
    %5148 = vmatmul.mubr.bf16.gmra.mxu0 %v5110
    %v5149 = vpop.f32.mrf.mxu0
    %v5150 = vadd.f32 0.0, %v5149
    %v5151 = vpop.f32.mrf.mxu0
    %v5152 = vpop.f32.mrf.mxu0
    %v5153 = vpop.f32.mrf.mxu0
    %5154 = vdwg.mxu0
    %v5155 = vsel %vm1579, %v5012, -inf
    %5156 = vmax.xlane.f32.xlu0 %v5155
    %v5157 = vpop.xlane.xlu0 %5156
    %v5158 = vsel %vm1579, %v5058, -inf
    %5159 = vmax.xlane.f32.xlu0 %v5158
    %v5160 = vpop.xlane.xlu0 %5159
    %v5161 = vsel %vm1579, %v5104, -inf
    %5162 = vmax.xlane.f32.xlu0 %v5161
    %v5163 = vpop.xlane.xlu0 %5162
    %v5164 = vsel %vm1579, %v5150, -inf
    %5165 = vmax.xlane.f32.xlu0 %v5164
    %v5166 = vpop.xlane.xlu0 %5165
    %v5167 = vsub.f32 %v5012, %v5157
    %v5168 = vsub.f32 %v5058, %v5160
    %v5169 = vsub.f32 %v5104, %v5163
    %v5170 = vsub.f32 %v5150, %v5166
    %v5171 = vmul.f32 %v5167, 1.442695
    %v5172 = vpow.pop %v5171
    %v5173 = vmul.f32 %v5168, 1.442695
    %v5174 = vpow.pop %v5173
    %v5175 = vmul.f32 %v5169, 1.442695
    %v5176 = vpow.pop %v5175
    %v5177 = vmul.f32 %v5170, 1.442695
    %v5178 = vpow.pop %v5177
    %v5179 = vsel %vm1579, %v5172, 0.0
    %5180 = vadd.xlane.f32.xlu0 %v5179
    %v5181 = vpop.xlane.xlu0 %5180
    %v5182 = vsel %vm1579, %v5174, 0.0
    %5183 = vadd.xlane.f32.xlu0 %v5182
    %v5184 = vpop.xlane.xlu0 %5183
    %v5185 = vsel %vm1579, %v5176, 0.0
    %5186 = vadd.xlane.f32.xlu0 %v5185
    %v5187 = vpop.xlane.xlu0 %5186
    %v5188 = vsel %vm1579, %v5178, 0.0
    %5189 = vadd.xlane.f32.xlu0 %v5188
    %v5190 = vpop.xlane.xlu0 %5189
    %v5191 = vpack.c.bf16 %v5172, %v5172
    %v5192 = vpack.c.bf16 %v5174, %v5174
    %v5193 = vpack.c.bf16 %v5176, %v5176
    %v5194 = vpack.c.bf16 %v5178, %v5178
    %v5195 = vpack.c.bf16 %v4959, %v4891
    %v5196 = vpack.c.bf16 %v4960, %v4892
    %v5197 = vpack.c.bf16 %v4961, %v4893
    %v5198 = vpack.c.bf16 %v4962, %v4894
    %v5200 = vsel %vm1579, %v5191, 0
    %5202 = vmatprep.subr.bf16.mxu0 0
    %5203 = vmatpush1.bf16.msra.mxu0 0
    %5204 = vmatprep.subr.bf16.mxu0 0
    %5205 = vmatpush1.bf16.msra.mxu0 0
    %5206 = vmatprep.subr.bf16.mxu0 0
    %5207 = vmatpush1.bf16.msra.mxu0 0
    %5208 = vmatprep.subr.bf16.mxu0 0
    %5209 = vmatpush1.bf16.msra.mxu0 0
    %5210 = vmatprep.subr.bf16.mxu0 0
    %5211 = vmatpush1.bf16.msra.mxu0 0
    %5212 = vmatprep.subr.bf16.mxu0 0
    %5213 = vmatpush1.bf16.msra.mxu0 0
    %5214 = vmatprep.subr.bf16.mxu0 0
    %5215 = vmatpush1.bf16.msra.mxu0 0
    %5216 = vmatprep.subr.bf16.mxu0 0
    %5217 = vmatpush1.bf16.msra.mxu0 %v5195
    %5218 = vmatprep.subr.bf16.mxu0 0
    %5219 = vmatpush2.bf16.msra.mxu0 0
    %5220 = vmatprep.subr.bf16.mxu0 0
    %5221 = vmatpush2.bf16.msra.mxu0 0
    %5222 = vmatprep.subr.bf16.mxu0 0
    %5223 = vmatpush2.bf16.msra.mxu0 0
    %5224 = vmatprep.subr.bf16.mxu0 0
    %5225 = vmatpush2.bf16.msra.mxu0 0
    %5226 = vmatprep.subr.bf16.mxu0 0
    %5227 = vmatpush2.bf16.msra.mxu0 0
    %5228 = vmatprep.subr.bf16.mxu0 0
    %5229 = vmatpush2.bf16.msra.mxu0 0
    %5230 = vmatprep.subr.bf16.mxu0 0
    %5231 = vmatpush2.bf16.msra.mxu0 0
    %5232 = vmatprep.subr.bf16.mxu0 0
    %5233 = vmatpush2.bf16.msra.mxu0 0
    %5234 = vmatprep.mubr.bf16.mxu0 0
    %5235 = vmatmul.mubr.bf16.gmra.mxu0 %v5200
    %v5236 = vpop.f32.mrf.mxu0
    %v5237 = vadd.f32 0.0, %v5236
    %v5238 = vpop.f32.mrf.mxu0
    %v5239 = vpop.f32.mrf.mxu0
    %v5240 = vpop.f32.mrf.mxu0
    %5241 = vdwg.mxu0
    %v5243 = vsel %vm1579, %v5192, 0
    %5245 = vmatprep.subr.bf16.mxu0 0
    %5246 = vmatpush1.bf16.msra.mxu0 0
    %5247 = vmatprep.subr.bf16.mxu0 0
    %5248 = vmatpush1.bf16.msra.mxu0 0
    %5249 = vmatprep.subr.bf16.mxu0 0
    %5250 = vmatpush1.bf16.msra.mxu0 0
    %5251 = vmatprep.subr.bf16.mxu0 0
    %5252 = vmatpush1.bf16.msra.mxu0 0
    %5253 = vmatprep.subr.bf16.mxu0 0
    %5254 = vmatpush1.bf16.msra.mxu0 0
    %5255 = vmatprep.subr.bf16.mxu0 0
    %5256 = vmatpush1.bf16.msra.mxu0 0
    %5257 = vmatprep.subr.bf16.mxu0 0
    %5258 = vmatpush1.bf16.msra.mxu0 0
    %5259 = vmatprep.subr.bf16.mxu0 0
    %5260 = vmatpush1.bf16.msra.mxu0 %v5196
    %5261 = vmatprep.subr.bf16.mxu0 0
    %5262 = vmatpush2.bf16.msra.mxu0 0
    %5263 = vmatprep.subr.bf16.mxu0 0
    %5264 = vmatpush2.bf16.msra.mxu0 0
    %5265 = vmatprep.subr.bf16.mxu0 0
    %5266 = vmatpush2.bf16.msra.mxu0 0
    %5267 = vmatprep.subr.bf16.mxu0 0
    %5268 = vmatpush2.bf16.msra.mxu0 0
    %5269 = vmatprep.subr.bf16.mxu0 0
    %5270 = vmatpush2.bf16.msra.mxu0 0
    %5271 = vmatprep.subr.bf16.mxu0 0
    %5272 = vmatpush2.bf16.msra.mxu0 0
    %5273 = vmatprep.subr.bf16.mxu0 0
    %5274 = vmatpush2.bf16.msra.mxu0 0
    %5275 = vmatprep.subr.bf16.mxu0 0
    %5276 = vmatpush2.bf16.msra.mxu0 0
    %5277 = vmatprep.mubr.bf16.mxu0 0
    %5278 = vmatmul.mubr.bf16.gmra.mxu0 %v5243
    %v5279 = vpop.f32.mrf.mxu0
    %v5280 = vadd.f32 0.0, %v5279
    %v5281 = vpop.f32.mrf.mxu0
    %v5282 = vpop.f32.mrf.mxu0
    %v5283 = vpop.f32.mrf.mxu0
    %5284 = vdwg.mxu0
    %v5286 = vsel %vm1579, %v5193, 0
    %5288 = vmatprep.subr.bf16.mxu0 0
    %5289 = vmatpush1.bf16.msra.mxu0 0
    %5290 = vmatprep.subr.bf16.mxu0 0
    %5291 = vmatpush1.bf16.msra.mxu0 0
    %5292 = vmatprep.subr.bf16.mxu0 0
    %5293 = vmatpush1.bf16.msra.mxu0 0
    %5294 = vmatprep.subr.bf16.mxu0 0
    %5295 = vmatpush1.bf16.msra.mxu0 0
    %5296 = vmatprep.subr.bf16.mxu0 0
    %5297 = vmatpush1.bf16.msra.mxu0 0
    %5298 = vmatprep.subr.bf16.mxu0 0
    %5299 = vmatpush1.bf16.msra.mxu0 0
    %5300 = vmatprep.subr.bf16.mxu0 0
    %5301 = vmatpush1.bf16.msra.mxu0 0
    %5302 = vmatprep.subr.bf16.mxu0 0
    %5303 = vmatpush1.bf16.msra.mxu0 %v5197
    %5304 = vmatprep.subr.bf16.mxu0 0
    %5305 = vmatpush2.bf16.msra.mxu0 0
    %5306 = vmatprep.subr.bf16.mxu0 0
    %5307 = vmatpush2.bf16.msra.mxu0 0
    %5308 = vmatprep.subr.bf16.mxu0 0
    %5309 = vmatpush2.bf16.msra.mxu0 0
    %5310 = vmatprep.subr.bf16.mxu0 0
    %5311 = vmatpush2.bf16.msra.mxu0 0
    %5312 = vmatprep.subr.bf16.mxu0 0
    %5313 = vmatpush2.bf16.msra.mxu0 0
    %5314 = vmatprep.subr.bf16.mxu0 0
    %5315 = vmatpush2.bf16.msra.mxu0 0
    %5316 = vmatprep.subr.bf16.mxu0 0
    %5317 = vmatpush2.bf16.msra.mxu0 0
    %5318 = vmatprep.subr.bf16.mxu0 0
    %5319 = vmatpush2.bf16.msra.mxu0 0
    %5320 = vmatprep.mubr.bf16.mxu0 0
    %5321 = vmatmul.mubr.bf16.gmra.mxu0 %v5286
    %v5322 = vpop.f32.mrf.mxu0
    %v5323 = vadd.f32 0.0, %v5322
    %v5324 = vpop.f32.mrf.mxu0
    %v5325 = vpop.f32.mrf.mxu0
    %v5326 = vpop.f32.mrf.mxu0
    %5327 = vdwg.mxu0
    %v5329 = vsel %vm1579, %v5194, 0
    %5331 = vmatprep.subr.bf16.mxu0 0
    %5332 = vmatpush1.bf16.msra.mxu0 0
    %5333 = vmatprep.subr.bf16.mxu0 0
    %5334 = vmatpush1.bf16.msra.mxu0 0
    %5335 = vmatprep.subr.bf16.mxu0 0
    %5336 = vmatpush1.bf16.msra.mxu0 0
    %5337 = vmatprep.subr.bf16.mxu0 0
    %5338 = vmatpush1.bf16.msra.mxu0 0
    %5339 = vmatprep.subr.bf16.mxu0 0
    %5340 = vmatpush1.bf16.msra.mxu0 0
    %5341 = vmatprep.subr.bf16.mxu0 0
    %5342 = vmatpush1.bf16.msra.mxu0 0
    %5343 = vmatprep.subr.bf16.mxu0 0
    %5344 = vmatpush1.bf16.msra.mxu0 0
    %5345 = vmatprep.subr.bf16.mxu0 0
    %5346 = vmatpush1.bf16.msra.mxu0 %v5198
    %5347 = vmatprep.subr.bf16.mxu0 0
    %5348 = vmatpush2.bf16.msra.mxu0 0
    %5349 = vmatprep.subr.bf16.mxu0 0
    %5350 = vmatpush2.bf16.msra.mxu0 0
    %5351 = vmatprep.subr.bf16.mxu0 0
    %5352 = vmatpush2.bf16.msra.mxu0 0
    %5353 = vmatprep.subr.bf16.mxu0 0
    %5354 = vmatpush2.bf16.msra.mxu0 0
    %5355 = vmatprep.subr.bf16.mxu0 0
    %5356 = vmatpush2.bf16.msra.mxu0 0
    %5357 = vmatprep.subr.bf16.mxu0 0
    %5358 = vmatpush2.bf16.msra.mxu0 0
    %5359 = vmatprep.subr.bf16.mxu0 0
    %5360 = vmatpush2.bf16.msra.mxu0 0
    %5361 = vmatprep.subr.bf16.mxu0 0
    %5362 = vmatpush2.bf16.msra.mxu0 0
    %5363 = vmatprep.mubr.bf16.mxu0 0
    %5364 = vmatmul.mubr.bf16.gmra.mxu0 %v5329
    %v5365 = vpop.f32.mrf.mxu0
    %v5366 = vadd.f32 0.0, %v5365
    %v5367 = vpop.f32.mrf.mxu0
    %v5368 = vpop.f32.mrf.mxu0
    %v5369 = vpop.f32.mrf.mxu0
    %5370 = vdwg.mxu0
    %v5371 = vrcp.pop %v5181
    %v5372 = vrcp.pop %v5184
    %v5373 = vrcp.pop %v5187
    %v5374 = vrcp.pop %v5190
    %v5375 = vmul.f32 %v5237, %v5371
    %v5376 = vmul.f32 %v5280, %v5372
    %v5377 = vmul.f32 %v5323, %v5373
    %v5378 = vmul.f32 %v5366, %v5374
    %v5379 = vcombine.low %v5375, %v5377
    %v5380 = vcombine.high %v5375, %v5377
    %v5382 = vunpack.c.l.s4 1983009808
    %v5383 = vunpack.c.0.s8 %v5382
    %v5384 = vlaneseq
    %v5385 = vshrl.u32 %v5384, 7
    %v5386 = vsub.s32 %v5383, %v5385
    %v5387 = vrot.slane %v5379, %v5386
    %v5389 = vunpack.c.l.s4 1983009808
    %v5390 = vunpack.c.0.s8 %v5389
    %v5391 = vlaneseq
    %v5392 = vshrl.u32 %v5391, 7
    %v5393 = vsub.s32 %v5390, %v5392
    %v5394 = vrot.slane %v5380, %v5393
    %v5395 = vcombine.low %v5376, %v5378
    %v5396 = vcombine.high %v5376, %v5378
    %v5398 = vunpack.c.l.s4 1983009808
    %v5399 = vunpack.c.0.s8 %v5398
    %v5400 = vlaneseq
    %v5401 = vshrl.u32 %v5400, 7
    %v5402 = vsub.s32 %v5399, %v5401
    %v5403 = vrot.slane %v5395, %v5402
    %v5405 = vunpack.c.l.s4 1983009808
    %v5406 = vunpack.c.0.s8 %v5405
    %v5407 = vlaneseq
    %v5408 = vshrl.u32 %v5407, 7
    %v5409 = vsub.s32 %v5406, %v5408
    %v5410 = vrot.slane %v5396, %v5409
    %v5411 = vcombine.low %v5387, %v5403
    %v5412 = vcombine.high %v5387, %v5403
    %v5414 = vunpack.c.l.s4 1934713408
    %v5415 = vunpack.c.0.s8 %v5414
    %v5416 = vlaneseq
    %v5417 = vshrl.u32 %v5416, 7
    %v5418 = vsub.s32 %v5415, %v5417
    %v5419 = vrot.slane %v5411, %v5418
    %v5421 = vunpack.c.l.s4 1934713408
    %v5422 = vunpack.c.0.s8 %v5421
    %v5423 = vlaneseq
    %v5424 = vshrl.u32 %v5423, 7
    %v5425 = vsub.s32 %v5422, %v5424
    %v5426 = vrot.slane %v5412, %v5425
    %v5427 = vcombine.low %v5394, %v5410
    %v5428 = vcombine.high %v5394, %v5410
    %v5430 = vunpack.c.l.s4 1934713408
    %v5431 = vunpack.c.0.s8 %v5430
    %v5432 = vlaneseq
    %v5433 = vshrl.u32 %v5432, 7
    %v5434 = vsub.s32 %v5431, %v5433
    %v5435 = vrot.slane %v5427, %v5434
    %v5437 = vunpack.c.l.s4 1934713408
    %v5438 = vunpack.c.0.s8 %v5437
    %v5439 = vlaneseq
    %v5440 = vshrl.u32 %v5439, 7
    %v5441 = vsub.s32 %v5438, %v5440
    %v5442 = vrot.slane %v5428, %v5441
    %v5443 = vcombine.high %v5419, 0.0
    %v5444 = vcombine.high %v5426, 0.0
    %v5445 = vcombine.high %v5435, 0.0
    %v5446 = vcombine.high %v5442, 0.0
    %v5447 = vcombine.low %v5419, %v5426
    %v5449 = vunpack.c.l.s4 1983009808
    %v5450 = vunpack.c.0.s8 %v5449
    %v5451 = vlaneseq
    %v5452 = vshrl.u32 %v5451, 7
    %v5453 = vsub.s32 %v5450, %v5452
    %v5454 = vrot.slane %v5447, %v5453
    %v5455 = vcombine.low %v5443, %v5444
    %v5457 = vunpack.c.l.s4 1983009808
    %v5458 = vunpack.c.0.s8 %v5457
    %v5459 = vlaneseq
    %v5460 = vshrl.u32 %v5459, 7
    %v5461 = vsub.s32 %v5458, %v5460
    %v5462 = vrot.slane %v5455, %v5461
    %v5463 = vcombine.low %v5435, %v5442
    %v5465 = vunpack.c.l.s4 1983009808
    %v5466 = vunpack.c.0.s8 %v5465
    %v5467 = vlaneseq
    %v5468 = vshrl.u32 %v5467, 7
    %v5469 = vsub.s32 %v5466, %v5468
    %v5470 = vrot.slane %v5463, %v5469
    %v5471 = vcombine.low %v5445, %v5446
    %v5473 = vunpack.c.l.s4 1983009808
    %v5474 = vunpack.c.0.s8 %v5473
    %v5475 = vlaneseq
    %v5476 = vshrl.u32 %v5475, 7
    %v5477 = vsub.s32 %v5474, %v5476
    %v5478 = vrot.slane %v5471, %v5477
    %v5479 = vcombine.low %v5454, %v5462
    %v5480 = vcombine.high %v5454, %v5462
    %v5482 = vunpack.c.l.s4 1934713408
    %v5483 = vunpack.c.0.s8 %v5482
    %v5484 = vlaneseq
    %v5485 = vshrl.u32 %v5484, 7
    %v5486 = vsub.s32 %v5483, %v5485
    %v5487 = vrot.slane %v5479, %v5486
    %v5489 = vunpack.c.l.s4 1934713408
    %v5490 = vunpack.c.0.s8 %v5489
    %v5491 = vlaneseq
    %v5492 = vshrl.u32 %v5491, 7
    %v5493 = vsub.s32 %v5490, %v5492
    %v5494 = vrot.slane %v5480, %v5493
    %v5495 = vcombine.low %v5470, %v5478
    %v5496 = vcombine.high %v5470, %v5478
    %v5498 = vunpack.c.l.s4 1934713408
    %v5499 = vunpack.c.0.s8 %v5498
    %v5500 = vlaneseq
    %v5501 = vshrl.u32 %v5500, 7
    %v5502 = vsub.s32 %v5499, %v5501
    %v5503 = vrot.slane %v5495, %v5502
    %v5505 = vunpack.c.l.s4 1934713408
    %v5506 = vunpack.c.0.s8 %v5505
    %v5507 = vlaneseq
    %v5508 = vshrl.u32 %v5507, 7
    %v5509 = vsub.s32 %v5506, %v5508
    %v5510 = vrot.slane %v5496, %v5509
    %v5511 = vcombine.low %v5487, %v5503
    %v5512 = vcombine.high %v5487, %v5503
    %v5513 = vcombine.low %v5494, %v5510
    %v5514 = vcombine.high %v5494, %v5510
    %5516 = vrot.lane.b32.xlu0 %v5512, 8
    %v5517 = vpop.permute.xlu0 %5516
    %5520 = vrot.lane.b32.xlu0 %v5513, 16
    %v5521 = vpop.permute.xlu0 %5520
    %5524 = vrot.lane.b32.xlu0 %v5514, 24
    %v5525 = vpop.permute.xlu0 %5524
    %v5527 = vsel %vm1008, %v5511, %v5517
    %v5528 = vsel %vm1579, %v5527, %v5521
    %v5529 = vsel %vm1581, %v5528, %v5525
    %v5530 = vpack.c.bf16 %v5529, %v4232
    %v5532 = vlaneseq
    %v5533 = vshrl.u32 %v5532, 7
    %v5534 = vsub.s32 0, %v5533
    %v5535 = vrot.slane %v2728, %v5534
    %v5541 = vunpack.c.l.b16 %v2724
    %v5542 = vunpack.c.l.b16 %v2725
    %v5543 = vunpack.c.l.b16 %v2726
    %v5544 = vunpack.c.l.b16 %v2727
    %v5545 = vpack.c.b16 %v5542, %v5541
    %v5546 = vpack.c.b16 %v5544, %v5543
    %v5550 = vsel %vm309, %v5530, 0
    %5552 = vmatprep.subr.bf16.mxu0 0
    %5553 = vmatpush1.bf16.msra.mxu0 0
    %5554 = vmatprep.subr.bf16.mxu0 0
    %5555 = vmatpush1.bf16.msra.mxu0 0
    %5556 = vmatprep.subr.bf16.mxu0 0
    %5557 = vmatpush1.bf16.msra.mxu0 0
    %5558 = vmatprep.subr.bf16.mxu0 0
    %5559 = vmatpush1.bf16.msra.mxu0 0
    %5560 = vmatprep.subr.bf16.mxu0 0
    %5561 = vmatpush1.bf16.msra.mxu0 0
    %5562 = vmatprep.subr.bf16.mxu0 0
    %5563 = vmatpush1.bf16.msra.mxu0 0
    %5564 = vmatprep.subr.bf16.mxu0 0
    %5565 = vmatpush1.bf16.msra.mxu0 %v5546
    %5566 = vmatprep.subr.bf16.mxu0 0
    %5567 = vmatpush1.bf16.msra.mxu0 %v5545
    %5568 = vmatprep.subr.bf16.mxu0 0
    %5569 = vmatpush2.bf16.msra.mxu0 0
    %5570 = vmatprep.subr.bf16.mxu0 0
    %5571 = vmatpush2.bf16.msra.mxu0 0
    %5572 = vmatprep.subr.bf16.mxu0 0
    %5573 = vmatpush2.bf16.msra.mxu0 0
    %5574 = vmatprep.subr.bf16.mxu0 0
    %5575 = vmatpush2.bf16.msra.mxu0 0
    %5576 = vmatprep.subr.bf16.mxu0 0
    %5577 = vmatpush2.bf16.msra.mxu0 0
    %5578 = vmatprep.subr.bf16.mxu0 0
    %5579 = vmatpush2.bf16.msra.mxu0 0
    %5580 = vmatprep.subr.bf16.mxu0 0
    %5581 = vmatpush2.bf16.msra.mxu0 0
    %5582 = vmatprep.subr.bf16.mxu0 0
    %5583 = vmatpush2.bf16.msra.mxu0 0
    %5584 = vmatprep.mubr.bf16.mxu0 0
    %5585 = vmatmul.mubr.bf16.gmra.mxu0 %v5550
    %v5586 = vpop.f32.mrf.mxu0
    %v5587 = vadd.f32 %v5535, %v5586
    %v5588 = vpop.f32.mrf.mxu0
    %v5589 = vpop.f32.mrf.mxu0
    %v5590 = vadd.f32 %v5535, %v5589
    %v5591 = vpop.f32.mrf.mxu0
    %5592 = vdwg.mxu0
    %v5593 = vadd.f32 %v2663, %v5587
    %v5594 = vadd.f32 %v2664, %v5590
    %v5595 = vld [vmem:[%s22] sm:$0x1]
    %v5596 = vld [vmem:[%s23] sm:$0x1]
    %v5597 = vsel %vm309, %v5593, 0.0
    %5598 = vadd.xlane.f32.xlu0 %v5597
    %v5599 = vpop.xlane.xlu0 %5598
    %v5600 = vsel %vm309, %v5594, 0.0
    %5601 = vadd.xlane.f32.xlu0 %v5600
    %v5602 = vpop.xlane.xlu0 %5601
    %v5603 = vmul.f32 %v5599, %v316
    %v5604 = vmul.f32 %v5602, %v316
    %v5605 = vsub.f32 %v5593, %v5603
    %v5606 = vsub.f32 %v5594, %v5604
    %v5607 = vmul.f32 %v5605, %v5605
    %v5608 = vmul.f32 %v5606, %v5606
    %v5609 = vsel %vm309, %v5607, 0.0
    %5610 = vadd.xlane.f32.xlu0 %v5609
    %v5611 = vpop.xlane.xlu0 %5610
    %v5612 = vsel %vm309, %v5608, 0.0
    %5613 = vadd.xlane.f32.xlu0 %v5612
    %v5614 = vpop.xlane.xlu0 %5613
    %v5615 = vmul.f32 %v5611, %v316
    %v5616 = vmul.f32 %v5614, %v316
    %v5617 = vadd.f32 %v5615, 1e-05
    %v5618 = vadd.f32 %v5616, 1e-05
    %v5619 = vrsqrt.pop %v5617
    %v5620 = vrsqrt.pop %v5618
    %v5621 = vmul.f32 %v5605, %v5619
    %v5622 = vmul.f32 %v5606, %v5620
    %v5624 = vlaneseq
    %v5625 = vshrl.u32 %v5624, 7
    %v5626 = vsub.s32 0, %v5625
    %v5627 = vrot.slane %v5595, %v5626
    %v5629 = vmul.f32 %v5621, %v5627
    %v5630 = vmul.f32 %v5622, %v5627
    %v5632 = vlaneseq
    %v5633 = vshrl.u32 %v5632, 7
    %v5634 = vsub.s32 0, %v5633
    %v5635 = vrot.slane %v5596, %v5634
    %v5637 = vadd.f32 %v5629, %v5635
    %v5638 = vadd.f32 %v5630, %v5635
    %v5639 = vpack.c.bf16 %v5638, %v5637
    %v5640 = vld [vmem:[#allocation28] sm:$0xf]
    %v5641 = vld [vmem:[#allocation28 + $0x4] sm:$0xf]
    %v5642 = vld [vmem:[#allocation28 + $0x8] sm:$0xf]
    %v5643 = vld [vmem:[#allocation28 + $0xc] sm:$0xf]
    %v5644 = vld [vmem:[%s25] sm:$0x1]
    %v5646 = vlaneseq
    %v5647 = vshrl.u32 %v5646, 7
    %v5648 = vsub.s32 0, %v5647
    %v5649 = vrot.slane %v5644, %v5648
    %v5655 = vunpack.c.l.b16 %v5640
    %v5656 = vunpack.c.l.b16 %v5641
    %v5657 = vunpack.c.l.b16 %v5642
    %v5658 = vunpack.c.l.b16 %v5643
    %v5659 = vpack.c.b16 %v5656, %v5655
    %v5660 = vpack.c.b16 %v5658, %v5657
    %v5664 = vsel %vm309, %v5639, 0
    %5666 = vmatprep.subr.bf16.mxu0 0
    %5667 = vmatpush1.bf16.msra.mxu0 0
    %5668 = vmatprep.subr.bf16.mxu0 0
    %5669 = vmatpush1.bf16.msra.mxu0 0
    %5670 = vmatprep.subr.bf16.mxu0 0
    %5671 = vmatpush1.bf16.msra.mxu0 0
    %5672 = vmatprep.subr.bf16.mxu0 0
    %5673 = vmatpush1.bf16.msra.mxu0 0
    %5674 = vmatprep.subr.bf16.mxu0 0
    %5675 = vmatpush1.bf16.msra.mxu0 0
    %5676 = vmatprep.subr.bf16.mxu0 0
    %5677 = vmatpush1.bf16.msra.mxu0 0
    %5678 = vmatprep.subr.bf16.mxu0 0
    %5679 = vmatpush1.bf16.msra.mxu0 %v5660
    %5680 = vmatprep.subr.bf16.mxu0 0
    %5681 = vmatpush1.bf16.msra.mxu0 %v5659
    %5682 = vmatprep.subr.bf16.mxu0 0
    %5683 = vmatpush2.bf16.msra.mxu0 0
    %5684 = vmatprep.subr.bf16.mxu0 0
    %5685 = vmatpush2.bf16.msra.mxu0 0
    %5686 = vmatprep.subr.bf16.mxu0 0
    %5687 = vmatpush2.bf16.msra.mxu0 0
    %5688 = vmatprep.subr.bf16.mxu0 0
    %5689 = vmatpush2.bf16.msra.mxu0 0
    %5690 = vmatprep.subr.bf16.mxu0 0
    %5691 = vmatpush2.bf16.msra.mxu0 0
    %5692 = vmatprep.subr.bf16.mxu0 0
    %5693 = vmatpush2.bf16.msra.mxu0 0
    %5694 = vmatprep.subr.bf16.mxu0 0
    %5695 = vmatpush2.bf16.msra.mxu0 0
    %5696 = vmatprep.subr.bf16.mxu0 0
    %5697 = vmatpush2.bf16.msra.mxu0 0
    %5698 = vmatprep.mubr.bf16.mxu0 0
    %5699 = vmatmul.mubr.bf16.gmra.mxu0 %v5664
    %v5700 = vpop.f32.mrf.mxu0
    %v5701 = vadd.f32 %v5649, %v5700
    %v5702 = vpop.f32.mrf.mxu0
    %v5703 = vpop.f32.mrf.mxu0
    %v5704 = vadd.f32 %v5649, %v5703
    %v5705 = vpop.f32.mrf.mxu0
    %5706 = vdwg.mxu0
    %v5707 = vmax.f32 %v5701, 0.0
    %v5708 = vmax.f32 %v5704, 0.0
    %v5709 = vpack.c.bf16 %v5708, %v5707
    %v5710 = vld [vmem:[%s26] sm:$0xf]
    %v5711 = vld [vmem:[%s26 + $0x4] sm:$0xf]
    %v5712 = vld [vmem:[%s26 + $0x8] sm:$0xf]
    %v5713 = vld [vmem:[%s26 + $0xc] sm:$0xf]
    %v5714 = vld [vmem:[%s26 + $0x10] sm:$0xf]
    %v5715 = vld [vmem:[%s26 + $0x14] sm:$0xf]
    %v5716 = vld [vmem:[%s26 + $0x18] sm:$0xf]
    %v5717 = vld [vmem:[%s26 + $0x1c] sm:$0xf]
    %v5726 = vunpack.c.l.b16 %v5710
    %v5727 = vunpack.c.l.b16 %v5711
    %v5728 = vunpack.c.l.b16 %v5712
    %v5729 = vunpack.c.l.b16 %v5713
    %v5730 = vunpack.c.l.b16 %v5714
    %v5731 = vunpack.c.l.b16 %v5715
    %v5732 = vunpack.c.l.b16 %v5716
    %v5733 = vunpack.c.l.b16 %v5717
    %v5734 = vpack.c.b16 %v5727, %v5726
    %v5735 = vpack.c.b16 %v5729, %v5728
    %v5736 = vpack.c.b16 %v5731, %v5730
    %v5737 = vpack.c.b16 %v5733, %v5732
    %vm5742 = vcmask 523264
    %v5744 = vsel %vm5742, %v5709, 0
    %5746 = vmatprep.subr.bf16.mxu0 0
    %5747 = vmatpush1.bf16.msra.mxu0 0
    %5748 = vmatprep.subr.bf16.mxu0 0
    %5749 = vmatpush1.bf16.msra.mxu0 0
    %5750 = vmatprep.subr.bf16.mxu0 0
    %5751 = vmatpush1.bf16.msra.mxu0 0
    %5752 = vmatprep.subr.bf16.mxu0 0
    %5753 = vmatpush1.bf16.msra.mxu0 0
    %5754 = vmatprep.subr.bf16.mxu0 0
    %5755 = vmatpush1.bf16.msra.mxu0 %v5737
    %5756 = vmatprep.subr.bf16.mxu0 0
    %5757 = vmatpush1.bf16.msra.mxu0 %v5736
    %5758 = vmatprep.subr.bf16.mxu0 0
    %5759 = vmatpush1.bf16.msra.mxu0 %v5735
    %5760 = vmatprep.subr.bf16.mxu0 0
    %5761 = vmatpush1.bf16.msra.mxu0 %v5734
    %5762 = vmatprep.subr.bf16.mxu0 0
    %5763 = vmatpush2.bf16.msra.mxu0 0
    %5764 = vmatprep.subr.bf16.mxu0 0
    %5765 = vmatpush2.bf16.msra.mxu0 0
    %5766 = vmatprep.subr.bf16.mxu0 0
    %5767 = vmatpush2.bf16.msra.mxu0 0
    %5768 = vmatprep.subr.bf16.mxu0 0
    %5769 = vmatpush2.bf16.msra.mxu0 0
    %5770 = vmatprep.subr.bf16.mxu0 0
    %5771 = vmatpush2.bf16.msra.mxu0 0
    %5772 = vmatprep.subr.bf16.mxu0 0
    %5773 = vmatpush2.bf16.msra.mxu0 0
    %5774 = vmatprep.subr.bf16.mxu0 0
    %5775 = vmatpush2.bf16.msra.mxu0 0
    %5776 = vmatprep.subr.bf16.mxu0 0
    %5777 = vmatpush2.bf16.msra.mxu0 0
    %5778 = vmatprep.mubr.bf16.mxu0 0
    %5779 = vmatmul.mubr.bf16.gmra.mxu0 %v5744
    %v5780 = vpop.f32.mrf.mxu0
    %v5781 = vadd.f32 0.0, %v5780
    %v5782 = vpop.f32.mrf.mxu0
    %v5783 = vpop.f32.mrf.mxu0
    %v5784 = vadd.f32 0.0, %v5783
    %v5785 = vpop.f32.mrf.mxu0
    %5786 = vdwg.mxu0
    %v5787 = vadd.f32 %v5593, %v5781
    %v5788 = vadd.f32 %v5594, %v5784
    %v5789 = vld [vmem:[%s27] sm:$0x1]
    %v5791 = vlaneseq
    %v5792 = vshrl.u32 %v5791, 7
    %v5793 = vsub.s32 0, %v5792
    %v5794 = vrot.slane %v5789, %v5793
    %v5796 = vadd.f32 %v5787, %v5794
    %v5797 = vadd.f32 %v5788, %v5794
    %5798 = vst.msk [vmem:[#allocation29] sm:$0xff] %vm309, %v5796
    %5799 = vst.msk [vmem:[#allocation29 + $0x8] sm:$0xff] %vm309, %v5797
    // Predicated region
    $region182: #{tpu_custom_call.1} parent=1 // pred_check
      _
    $region183: #{tpu_custom_call.1} parent=1 // pred_check_branch
      %5801 = sbr.rel (0) target = $region185
    $region184: #{tpu_custom_call.1} parent=1 // pred_region
      %s5803 = ssub.s32 256, 256
      %5804 = vsyncadd [#allocation4], %s5803
      %s5805 = sshll.u32 [#allocation29], 4
      %s5806 = int_to_ptr.vmem [resolvable:$true] %s5805
      %5811 = dma.vmem_to_hbm [thread:$0]  %s5806, 256, %s28, [#allocation4], 128, 128, 8
    $region185: #{tpu_custom_call.1} parent=1 // pred_fallthru
      _
    // Predicated region
    $region186: #{tpu_custom_call.1} parent=1 // pred_check
      _
    $region187: #{tpu_custom_call.1} parent=1 // pred_check_branch
      %5813 = sbr.rel (0) target = $region189
    $region188: #{tpu_custom_call.1} parent=1 // pred_region
      %5814 = dma.done [#allocation4], 256
    $region189: #{tpu_custom_call.1} parent=1 // pred_fallthru
      _
    %5815 = vsyncpa [#allocation3], 1
    %5816 = vsyncpa [#allocation6], 1
    %5817 = vsyncpa [#allocation9], 1
    %5818 = vsyncpa [#allocation12], 1
    %5819 = vsyncpa [#allocation15], 1
    %5820 = vsyncpa [#allocation18], 1
    %5821 = vsyncpa [#allocation21], 1
    %5822 = vsyncpa [#allocation24], 1
    %5823 = vsyncpa [#allocation27], 1
    %5824 = vsyncpa [#allocation4], 1

// kernel: tpu_custom_call.1
$region0: #{tpu_custom_call.1}
  #allocation0 [shape = 'u32[]', space=smem, size = 0x4, offset = 0x4, fixed_abs, tag = 'smem constant byte address 0x4 - core index']
  #allocation1 [shape = 'u32[144,128]{1,0:T(1,128)}', space=vmem, size = 0x12000, scoped, tag = 'internal scratch']
  %s0 = inlined_call_operand.vmem [shape: f32[2,8,32], index: 0, kind: input, shape index: {}]
  %s1 = inlined_call_operand.vmem [shape: f32[2,16,32], index: 1, kind: input, shape index: {}]
  %s2 = inlined_call_operand.hbm [shape: f32[1,32], index: 2, kind: input, shape index: {}]
  %s3 = inlined_call_operand.hbm [shape: f32[1,32], index: 3, kind: input, shape index: {}]
  %s4 = inlined_call_operand.hbm [shape: bf16[32,32], index: 4, kind: input, shape index: {}]
  %s5 = inlined_call_operand.hbm [shape: f32[1,32], index: 5, kind: input, shape index: {}]
  %s6 = inlined_call_operand.hbm [shape: bf16[32,32], index: 6, kind: input, shape index: {}]
  %s7 = inlined_call_operand.hbm [shape: f32[1,32], index: 7, kind: input, shape index: {}]
  %s8 = inlined_call_operand.hbm [shape: bf16[32,32], index: 8, kind: input, shape index: {}]
  %s9 = inlined_call_operand.hbm [shape: f32[1,32], index: 9, kind: input, shape index: {}]
  %s10 = inlined_call_operand.vmem [shape: bf16[32,32], index: 10, kind: input, shape index: {}]
  %s11 = inlined_call_operand.hbm [shape: f32[1,32], index: 11, kind: input, shape index: {}]
  %s12 = inlined_call_operand.hbm [shape: f32[1,32], index: 12, kind: input, shape index: {}]
  %s13 = inlined_call_operand.hbm [shape: f32[1,32], index: 13, kind: input, shape index: {}]
  %s14 = inlined_call_operand.hbm [shape: bf16[32,32], index: 14, kind: input, shape index: {}]
  %s15 = inlined_call_operand.hbm [shape: f32[1,32], index: 15, kind: input, shape index: {}]
  %s16 = inlined_call_operand.hbm [shape: bf16[32,32], index: 16, kind: input, shape index: {}]
  %s17 = inlined_call_operand.hbm [shape: f32[1,32], index: 17, kind: input, shape index: {}]
  %s18 = inlined_call_operand.vmem [shape: bf16[32,32], index: 18, kind: input, shape index: {}]
  %s19 = inlined_call_operand.vmem [shape: f32[1,32], index: 19, kind: input, shape index: {}]
  %s20 = inlined_call_operand.hbm [shape: bf16[32,32], index: 20, kind: input, shape index: {}]
  %s21 = inlined_call_operand.vmem [shape: f32[1,32], index: 21, kind: input, shape index: {}]
  %s22 = inlined_call_operand.vmem [shape: f32[1,32], index: 22, kind: input, shape index: {}]
  %s23 = inlined_call_operand.vmem [shape: f32[1,32], index: 23, kind: input, shape index: {}]
  %s24 = inlined_call_operand.hbm [shape: bf16[32,64], index: 24, kind: input, shape index: {}]
  %s25 = inlined_call_operand.vmem [shape: f32[1,64], index: 25, kind: input, shape index: {}]
  %s26 = inlined_call_operand.vmem [shape: bf16[64,32], index: 26, kind: input, shape index: {}]
  %s27 = inlined_call_operand.vmem [shape: f32[1,32], index: 27, kind: input, shape index: {}]
  %s28 = inlined_call_operand.hbm [shape: f32[2,8,32], index: 28, kind: output, shape index: {}]
  %s29 = sld [smem:[#allocation0]]
  $region190: #{tpu_custom_call.1} parent=0
    _
  %s31 = ssub.s32 1, %s29
  %s32 = scalar_select 0, %s31, %s29
  $region1: #{tpu_custom_call.1} parent=0
    #allocation2 [shape = 'u8[512]{0}', space=vmem, size = 0x400, scoped, tag = 'input window, operand 2, single buffered']
    #allocation3 [shape = 's32[1]{0}', space=sflag, size = 0x4, scoped, tag = 'scoped memory for tpu_custom_call.1']
    #allocation4 [shape = 's32[1]{0}', space=sflag, size = 0x4, scoped, tag = 'scoped memory for tpu_custom_call.1']
    #allocation5 [shape = 'u8[512]{0}', space=vmem, size = 0x400, scoped, tag = 'input window, operand 3, single buffered']
    #allocation6 [shape = 's32[1]{0}', space=sflag, size = 0x4, scoped, tag = 'scoped memory for tpu_custom_call.1']
    #allocation7 [shape = 'u8[8192]{0}', space=vmem, size = 0x2000, scoped, tag = 'input window, operand 4, single buffered']
    #allocation8 [shape = 'u8[512]{0}', space=vmem, size = 0x400, scoped, tag = 'input window, operand 5, single buffered']
    #allocation9 [shape = 's32[1]{0}', space=sflag, size = 0x4, scoped, tag = 'scoped memory for tpu_custom_call.1']
    #allocation10 [shape = 'u8[8192]{0}', space=vmem, size = 0x2000, scoped, tag = 'input window, operand 6, single buffered']
    #allocation11 [shape = 'u8[512]{0}', space=vmem, size = 0x400, scoped, tag = 'input window, operand 7, single buffered']
    #allocation12 [shape = 's32[1]{0}', space=sflag, size = 0x4, scoped, tag = 'scoped memory for tpu_custom_call.1']
    #allocation13 [shape = 'u8[8192]{0}', space=vmem, size = 0x2000, scoped, tag = 'input window, operand 8, single buffered']
    #allocation14 [shape = 'u8[512]{0}', space=vmem, size = 0x400, scoped, tag = 'input window, operand 9, single buffered']
    #allocation15 [shape = 's32[1]{0}', space=sflag, size = 0x4, scoped, tag = 'scoped memory for tpu_custom_call.1']
    #allocation16 [shape = 'u8[512]{0}', space=vmem, size = 0x400, scoped, tag = 'input window, operand 11, single buffered']
    #allocation17 [shape = 'u8[512]{0}', space=vmem, size = 0x400, scoped, tag = 'input window, operand 12, single buffered']
    #allocation18 [shape = 's32[1]{0}', space=sflag, size = 0x4, scoped, tag = 'scoped memory for tpu_custom_call.1']
    #allocation19 [shape = 'u8[512]{0}', space=vmem, size = 0x400, scoped, tag = 'input window, operand 13, single buffered']
    #allocation20 [shape = 'u8[8192]{0}', space=vmem, size = 0x2000, scoped, tag = 'input window, operand 14, single buffered']
    #allocation21 [shape = 's32[1]{0}', space=sflag, size = 0x4, scoped, tag = 'scoped memory for tpu_custom_call.1']
    #allocation22 [shape = 'u8[512]{0}', space=vmem, size = 0x400, scoped, tag = 'input window, operand 15, single buffered']
    #allocation23 [shape = 'u8[8192]{0}', space=vmem, size = 0x2000, scoped, tag = 'input window, operand 16, single buffered']
    #allocation24 [shape = 's32[1]{0}', space=sflag, size = 0x4, scoped, tag = 'scoped memory for tpu_custom_call.1']
    #allocation25 [shape = 'u8[512]{0}', space=vmem, size = 0x400, scoped, tag = 'input window, operand 17, single buffered']
    #allocation26 [shape = 'u8[8192]{0}', space=vmem, size = 0x2000, scoped, tag = 'input window, operand 20, single buffered']
    #allocation27 [shape = 's32[1]{0}', space=sflag, size = 0x4, scoped, tag = 'scoped memory for tpu_custom_call.1']
    #allocation28 [shape = 'u8[8192]{0}', space=vmem, size = 0x2000, scoped, tag = 'input window, operand 24, single buffered']
    #allocation29 [shape = 'u8[8192]{0}', space=vmem, size = 0x2000, scoped, tag = 'output window, operand 0, single buffered']
    %33 = vsyncpa [#allocation3], 0
    %34 = vsyncpa [#allocation6], 0
    %35 = vsyncpa [#allocation9], 0
    %36 = vsyncpa [#allocation12], 0
    %37 = vsyncpa [#allocation15], 0
    %38 = vsyncpa [#allocation18], 0
    %39 = vsyncpa [#allocation21], 0
    %40 = vsyncpa [#allocation24], 0
    %41 = vsyncpa [#allocation27], 0
    %42 = vsyncpa [#allocation4], 0
    // Predicated region
    $region2: #{tpu_custom_call.1} parent=1 // pred_check
      _
    $region3: #{tpu_custom_call.1} parent=1 // pred_check_branch
      %44 = sbr.rel (0) target = $region5
    $region4: #{tpu_custom_call.1} parent=1 // pred_region
      _
    $region5: #{tpu_custom_call.1} parent=1 // pred_fallthru
      _
    // Predicated region
    $region6: #{tpu_custom_call.1} parent=1 // pred_check
      _
    $region7: #{tpu_custom_call.1} parent=1 // pred_check_branch
      %46 = sbr.rel (0) target = $region9
    $region8: #{tpu_custom_call.1} parent=1 // pred_region
      _
    $region9: #{tpu_custom_call.1} parent=1 // pred_fallthru
      _
    // Predicated region
    $region10: #{tpu_custom_call.1} parent=1 // pred_check
      _
    $region11: #{tpu_custom_call.1} parent=1 // pred_check_branch
      %48 = sbr.rel (0) target = $region13
    $region12: #{tpu_custom_call.1} parent=1 // pred_region
      %s50 = ssub.s32 16, 16
      %51 = vsyncadd [#allocation3], %s50
      %s53 = sshll.u32 [#allocation2], 4
      %s54 = int_to_ptr.vmem [resolvable:$true] %s53
      %56 = dma.hbm_to_vmem [thread:$0]  %s2, 16, %s54, [#allocation3]
    $region13: #{tpu_custom_call.1} parent=1 // pred_fallthru
      _
    // Predicated region
    $region14: #{tpu_custom_call.1} parent=1 // pred_check
      _
    $region15: #{tpu_custom_call.1} parent=1 // pred_check_branch
      %58 = sbr.rel (0) target = $region17
    $region16: #{tpu_custom_call.1} parent=1 // pred_region
      %s60 = ssub.s32 16, 16
      %61 = vsyncadd [#allocation6], %s60
      %s63 = sshll.u32 [#allocation5], 4
      %s64 = int_to_ptr.vmem [resolvable:$true] %s63
      %66 = dma.hbm_to_vmem [thread:$0]  %s3, 16, %s64, [#allocation6]
    $region17: #{tpu_custom_call.1} parent=1 // pred_fallthru
      _
    // Predicated region
    $region18: #{tpu_custom_call.1} parent=1 // pred_check
      _
    $region19: #{tpu_custom_call.1} parent=1 // pred_check_branch
      %68 = sbr.rel (0) target = $region21
    $region20: #{tpu_custom_call.1} parent=1 // pred_region
      %s70 = ssub.s32 256, 256
      %71 = vsyncadd [#allocation6], %s70
      %s72 = sshll.u32 [#allocation7], 4
      %s73 = int_to_ptr.vmem [resolvable:$true] %s72
      %78 = dma.hbm_to_vmem [thread:$0]  %s4, 256, %s73, [#allocation6], 64, 64, 4
    $region21: #{tpu_custom_call.1} parent=1 // pred_fallthru
      _
    // Predicated region
    $region22: #{tpu_custom_call.1} parent=1 // pred_check
      _
    $region23: #{tpu_custom_call.1} parent=1 // pred_check_branch
      %80 = sbr.rel (0) target = $region25
    $region24: #{tpu_custom_call.1} parent=1 // pred_region
      %s82 = ssub.s32 16, 16
      %83 = vsyncadd [#allocation9], %s82
      %s85 = sshll.u32 [#allocation8], 4
      %s86 = int_to_ptr.vmem [resolvable:$true] %s85
      %88 = dma.hbm_to_vmem [thread:$0]  %s5, 16, %s86, [#allocation9]
    $region25: #{tpu_custom_call.1} parent=1 // pred_fallthru
      _
    // Predicated region
    $region26: #{tpu_custom_call.1} parent=1 // pred_check
      _
    $region27: #{tpu_custom_call.1} parent=1 // pred_check_branch
      %90 = sbr.rel (0) target = $region29
    $region28: #{tpu_custom_call.1} parent=1 // pred_region
      %s92 = ssub.s32 256, 256
      %93 = vsyncadd [#allocation9], %s92
      %s94 = sshll.u32 [#allocation10], 4
      %s95 = int_to_ptr.vmem [resolvable:$true] %s94
      %100 = dma.hbm_to_vmem [thread:$0]  %s6, 256, %s95, [#allocation9], 64, 64, 4
    $region29: #{tpu_custom_call.1} parent=1 // pred_fallthru
      _
    // Predicated region
    $region30: #{tpu_custom_call.1} parent=1 // pred_check
      _
    $region31: #{tpu_custom_call.1} parent=1 // pred_check_branch
      %102 = sbr.rel (0) target = $region33
    $region32: #{tpu_custom_call.1} parent=1 // pred_region
      %s104 = ssub.s32 16, 16
      %105 = vsyncadd [#allocation12], %s104
      %s107 = sshll.u32 [#allocation11], 4
      %s108 = int_to_ptr.vmem [resolvable:$true] %s107
      %110 = dma.hbm_to_vmem [thread:$0]  %s7, 16, %s108, [#allocation12]
    $region33: #{tpu_custom_call.1} parent=1 // pred_fallthru
      _
    // Predicated region
    $region34: #{tpu_custom_call.1} parent=1 // pred_check
      _
    $region35: #{tpu_custom_call.1} parent=1 // pred_check_branch
      %112 = sbr.rel (0) target = $region37
    $region36: #{tpu_custom_call.1} parent=1 // pred_region
      %s114 = ssub.s32 256, 256
      %115 = vsyncadd [#allocation12], %s114
      %s116 = sshll.u32 [#allocation13], 4
      %s117 = int_to_ptr.vmem [resolvable:$true] %s116
      %122 = dma.hbm_to_vmem [thread:$0]  %s8, 256, %s117, [#allocation12], 64, 64, 4
    $region37: #{tpu_custom_call.1} parent=1 // pred_fallthru
      _
    // Predicated region
    $region38: #{tpu_custom_call.1} parent=1 // pred_check
      _
    $region39: #{tpu_custom_call.1} parent=1 // pred_check_branch
      %124 = sbr.rel (0) target = $region41
    $region40: #{tpu_custom_call.1} parent=1 // pred_region
      %s126 = ssub.s32 16, 16
      %127 = vsyncadd [#allocation15], %s126
      %s129 = sshll.u32 [#allocation14], 4
      %s130 = int_to_ptr.vmem [resolvable:$true] %s129
      %132 = dma.hbm_to_vmem [thread:$0]  %s9, 16, %s130, [#allocation15]
    $region41: #{tpu_custom_call.1} parent=1 // pred_fallthru
      _
    // Predicated region
    $region42: #{tpu_custom_call.1} parent=1 // pred_check
      _
    $region43: #{tpu_custom_call.1} parent=1 // pred_check_branch
      %134 = sbr.rel (0) target = $region45
    $region44: #{tpu_custom_call.1} parent=1 // pred_region
      _
    $region45: #{tpu_custom_call.1} parent=1 // pred_fallthru
      _
    // Predicated region
    $region46: #{tpu_custom_call.1} parent=1 // pred_check
      _
    $region47: #{tpu_custom_call.1} parent=1 // pred_check_branch
      %136 = sbr.rel (0) target = $region49
    $region48: #{tpu_custom_call.1} parent=1 // pred_region
      %s138 = ssub.s32 16, 16
      %139 = vsyncadd [#allocation15], %s138
      %s141 = sshll.u32 [#allocation16], 4
      %s142 = int_to_ptr.vmem [resolvable:$true] %s141
      %144 = dma.hbm_to_vmem [thread:$0]  %s11, 16, %s142, [#allocation15]
    $region49: #{tpu_custom_call.1} parent=1 // pred_fallthru
      _
    // Predicated region
    $region50: #{tpu_custom_call.1} parent=1 // pred_check
      _
    $region51: #{tpu_custom_call.1} parent=1 // pred_check_branch
      %146 = sbr.rel (0) target = $region53
    $region52: #{tpu_custom_call.1} parent=1 // pred_region
      %s148 = ssub.s32 16, 16
      %149 = vsyncadd [#allocation18], %s148
      %s151 = sshll.u32 [#allocation17], 4
      %s152 = int_to_ptr.vmem [resolvable:$true] %s151
      %154 = dma.hbm_to_vmem [thread:$0]  %s12, 16, %s152, [#allocation18]
    $region53: #{tpu_custom_call.1} parent=1 // pred_fallthru
      _
    // Predicated region
    $region54: #{tpu_custom_call.1} parent=1 // pred_check
      _
    $region55: #{tpu_custom_call.1} parent=1 // pred_check_branch
      %156 = sbr.rel (0) target = $region57
    $region56: #{tpu_custom_call.1} parent=1 // pred_region
      %s158 = ssub.s32 16, 16
      %159 = vsyncadd [#allocation18], %s158
      %s161 = sshll.u32 [#allocation19], 4
      %s162 = int_to_ptr.vmem [resolvable:$true] %s161
      %164 = dma.hbm_to_vmem [thread:$0]  %s13, 16, %s162, [#allocation18]
    $region57: #{tpu_custom_call.1} parent=1 // pred_fallthru
      _
    // Predicated region
    $region58: #{tpu_custom_call.1} parent=1 // pred_check
      _
    $region59: #{tpu_custom_call.1} parent=1 // pred_check_branch
      %166 = sbr.rel (0) target = $region61
    $region60: #{tpu_custom_call.1} parent=1 // pred_region
      %s168 = ssub.s32 256, 256
      %169 = vsyncadd [#allocation21], %s168
      %s170 = sshll.u32 [#allocation20], 4
      %s171 = int_to_ptr.vmem [resolvable:$true] %s170
      %176 = dma.hbm_to_vmem [thread:$0]  %s14, 256, %s171, [#allocation21], 64, 64, 4
    $region61: #{tpu_custom_call.1} parent=1 // pred_fallthru
      _
    // Predicated region
    $region62: #{tpu_custom_call.1} parent=1 // pred_check
      _
    $region63: #{tpu_custom_call.1} parent=1 // pred_check_branch
      %178 = sbr.rel (0) target = $region65
    $region64: #{tpu_custom_call.1} parent=1 // pred_region
      %s180 = ssub.s32 16, 16
      %181 = vsyncadd [#allocation21], %s180
      %s183 = sshll.u32 [#allocation22], 4
      %s184 = int_to_ptr.vmem [resolvable:$true] %s183
      %186 = dma.hbm_to_vmem [thread:$0]  %s15, 16, %s184, [#allocation21]
    $region65: #{tpu_custom_call.1} parent=1 // pred_fallthru
      _
    // Predicated region
    $region66: #{tpu_custom_call.1} parent=1 // pred_check
      _
    $region67: #{tpu_custom_call.1} parent=1 // pred_check_branch
      %188 = sbr.rel (0) target = $region69
    $region68: #{tpu_custom_call.1} parent=1 // pred_region
      %s190 = ssub.s32 256, 256
      %191 = vsyncadd [#allocation24], %s190
      %s192 = sshll.u32 [#allocation23], 4
      %s193 = int_to_ptr.vmem [resolvable:$true] %s192
      %198 = dma.hbm_to_vmem [thread:$0]  %s16, 256, %s193, [#allocation24], 64, 64, 4
    $region69: #{tpu_custom_call.1} parent=1 // pred_fallthru
      _
    // Predicated region
    $region70: #{tpu_custom_call.1} parent=1 // pred_check
      _
    $region71: #{tpu_custom_call.1} parent=1 // pred_check_branch
      %200 = sbr.rel (0) target = $region73
    $region72: #{tpu_custom_call.1} parent=1 // pred_region
      %s202 = ssub.s32 16, 16
      %203 = vsyncadd [#allocation24], %s202
      %s205 = sshll.u32 [#allocation25], 4
      %s206 = int_to_ptr.vmem [resolvable:$true] %s205
      %208 = dma.hbm_to_vmem [thread:$0]  %s17, 16, %s206, [#allocation24]
    $region73: #{tpu_custom_call.1} parent=1 // pred_fallthru
      _
    // Predicated region
    $region74: #{tpu_custom_call.1} parent=1 // pred_check
      _
    $region75: #{tpu_custom_call.1} parent=1 // pred_check_branch
      %210 = sbr.rel (0) target = $region77
    $region76: #{tpu_custom_call.1} parent=1 // pred_region
      _
    $region77: #{tpu_custom_call.1} parent=1 // pred_fallthru
      _
    // Predicated region
    $region78: #{tpu_custom_call.1} parent=1 // pred_check
      _
    $region79: #{tpu_custom_call.1} parent=1 // pred_check_branch
      %212 = sbr.rel (0) target = $region81
    $region80: #{tpu_custom_call.1} parent=1 // pred_region
      _
    $region81: #{tpu_custom_call.1} parent=1 // pred_fallthru
      _
    // Predicated region
    $region82: #{tpu_custom_call.1} parent=1 // pred_check
      _
    $region83: #{tpu_custom_call.1} parent=1 // pred_check_branch
      %214 = sbr.rel (0) target = $region85
    $region84: #{tpu_custom_call.1} parent=1 // pred_region
      %s216 = ssub.s32 256, 256
      %217 = vsyncadd [#allocation27], %s216
      %s218 = sshll.u32 [#allocation26], 4
      %s219 = int_to_ptr.vmem [resolvable:$true] %s218
      %224 = dma.hbm_to_vmem [thread:$0]  %s20, 256, %s219, [#allocation27], 64, 64, 4
    $region85: #{tpu_custom_call.1} parent=1 // pred_fallthru
      _
    // Predicated region
    $region86: #{tpu_custom_call.1} parent=1 // pred_check
      _
    $region87: #{tpu_custom_call.1} parent=1 // pred_check_branch
      %226 = sbr.rel (0) target = $region89
    $region88: #{tpu_custom_call.1} parent=1 // pred_region
      _
    $region89: #{tpu_custom_call.1} parent=1 // pred_fallthru
      _
    // Predicated region
    $region90: #{tpu_custom_call.1} parent=1 // pred_check
      _
    $region91: #{tpu_custom_call.1} parent=1 // pred_check_branch
      %228 = sbr.rel (0) target = $region93
    $region92: #{tpu_custom_call.1} parent=1 // pred_region
      _
    $region93: #{tpu_custom_call.1} parent=1 // pred_fallthru
      _
    // Predicated region
    $region94: #{tpu_custom_call.1} parent=1 // pred_check
      _
    $region95: #{tpu_custom_call.1} parent=1 // pred_check_branch
      %230 = sbr.rel (0) target = $region97
    $region96: #{tpu_custom_call.1} parent=1 // pred_region
      _
    $region97: #{tpu_custom_call.1} parent=1 // pred_fallthru
      _
    // Predicated region
    $region98: #{tpu_custom_call.1} parent=1 // pred_check
      _
    $region99: #{tpu_custom_call.1} parent=1 // pred_check_branch
      %232 = sbr.rel (0) target = $region101
    $region100: #{tpu_custom_call.1} parent=1 // pred_region
      %s234 = ssub.s32 256, 256
      %235 = vsyncadd [#allocation27], %s234
      %s236 = sshll.u32 [#allocation28], 4
      %s237 = int_to_ptr.vmem [resolvable:$true] %s236
      %242 = dma.hbm_to_vmem [thread:$0]  %s24, 256, %s237, [#allocation27], 64, 64, 4
    $region101: #{tpu_custom_call.1} parent=1 // pred_fallthru
      _
    // Predicated region
    $region102: #{tpu_custom_call.1} parent=1 // pred_check
      _
    $region103: #{tpu_custom_call.1} parent=1 // pred_check_branch
      %244 = sbr.rel (0) target = $region105
    $region104: #{tpu_custom_call.1} parent=1 // pred_region
      _
    $region105: #{tpu_custom_call.1} parent=1 // pred_fallthru
      _
    // Predicated region
    $region106: #{tpu_custom_call.1} parent=1 // pred_check
      _
    $region107: #{tpu_custom_call.1} parent=1 // pred_check_branch
      %246 = sbr.rel (0) target = $region109
    $region108: #{tpu_custom_call.1} parent=1 // pred_region
      _
    $region109: #{tpu_custom_call.1} parent=1 // pred_fallthru
      _
    // Predicated region
    $region110: #{tpu_custom_call.1} parent=1 // pred_check
      _
    $region111: #{tpu_custom_call.1} parent=1 // pred_check_branch
      %248 = sbr.rel (0) target = $region113
    $region112: #{tpu_custom_call.1} parent=1 // pred_region
      _
    $region113: #{tpu_custom_call.1} parent=1 // pred_fallthru
      _
    // Predicated region
    $region114: #{tpu_custom_call.1} parent=1 // pred_check
      _
    $region115: #{tpu_custom_call.1} parent=1 // pred_check_branch
      %250 = sbr.rel (0) target = $region117
    $region116: #{tpu_custom_call.1} parent=1 // pred_region
      %251 = dma.done [#allocation3], 16
    $region117: #{tpu_custom_call.1} parent=1 // pred_fallthru
      _
    // Predicated region
    $region118: #{tpu_custom_call.1} parent=1 // pred_check
      _
    $region119: #{tpu_custom_call.1} parent=1 // pred_check_branch
      %253 = sbr.rel (0) target = $region121
    $region120: #{tpu_custom_call.1} parent=1 // pred_region
      %254 = dma.done [#allocation6], 16
    $region121: #{tpu_custom_call.1} parent=1 // pred_fallthru
      _
    // Predicated region
    $region122: #{tpu_custom_call.1} parent=1 // pred_check
      _
    $region123: #{tpu_custom_call.1} parent=1 // pred_check_branch
      %256 = sbr.rel (0) target = $region125
    $region124: #{tpu_custom_call.1} parent=1 // pred_region
      %257 = dma.done [#allocation6], 256
    $region125: #{tpu_custom_call.1} parent=1 // pred_fallthru
      _
    // Predicated region
    $region126: #{tpu_custom_call.1} parent=1 // pred_check
      _
    $region127: #{tpu_custom_call.1} parent=1 // pred_check_branch
      %259 = sbr.rel (0) target = $region129
    $region128: #{tpu_custom_call.1} parent=1 // pred_region
      %260 = dma.done [#allocation9], 16
    $region129: #{tpu_custom_call.1} parent=1 // pred_fallthru
      _
    // Predicated region
    $region130: #{tpu_custom_call.1} parent=1 // pred_check
      _
    $region131: #{tpu_custom_call.1} parent=1 // pred_check_branch
      %262 = sbr.rel (0) target = $region133
    $region132: #{tpu_custom_call.1} parent=1 // pred_region
      %263 = dma.done [#allocation9], 256
    $region133: #{tpu_custom_call.1} parent=1 // pred_fallthru
      _
    // Predicated region
    $region134: #{tpu_custom_call.1} parent=1 // pred_check
      _
    $region135: #{tpu_custom_call.1} parent=1 // pred_check_branch
      %265 = sbr.rel (0) target = $region137
    $region136: #{tpu_custom_call.1} parent=1 // pred_region
      %266 = dma.done [#allocation12], 16
    $region137: #{tpu_custom_call.1} parent=1 // pred_fallthru
      _
    // Predicated region
    $region138: #{tpu_custom_call.1} parent=1 // pred_check
      _
    $region139: #{tpu_custom_call.1} parent=1 // pred_check_branch
      %268 = sbr.rel (0) target = $region141
    $region140: #{tpu_custom_call.1} parent=1 // pred_region
      %269 = dma.done [#allocation12], 256
    $region141: #{tpu_custom_call.1} parent=1 // pred_fallthru
      _
    // Predicated region
    $region142: #{tpu_custom_call.1} parent=1 // pred_check
      _
    $region143: #{tpu_custom_call.1} parent=1 // pred_check_branch
      %271 = sbr.rel (0) target = $region145
    $region144: #{tpu_custom_call.1} parent=1 // pred_region
      %272 = dma.done [#allocation15], 16
    $region145: #{tpu_custom_call.1} parent=1 // pred_fallthru
      _
    // Predicated region
    $region146: #{tpu_custom_call.1} parent=1 // pred_check
      _
    $region147: #{tpu_custom_call.1} parent=1 // pred_check_branch
      %274 = sbr.rel (0) target = $region149
    $region148: #{tpu_custom_call.1} parent=1 // pred_region
      %275 = dma.done [#allocation15], 16
    $region149: #{tpu_custom_call.1} parent=1 // pred_fallthru
      _
    // Predicated region
    $region150: #{tpu_custom_call.1} parent=1 // pred_check
      _
    $region151: #{tpu_custom_call.1} parent=1 // pred_check_branch
      %277 = sbr.rel (0) target = $region153
    $region152: #{tpu_custom_call.1} parent=1 // pred_region
      %278 = dma.done [#allocation18], 16
    $region153: #{tpu_custom_call.1} parent=1 // pred_fallthru
      _
    // Predicated region
    $region154: #{tpu_custom_call.1} parent=1 // pred_check
      _
    $region155: #{tpu_custom_call.1} parent=1 // pred_check_branch
      %280 = sbr.rel (0) target = $region157
    $region156: #{tpu_custom_call.1} parent=1 // pred_region
      %281 = dma.done [#allocation18], 16
    $region157: #{tpu_custom_call.1} parent=1 // pred_fallthru
      _
    // Predicated region
    $region158: #{tpu_custom_call.1} parent=1 // pred_check
      _
    $region159: #{tpu_custom_call.1} parent=1 // pred_check_branch
      %283 = sbr.rel (0) target = $region161
    $region160: #{tpu_custom_call.1} parent=1 // pred_region
      %284 = dma.done [#allocation21], 256
    $region161: #{tpu_custom_call.1} parent=1 // pred_fallthru
      _
    // Predicated region
    $region162: #{tpu_custom_call.1} parent=1 // pred_check
      _
    $region163: #{tpu_custom_call.1} parent=1 // pred_check_branch
      %286 = sbr.rel (0) target = $region165
    $region164: #{tpu_custom_call.1} parent=1 // pred_region
      %287 = dma.done [#allocation21], 16
    $region165: #{tpu_custom_call.1} parent=1 // pred_fallthru
      _
    // Predicated region
    $region166: #{tpu_custom_call.1} parent=1 // pred_check
      _
    $region167: #{tpu_custom_call.1} parent=1 // pred_check_branch
      %289 = sbr.rel (0) target = $region169
    $region168: #{tpu_custom_call.1} parent=1 // pred_region
      %290 = dma.done [#allocation24], 256
    $region169: #{tpu_custom_call.1} parent=1 // pred_fallthru
      _
    // Predicated region
    $region170: #{tpu_custom_call.1} parent=1 // pred_check
      _
    $region171: #{tpu_custom_call.1} parent=1 // pred_check_branch
      %292 = sbr.rel (0) target = $region173
    $region172: #{tpu_custom_call.1} parent=1 // pred_region
      %293 = dma.done [#allocation24], 16
    $region173: #{tpu_custom_call.1} parent=1 // pred_fallthru
      _
    // Predicated region
    $region174: #{tpu_custom_call.1} parent=1 // pred_check
      _
    $region175: #{tpu_custom_call.1} parent=1 // pred_check_branch
      %295 = sbr.rel (0) target = $region177
    $region176: #{tpu_custom_call.1} parent=1 // pred_region
      %296 = dma.done [#allocation27], 256
    $region177: #{tpu_custom_call.1} parent=1 // pred_fallthru
      _
    // Predicated region
    $region178: #{tpu_custom_call.1} parent=1 // pred_check
      _
    $region179: #{tpu_custom_call.1} parent=1 // pred_check_branch
      %298 = sbr.rel (0) target = $region181
    $region180: #{tpu_custom_call.1} parent=1 // pred_region
      %299 = dma.done [#allocation27], 256
    $region181: #{tpu_custom_call.1} parent=1 // pred_fallthru
      _
    %v301 = vld [vmem:[%s0] sm:$0xff]
    %v302 = vld [vmem:[%s0 + $0x8] sm:$0xff]
    %v303 = vld [vmem:[%s1] sm:$0xff]
    %v304 = vld [vmem:[%s1 + $0x8] sm:$0xff]
    %v305 = vld [vmem:[%s1 + $0x10] sm:$0xff]
    %v306 = vld [vmem:[%s1 + $0x18] sm:$0xff]
    %v307 = vld [vmem:[#allocation2] sm:$0x1]
    %v308 = vld [vmem:[#allocation5] sm:$0x1]
    %vm309 = vcmask 261120
    %v310 = vsel %vm309, %v301, 0.0
    %311 = vadd.xlane.f32.xlu0 %v310
    %v312 = vpop.xlane.xlu0 %311
    %v313 = vsel %vm309, %v302, 0.0
    %314 = vadd.xlane.f32.xlu0 %v313
    %v315 = vpop.xlane.xlu0 %314
    %v316 = vrcp.pop 32.0
    %v317 = vmul.f32 %v312, %v316
    %v318 = vmul.f32 %v315, %v316
    %v319 = vsub.f32 %v301, %v317
    %v320 = vsub.f32 %v302, %v318
    %v321 = vmul.f32 %v319, %v319
    %v322 = vmul.f32 %v320, %v320
    %v323 = vsel %vm309, %v321, 0.0
    %324 = vadd.xlane.f32.xlu0 %v323
    %v325 = vpop.xlane.xlu0 %324
    %v326 = vsel %vm309, %v322, 0.0
    %327 = vadd.xlane.f32.xlu0 %v326
    %v328 = vpop.xlane.xlu0 %327
    %v329 = vmul.f32 %v325, %v316
    %v330 = vmul.f32 %v328, %v316
    %v331 = vadd.f32 %v329, 1e-05
    %v332 = vadd.f32 %v330, 1e-05
    %v333 = vrsqrt.pop %v331
    %v334 = vrsqrt.pop %v332
    %v335 = vmul.f32 %v319, %v333
    %v336 = vmul.f32 %v320, %v334
    %v338 = vlaneseq
    %v339 = vshrl.u32 %v338, 7
    %v340 = vsub.s32 0, %v339
    %v341 = vrot.slane %v307, %v340
    %v343 = vmul.f32 %v335, %v341
    %v344 = vmul.f32 %v336, %v341
    %v346 = vlaneseq
    %v347 = vshrl.u32 %v346, 7
    %v348 = vsub.s32 0, %v347
    %v349 = vrot.slane %v308, %v348
    %v351 = vadd.f32 %v343, %v349
    %v352 = vadd.f32 %v344, %v349
    %v353 = vld [vmem:[#allocation7] sm:$0xf]
    %v354 = vld [vmem:[#allocation7 + $0x4] sm:$0xf]
    %v355 = vld [vmem:[#allocation7 + $0x8] sm:$0xf]
    %v356 = vld [vmem:[#allocation7 + $0xc] sm:$0xf]
    %v357 = vld [vmem:[#allocation8] sm:$0x1]
    %v358 = vld [vmem:[#allocation10] sm:$0xf]
    %v359 = vld [vmem:[#allocation10 + $0x4] sm:$0xf]
    %v360 = vld [vmem:[#allocation10 + $0x8] sm:$0xf]
    %v361 = vld [vmem:[#allocation10 + $0xc] sm:$0xf]
    %v362 = vld [vmem:[#allocation11] sm:$0x1]
    %v363 = vld [vmem:[#allocation13] sm:$0xf]
    %v364 = vld [vmem:[#allocation13 + $0x4] sm:$0xf]
    %v365 = vld [vmem:[#allocation13 + $0x8] sm:$0xf]
    %v366 = vld [vmem:[#allocation13 + $0xc] sm:$0xf]
    %v367 = vld [vmem:[#allocation14] sm:$0x1]
    %v368 = vld [vmem:[%s10] sm:$0xf]
    %v369 = vld [vmem:[%s10 + $0x4] sm:$0xf]
    %v370 = vld [vmem:[%s10 + $0x8] sm:$0xf]
    %v371 = vld [vmem:[%s10 + $0xc] sm:$0xf]
    %v372 = vld [vmem:[#allocation16] sm:$0x1]
    %v373 = vpack.c.bf16 %v352, %v351
    %v375 = vlaneseq
    %v376 = vshrl.u32 %v375, 7
    %v377 = vsub.s32 0, %v376
    %v378 = vrot.slane %v357, %v377
    %v384 = vunpack.c.l.b16 %v353
    %v385 = vunpack.c.l.b16 %v354
    %v386 = vunpack.c.l.b16 %v355
    %v387 = vunpack.c.l.b16 %v356
    %v388 = vpack.c.b16 %v385, %v384
    %v389 = vpack.c.b16 %v387, %v386
    %v393 = vsel %vm309, %v373, 0
    %395 = vmatprep.subr.bf16.mxu0 0
    %396 = vmatpush1.bf16.msra.mxu0 0
    %397 = vmatprep.subr.bf16.mxu0 0
    %398 = vmatpush1.bf16.msra.mxu0 0
    %399 = vmatprep.subr.bf16.mxu0 0
    %400 = vmatpush1.bf16.msra.mxu0 0
    %401 = vmatprep.subr.bf16.mxu0 0
    %402 = vmatpush1.bf16.msra.mxu0 0
    %403 = vmatprep.subr.bf16.mxu0 0
    %404 = vmatpush1.bf16.msra.mxu0 0
    %405 = vmatprep.subr.bf16.mxu0 0
    %406 = vmatpush1.bf16.msra.mxu0 0
    %407 = vmatprep.subr.bf16.mxu0 0
    %408 = vmatpush1.bf16.msra.mxu0 %v389
    %409 = vmatprep.subr.bf16.mxu0 0
    %410 = vmatpush1.bf16.msra.mxu0 %v388
    %411 = vmatprep.subr.bf16.mxu0 0
    %412 = vmatpush2.bf16.msra.mxu0 0
    %413 = vmatprep.subr.bf16.mxu0 0
    %414 = vmatpush2.bf16.msra.mxu0 0
    %415 = vmatprep.subr.bf16.mxu0 0
    %416 = vmatpush2.bf16.msra.mxu0 0
    %417 = vmatprep.subr.bf16.mxu0 0
    %418 = vmatpush2.bf16.msra.mxu0 0
    %419 = vmatprep.subr.bf16.mxu0 0
    %420 = vmatpush2.bf16.msra.mxu0 0
    %421 = vmatprep.subr.bf16.mxu0 0
    %422 = vmatpush2.bf16.msra.mxu0 0
    %423 = vmatprep.subr.bf16.mxu0 0
    %424 = vmatpush2.bf16.msra.mxu0 0
    %425 = vmatprep.subr.bf16.mxu0 0
    %426 = vmatpush2.bf16.msra.mxu0 0
    %427 = vmatprep.mubr.bf16.mxu0 0
    %428 = vmatmul.mubr.bf16.gmra.mxu0 %v393
    %v429 = vpop.f32.mrf.mxu0
    %v430 = vadd.f32 %v378, %v429
    %v431 = vpop.f32.mrf.mxu0
    %v432 = vpop.f32.mrf.mxu0
    %v433 = vadd.f32 %v378, %v432
    %v434 = vpop.f32.mrf.mxu0
    %435 = vdwg.mxu0
    %v436 = vmul.f32 %v430, 0.35355338
    %v437 = vmul.f32 %v433, 0.35355338
    %v439 = vlaneseq
    %v440 = vshrl.u32 %v439, 7
    %v441 = vsub.s32 0, %v440
    %v442 = vrot.slane %v362, %v441
    %v448 = vunpack.c.l.b16 %v358
    %v449 = vunpack.c.l.b16 %v359
    %v450 = vunpack.c.l.b16 %v360
    %v451 = vunpack.c.l.b16 %v361
    %v452 = vpack.c.b16 %v449, %v448
    %v453 = vpack.c.b16 %v451, %v450
    %456 = vmatprep.subr.bf16.mxu0 0
    %457 = vmatpush1.bf16.msra.mxu0 0
    %458 = vmatprep.subr.bf16.mxu0 0
    %459 = vmatpush1.bf16.msra.mxu0 0
    %460 = vmatprep.subr.bf16.mxu0 0
    %461 = vmatpush1.bf16.msra.mxu0 0
    %462 = vmatprep.subr.bf16.mxu0 0
    %463 = vmatpush1.bf16.msra.mxu0 0
    %464 = vmatprep.subr.bf16.mxu0 0
    %465 = vmatpush1.bf16.msra.mxu0 0
    %466 = vmatprep.subr.bf16.mxu0 0
    %467 = vmatpush1.bf16.msra.mxu0 0
    %468 = vmatprep.subr.bf16.mxu0 0
    %469 = vmatpush1.bf16.msra.mxu0 %v453
    %470 = vmatprep.subr.bf16.mxu0 0
    %471 = vmatpush1.bf16.msra.mxu0 %v452
    %472 = vmatprep.subr.bf16.mxu0 0
    %473 = vmatpush2.bf16.msra.mxu0 0
    %474 = vmatprep.subr.bf16.mxu0 0
    %475 = vmatpush2.bf16.msra.mxu0 0
    %476 = vmatprep.subr.bf16.mxu0 0
    %477 = vmatpush2.bf16.msra.mxu0 0
    %478 = vmatprep.subr.bf16.mxu0 0
    %479 = vmatpush2.bf16.msra.mxu0 0
    %480 = vmatprep.subr.bf16.mxu0 0
    %481 = vmatpush2.bf16.msra.mxu0 0
    %482 = vmatprep.subr.bf16.mxu0 0
    %483 = vmatpush2.bf16.msra.mxu0 0
    %484 = vmatprep.subr.bf16.mxu0 0
    %485 = vmatpush2.bf16.msra.mxu0 0
    %486 = vmatprep.subr.bf16.mxu0 0
    %487 = vmatpush2.bf16.msra.mxu0 0
    %488 = vmatprep.mubr.bf16.mxu0 0
    %489 = vmatmul.mubr.bf16.gmra.mxu0 %v393
    %v490 = vpop.f32.mrf.mxu0
    %v491 = vadd.f32 %v442, %v490
    %v492 = vpop.f32.mrf.mxu0
    %v493 = vpop.f32.mrf.mxu0
    %v494 = vadd.f32 %v442, %v493
    %v495 = vpop.f32.mrf.mxu0
    %496 = vdwg.mxu0
    %v498 = vlaneseq
    %v499 = vshrl.u32 %v498, 7
    %v500 = vsub.s32 0, %v499
    %v501 = vrot.slane %v367, %v500
    %v507 = vunpack.c.l.b16 %v363
    %v508 = vunpack.c.l.b16 %v364
    %v509 = vunpack.c.l.b16 %v365
    %v510 = vunpack.c.l.b16 %v366
    %v511 = vpack.c.b16 %v508, %v507
    %v512 = vpack.c.b16 %v510, %v509
    %515 = vmatprep.subr.bf16.mxu0 0
    %516 = vmatpush1.bf16.msra.mxu0 0
    %517 = vmatprep.subr.bf16.mxu0 0
    %518 = vmatpush1.bf16.msra.mxu0 0
    %519 = vmatprep.subr.bf16.mxu0 0
    %520 = vmatpush1.bf16.msra.mxu0 0
    %521 = vmatprep.subr.bf16.mxu0 0
    %522 = vmatpush1.bf16.msra.mxu0 0
    %523 = vmatprep.subr.bf16.mxu0 0
    %524 = vmatpush1.bf16.msra.mxu0 0
    %525 = vmatprep.subr.bf16.mxu0 0
    %526 = vmatpush1.bf16.msra.mxu0 0
    %527 = vmatprep.subr.bf16.mxu0 0
    %528 = vmatpush1.bf16.msra.mxu0 %v512
    %529 = vmatprep.subr.bf16.mxu0 0
    %530 = vmatpush1.bf16.msra.mxu0 %v511
    %531 = vmatprep.subr.bf16.mxu0 0
    %532 = vmatpush2.bf16.msra.mxu0 0
    %533 = vmatprep.subr.bf16.mxu0 0
    %534 = vmatpush2.bf16.msra.mxu0 0
    %535 = vmatprep.subr.bf16.mxu0 0
    %536 = vmatpush2.bf16.msra.mxu0 0
    %537 = vmatprep.subr.bf16.mxu0 0
    %538 = vmatpush2.bf16.msra.mxu0 0
    %539 = vmatprep.subr.bf16.mxu0 0
    %540 = vmatpush2.bf16.msra.mxu0 0
    %541 = vmatprep.subr.bf16.mxu0 0
    %542 = vmatpush2.bf16.msra.mxu0 0
    %543 = vmatprep.subr.bf16.mxu0 0
    %544 = vmatpush2.bf16.msra.mxu0 0
    %545 = vmatprep.subr.bf16.mxu0 0
    %546 = vmatpush2.bf16.msra.mxu0 0
    %547 = vmatprep.mubr.bf16.mxu0 0
    %548 = vmatmul.mubr.bf16.gmra.mxu0 %v393
    %v549 = vpop.f32.mrf.mxu0
    %v550 = vadd.f32 %v501, %v549
    %v551 = vpop.f32.mrf.mxu0
    %v552 = vpop.f32.mrf.mxu0
    %v553 = vadd.f32 %v501, %v552
    %v554 = vpop.f32.mrf.mxu0
    %555 = vdwg.mxu0
    %v556 = vlaneseq
    %v557 = vshrl.u32 %v556, 7
    %v558 = vlaneseq
    %v559 = vand.u32 %v558, 127
    %vm560 = vcmp.ge.s32.totalorder %v557, %v559
    %v561 = vsel %vm560, 0.0, -1e+09
    %563 = vrot.lane.b32.xlu0 %v436, 120
    %v564 = vpop.permute.xlu0 %563
    %566 = vrot.lane.b32.xlu0 %v436, 112
    %v567 = vpop.permute.xlu0 %566
    %569 = vrot.lane.b32.xlu0 %v436, 104
    %v570 = vpop.permute.xlu0 %569
    %573 = vrot.lane.b32.xlu0 %v491, 120
    %v574 = vpop.permute.xlu0 %573
    %576 = vrot.lane.b32.xlu0 %v491, 112
    %v577 = vpop.permute.xlu0 %576
    %579 = vrot.lane.b32.xlu0 %v491, 104
    %v580 = vpop.permute.xlu0 %579
    %583 = vrot.lane.b32.xlu0 %v550, 120
    %v584 = vpop.permute.xlu0 %583
    %586 = vrot.lane.b32.xlu0 %v550, 112
    %v587 = vpop.permute.xlu0 %586
    %589 = vrot.lane.b32.xlu0 %v550, 104
    %v590 = vpop.permute.xlu0 %589
    %v592 = vpack.c.bf16 %v436, %v436
    %v593 = vpack.c.bf16 %v564, %v564
    %v594 = vpack.c.bf16 %v567, %v567
    %v595 = vpack.c.bf16 %v570, %v570
    %v596 = vpack.c.bf16 %v491, %v491
    %v597 = vpack.c.bf16 %v574, %v574
    %v598 = vpack.c.bf16 %v577, %v577
    %v599 = vpack.c.bf16 %v580, %v580
    %vm600 = vcmask 64512
    %v602 = vsel %vm600, %v592, 0
    %v605 = vsel %vm600, %v596, 0
    %607 = vmatprep.subr.bf16.mxu0 0
    %608 = vmatpush1.bf16.xpose.msra.mxu0 0
    %609 = vmatprep.subr.bf16.mxu0 0
    %610 = vmatpush1.bf16.xpose.msra.mxu0 0
    %611 = vmatprep.subr.bf16.mxu0 0
    %612 = vmatpush1.bf16.xpose.msra.mxu0 0
    %613 = vmatprep.subr.bf16.mxu0 0
    %614 = vmatpush1.bf16.xpose.msra.mxu0 0
    %615 = vmatprep.subr.bf16.mxu0 0
    %616 = vmatpush1.bf16.xpose.msra.mxu0 0
    %617 = vmatprep.subr.bf16.mxu0 0
    %618 = vmatpush1.bf16.xpose.msra.mxu0 0
    %619 = vmatprep.subr.bf16.mxu0 0
    %620 = vmatpush1.bf16.xpose.msra.mxu0 0
    %621 = vmatprep.subr.bf16.mxu0 0
    %622 = vmatpush1.bf16.xpose.msra.mxu0 %v605
    %623 = vmatprep.subr.bf16.mxu0 0
    %624 = vmatpush2.bf16.xpose.msra.mxu0 0
    %625 = vmatprep.subr.bf16.mxu0 0
    %626 = vmatpush2.bf16.xpose.msra.mxu0 0
    %627 = vmatprep.subr.bf16.mxu0 0
    %628 = vmatpush2.bf16.xpose.msra.mxu0 0
    %629 = vmatprep.subr.bf16.mxu0 0
    %630 = vmatpush2.bf16.xpose.msra.mxu0 0
    %631 = vmatprep.subr.bf16.mxu0 0
    %632 = vmatpush2.bf16.xpose.msra.mxu0 0
    %633 = vmatprep.subr.bf16.mxu0 0
    %634 = vmatpush2.bf16.xpose.msra.mxu0 0
    %635 = vmatprep.subr.bf16.mxu0 0
    %636 = vmatpush2.bf16.xpose.msra.mxu0 0
    %637 = vmatprep.subr.bf16.mxu0 0
    %638 = vmatpush2.bf16.xpose.msra.mxu0 0
    %639 = vmatprep.mubr.bf16.mxu0 0
    %640 = vmatmul.mubr.bf16.gmra.mxu0 %v602
    %v641 = vpop.f32.mrf.mxu0
    %v642 = vadd.f32 %v561, %v641
    %v643 = vpop.f32.mrf.mxu0
    %v644 = vpop.f32.mrf.mxu0
    %v645 = vpop.f32.mrf.mxu0
    %646 = vdwg.mxu0
    %v648 = vsel %vm600, %v593, 0
    %v651 = vsel %vm600, %v597, 0
    %653 = vmatprep.subr.bf16.mxu0 0
    %654 = vmatpush1.bf16.xpose.msra.mxu0 0
    %655 = vmatprep.subr.bf16.mxu0 0
    %656 = vmatpush1.bf16.xpose.msra.mxu0 0
    %657 = vmatprep.subr.bf16.mxu0 0
    %658 = vmatpush1.bf16.xpose.msra.mxu0 0
    %659 = vmatprep.subr.bf16.mxu0 0
    %660 = vmatpush1.bf16.xpose.msra.mxu0 0
    %661 = vmatprep.subr.bf16.mxu0 0
    %662 = vmatpush1.bf16.xpose.msra.mxu0 0
    %663 = vmatprep.subr.bf16.mxu0 0
    %664 = vmatpush1.bf16.xpose.msra.mxu0 0
    %665 = vmatprep.subr.bf16.mxu0 0
    %666 = vmatpush1.bf16.xpose.msra.mxu0 0
    %667 = vmatprep.subr.bf16.mxu0 0
    %668 = vmatpush1.bf16.xpose.msra.mxu0 %v651
    %669 = vmatprep.subr.bf16.mxu0 0
    %670 = vmatpush2.bf16.xpose.msra.mxu0 0
    %671 = vmatprep.subr.bf16.mxu0 0
    %672 = vmatpush2.bf16.xpose.msra.mxu0 0
    %673 = vmatprep.subr.bf16.mxu0 0
    %674 = vmatpush2.bf16.xpose.msra.mxu0 0
    %675 = vmatprep.subr.bf16.mxu0 0
    %676 = vmatpush2.bf16.xpose.msra.mxu0 0
    %677 = vmatprep.subr.bf16.mxu0 0
    %678 = vmatpush2.bf16.xpose.msra.mxu0 0
    %679 = vmatprep.subr.bf16.mxu0 0
    %680 = vmatpush2.bf16.xpose.msra.mxu0 0
    %681 = vmatprep.subr.bf16.mxu0 0
    %682 = vmatpush2.bf16.xpose.msra.mxu0 0
    %683 = vmatprep.subr.bf16.mxu0 0
    %684 = vmatpush2.bf16.xpose.msra.mxu0 0
    %685 = vmatprep.mubr.bf16.mxu0 0
    %686 = vmatmul.mubr.bf16.gmra.mxu0 %v648
    %v687 = vpop.f32.mrf.mxu0
    %v688 = vadd.f32 %v561, %v687
    %v689 = vpop.f32.mrf.mxu0
    %v690 = vpop.f32.mrf.mxu0
    %v691 = vpop.f32.mrf.mxu0
    %692 = vdwg.mxu0
    %v694 = vsel %vm600, %v594, 0
    %v697 = vsel %vm600, %v598, 0
    %699 = vmatprep.subr.bf16.mxu0 0
    %700 = vmatpush1.bf16.xpose.msra.mxu0 0
    %701 = vmatprep.subr.bf16.mxu0 0
    %702 = vmatpush1.bf16.xpose.msra.mxu0 0
    %703 = vmatprep.subr.bf16.mxu0 0
    %704 = vmatpush1.bf16.xpose.msra.mxu0 0
    %705 = vmatprep.subr.bf16.mxu0 0
    %706 = vmatpush1.bf16.xpose.msra.mxu0 0
    %707 = vmatprep.subr.bf16.mxu0 0
    %708 = vmatpush1.bf16.xpose.msra.mxu0 0
    %709 = vmatprep.subr.bf16.mxu0 0
    %710 = vmatpush1.bf16.xpose.msra.mxu0 0
    %711 = vmatprep.subr.bf16.mxu0 0
    %712 = vmatpush1.bf16.xpose.msra.mxu0 0
    %713 = vmatprep.subr.bf16.mxu0 0
    %714 = vmatpush1.bf16.xpose.msra.mxu0 %v697
    %715 = vmatprep.subr.bf16.mxu0 0
    %716 = vmatpush2.bf16.xpose.msra.mxu0 0
    %717 = vmatprep.subr.bf16.mxu0 0
    %718 = vmatpush2.bf16.xpose.msra.mxu0 0
    %719 = vmatprep.subr.bf16.mxu0 0
    %720 = vmatpush2.bf16.xpose.msra.mxu0 0
    %721 = vmatprep.subr.bf16.mxu0 0
    %722 = vmatpush2.bf16.xpose.msra.mxu0 0
    %723 = vmatprep.subr.bf16.mxu0 0
    %724 = vmatpush2.bf16.xpose.msra.mxu0 0
    %725 = vmatprep.subr.bf16.mxu0 0
    %726 = vmatpush2.bf16.xpose.msra.mxu0 0
    %727 = vmatprep.subr.bf16.mxu0 0
    %728 = vmatpush2.bf16.xpose.msra.mxu0 0
    %729 = vmatprep.subr.bf16.mxu0 0
    %730 = vmatpush2.bf16.xpose.msra.mxu0 0
    %731 = vmatprep.mubr.bf16.mxu0 0
    %732 = vmatmul.mubr.bf16.gmra.mxu0 %v694
    %v733 = vpop.f32.mrf.mxu0
    %v734 = vadd.f32 %v561, %v733
    %v735 = vpop.f32.mrf.mxu0
    %v736 = vpop.f32.mrf.mxu0
    %v737 = vpop.f32.mrf.mxu0
    %738 = vdwg.mxu0
    %v740 = vsel %vm600, %v595, 0
    %v743 = vsel %vm600, %v599, 0
    %745 = vmatprep.subr.bf16.mxu0 0
    %746 = vmatpush1.bf16.xpose.msra.mxu0 0
    %747 = vmatprep.subr.bf16.mxu0 0
    %748 = vmatpush1.bf16.xpose.msra.mxu0 0
    %749 = vmatprep.subr.bf16.mxu0 0
    %750 = vmatpush1.bf16.xpose.msra.mxu0 0
    %751 = vmatprep.subr.bf16.mxu0 0
    %752 = vmatpush1.bf16.xpose.msra.mxu0 0
    %753 = vmatprep.subr.bf16.mxu0 0
    %754 = vmatpush1.bf16.xpose.msra.mxu0 0
    %755 = vmatprep.subr.bf16.mxu0 0
    %756 = vmatpush1.bf16.xpose.msra.mxu0 0
    %757 = vmatprep.subr.bf16.mxu0 0
    %758 = vmatpush1.bf16.xpose.msra.mxu0 0
    %759 = vmatprep.subr.bf16.mxu0 0
    %760 = vmatpush1.bf16.xpose.msra.mxu0 %v743
    %761 = vmatprep.subr.bf16.mxu0 0
    %762 = vmatpush2.bf16.xpose.msra.mxu0 0
    %763 = vmatprep.subr.bf16.mxu0 0
    %764 = vmatpush2.bf16.xpose.msra.mxu0 0
    %765 = vmatprep.subr.bf16.mxu0 0
    %766 = vmatpush2.bf16.xpose.msra.mxu0 0
    %767 = vmatprep.subr.bf16.mxu0 0
    %768 = vmatpush2.bf16.xpose.msra.mxu0 0
    %769 = vmatprep.subr.bf16.mxu0 0
    %770 = vmatpush2.bf16.xpose.msra.mxu0 0
    %771 = vmatprep.subr.bf16.mxu0 0
    %772 = vmatpush2.bf16.xpose.msra.mxu0 0
    %773 = vmatprep.subr.bf16.mxu0 0
    %774 = vmatpush2.bf16.xpose.msra.mxu0 0
    %775 = vmatprep.subr.bf16.mxu0 0
    %776 = vmatpush2.bf16.xpose.msra.mxu0 0
    %777 = vmatprep.mubr.bf16.mxu0 0
    %778 = vmatmul.mubr.bf16.gmra.mxu0 %v740
    %v779 = vpop.f32.mrf.mxu0
    %v780 = vadd.f32 %v561, %v779
    %v781 = vpop.f32.mrf.mxu0
    %v782 = vpop.f32.mrf.mxu0
    %v783 = vpop.f32.mrf.mxu0
    %784 = vdwg.mxu0
    %v785 = vsel %vm600, %v642, -inf
    %786 = vmax.xlane.f32.xlu0 %v785
    %v787 = vpop.xlane.xlu0 %786
    %v788 = vsel %vm600, %v688, -inf
    %789 = vmax.xlane.f32.xlu0 %v788
    %v790 = vpop.xlane.xlu0 %789
    %v791 = vsel %vm600, %v734, -inf
    %792 = vmax.xlane.f32.xlu0 %v791
    %v793 = vpop.xlane.xlu0 %792
    %v794 = vsel %vm600, %v780, -inf
    %795 = vmax.xlane.f32.xlu0 %v794
    %v796 = vpop.xlane.xlu0 %795
    %v797 = vsub.f32 %v642, %v787
    %v798 = vsub.f32 %v688, %v790
    %v799 = vsub.f32 %v734, %v793
    %v800 = vsub.f32 %v780, %v796
    %v801 = vmul.f32 %v797, 1.442695
    %v802 = vpow.pop %v801
    %v803 = vmul.f32 %v798, 1.442695
    %v804 = vpow.pop %v803
    %v805 = vmul.f32 %v799, 1.442695
    %v806 = vpow.pop %v805
    %v807 = vmul.f32 %v800, 1.442695
    %v808 = vpow.pop %v807
    %v809 = vsel %vm600, %v802, 0.0
    %810 = vadd.xlane.f32.xlu0 %v809
    %v811 = vpop.xlane.xlu0 %810
    %v812 = vsel %vm600, %v804, 0.0
    %813 = vadd.xlane.f32.xlu0 %v812
    %v814 = vpop.xlane.xlu0 %813
    %v815 = vsel %vm600, %v806, 0.0
    %816 = vadd.xlane.f32.xlu0 %v815
    %v817 = vpop.xlane.xlu0 %816
    %v818 = vsel %vm600, %v808, 0.0
    %819 = vadd.xlane.f32.xlu0 %v818
    %v820 = vpop.xlane.xlu0 %819
    %v821 = vpack.c.bf16 %v802, %v802
    %v822 = vpack.c.bf16 %v804, %v804
    %v823 = vpack.c.bf16 %v806, %v806
    %v824 = vpack.c.bf16 %v808, %v808
    %v825 = vpack.c.bf16 %v550, %v550
    %v826 = vpack.c.bf16 %v584, %v584
    %v827 = vpack.c.bf16 %v587, %v587
    %v828 = vpack.c.bf16 %v590, %v590
    %v830 = vsel %vm600, %v821, 0
    %vm832 = vcmask 1043456
    %v834 = vsel %vm832, %v825, 0
    %836 = vmatprep.subr.bf16.mxu0 0
    %837 = vmatpush1.bf16.msra.mxu0 0
    %838 = vmatprep.subr.bf16.mxu0 0
    %839 = vmatpush1.bf16.msra.mxu0 0
    %840 = vmatprep.subr.bf16.mxu0 0
    %841 = vmatpush1.bf16.msra.mxu0 0
    %842 = vmatprep.subr.bf16.mxu0 0
    %843 = vmatpush1.bf16.msra.mxu0 0
    %844 = vmatprep.subr.bf16.mxu0 0
    %845 = vmatpush1.bf16.msra.mxu0 0
    %846 = vmatprep.subr.bf16.mxu0 0
    %847 = vmatpush1.bf16.msra.mxu0 0
    %848 = vmatprep.subr.bf16.mxu0 0
    %849 = vmatpush1.bf16.msra.mxu0 0
    %850 = vmatprep.subr.bf16.mxu0 0
    %851 = vmatpush1.bf16.msra.mxu0 %v834
    %852 = vmatprep.subr.bf16.mxu0 0
    %853 = vmatpush2.bf16.msra.mxu0 0
    %854 = vmatprep.subr.bf16.mxu0 0
    %855 = vmatpush2.bf16.msra.mxu0 0
    %856 = vmatprep.subr.bf16.mxu0 0
    %857 = vmatpush2.bf16.msra.mxu0 0
    %858 = vmatprep.subr.bf16.mxu0 0
    %859 = vmatpush2.bf16.msra.mxu0 0
    %860 = vmatprep.subr.bf16.mxu0 0
    %861 = vmatpush2.bf16.msra.mxu0 0
    %862 = vmatprep.subr.bf16.mxu0 0
    %863 = vmatpush2.bf16.msra.mxu0 0
    %864 = vmatprep.subr.bf16.mxu0 0
    %865 = vmatpush2.bf16.msra.mxu0 0
    %866 = vmatprep.subr.bf16.mxu0 0
    %867 = vmatpush2.bf16.msra.mxu0 0
    %868 = vmatprep.mubr.bf16.mxu0 0
    %869 = vmatmul.mubr.bf16.gmra.mxu0 %v830
    %v870 = vpop.f32.mrf.mxu0
    %v871 = vadd.f32 0.0, %v870
    %v872 = vpop.f32.mrf.mxu0
    %v873 = vpop.f32.mrf.mxu0
    %v874 = vpop.f32.mrf.mxu0
    %875 = vdwg.mxu0
    %v877 = vsel %vm600, %v822, 0
    %v880 = vsel %vm832, %v826, 0
    %882 = vmatprep.subr.bf16.mxu0 0
    %883 = vmatpush1.bf16.msra.mxu0 0
    %884 = vmatprep.subr.bf16.mxu0 0
    %885 = vmatpush1.bf16.msra.mxu0 0
    %886 = vmatprep.subr.bf16.mxu0 0
    %887 = vmatpush1.bf16.msra.mxu0 0
    %888 = vmatprep.subr.bf16.mxu0 0
    %889 = vmatpush1.bf16.msra.mxu0 0
    %890 = vmatprep.subr.bf16.mxu0 0
    %891 = vmatpush1.bf16.msra.mxu0 0
    %892 = vmatprep.subr.bf16.mxu0 0
    %893 = vmatpush1.bf16.msra.mxu0 0
    %894 = vmatprep.subr.bf16.mxu0 0
    %895 = vmatpush1.bf16.msra.mxu0 0
    %896 = vmatprep.subr.bf16.mxu0 0
    %897 = vmatpush1.bf16.msra.mxu0 %v880
    %898 = vmatprep.subr.bf16.mxu0 0
    %899 = vmatpush2.bf16.msra.mxu0 0
    %900 = vmatprep.subr.bf16.mxu0 0
    %901 = vmatpush2.bf16.msra.mxu0 0
    %902 = vmatprep.subr.bf16.mxu0 0
    %903 = vmatpush2.bf16.msra.mxu0 0
    %904 = vmatprep.subr.bf16.mxu0 0
    %905 = vmatpush2.bf16.msra.mxu0 0
    %906 = vmatprep.subr.bf16.mxu0 0
    %907 = vmatpush2.bf16.msra.mxu0 0
    %908 = vmatprep.subr.bf16.mxu0 0
    %909 = vmatpush2.bf16.msra.mxu0 0
    %910 = vmatprep.subr.bf16.mxu0 0
    %911 = vmatpush2.bf16.msra.mxu0 0
    %912 = vmatprep.subr.bf16.mxu0 0
    %913 = vmatpush2.bf16.msra.mxu0 0
    %914 = vmatprep.mubr.bf16.mxu0 0
    %915 = vmatmul.mubr.bf16.gmra.mxu0 %v877
    %v916 = vpop.f32.mrf.mxu0
    %v917 = vadd.f32 0.0, %v916
    %v918 = vpop.f32.mrf.mxu0
    %v919 = vpop.f32.mrf.mxu0
    %v920 = vpop.f32.mrf.mxu0
    %921 = vdwg.mxu0
    %v923 = vsel %vm600, %v823, 0
    %v926 = vsel %vm832, %v827, 0
    %928 = vmatprep.subr.bf16.mxu0 0
    %929 = vmatpush1.bf16.msra.mxu0 0
    %930 = vmatprep.subr.bf16.mxu0 0
    %931 = vmatpush1.bf16.msra.mxu0 0
    %932 = vmatprep.subr.bf16.mxu0 0
    %933 = vmatpush1.bf16.msra.mxu0 0
    %934 = vmatprep.subr.bf16.mxu0 0
    %935 = vmatpush1.bf16.msra.mxu0 0
    %936 = vmatprep.subr.bf16.mxu0 0
    %937 = vmatpush1.bf16.msra.mxu0 0
    %938 = vmatprep.subr.bf16.mxu0 0
    %939 = vmatpush1.bf16.msra.mxu0 0
    %940 = vmatprep.subr.bf16.mxu0 0
    %941 = vmatpush1.bf16.msra.mxu0 0
    %942 = vmatprep.subr.bf16.mxu0 0
    %943 = vmatpush1.bf16.msra.mxu0 %v926
    %944 = vmatprep.subr.bf16.mxu0 0
    %945 = vmatpush2.bf16.msra.mxu0 0
    %946 = vmatprep.subr.bf16.mxu0 0
    %947 = vmatpush2.bf16.msra.mxu0 0
    %948 = vmatprep.subr.bf16.mxu0 0
    %949 = vmatpush2.bf16.msra.mxu0 0
    %950 = vmatprep.subr.bf16.mxu0 0
    %951 = vmatpush2.bf16.msra.mxu0 0
    %952 = vmatprep.subr.bf16.mxu0 0
    %953 = vmatpush2.bf16.msra.mxu0 0
    %954 = vmatprep.subr.bf16.mxu0 0
    %955 = vmatpush2.bf16.msra.mxu0 0
    %956 = vmatprep.subr.bf16.mxu0 0
    %957 = vmatpush2.bf16.msra.mxu0 0
    %958 = vmatprep.subr.bf16.mxu0 0
    %959 = vmatpush2.bf16.msra.mxu0 0
    %960 = vmatprep.mubr.bf16.mxu0 0
    %961 = vmatmul.mubr.bf16.gmra.mxu0 %v923
    %v962 = vpop.f32.mrf.mxu0
    %v963 = vadd.f32 0.0, %v962
    %v964 = vpop.f32.mrf.mxu0
    %v965 = vpop.f32.mrf.mxu0
    %v966 = vpop.f32.mrf.mxu0
    %967 = vdwg.mxu0
    %v969 = vsel %vm600, %v824, 0
    %v972 = vsel %vm832, %v828, 0
    %974 = vmatprep.subr.bf16.mxu0 0
    %975 = vmatpush1.bf16.msra.mxu0 0
    %976 = vmatprep.subr.bf16.mxu0 0
    %977 = vmatpush1.bf16.msra.mxu0 0
    %978 = vmatprep.subr.bf16.mxu0 0
    %979 = vmatpush1.bf16.msra.mxu0 0
    %980 = vmatprep.subr.bf16.mxu0 0
    %981 = vmatpush1.bf16.msra.mxu0 0
    %982 = vmatprep.subr.bf16.mxu0 0
    %983 = vmatpush1.bf16.msra.mxu0 0
    %984 = vmatprep.subr.bf16.mxu0 0
    %985 = vmatpush1.bf16.msra.mxu0 0
    %986 = vmatprep.subr.bf16.mxu0 0
    %987 = vmatpush1.bf16.msra.mxu0 0
    %988 = vmatprep.subr.bf16.mxu0 0
    %989 = vmatpush1.bf16.msra.mxu0 %v972
    %990 = vmatprep.subr.bf16.mxu0 0
    %991 = vmatpush2.bf16.msra.mxu0 0
    %992 = vmatprep.subr.bf16.mxu0 0
    %993 = vmatpush2.bf16.msra.mxu0 0
    %994 = vmatprep.subr.bf16.mxu0 0
    %995 = vmatpush2.bf16.msra.mxu0 0
    %996 = vmatprep.subr.bf16.mxu0 0
    %997 = vmatpush2.bf16.msra.mxu0 0
    %998 = vmatprep.subr.bf16.mxu0 0
    %999 = vmatpush2.bf16.msra.mxu0 0
    %1000 = vmatprep.subr.bf16.mxu0 0
    %1001 = vmatpush2.bf16.msra.mxu0 0
    %1002 = vmatprep.subr.bf16.mxu0 0
    %1003 = vmatpush2.bf16.msra.mxu0 0
    %1004 = vmatprep.subr.bf16.mxu0 0
    %1005 = vmatpush2.bf16.msra.mxu0 0
    %1006 = vmatprep.mubr.bf16.mxu0 0
    %1007 = vmatmul.mubr.bf16.gmra.mxu0 %v969
    %v1008 = vpop.f32.mrf.mxu0
    %v1009 = vadd.f32 0.0, %v1008
    %v1010 = vpop.f32.mrf.mxu0
    %v1011 = vpop.f32.mrf.mxu0
    %v1012 = vpop.f32.mrf.mxu0
    %1013 = vdwg.mxu0
    %v1014 = vrcp.pop %v811
    %v1015 = vrcp.pop %v814
    %v1016 = vrcp.pop %v817
    %v1017 = vrcp.pop %v820
    %v1018 = vmul.f32 %v871, %v1014
    %v1019 = vmul.f32 %v917, %v1015
    %v1020 = vmul.f32 %v963, %v1016
    %v1021 = vmul.f32 %v1009, %v1017
    %1023 = vrot.lane.b32.xlu0 %v1019, 8
    %v1024 = vpop.permute.xlu0 %1023
    %1027 = vrot.lane.b32.xlu0 %v1020, 16
    %v1028 = vpop.permute.xlu0 %1027
    %1031 = vrot.lane.b32.xlu0 %v1021, 24
    %v1032 = vpop.permute.xlu0 %1031
    %v1034 = vsel %vm600, %v1018, %v1024
    %vm1035 = vcmask 130048
    %v1036 = vsel %vm1035, %v1034, %v1028
    %vm1037 = vcmask 195584
    %v1038 = vsel %vm1037, %v1036, %v1032
    %1040 = vrot.lane.b32.xlu0 %v437, 120
    %v1041 = vpop.permute.xlu0 %1040
    %1043 = vrot.lane.b32.xlu0 %v437, 112
    %v1044 = vpop.permute.xlu0 %1043
    %1046 = vrot.lane.b32.xlu0 %v437, 104
    %v1047 = vpop.permute.xlu0 %1046
    %1050 = vrot.lane.b32.xlu0 %v494, 120
    %v1051 = vpop.permute.xlu0 %1050
    %1053 = vrot.lane.b32.xlu0 %v494, 112
    %v1054 = vpop.permute.xlu0 %1053
    %1056 = vrot.lane.b32.xlu0 %v494, 104
    %v1057 = vpop.permute.xlu0 %1056
    %1060 = vrot.lane.b32.xlu0 %v553, 120
    %v1061 = vpop.permute.xlu0 %1060
    %1063 = vrot.lane.b32.xlu0 %v553, 112
    %v1064 = vpop.permute.xlu0 %1063
    %1066 = vrot.lane.b32.xlu0 %v553, 104
    %v1067 = vpop.permute.xlu0 %1066
    %v1069 = vpack.c.bf16 %v437, %v437
    %v1070 = vpack.c.bf16 %v1041, %v1041
    %v1071 = vpack.c.bf16 %v1044, %v1044
    %v1072 = vpack.c.bf16 %v1047, %v1047
    %v1073 = vpack.c.bf16 %v494, %v494
    %v1074 = vpack.c.bf16 %v1051, %v1051
    %v1075 = vpack.c.bf16 %v1054, %v1054
    %v1076 = vpack.c.bf16 %v1057, %v1057
    %v1078 = vsel %vm600, %v1069, 0
    %v1081 = vsel %vm600, %v1073, 0
    %1083 = vmatprep.subr.bf16.mxu0 0
    %1084 = vmatpush1.bf16.xpose.msra.mxu0 0
    %1085 = vmatprep.subr.bf16.mxu0 0
    %1086 = vmatpush1.bf16.xpose.msra.mxu0 0
    %1087 = vmatprep.subr.bf16.mxu0 0
    %1088 = vmatpush1.bf16.xpose.msra.mxu0 0
    %1089 = vmatprep.subr.bf16.mxu0 0
    %1090 = vmatpush1.bf16.xpose.msra.mxu0 0
    %1091 = vmatprep.subr.bf16.mxu0 0
    %1092 = vmatpush1.bf16.xpose.msra.mxu0 0
    %1093 = vmatprep.subr.bf16.mxu0 0
    %1094 = vmatpush1.bf16.xpose.msra.mxu0 0
    %1095 = vmatprep.subr.bf16.mxu0 0
    %1096 = vmatpush1.bf16.xpose.msra.mxu0 0
    %1097 = vmatprep.subr.bf16.mxu0 0
    %1098 = vmatpush1.bf16.xpose.msra.mxu0 %v1081
    %1099 = vmatprep.subr.bf16.mxu0 0
    %1100 = vmatpush2.bf16.xpose.msra.mxu0 0
    %1101 = vmatprep.subr.bf16.mxu0 0
    %1102 = vmatpush2.bf16.xpose.msra.mxu0 0
    %1103 = vmatprep.subr.bf16.mxu0 0
    %1104 = vmatpush2.bf16.xpose.msra.mxu0 0
    %1105 = vmatprep.subr.bf16.mxu0 0
    %1106 = vmatpush2.bf16.xpose.msra.mxu0 0
    %1107 = vmatprep.subr.bf16.mxu0 0
    %1108 = vmatpush2.bf16.xpose.msra.mxu0 0
    %1109 = vmatprep.subr.bf16.mxu0 0
    %1110 = vmatpush2.bf16.xpose.msra.mxu0 0
    %1111 = vmatprep.subr.bf16.mxu0 0
    %1112 = vmatpush2.bf16.xpose.msra.mxu0 0
    %1113 = vmatprep.subr.bf16.mxu0 0
    %1114 = vmatpush2.bf16.xpose.msra.mxu0 0
    %1115 = vmatprep.mubr.bf16.mxu0 0
    %1116 = vmatmul.mubr.bf16.gmra.mxu0 %v1078
    %v1117 = vpop.f32.mrf.mxu0
    %v1118 = vadd.f32 %v561, %v1117
    %v1119 = vpop.f32.mrf.mxu0
    %v1120 = vpop.f32.mrf.mxu0
    %v1121 = vpop.f32.mrf.mxu0
    %1122 = vdwg.mxu0
    %v1124 = vsel %vm600, %v1070, 0
    %v1127 = vsel %vm600, %v1074, 0
    %1129 = vmatprep.subr.bf16.mxu0 0
    %1130 = vmatpush1.bf16.xpose.msra.mxu0 0
    %1131 = vmatprep.subr.bf16.mxu0 0
    %1132 = vmatpush1.bf16.xpose.msra.mxu0 0
    %1133 = vmatprep.subr.bf16.mxu0 0
    %1134 = vmatpush1.bf16.xpose.msra.mxu0 0
    %1135 = vmatprep.subr.bf16.mxu0 0
    %1136 = vmatpush1.bf16.xpose.msra.mxu0 0
    %1137 = vmatprep.subr.bf16.mxu0 0
    %1138 = vmatpush1.bf16.xpose.msra.mxu0 0
    %1139 = vmatprep.subr.bf16.mxu0 0
    %1140 = vmatpush1.bf16.xpose.msra.mxu0 0
    %1141 = vmatprep.subr.bf16.mxu0 0
    %1142 = vmatpush1.bf16.xpose.msra.mxu0 0
    %1143 = vmatprep.subr.bf16.mxu0 0
    %1144 = vmatpush1.bf16.xpose.msra.mxu0 %v1127
    %1145 = vmatprep.subr.bf16.mxu0 0
    %1146 = vmatpush2.bf16.xpose.msra.mxu0 0
    %1147 = vmatprep.subr.bf16.mxu0 0
    %1148 = vmatpush2.bf16.xpose.msra.mxu0 0
    %1149 = vmatprep.subr.bf16.mxu0 0
    %1150 = vmatpush2.bf16.xpose.msra.mxu0 0
    %1151 = vmatprep.subr.bf16.mxu0 0
    %1152 = vmatpush2.bf16.xpose.msra.mxu0 0
    %1153 = vmatprep.subr.bf16.mxu0 0
    %1154 = vmatpush2.bf16.xpose.msra.mxu0 0
    %1155 = vmatprep.subr.bf16.mxu0 0
    %1156 = vmatpush2.bf16.xpose.msra.mxu0 0
    %1157 = vmatprep.subr.bf16.mxu0 0
    %1158 = vmatpush2.bf16.xpose.msra.mxu0 0
    %1159 = vmatprep.subr.bf16.mxu0 0
    %1160 = vmatpush2.bf16.xpose.msra.mxu0 0
    %1161 = vmatprep.mubr.bf16.mxu0 0
    %1162 = vmatmul.mubr.bf16.gmra.mxu0 %v1124
    %v1163 = vpop.f32.mrf.mxu0
    %v1164 = vadd.f32 %v561, %v1163
    %v1165 = vpop.f32.mrf.mxu0
    %v1166 = vpop.f32.mrf.mxu0
    %v1167 = vpop.f32.mrf.mxu0
    %1168 = vdwg.mxu0
    %v1170 = vsel %vm600, %v1071, 0
    %v1173 = vsel %vm600, %v1075, 0
    %1175 = vmatprep.subr.bf16.mxu0 0
    %1176 = vmatpush1.bf16.xpose.msra.mxu0 0
    %1177 = vmatprep.subr.bf16.mxu0 0
    %1178 = vmatpush1.bf16.xpose.msra.mxu0 0
    %1179 = vmatprep.subr.bf16.mxu0 0
    %1180 = vmatpush1.bf16.xpose.msra.mxu0 0
    %1181 = vmatprep.subr.bf16.mxu0 0
    %1182 = vmatpush1.bf16.xpose.msra.mxu0 0
    %1183 = vmatprep.subr.bf16.mxu0 0
    %1184 = vmatpush1.bf16.xpose.msra.mxu0 0
    %1185 = vmatprep.subr.bf16.mxu0 0
    %1186 = vmatpush1.bf16.xpose.msra.mxu0 0
    %1187 = vmatprep.subr.bf16.mxu0 0
    %1188 = vmatpush1.bf16.xpose.msra.mxu0 0
    %1189 = vmatprep.subr.bf16.mxu0 0
    %1190 = vmatpush1.bf16.xpose.msra.mxu0 %v1173
    %1191 = vmatprep.subr.bf16.mxu0 0
    %1192 = vmatpush2.bf16.xpose.msra.mxu0 0
    %1193 = vmatprep.subr.bf16.mxu0 0
    %1194 = vmatpush2.bf16.xpose.msra.mxu0 0
    %1195 = vmatprep.subr.bf16.mxu0 0
    %1196 = vmatpush2.bf16.xpose.msra.mxu0 0
    %1197 = vmatprep.subr.bf16.mxu0 0
    %1198 = vmatpush2.bf16.xpose.msra.mxu0 0
    %1199 = vmatprep.subr.bf16.mxu0 0
    %1200 = vmatpush2.bf16.xpose.msra.mxu0 0
    %1201 = vmatprep.subr.bf16.mxu0 0
    %1202 = vmatpush2.bf16.xpose.msra.mxu0 0
    %1203 = vmatprep.subr.bf16.mxu0 0
    %1204 = vmatpush2.bf16.xpose.msra.mxu0 0
    %1205 = vmatprep.subr.bf16.mxu0 0
    %1206 = vmatpush2.bf16.xpose.msra.mxu0 0
    %1207 = vmatprep.mubr.bf16.mxu0 0
    %1208 = vmatmul.mubr.bf16.gmra.mxu0 %v1170
    %v1209 = vpop.f32.mrf.mxu0
    %v1210 = vadd.f32 %v561, %v1209
    %v1211 = vpop.f32.mrf.mxu0
    %v1212 = vpop.f32.mrf.mxu0
    %v1213 = vpop.f32.mrf.mxu0
    %1214 = vdwg.mxu0
    %v1216 = vsel %vm600, %v1072, 0
    %v1219 = vsel %vm600, %v1076, 0
    %1221 = vmatprep.subr.bf16.mxu0 0
    %1222 = vmatpush1.bf16.xpose.msra.mxu0 0
    %1223 = vmatprep.subr.bf16.mxu0 0
    %1224 = vmatpush1.bf16.xpose.msra.mxu0 0
    %1225 = vmatprep.subr.bf16.mxu0 0
    %1226 = vmatpush1.bf16.xpose.msra.mxu0 0
    %1227 = vmatprep.subr.bf16.mxu0 0
    %1228 = vmatpush1.bf16.xpose.msra.mxu0 0
    %1229 = vmatprep.subr.bf16.mxu0 0
    %1230 = vmatpush1.bf16.xpose.msra.mxu0 0
    %1231 = vmatprep.subr.bf16.mxu0 0
    %1232 = vmatpush1.bf16.xpose.msra.mxu0 0
    %1233 = vmatprep.subr.bf16.mxu0 0
    %1234 = vmatpush1.bf16.xpose.msra.mxu0 0
    %1235 = vmatprep.subr.bf16.mxu0 0
    %1236 = vmatpush1.bf16.xpose.msra.mxu0 %v1219
    %1237 = vmatprep.subr.bf16.mxu0 0
    %1238 = vmatpush2.bf16.xpose.msra.mxu0 0
    %1239 = vmatprep.subr.bf16.mxu0 0
    %1240 = vmatpush2.bf16.xpose.msra.mxu0 0
    %1241 = vmatprep.subr.bf16.mxu0 0
    %1242 = vmatpush2.bf16.xpose.msra.mxu0 0
    %1243 = vmatprep.subr.bf16.mxu0 0
    %1244 = vmatpush2.bf16.xpose.msra.mxu0 0
    %1245 = vmatprep.subr.bf16.mxu0 0
    %1246 = vmatpush2.bf16.xpose.msra.mxu0 0
    %1247 = vmatprep.subr.bf16.mxu0 0
    %1248 = vmatpush2.bf16.xpose.msra.mxu0 0
    %1249 = vmatprep.subr.bf16.mxu0 0
    %1250 = vmatpush2.bf16.xpose.msra.mxu0 0
    %1251 = vmatprep.subr.bf16.mxu0 0
    %1252 = vmatpush2.bf16.xpose.msra.mxu0 0
    %1253 = vmatprep.mubr.bf16.mxu0 0
    %1254 = vmatmul.mubr.bf16.gmra.mxu0 %v1216
    %v1255 = vpop.f32.mrf.mxu0
    %v1256 = vadd.f32 %v561, %v1255
    %v1257 = vpop.f32.mrf.mxu0
    %v1258 = vpop.f32.mrf.mxu0
    %v1259 = vpop.f32.mrf.mxu0
    %1260 = vdwg.mxu0
    %v1261 = vsel %vm600, %v1118, -inf
    %1262 = vmax.xlane.f32.xlu0 %v1261
    %v1263 = vpop.xlane.xlu0 %1262
    %v1264 = vsel %vm600, %v1164, -inf
    %1265 = vmax.xlane.f32.xlu0 %v1264
    %v1266 = vpop.xlane.xlu0 %1265
    %v1267 = vsel %vm600, %v1210, -inf
    %1268 = vmax.xlane.f32.xlu0 %v1267
    %v1269 = vpop.xlane.xlu0 %1268
    %v1270 = vsel %vm600, %v1256, -inf
    %1271 = vmax.xlane.f32.xlu0 %v1270
    %v1272 = vpop.xlane.xlu0 %1271
    %v1273 = vsub.f32 %v1118, %v1263
    %v1274 = vsub.f32 %v1164, %v1266
    %v1275 = vsub.f32 %v1210, %v1269
    %v1276 = vsub.f32 %v1256, %v1272
    %v1277 = vmul.f32 %v1273, 1.442695
    %v1278 = vpow.pop %v1277
    %v1279 = vmul.f32 %v1274, 1.442695
    %v1280 = vpow.pop %v1279
    %v1281 = vmul.f32 %v1275, 1.442695
    %v1282 = vpow.pop %v1281
    %v1283 = vmul.f32 %v1276, 1.442695
    %v1284 = vpow.pop %v1283
    %v1285 = vsel %vm600, %v1278, 0.0
    %1286 = vadd.xlane.f32.xlu0 %v1285
    %v1287 = vpop.xlane.xlu0 %1286
    %v1288 = vsel %vm600, %v1280, 0.0
    %1289 = vadd.xlane.f32.xlu0 %v1288
    %v1290 = vpop.xlane.xlu0 %1289
    %v1291 = vsel %vm600, %v1282, 0.0
    %1292 = vadd.xlane.f32.xlu0 %v1291
    %v1293 = vpop.xlane.xlu0 %1292
    %v1294 = vsel %vm600, %v1284, 0.0
    %1295 = vadd.xlane.f32.xlu0 %v1294
    %v1296 = vpop.xlane.xlu0 %1295
    %v1297 = vpack.c.bf16 %v1278, %v1278
    %v1298 = vpack.c.bf16 %v1280, %v1280
    %v1299 = vpack.c.bf16 %v1282, %v1282
    %v1300 = vpack.c.bf16 %v1284, %v1284
    %v1301 = vpack.c.bf16 %v553, %v553
    %v1302 = vpack.c.bf16 %v1061, %v1061
    %v1303 = vpack.c.bf16 %v1064, %v1064
    %v1304 = vpack.c.bf16 %v1067, %v1067
    %v1306 = vsel %vm600, %v1297, 0
    %v1309 = vsel %vm832, %v1301, 0
    %1311 = vmatprep.subr.bf16.mxu0 0
    %1312 = vmatpush1.bf16.msra.mxu0 0
    %1313 = vmatprep.subr.bf16.mxu0 0
    %1314 = vmatpush1.bf16.msra.mxu0 0
    %1315 = vmatprep.subr.bf16.mxu0 0
    %1316 = vmatpush1.bf16.msra.mxu0 0
    %1317 = vmatprep.subr.bf16.mxu0 0
    %1318 = vmatpush1.bf16.msra.mxu0 0
    %1319 = vmatprep.subr.bf16.mxu0 0
    %1320 = vmatpush1.bf16.msra.mxu0 0
    %1321 = vmatprep.subr.bf16.mxu0 0
    %1322 = vmatpush1.bf16.msra.mxu0 0
    %1323 = vmatprep.subr.bf16.mxu0 0
    %1324 = vmatpush1.bf16.msra.mxu0 0
    %1325 = vmatprep.subr.bf16.mxu0 0
    %1326 = vmatpush1.bf16.msra.mxu0 %v1309
    %1327 = vmatprep.subr.bf16.mxu0 0
    %1328 = vmatpush2.bf16.msra.mxu0 0
    %1329 = vmatprep.subr.bf16.mxu0 0
    %1330 = vmatpush2.bf16.msra.mxu0 0
    %1331 = vmatprep.subr.bf16.mxu0 0
    %1332 = vmatpush2.bf16.msra.mxu0 0
    %1333 = vmatprep.subr.bf16.mxu0 0
    %1334 = vmatpush2.bf16.msra.mxu0 0
    %1335 = vmatprep.subr.bf16.mxu0 0
    %1336 = vmatpush2.bf16.msra.mxu0 0
    %1337 = vmatprep.subr.bf16.mxu0 0
    %1338 = vmatpush2.bf16.msra.mxu0 0
    %1339 = vmatprep.subr.bf16.mxu0 0
    %1340 = vmatpush2.bf16.msra.mxu0 0
    %1341 = vmatprep.subr.bf16.mxu0 0
    %1342 = vmatpush2.bf16.msra.mxu0 0
    %1343 = vmatprep.mubr.bf16.mxu0 0
    %1344 = vmatmul.mubr.bf16.gmra.mxu0 %v1306
    %v1345 = vpop.f32.mrf.mxu0
    %v1346 = vadd.f32 0.0, %v1345
    %v1347 = vpop.f32.mrf.mxu0
    %v1348 = vpop.f32.mrf.mxu0
    %v1349 = vpop.f32.mrf.mxu0
    %1350 = vdwg.mxu0
    %v1352 = vsel %vm600, %v1298, 0
    %v1355 = vsel %vm832, %v1302, 0
    %1357 = vmatprep.subr.bf16.mxu0 0
    %1358 = vmatpush1.bf16.msra.mxu0 0
    %1359 = vmatprep.subr.bf16.mxu0 0
    %1360 = vmatpush1.bf16.msra.mxu0 0
    %1361 = vmatprep.subr.bf16.mxu0 0
    %1362 = vmatpush1.bf16.msra.mxu0 0
    %1363 = vmatprep.subr.bf16.mxu0 0
    %1364 = vmatpush1.bf16.msra.mxu0 0
    %1365 = vmatprep.subr.bf16.mxu0 0
    %1366 = vmatpush1.bf16.msra.mxu0 0
    %1367 = vmatprep.subr.bf16.mxu0 0
    %1368 = vmatpush1.bf16.msra.mxu0 0
    %1369 = vmatprep.subr.bf16.mxu0 0
    %1370 = vmatpush1.bf16.msra.mxu0 0
    %1371 = vmatprep.subr.bf16.mxu0 0
    %1372 = vmatpush1.bf16.msra.mxu0 %v1355
    %1373 = vmatprep.subr.bf16.mxu0 0
    %1374 = vmatpush2.bf16.msra.mxu0 0
    %1375 = vmatprep.subr.bf16.mxu0 0
    %1376 = vmatpush2.bf16.msra.mxu0 0
    %1377 = vmatprep.subr.bf16.mxu0 0
    %1378 = vmatpush2.bf16.msra.mxu0 0
    %1379 = vmatprep.subr.bf16.mxu0 0
    %1380 = vmatpush2.bf16.msra.mxu0 0
    %1381 = vmatprep.subr.bf16.mxu0 0
    %1382 = vmatpush2.bf16.msra.mxu0 0
    %1383 = vmatprep.subr.bf16.mxu0 0
    %1384 = vmatpush2.bf16.msra.mxu0 0
    %1385 = vmatprep.subr.bf16.mxu0 0
    %1386 = vmatpush2.bf16.msra.mxu0 0
    %1387 = vmatprep.subr.bf16.mxu0 0
    %1388 = vmatpush2.bf16.msra.mxu0 0
    %1389 = vmatprep.mubr.bf16.mxu0 0
    %1390 = vmatmul.mubr.bf16.gmra.mxu0 %v1352
    %v1391 = vpop.f32.mrf.mxu0
    %v1392 = vadd.f32 0.0, %v1391
    %v1393 = vpop.f32.mrf.mxu0
    %v1394 = vpop.f32.mrf.mxu0
    %v1395 = vpop.f32.mrf.mxu0
    %1396 = vdwg.mxu0
    %v1398 = vsel %vm600, %v1299, 0
    %v1401 = vsel %vm832, %v1303, 0
    %1403 = vmatprep.subr.bf16.mxu0 0
    %1404 = vmatpush1.bf16.msra.mxu0 0
    %1405 = vmatprep.subr.bf16.mxu0 0
    %1406 = vmatpush1.bf16.msra.mxu0 0
    %1407 = vmatprep.subr.bf16.mxu0 0
    %1408 = vmatpush1.bf16.msra.mxu0 0
    %1409 = vmatprep.subr.bf16.mxu0 0
    %1410 = vmatpush1.bf16.msra.mxu0 0
    %1411 = vmatprep.subr.bf16.mxu0 0
    %1412 = vmatpush1.bf16.msra.mxu0 0
    %1413 = vmatprep.subr.bf16.mxu0 0
    %1414 = vmatpush1.bf16.msra.mxu0 0
    %1415 = vmatprep.subr.bf16.mxu0 0
    %1416 = vmatpush1.bf16.msra.mxu0 0
    %1417 = vmatprep.subr.bf16.mxu0 0
    %1418 = vmatpush1.bf16.msra.mxu0 %v1401
    %1419 = vmatprep.subr.bf16.mxu0 0
    %1420 = vmatpush2.bf16.msra.mxu0 0
    %1421 = vmatprep.subr.bf16.mxu0 0
    %1422 = vmatpush2.bf16.msra.mxu0 0
    %1423 = vmatprep.subr.bf16.mxu0 0
    %1424 = vmatpush2.bf16.msra.mxu0 0
    %1425 = vmatprep.subr.bf16.mxu0 0
    %1426 = vmatpush2.bf16.msra.mxu0 0
    %1427 = vmatprep.subr.bf16.mxu0 0
    %1428 = vmatpush2.bf16.msra.mxu0 0
    %1429 = vmatprep.subr.bf16.mxu0 0
    %1430 = vmatpush2.bf16.msra.mxu0 0
    %1431 = vmatprep.subr.bf16.mxu0 0
    %1432 = vmatpush2.bf16.msra.mxu0 0
    %1433 = vmatprep.subr.bf16.mxu0 0
    %1434 = vmatpush2.bf16.msra.mxu0 0
    %1435 = vmatprep.mubr.bf16.mxu0 0
    %1436 = vmatmul.mubr.bf16.gmra.mxu0 %v1398
    %v1437 = vpop.f32.mrf.mxu0
    %v1438 = vadd.f32 0.0, %v1437
    %v1439 = vpop.f32.mrf.mxu0
    %v1440 = vpop.f32.mrf.mxu0
    %v1441 = vpop.f32.mrf.mxu0
    %1442 = vdwg.mxu0
    %v1444 = vsel %vm600, %v1300, 0
    %v1447 = vsel %vm832, %v1304, 0
    %1449 = vmatprep.subr.bf16.mxu0 0
    %1450 = vmatpush1.bf16.msra.mxu0 0
    %1451 = vmatprep.subr.bf16.mxu0 0
    %1452 = vmatpush1.bf16.msra.mxu0 0
    %1453 = vmatprep.subr.bf16.mxu0 0
    %1454 = vmatpush1.bf16.msra.mxu0 0
    %1455 = vmatprep.subr.bf16.mxu0 0
    %1456 = vmatpush1.bf16.msra.mxu0 0
    %1457 = vmatprep.subr.bf16.mxu0 0
    %1458 = vmatpush1.bf16.msra.mxu0 0
    %1459 = vmatprep.subr.bf16.mxu0 0
    %1460 = vmatpush1.bf16.msra.mxu0 0
    %1461 = vmatprep.subr.bf16.mxu0 0
    %1462 = vmatpush1.bf16.msra.mxu0 0
    %1463 = vmatprep.subr.bf16.mxu0 0
    %1464 = vmatpush1.bf16.msra.mxu0 %v1447
    %1465 = vmatprep.subr.bf16.mxu0 0
    %1466 = vmatpush2.bf16.msra.mxu0 0
    %1467 = vmatprep.subr.bf16.mxu0 0
    %1468 = vmatpush2.bf16.msra.mxu0 0
    %1469 = vmatprep.subr.bf16.mxu0 0
    %1470 = vmatpush2.bf16.msra.mxu0 0
    %1471 = vmatprep.subr.bf16.mxu0 0
    %1472 = vmatpush2.bf16.msra.mxu0 0
    %1473 = vmatprep.subr.bf16.mxu0 0
    %1474 = vmatpush2.bf16.msra.mxu0 0
    %1475 = vmatprep.subr.bf16.mxu0 0
    %1476 = vmatpush2.bf16.msra.mxu0 0
    %1477 = vmatprep.subr.bf16.mxu0 0
    %1478 = vmatpush2.bf16.msra.mxu0 0
    %1479 = vmatprep.subr.bf16.mxu0 0
    %1480 = vmatpush2.bf16.msra.mxu0 0
    %1481 = vmatprep.mubr.bf16.mxu0 0
    %1482 = vmatmul.mubr.bf16.gmra.mxu0 %v1444
    %v1483 = vpop.f32.mrf.mxu0
    %v1484 = vadd.f32 0.0, %v1483
    %v1485 = vpop.f32.mrf.mxu0
    %v1486 = vpop.f32.mrf.mxu0
    %v1487 = vpop.f32.mrf.mxu0
    %1488 = vdwg.mxu0
    %v1489 = vrcp.pop %v1287
    %v1490 = vrcp.pop %v1290
    %v1491 = vrcp.pop %v1293
    %v1492 = vrcp.pop %v1296
    %v1493 = vmul.f32 %v1346, %v1489
    %v1494 = vmul.f32 %v1392, %v1490
    %v1495 = vmul.f32 %v1438, %v1491
    %v1496 = vmul.f32 %v1484, %v1492
    %1498 = vrot.lane.b32.xlu0 %v1494, 8
    %v1499 = vpop.permute.xlu0 %1498
    %1502 = vrot.lane.b32.xlu0 %v1495, 16
    %v1503 = vpop.permute.xlu0 %1502
    %1506 = vrot.lane.b32.xlu0 %v1496, 24
    %v1507 = vpop.permute.xlu0 %1506
    %v1509 = vsel %vm600, %v1493, %v1499
    %v1510 = vsel %vm1035, %v1509, %v1503
    %v1511 = vsel %vm1037, %v1510, %v1507
    %v1512 = vpack.c.bf16 %v1511, %v1038
    %v1514 = vlaneseq
    %v1515 = vshrl.u32 %v1514, 7
    %v1516 = vsub.s32 0, %v1515
    %v1517 = vrot.slane %v372, %v1516
    %v1523 = vunpack.c.l.b16 %v368
    %v1524 = vunpack.c.l.b16 %v369
    %v1525 = vunpack.c.l.b16 %v370
    %v1526 = vunpack.c.l.b16 %v371
    %v1527 = vpack.c.b16 %v1524, %v1523
    %v1528 = vpack.c.b16 %v1526, %v1525
    %v1532 = vsel %vm309, %v1512, 0
    %1534 = vmatprep.subr.bf16.mxu0 0
    %1535 = vmatpush1.bf16.msra.mxu0 0
    %1536 = vmatprep.subr.bf16.mxu0 0
    %1537 = vmatpush1.bf16.msra.mxu0 0
    %1538 = vmatprep.subr.bf16.mxu0 0
    %1539 = vmatpush1.bf16.msra.mxu0 0
    %1540 = vmatprep.subr.bf16.mxu0 0
    %1541 = vmatpush1.bf16.msra.mxu0 0
    %1542 = vmatprep.subr.bf16.mxu0 0
    %1543 = vmatpush1.bf16.msra.mxu0 0
    %1544 = vmatprep.subr.bf16.mxu0 0
    %1545 = vmatpush1.bf16.msra.mxu0 0
    %1546 = vmatprep.subr.bf16.mxu0 0
    %1547 = vmatpush1.bf16.msra.mxu0 %v1528
    %1548 = vmatprep.subr.bf16.mxu0 0
    %1549 = vmatpush1.bf16.msra.mxu0 %v1527
    %1550 = vmatprep.subr.bf16.mxu0 0
    %1551 = vmatpush2.bf16.msra.mxu0 0
    %1552 = vmatprep.subr.bf16.mxu0 0
    %1553 = vmatpush2.bf16.msra.mxu0 0
    %1554 = vmatprep.subr.bf16.mxu0 0
    %1555 = vmatpush2.bf16.msra.mxu0 0
    %1556 = vmatprep.subr.bf16.mxu0 0
    %1557 = vmatpush2.bf16.msra.mxu0 0
    %1558 = vmatprep.subr.bf16.mxu0 0
    %1559 = vmatpush2.bf16.msra.mxu0 0
    %1560 = vmatprep.subr.bf16.mxu0 0
    %1561 = vmatpush2.bf16.msra.mxu0 0
    %1562 = vmatprep.subr.bf16.mxu0 0
    %1563 = vmatpush2.bf16.msra.mxu0 0
    %1564 = vmatprep.subr.bf16.mxu0 0
    %1565 = vmatpush2.bf16.msra.mxu0 0
    %1566 = vmatprep.mubr.bf16.mxu0 0
    %1567 = vmatmul.mubr.bf16.gmra.mxu0 %v1532
    %v1568 = vpop.f32.mrf.mxu0
    %v1569 = vadd.f32 %v1517, %v1568
    %v1570 = vpop.f32.mrf.mxu0
    %v1571 = vpop.f32.mrf.mxu0
    %v1572 = vadd.f32 %v1517, %v1571
    %v1573 = vpop.f32.mrf.mxu0
    %1574 = vdwg.mxu0
    %v1575 = vadd.f32 %v301, %v1569
    %v1576 = vadd.f32 %v302, %v1572
    %v1577 = vld [vmem:[#allocation17] sm:$0x1]
    %v1578 = vld [vmem:[#allocation19] sm:$0x1]
    %v1579 = vsel %vm309, %v1575, 0.0
    %1580 = vadd.xlane.f32.xlu0 %v1579
    %v1581 = vpop.xlane.xlu0 %1580
    %v1582 = vsel %vm309, %v1576, 0.0
    %1583 = vadd.xlane.f32.xlu0 %v1582
    %v1584 = vpop.xlane.xlu0 %1583
    %v1585 = vmul.f32 %v1581, %v316
    %v1586 = vmul.f32 %v1584, %v316
    %v1587 = vsub.f32 %v1575, %v1585
    %v1588 = vsub.f32 %v1576, %v1586
    %v1589 = vmul.f32 %v1587, %v1587
    %v1590 = vmul.f32 %v1588, %v1588
    %v1591 = vsel %vm309, %v1589, 0.0
    %1592 = vadd.xlane.f32.xlu0 %v1591
    %v1593 = vpop.xlane.xlu0 %1592
    %v1594 = vsel %vm309, %v1590, 0.0
    %1595 = vadd.xlane.f32.xlu0 %v1594
    %v1596 = vpop.xlane.xlu0 %1595
    %v1597 = vmul.f32 %v1593, %v316
    %v1598 = vmul.f32 %v1596, %v316
    %v1599 = vadd.f32 %v1597, 1e-05
    %v1600 = vadd.f32 %v1598, 1e-05
    %v1601 = vrsqrt.pop %v1599
    %v1602 = vrsqrt.pop %v1600
    %v1603 = vmul.f32 %v1587, %v1601
    %v1604 = vmul.f32 %v1588, %v1602
    %v1606 = vlaneseq
    %v1607 = vshrl.u32 %v1606, 7
    %v1608 = vsub.s32 0, %v1607
    %v1609 = vrot.slane %v1577, %v1608
    %v1611 = vmul.f32 %v1603, %v1609
    %v1612 = vmul.f32 %v1604, %v1609
    %v1614 = vlaneseq
    %v1615 = vshrl.u32 %v1614, 7
    %v1616 = vsub.s32 0, %v1615
    %v1617 = vrot.slane %v1578, %v1616
    %v1619 = vadd.f32 %v1611, %v1617
    %v1620 = vadd.f32 %v1612, %v1617
    %v1621 = vld [vmem:[#allocation20] sm:$0xf]
    %v1622 = vld [vmem:[#allocation20 + $0x4] sm:$0xf]
    %v1623 = vld [vmem:[#allocation20 + $0x8] sm:$0xf]
    %v1624 = vld [vmem:[#allocation20 + $0xc] sm:$0xf]
    %v1625 = vld [vmem:[#allocation22] sm:$0x1]
    %v1626 = vld [vmem:[#allocation23] sm:$0xf]
    %v1627 = vld [vmem:[#allocation23 + $0x4] sm:$0xf]
    %v1628 = vld [vmem:[#allocation23 + $0x8] sm:$0xf]
    %v1629 = vld [vmem:[#allocation23 + $0xc] sm:$0xf]
    %v1630 = vld [vmem:[#allocation25] sm:$0x1]
    %v1631 = vld [vmem:[%s18] sm:$0xf]
    %v1632 = vld [vmem:[%s18 + $0x4] sm:$0xf]
    %v1633 = vld [vmem:[%s18 + $0x8] sm:$0xf]
    %v1634 = vld [vmem:[%s18 + $0xc] sm:$0xf]
    %v1635 = vld [vmem:[%s19] sm:$0x1]
    %v1636 = vld [vmem:[#allocation26] sm:$0xf]
    %v1637 = vld [vmem:[#allocation26 + $0x4] sm:$0xf]
    %v1638 = vld [vmem:[#allocation26 + $0x8] sm:$0xf]
    %v1639 = vld [vmem:[#allocation26 + $0xc] sm:$0xf]
    %v1640 = vld [vmem:[%s21] sm:$0x1]
    %v1641 = vpack.c.bf16 %v1620, %v1619
    %v1642 = vpack.c.bf16 %v304, %v303
    %v1643 = vpack.c.bf16 %v306, %v305
    %v1645 = vlaneseq
    %v1646 = vshrl.u32 %v1645, 7
    %v1647 = vsub.s32 0, %v1646
    %v1648 = vrot.slane %v1625, %v1647
    %v1654 = vunpack.c.l.b16 %v1621
    %v1655 = vunpack.c.l.b16 %v1622
    %v1656 = vunpack.c.l.b16 %v1623
    %v1657 = vunpack.c.l.b16 %v1624
    %v1658 = vpack.c.b16 %v1655, %v1654
    %v1659 = vpack.c.b16 %v1657, %v1656
    %v1663 = vsel %vm309, %v1641, 0
    %1665 = vmatprep.subr.bf16.mxu0 0
    %1666 = vmatpush1.bf16.msra.mxu0 0
    %1667 = vmatprep.subr.bf16.mxu0 0
    %1668 = vmatpush1.bf16.msra.mxu0 0
    %1669 = vmatprep.subr.bf16.mxu0 0
    %1670 = vmatpush1.bf16.msra.mxu0 0
    %1671 = vmatprep.subr.bf16.mxu0 0
    %1672 = vmatpush1.bf16.msra.mxu0 0
    %1673 = vmatprep.subr.bf16.mxu0 0
    %1674 = vmatpush1.bf16.msra.mxu0 0
    %1675 = vmatprep.subr.bf16.mxu0 0
    %1676 = vmatpush1.bf16.msra.mxu0 0
    %1677 = vmatprep.subr.bf16.mxu0 0
    %1678 = vmatpush1.bf16.msra.mxu0 %v1659
    %1679 = vmatprep.subr.bf16.mxu0 0
    %1680 = vmatpush1.bf16.msra.mxu0 %v1658
    %1681 = vmatprep.subr.bf16.mxu0 0
    %1682 = vmatpush2.bf16.msra.mxu0 0
    %1683 = vmatprep.subr.bf16.mxu0 0
    %1684 = vmatpush2.bf16.msra.mxu0 0
    %1685 = vmatprep.subr.bf16.mxu0 0
    %1686 = vmatpush2.bf16.msra.mxu0 0
    %1687 = vmatprep.subr.bf16.mxu0 0
    %1688 = vmatpush2.bf16.msra.mxu0 0
    %1689 = vmatprep.subr.bf16.mxu0 0
    %1690 = vmatpush2.bf16.msra.mxu0 0
    %1691 = vmatprep.subr.bf16.mxu0 0
    %1692 = vmatpush2.bf16.msra.mxu0 0
    %1693 = vmatprep.subr.bf16.mxu0 0
    %1694 = vmatpush2.bf16.msra.mxu0 0
    %1695 = vmatprep.subr.bf16.mxu0 0
    %1696 = vmatpush2.bf16.msra.mxu0 0
    %1697 = vmatprep.mubr.bf16.mxu0 0
    %1698 = vmatmul.mubr.bf16.gmra.mxu0 %v1663
    %v1699 = vpop.f32.mrf.mxu0
    %v1700 = vadd.f32 %v1648, %v1699
    %v1701 = vpop.f32.mrf.mxu0
    %v1702 = vpop.f32.mrf.mxu0
    %v1703 = vadd.f32 %v1648, %v1702
    %v1704 = vpop.f32.mrf.mxu0
    %1705 = vdwg.mxu0
    %v1706 = vmul.f32 %v1700, 0.35355338
    %v1707 = vmul.f32 %v1703, 0.35355338
    %v1709 = vlaneseq
    %v1710 = vshrl.u32 %v1709, 7
    %v1711 = vsub.s32 0, %v1710
    %v1712 = vrot.slane %v1630, %v1711
    %v1718 = vunpack.c.l.b16 %v1626
    %v1719 = vunpack.c.l.b16 %v1627
    %v1720 = vunpack.c.l.b16 %v1628
    %v1721 = vunpack.c.l.b16 %v1629
    %v1722 = vpack.c.b16 %v1719, %v1718
    %v1723 = vpack.c.b16 %v1721, %v1720
    %v1727 = vsel %vm309, %v1642, 0
    %v1730 = vsel %vm309, %v1643, 0
    %1732 = vmatprep.subr.bf16.mxu0 0
    %1733 = vmatpush1.bf16.msra.mxu0 0
    %1734 = vmatprep.subr.bf16.mxu0 0
    %1735 = vmatpush1.bf16.msra.mxu0 0
    %1736 = vmatprep.subr.bf16.mxu0 0
    %1737 = vmatpush1.bf16.msra.mxu0 0
    %1738 = vmatprep.subr.bf16.mxu0 0
    %1739 = vmatpush1.bf16.msra.mxu0 0
    %1740 = vmatprep.subr.bf16.mxu0 0
    %1741 = vmatpush1.bf16.msra.mxu0 0
    %1742 = vmatprep.subr.bf16.mxu0 0
    %1743 = vmatpush1.bf16.msra.mxu0 0
    %1744 = vmatprep.subr.bf16.mxu0 0
    %1745 = vmatpush1.bf16.msra.mxu0 %v1723
    %1746 = vmatprep.subr.bf16.mxu0 0
    %1747 = vmatpush1.bf16.msra.mxu0 %v1722
    %1748 = vmatprep.subr.bf16.mxu0 0
    %1749 = vmatpush2.bf16.msra.mxu0 0
    %1750 = vmatprep.subr.bf16.mxu0 0
    %1751 = vmatpush2.bf16.msra.mxu0 0
    %1752 = vmatprep.subr.bf16.mxu0 0
    %1753 = vmatpush2.bf16.msra.mxu0 0
    %1754 = vmatprep.subr.bf16.mxu0 0
    %1755 = vmatpush2.bf16.msra.mxu0 0
    %1756 = vmatprep.subr.bf16.mxu0 0
    %1757 = vmatpush2.bf16.msra.mxu0 0
    %1758 = vmatprep.subr.bf16.mxu0 0
    %1759 = vmatpush2.bf16.msra.mxu0 0
    %1760 = vmatprep.subr.bf16.mxu0 0
    %1761 = vmatpush2.bf16.msra.mxu0 0
    %1762 = vmatprep.subr.bf16.mxu0 0
    %1763 = vmatpush2.bf16.msra.mxu0 0
    %1764 = vmatprep.mubr.bf16.mxu0 0
    %1765 = vmatmul.mubr.bf16.gmra.mxu0 %v1727
    %v1766 = vpop.f32.mrf.mxu0
    %v1767 = vadd.f32 %v1712, %v1766
    %v1768 = vpop.f32.mrf.mxu0
    %v1769 = vpop.f32.mrf.mxu0
    %v1770 = vadd.f32 %v1712, %v1769
    %v1771 = vpop.f32.mrf.mxu0
    %1772 = vmatprep.mubr.bf16.mxu0 0
    %1773 = vmatmul.mubr.bf16.gmra.mxu0 %v1730
    %v1774 = vpop.f32.mrf.mxu0
    %v1775 = vadd.f32 %v1712, %v1774
    %v1776 = vpop.f32.mrf.mxu0
    %v1777 = vpop.f32.mrf.mxu0
    %v1778 = vadd.f32 %v1712, %v1777
    %v1779 = vpop.f32.mrf.mxu0
    %1780 = vdwg.mxu0
    %v1782 = vlaneseq
    %v1783 = vshrl.u32 %v1782, 7
    %v1784 = vsub.s32 0, %v1783
    %v1785 = vrot.slane %v1635, %v1784
    %v1791 = vunpack.c.l.b16 %v1631
    %v1792 = vunpack.c.l.b16 %v1632
    %v1793 = vunpack.c.l.b16 %v1633
    %v1794 = vunpack.c.l.b16 %v1634
    %v1795 = vpack.c.b16 %v1792, %v1791
    %v1796 = vpack.c.b16 %v1794, %v1793
    %1799 = vmatprep.subr.bf16.mxu0 0
    %1800 = vmatpush1.bf16.msra.mxu0 0
    %1801 = vmatprep.subr.bf16.mxu0 0
    %1802 = vmatpush1.bf16.msra.mxu0 0
    %1803 = vmatprep.subr.bf16.mxu0 0
    %1804 = vmatpush1.bf16.msra.mxu0 0
    %1805 = vmatprep.subr.bf16.mxu0 0
    %1806 = vmatpush1.bf16.msra.mxu0 0
    %1807 = vmatprep.subr.bf16.mxu0 0
    %1808 = vmatpush1.bf16.msra.mxu0 0
    %1809 = vmatprep.subr.bf16.mxu0 0
    %1810 = vmatpush1.bf16.msra.mxu0 0
    %1811 = vmatprep.subr.bf16.mxu0 0
    %1812 = vmatpush1.bf16.msra.mxu0 %v1796
    %1813 = vmatprep.subr.bf16.mxu0 0
    %1814 = vmatpush1.bf16.msra.mxu0 %v1795
    %1815 = vmatprep.subr.bf16.mxu0 0
    %1816 = vmatpush2.bf16.msra.mxu0 0
    %1817 = vmatprep.subr.bf16.mxu0 0
    %1818 = vmatpush2.bf16.msra.mxu0 0
    %1819 = vmatprep.subr.bf16.mxu0 0
    %1820 = vmatpush2.bf16.msra.mxu0 0
    %1821 = vmatprep.subr.bf16.mxu0 0
    %1822 = vmatpush2.bf16.msra.mxu0 0
    %1823 = vmatprep.subr.bf16.mxu0 0
    %1824 = vmatpush2.bf16.msra.mxu0 0
    %1825 = vmatprep.subr.bf16.mxu0 0
    %1826 = vmatpush2.bf16.msra.mxu0 0
    %1827 = vmatprep.subr.bf16.mxu0 0
    %1828 = vmatpush2.bf16.msra.mxu0 0
    %1829 = vmatprep.subr.bf16.mxu0 0
    %1830 = vmatpush2.bf16.msra.mxu0 0
    %1831 = vmatprep.mubr.bf16.mxu0 0
    %1832 = vmatmul.mubr.bf16.gmra.mxu0 %v1727
    %v1833 = vpop.f32.mrf.mxu0
    %v1834 = vadd.f32 %v1785, %v1833
    %v1835 = vpop.f32.mrf.mxu0
    %v1836 = vpop.f32.mrf.mxu0
    %v1837 = vadd.f32 %v1785, %v1836
    %v1838 = vpop.f32.mrf.mxu0
    %1839 = vmatprep.mubr.bf16.mxu0 0
    %1840 = vmatmul.mubr.bf16.gmra.mxu0 %v1730
    %v1841 = vpop.f32.mrf.mxu0
    %v1842 = vadd.f32 %v1785, %v1841
    %v1843 = vpop.f32.mrf.mxu0
    %v1844 = vpop.f32.mrf.mxu0
    %v1845 = vadd.f32 %v1785, %v1844
    %v1846 = vpop.f32.mrf.mxu0
    %1847 = vdwg.mxu0
    %1849 = vrot.lane.b32.xlu0 %v1706, 120
    %v1850 = vpop.permute.xlu0 %1849
    %1852 = vrot.lane.b32.xlu0 %v1706, 112
    %v1853 = vpop.permute.xlu0 %1852
    %1855 = vrot.lane.b32.xlu0 %v1706, 104
    %v1856 = vpop.permute.xlu0 %1855
    %1860 = vrot.lane.b32.xlu0 %v1767, 120
    %v1861 = vpop.permute.xlu0 %1860
    %1862 = vrot.lane.b32.xlu0 %v1770, 120
    %v1863 = vpop.permute.xlu0 %1862
    %1866 = vrot.lane.b32.xlu0 %v1767, 112
    %v1867 = vpop.permute.xlu0 %1866
    %1868 = vrot.lane.b32.xlu0 %v1770, 112
    %v1869 = vpop.permute.xlu0 %1868
    %1872 = vrot.lane.b32.xlu0 %v1767, 104
    %v1873 = vpop.permute.xlu0 %1872
    %1874 = vrot.lane.b32.xlu0 %v1770, 104
    %v1875 = vpop.permute.xlu0 %1874
    %1880 = vrot.lane.b32.xlu0 %v1834, 120
    %v1881 = vpop.permute.xlu0 %1880
    %1882 = vrot.lane.b32.xlu0 %v1837, 120
    %v1883 = vpop.permute.xlu0 %1882
    %1886 = vrot.lane.b32.xlu0 %v1834, 112
    %v1887 = vpop.permute.xlu0 %1886
    %1888 = vrot.lane.b32.xlu0 %v1837, 112
    %v1889 = vpop.permute.xlu0 %1888
    %1892 = vrot.lane.b32.xlu0 %v1834, 104
    %v1893 = vpop.permute.xlu0 %1892
    %1894 = vrot.lane.b32.xlu0 %v1837, 104
    %v1895 = vpop.permute.xlu0 %1894
    %v1898 = vpack.c.bf16 %v1706, %v1706
    %v1899 = vpack.c.bf16 %v1850, %v1850
    %v1900 = vpack.c.bf16 %v1853, %v1853
    %v1901 = vpack.c.bf16 %v1856, %v1856
    %v1902 = vpack.c.bf16 %v1770, %v1767
    %v1903 = vpack.c.bf16 %v1863, %v1861
    %v1904 = vpack.c.bf16 %v1869, %v1867
    %v1905 = vpack.c.bf16 %v1875, %v1873
    %v1907 = vsel %vm600, %v1898, 0
    %v1910 = vsel %vm600, %v1902, 0
    %1912 = vmatprep.subr.bf16.mxu0 0
    %1913 = vmatpush1.bf16.xpose.msra.mxu0 0
    %1914 = vmatprep.subr.bf16.mxu0 0
    %1915 = vmatpush1.bf16.xpose.msra.mxu0 0
    %1916 = vmatprep.subr.bf16.mxu0 0
    %1917 = vmatpush1.bf16.xpose.msra.mxu0 0
    %1918 = vmatprep.subr.bf16.mxu0 0
    %1919 = vmatpush1.bf16.xpose.msra.mxu0 0
    %1920 = vmatprep.subr.bf16.mxu0 0
    %1921 = vmatpush1.bf16.xpose.msra.mxu0 0
    %1922 = vmatprep.subr.bf16.mxu0 0
    %1923 = vmatpush1.bf16.xpose.msra.mxu0 0
    %1924 = vmatprep.subr.bf16.mxu0 0
    %1925 = vmatpush1.bf16.xpose.msra.mxu0 0
    %1926 = vmatprep.subr.bf16.mxu0 0
    %1927 = vmatpush1.bf16.xpose.msra.mxu0 %v1910
    %1928 = vmatprep.subr.bf16.mxu0 0
    %1929 = vmatpush2.bf16.xpose.msra.mxu0 0
    %1930 = vmatprep.subr.bf16.mxu0 0
    %1931 = vmatpush2.bf16.xpose.msra.mxu0 0
    %1932 = vmatprep.subr.bf16.mxu0 0
    %1933 = vmatpush2.bf16.xpose.msra.mxu0 0
    %1934 = vmatprep.subr.bf16.mxu0 0
    %1935 = vmatpush2.bf16.xpose.msra.mxu0 0
    %1936 = vmatprep.subr.bf16.mxu0 0
    %1937 = vmatpush2.bf16.xpose.msra.mxu0 0
    %1938 = vmatprep.subr.bf16.mxu0 0
    %1939 = vmatpush2.bf16.xpose.msra.mxu0 0
    %1940 = vmatprep.subr.bf16.mxu0 0
    %1941 = vmatpush2.bf16.xpose.msra.mxu0 0
    %1942 = vmatprep.subr.bf16.mxu0 0
    %1943 = vmatpush2.bf16.xpose.msra.mxu0 0
    %1944 = vmatprep.mubr.bf16.mxu0 0
    %1945 = vmatmul.mubr.bf16.gmra.mxu0 %v1907
    %v1946 = vpop.f32.mrf.mxu0
    %v1947 = vadd.f32 0.0, %v1946
    %v1948 = vpop.f32.mrf.mxu0
    %v1949 = vpop.f32.mrf.mxu0
    %v1950 = vpop.f32.mrf.mxu0
    %1951 = vdwg.mxu0
    %v1953 = vsel %vm600, %v1899, 0
    %v1956 = vsel %vm600, %v1903, 0
    %1958 = vmatprep.subr.bf16.mxu0 0
    %1959 = vmatpush1.bf16.xpose.msra.mxu0 0
    %1960 = vmatprep.subr.bf16.mxu0 0
    %1961 = vmatpush1.bf16.xpose.msra.mxu0 0
    %1962 = vmatprep.subr.bf16.mxu0 0
    %1963 = vmatpush1.bf16.xpose.msra.mxu0 0
    %1964 = vmatprep.subr.bf16.mxu0 0
    %1965 = vmatpush1.bf16.xpose.msra.mxu0 0
    %1966 = vmatprep.subr.bf16.mxu0 0
    %1967 = vmatpush1.bf16.xpose.msra.mxu0 0
    %1968 = vmatprep.subr.bf16.mxu0 0
    %1969 = vmatpush1.bf16.xpose.msra.mxu0 0
    %1970 = vmatprep.subr.bf16.mxu0 0
    %1971 = vmatpush1.bf16.xpose.msra.mxu0 0
    %1972 = vmatprep.subr.bf16.mxu0 0
    %1973 = vmatpush1.bf16.xpose.msra.mxu0 %v1956
    %1974 = vmatprep.subr.bf16.mxu0 0
    %1975 = vmatpush2.bf16.xpose.msra.mxu0 0
    %1976 = vmatprep.subr.bf16.mxu0 0
    %1977 = vmatpush2.bf16.xpose.msra.mxu0 0
    %1978 = vmatprep.subr.bf16.mxu0 0
    %1979 = vmatpush2.bf16.xpose.msra.mxu0 0
    %1980 = vmatprep.subr.bf16.mxu0 0
    %1981 = vmatpush2.bf16.xpose.msra.mxu0 0
    %1982 = vmatprep.subr.bf16.mxu0 0
    %1983 = vmatpush2.bf16.xpose.msra.mxu0 0
    %1984 = vmatprep.subr.bf16.mxu0 0
    %1985 = vmatpush2.bf16.xpose.msra.mxu0 0
    %1986 = vmatprep.subr.bf16.mxu0 0
    %1987 = vmatpush2.bf16.xpose.msra.mxu0 0
    %1988 = vmatprep.subr.bf16.mxu0 0
    %1989 = vmatpush2.bf16.xpose.msra.mxu0 0
    %1990 = vmatprep.mubr.bf16.mxu0 0
    %1991 = vmatmul.mubr.bf16.gmra.mxu0 %v1953
    %v1992 = vpop.f32.mrf.mxu0
    %v1993 = vadd.f32 0.0, %v1992
    %v1994 = vpop.f32.mrf.mxu0
    %v1995 = vpop.f32.mrf.mxu0
    %v1996 = vpop.f32.mrf.mxu0
    %1997 = vdwg.mxu0
    %v1999 = vsel %vm600, %v1900, 0
    %v2002 = vsel %vm600, %v1904, 0
    %2004 = vmatprep.subr.bf16.mxu0 0
    %2005 = vmatpush1.bf16.xpose.msra.mxu0 0
    %2006 = vmatprep.subr.bf16.mxu0 0
    %2007 = vmatpush1.bf16.xpose.msra.mxu0 0
    %2008 = vmatprep.subr.bf16.mxu0 0
    %2009 = vmatpush1.bf16.xpose.msra.mxu0 0
    %2010 = vmatprep.subr.bf16.mxu0 0
    %2011 = vmatpush1.bf16.xpose.msra.mxu0 0
    %2012 = vmatprep.subr.bf16.mxu0 0
    %2013 = vmatpush1.bf16.xpose.msra.mxu0 0
    %2014 = vmatprep.subr.bf16.mxu0 0
    %2015 = vmatpush1.bf16.xpose.msra.mxu0 0
    %2016 = vmatprep.subr.bf16.mxu0 0
    %2017 = vmatpush1.bf16.xpose.msra.mxu0 0
    %2018 = vmatprep.subr.bf16.mxu0 0
    %2019 = vmatpush1.bf16.xpose.msra.mxu0 %v2002
    %2020 = vmatprep.subr.bf16.mxu0 0
    %2021 = vmatpush2.bf16.xpose.msra.mxu0 0
    %2022 = vmatprep.subr.bf16.mxu0 0
    %2023 = vmatpush2.bf16.xpose.msra.mxu0 0
    %2024 = vmatprep.subr.bf16.mxu0 0
    %2025 = vmatpush2.bf16.xpose.msra.mxu0 0
    %2026 = vmatprep.subr.bf16.mxu0 0
    %2027 = vmatpush2.bf16.xpose.msra.mxu0 0
    %2028 = vmatprep.subr.bf16.mxu0 0
    %2029 = vmatpush2.bf16.xpose.msra.mxu0 0
    %2030 = vmatprep.subr.bf16.mxu0 0
    %2031 = vmatpush2.bf16.xpose.msra.mxu0 0
    %2032 = vmatprep.subr.bf16.mxu0 0
    %2033 = vmatpush2.bf16.xpose.msra.mxu0 0
    %2034 = vmatprep.subr.bf16.mxu0 0
    %2035 = vmatpush2.bf16.xpose.msra.mxu0 0
    %2036 = vmatprep.mubr.bf16.mxu0 0
    %2037 = vmatmul.mubr.bf16.gmra.mxu0 %v1999
    %v2038 = vpop.f32.mrf.mxu0
    %v2039 = vadd.f32 0.0, %v2038
    %v2040 = vpop.f32.mrf.mxu0
    %v2041 = vpop.f32.mrf.mxu0
    %v2042 = vpop.f32.mrf.mxu0
    %2043 = vdwg.mxu0
    %v2045 = vsel %vm600, %v1901, 0
    %v2048 = vsel %vm600, %v1905, 0
    %2050 = vmatprep.subr.bf16.mxu0 0
    %2051 = vmatpush1.bf16.xpose.msra.mxu0 0
    %2052 = vmatprep.subr.bf16.mxu0 0
    %2053 = vmatpush1.bf16.xpose.msra.mxu0 0
    %2054 = vmatprep.subr.bf16.mxu0 0
    %2055 = vmatpush1.bf16.xpose.msra.mxu0 0
    %2056 = vmatprep.subr.bf16.mxu0 0
    %2057 = vmatpush1.bf16.xpose.msra.mxu0 0
    %2058 = vmatprep.subr.bf16.mxu0 0
    %2059 = vmatpush1.bf16.xpose.msra.mxu0 0
    %2060 = vmatprep.subr.bf16.mxu0 0
    %2061 = vmatpush1.bf16.xpose.msra.mxu0 0
    %2062 = vmatprep.subr.bf16.mxu0 0
    %2063 = vmatpush1.bf16.xpose.msra.mxu0 0
    %2064 = vmatprep.subr.bf16.mxu0 0
    %2065 = vmatpush1.bf16.xpose.msra.mxu0 %v2048
    %2066 = vmatprep.subr.bf16.mxu0 0
    %2067 = vmatpush2.bf16.xpose.msra.mxu0 0
    %2068 = vmatprep.subr.bf16.mxu0 0
    %2069 = vmatpush2.bf16.xpose.msra.mxu0 0
    %2070 = vmatprep.subr.bf16.mxu0 0
    %2071 = vmatpush2.bf16.xpose.msra.mxu0 0
    %2072 = vmatprep.subr.bf16.mxu0 0
    %2073 = vmatpush2.bf16.xpose.msra.mxu0 0
    %2074 = vmatprep.subr.bf16.mxu0 0
    %2075 = vmatpush2.bf16.xpose.msra.mxu0 0
    %2076 = vmatprep.subr.bf16.mxu0 0
    %2077 = vmatpush2.bf16.xpose.msra.mxu0 0
    %2078 = vmatprep.subr.bf16.mxu0 0
    %2079 = vmatpush2.bf16.xpose.msra.mxu0 0
    %2080 = vmatprep.subr.bf16.mxu0 0
    %2081 = vmatpush2.bf16.xpose.msra.mxu0 0
    %2082 = vmatprep.mubr.bf16.mxu0 0
    %2083 = vmatmul.mubr.bf16.gmra.mxu0 %v2045
    %v2084 = vpop.f32.mrf.mxu0
    %v2085 = vadd.f32 0.0, %v2084
    %v2086 = vpop.f32.mrf.mxu0
    %v2087 = vpop.f32.mrf.mxu0
    %v2088 = vpop.f32.mrf.mxu0
    %2089 = vdwg.mxu0
    %v2090 = vsel %vm1035, %v1947, -inf
    %2091 = vmax.xlane.f32.xlu0 %v2090
    %v2092 = vpop.xlane.xlu0 %2091
    %v2093 = vsel %vm1035, %v1993, -inf
    %2094 = vmax.xlane.f32.xlu0 %v2093
    %v2095 = vpop.xlane.xlu0 %2094
    %v2096 = vsel %vm1035, %v2039, -inf
    %2097 = vmax.xlane.f32.xlu0 %v2096
    %v2098 = vpop.xlane.xlu0 %2097
    %v2099 = vsel %vm1035, %v2085, -inf
    %2100 = vmax.xlane.f32.xlu0 %v2099
    %v2101 = vpop.xlane.xlu0 %2100
    %v2102 = vsub.f32 %v1947, %v2092
    %v2103 = vsub.f32 %v1993, %v2095
    %v2104 = vsub.f32 %v2039, %v2098
    %v2105 = vsub.f32 %v2085, %v2101
    %v2106 = vmul.f32 %v2102, 1.442695
    %v2107 = vpow.pop %v2106
    %v2108 = vmul.f32 %v2103, 1.442695
    %v2109 = vpow.pop %v2108
    %v2110 = vmul.f32 %v2104, 1.442695
    %v2111 = vpow.pop %v2110
    %v2112 = vmul.f32 %v2105, 1.442695
    %v2113 = vpow.pop %v2112
    %v2114 = vsel %vm1035, %v2107, 0.0
    %2115 = vadd.xlane.f32.xlu0 %v2114
    %v2116 = vpop.xlane.xlu0 %2115
    %v2117 = vsel %vm1035, %v2109, 0.0
    %2118 = vadd.xlane.f32.xlu0 %v2117
    %v2119 = vpop.xlane.xlu0 %2118
    %v2120 = vsel %vm1035, %v2111, 0.0
    %2121 = vadd.xlane.f32.xlu0 %v2120
    %v2122 = vpop.xlane.xlu0 %2121
    %v2123 = vsel %vm1035, %v2113, 0.0
    %2124 = vadd.xlane.f32.xlu0 %v2123
    %v2125 = vpop.xlane.xlu0 %2124
    %v2126 = vpack.c.bf16 %v2107, %v2107
    %v2127 = vpack.c.bf16 %v2109, %v2109
    %v2128 = vpack.c.bf16 %v2111, %v2111
    %v2129 = vpack.c.bf16 %v2113, %v2113
    %v2130 = vpack.c.bf16 %v1837, %v1834
    %v2131 = vpack.c.bf16 %v1883, %v1881
    %v2132 = vpack.c.bf16 %v1889, %v1887
    %v2133 = vpack.c.bf16 %v1895, %v1893
    %v2135 = vsel %vm1035, %v2126, 0
    %2137 = vmatprep.subr.bf16.mxu0 0
    %2138 = vmatpush1.bf16.msra.mxu0 0
    %2139 = vmatprep.subr.bf16.mxu0 0
    %2140 = vmatpush1.bf16.msra.mxu0 0
    %2141 = vmatprep.subr.bf16.mxu0 0
    %2142 = vmatpush1.bf16.msra.mxu0 0
    %2143 = vmatprep.subr.bf16.mxu0 0
    %2144 = vmatpush1.bf16.msra.mxu0 0
    %2145 = vmatprep.subr.bf16.mxu0 0
    %2146 = vmatpush1.bf16.msra.mxu0 0
    %2147 = vmatprep.subr.bf16.mxu0 0
    %2148 = vmatpush1.bf16.msra.mxu0 0
    %2149 = vmatprep.subr.bf16.mxu0 0
    %2150 = vmatpush1.bf16.msra.mxu0 0
    %2151 = vmatprep.subr.bf16.mxu0 0
    %2152 = vmatpush1.bf16.msra.mxu0 %v2130
    %2153 = vmatprep.subr.bf16.mxu0 0
    %2154 = vmatpush2.bf16.msra.mxu0 0
    %2155 = vmatprep.subr.bf16.mxu0 0
    %2156 = vmatpush2.bf16.msra.mxu0 0
    %2157 = vmatprep.subr.bf16.mxu0 0
    %2158 = vmatpush2.bf16.msra.mxu0 0
    %2159 = vmatprep.subr.bf16.mxu0 0
    %2160 = vmatpush2.bf16.msra.mxu0 0
    %2161 = vmatprep.subr.bf16.mxu0 0
    %2162 = vmatpush2.bf16.msra.mxu0 0
    %2163 = vmatprep.subr.bf16.mxu0 0
    %2164 = vmatpush2.bf16.msra.mxu0 0
    %2165 = vmatprep.subr.bf16.mxu0 0
    %2166 = vmatpush2.bf16.msra.mxu0 0
    %2167 = vmatprep.subr.bf16.mxu0 0
    %2168 = vmatpush2.bf16.msra.mxu0 0
    %2169 = vmatprep.mubr.bf16.mxu0 0
    %2170 = vmatmul.mubr.bf16.gmra.mxu0 %v2135
    %v2171 = vpop.f32.mrf.mxu0
    %v2172 = vadd.f32 0.0, %v2171
    %v2173 = vpop.f32.mrf.mxu0
    %v2174 = vpop.f32.mrf.mxu0
    %v2175 = vpop.f32.mrf.mxu0
    %2176 = vdwg.mxu0
    %v2178 = vsel %vm1035, %v2127, 0
    %2180 = vmatprep.subr.bf16.mxu0 0
    %2181 = vmatpush1.bf16.msra.mxu0 0
    %2182 = vmatprep.subr.bf16.mxu0 0
    %2183 = vmatpush1.bf16.msra.mxu0 0
    %2184 = vmatprep.subr.bf16.mxu0 0
    %2185 = vmatpush1.bf16.msra.mxu0 0
    %2186 = vmatprep.subr.bf16.mxu0 0
    %2187 = vmatpush1.bf16.msra.mxu0 0
    %2188 = vmatprep.subr.bf16.mxu0 0
    %2189 = vmatpush1.bf16.msra.mxu0 0
    %2190 = vmatprep.subr.bf16.mxu0 0
    %2191 = vmatpush1.bf16.msra.mxu0 0
    %2192 = vmatprep.subr.bf16.mxu0 0
    %2193 = vmatpush1.bf16.msra.mxu0 0
    %2194 = vmatprep.subr.bf16.mxu0 0
    %2195 = vmatpush1.bf16.msra.mxu0 %v2131
    %2196 = vmatprep.subr.bf16.mxu0 0
    %2197 = vmatpush2.bf16.msra.mxu0 0
    %2198 = vmatprep.subr.bf16.mxu0 0
    %2199 = vmatpush2.bf16.msra.mxu0 0
    %2200 = vmatprep.subr.bf16.mxu0 0
    %2201 = vmatpush2.bf16.msra.mxu0 0
    %2202 = vmatprep.subr.bf16.mxu0 0
    %2203 = vmatpush2.bf16.msra.mxu0 0
    %2204 = vmatprep.subr.bf16.mxu0 0
    %2205 = vmatpush2.bf16.msra.mxu0 0
    %2206 = vmatprep.subr.bf16.mxu0 0
    %2207 = vmatpush2.bf16.msra.mxu0 0
    %2208 = vmatprep.subr.bf16.mxu0 0
    %2209 = vmatpush2.bf16.msra.mxu0 0
    %2210 = vmatprep.subr.bf16.mxu0 0
    %2211 = vmatpush2.bf16.msra.mxu0 0
    %2212 = vmatprep.mubr.bf16.mxu0 0
    %2213 = vmatmul.mubr.bf16.gmra.mxu0 %v2178
    %v2214 = vpop.f32.mrf.mxu0
    %v2215 = vadd.f32 0.0, %v2214
    %v2216 = vpop.f32.mrf.mxu0
    %v2217 = vpop.f32.mrf.mxu0
    %v2218 = vpop.f32.mrf.mxu0
    %2219 = vdwg.mxu0
    %v2221 = vsel %vm1035, %v2128, 0
    %2223 = vmatprep.subr.bf16.mxu0 0
    %2224 = vmatpush1.bf16.msra.mxu0 0
    %2225 = vmatprep.subr.bf16.mxu0 0
    %2226 = vmatpush1.bf16.msra.mxu0 0
    %2227 = vmatprep.subr.bf16.mxu0 0
    %2228 = vmatpush1.bf16.msra.mxu0 0
    %2229 = vmatprep.subr.bf16.mxu0 0
    %2230 = vmatpush1.bf16.msra.mxu0 0
    %2231 = vmatprep.subr.bf16.mxu0 0
    %2232 = vmatpush1.bf16.msra.mxu0 0
    %2233 = vmatprep.subr.bf16.mxu0 0
    %2234 = vmatpush1.bf16.msra.mxu0 0
    %2235 = vmatprep.subr.bf16.mxu0 0
    %2236 = vmatpush1.bf16.msra.mxu0 0
    %2237 = vmatprep.subr.bf16.mxu0 0
    %2238 = vmatpush1.bf16.msra.mxu0 %v2132
    %2239 = vmatprep.subr.bf16.mxu0 0
    %2240 = vmatpush2.bf16.msra.mxu0 0
    %2241 = vmatprep.subr.bf16.mxu0 0
    %2242 = vmatpush2.bf16.msra.mxu0 0
    %2243 = vmatprep.subr.bf16.mxu0 0
    %2244 = vmatpush2.bf16.msra.mxu0 0
    %2245 = vmatprep.subr.bf16.mxu0 0
    %2246 = vmatpush2.bf16.msra.mxu0 0
    %2247 = vmatprep.subr.bf16.mxu0 0
    %2248 = vmatpush2.bf16.msra.mxu0 0
    %2249 = vmatprep.subr.bf16.mxu0 0
    %2250 = vmatpush2.bf16.msra.mxu0 0
    %2251 = vmatprep.subr.bf16.mxu0 0
    %2252 = vmatpush2.bf16.msra.mxu0 0
    %2253 = vmatprep.subr.bf16.mxu0 0
    %2254 = vmatpush2.bf16.msra.mxu0 0
    %2255 = vmatprep.mubr.bf16.mxu0 0
    %2256 = vmatmul.mubr.bf16.gmra.mxu0 %v2221
    %v2257 = vpop.f32.mrf.mxu0
    %v2258 = vadd.f32 0.0, %v2257
    %v2259 = vpop.f32.mrf.mxu0
    %v2260 = vpop.f32.mrf.mxu0
    %v2261 = vpop.f32.mrf.mxu0
    %2262 = vdwg.mxu0
    %v2264 = vsel %vm1035, %v2129, 0
    %2266 = vmatprep.subr.bf16.mxu0 0
    %2267 = vmatpush1.bf16.msra.mxu0 0
    %2268 = vmatprep.subr.bf16.mxu0 0
    %2269 = vmatpush1.bf16.msra.mxu0 0
    %2270 = vmatprep.subr.bf16.mxu0 0
    %2271 = vmatpush1.bf16.msra.mxu0 0
    %2272 = vmatprep.subr.bf16.mxu0 0
    %2273 = vmatpush1.bf16.msra.mxu0 0
    %2274 = vmatprep.subr.bf16.mxu0 0
    %2275 = vmatpush1.bf16.msra.mxu0 0
    %2276 = vmatprep.subr.bf16.mxu0 0
    %2277 = vmatpush1.bf16.msra.mxu0 0
    %2278 = vmatprep.subr.bf16.mxu0 0
    %2279 = vmatpush1.bf16.msra.mxu0 0
    %2280 = vmatprep.subr.bf16.mxu0 0
    %2281 = vmatpush1.bf16.msra.mxu0 %v2133
    %2282 = vmatprep.subr.bf16.mxu0 0
    %2283 = vmatpush2.bf16.msra.mxu0 0
    %2284 = vmatprep.subr.bf16.mxu0 0
    %2285 = vmatpush2.bf16.msra.mxu0 0
    %2286 = vmatprep.subr.bf16.mxu0 0
    %2287 = vmatpush2.bf16.msra.mxu0 0
    %2288 = vmatprep.subr.bf16.mxu0 0
    %2289 = vmatpush2.bf16.msra.mxu0 0
    %2290 = vmatprep.subr.bf16.mxu0 0
    %2291 = vmatpush2.bf16.msra.mxu0 0
    %2292 = vmatprep.subr.bf16.mxu0 0
    %2293 = vmatpush2.bf16.msra.mxu0 0
    %2294 = vmatprep.subr.bf16.mxu0 0
    %2295 = vmatpush2.bf16.msra.mxu0 0
    %2296 = vmatprep.subr.bf16.mxu0 0
    %2297 = vmatpush2.bf16.msra.mxu0 0
    %2298 = vmatprep.mubr.bf16.mxu0 0
    %2299 = vmatmul.mubr.bf16.gmra.mxu0 %v2264
    %v2300 = vpop.f32.mrf.mxu0
    %v2301 = vadd.f32 0.0, %v2300
    %v2302 = vpop.f32.mrf.mxu0
    %v2303 = vpop.f32.mrf.mxu0
    %v2304 = vpop.f32.mrf.mxu0
    %2305 = vdwg.mxu0
    %v2306 = vrcp.pop %v2116
    %v2307 = vrcp.pop %v2119
    %v2308 = vrcp.pop %v2122
    %v2309 = vrcp.pop %v2125
    %v2310 = vmul.f32 %v2172, %v2306
    %v2311 = vmul.f32 %v2215, %v2307
    %v2312 = vmul.f32 %v2258, %v2308
    %v2313 = vmul.f32 %v2301, %v2309
    %2315 = vrot.lane.b32.xlu0 %v2311, 8
    %v2316 = vpop.permute.xlu0 %2315
    %2319 = vrot.lane.b32.xlu0 %v2312, 16
    %v2320 = vpop.permute.xlu0 %2319
    %2323 = vrot.lane.b32.xlu0 %v2313, 24
    %v2324 = vpop.permute.xlu0 %2323
    %v2326 = vsel %vm600, %v2310, %v2316
    %v2327 = vsel %vm1035, %v2326, %v2320
    %v2328 = vsel %vm1037, %v2327, %v2324
    %2330 = vrot.lane.b32.xlu0 %v1707, 120
    %v2331 = vpop.permute.xlu0 %2330
    %2333 = vrot.lane.b32.xlu0 %v1707, 112
    %v2334 = vpop.permute.xlu0 %2333
    %2336 = vrot.lane.b32.xlu0 %v1707, 104
    %v2337 = vpop.permute.xlu0 %2336
    %2341 = vrot.lane.b32.xlu0 %v1775, 120
    %v2342 = vpop.permute.xlu0 %2341
    %2343 = vrot.lane.b32.xlu0 %v1778, 120
    %v2344 = vpop.permute.xlu0 %2343
    %2347 = vrot.lane.b32.xlu0 %v1775, 112
    %v2348 = vpop.permute.xlu0 %2347
    %2349 = vrot.lane.b32.xlu0 %v1778, 112
    %v2350 = vpop.permute.xlu0 %2349
    %2353 = vrot.lane.b32.xlu0 %v1775, 104
    %v2354 = vpop.permute.xlu0 %2353
    %2355 = vrot.lane.b32.xlu0 %v1778, 104
    %v2356 = vpop.permute.xlu0 %2355
    %2361 = vrot.lane.b32.xlu0 %v1842, 120
    %v2362 = vpop.permute.xlu0 %2361
    %2363 = vrot.lane.b32.xlu0 %v1845, 120
    %v2364 = vpop.permute.xlu0 %2363
    %2367 = vrot.lane.b32.xlu0 %v1842, 112
    %v2368 = vpop.permute.xlu0 %2367
    %2369 = vrot.lane.b32.xlu0 %v1845, 112
    %v2370 = vpop.permute.xlu0 %2369
    %2373 = vrot.lane.b32.xlu0 %v1842, 104
    %v2374 = vpop.permute.xlu0 %2373
    %2375 = vrot.lane.b32.xlu0 %v1845, 104
    %v2376 = vpop.permute.xlu0 %2375
    %v2379 = vpack.c.bf16 %v1707, %v1707
    %v2380 = vpack.c.bf16 %v2331, %v2331
    %v2381 = vpack.c.bf16 %v2334, %v2334
    %v2382 = vpack.c.bf16 %v2337, %v2337
    %v2383 = vpack.c.bf16 %v1778, %v1775
    %v2384 = vpack.c.bf16 %v2344, %v2342
    %v2385 = vpack.c.bf16 %v2350, %v2348
    %v2386 = vpack.c.bf16 %v2356, %v2354
    %v2388 = vsel %vm600, %v2379, 0
    %v2391 = vsel %vm600, %v2383, 0
    %2393 = vmatprep.subr.bf16.mxu0 0
    %2394 = vmatpush1.bf16.xpose.msra.mxu0 0
    %2395 = vmatprep.subr.bf16.mxu0 0
    %2396 = vmatpush1.bf16.xpose.msra.mxu0 0
    %2397 = vmatprep.subr.bf16.mxu0 0
    %2398 = vmatpush1.bf16.xpose.msra.mxu0 0
    %2399 = vmatprep.subr.bf16.mxu0 0
    %2400 = vmatpush1.bf16.xpose.msra.mxu0 0
    %2401 = vmatprep.subr.bf16.mxu0 0
    %2402 = vmatpush1.bf16.xpose.msra.mxu0 0
    %2403 = vmatprep.subr.bf16.mxu0 0
    %2404 = vmatpush1.bf16.xpose.msra.mxu0 0
    %2405 = vmatprep.subr.bf16.mxu0 0
    %2406 = vmatpush1.bf16.xpose.msra.mxu0 0
    %2407 = vmatprep.subr.bf16.mxu0 0
    %2408 = vmatpush1.bf16.xpose.msra.mxu0 %v2391
    %2409 = vmatprep.subr.bf16.mxu0 0
    %2410 = vmatpush2.bf16.xpose.msra.mxu0 0
    %2411 = vmatprep.subr.bf16.mxu0 0
    %2412 = vmatpush2.bf16.xpose.msra.mxu0 0
    %2413 = vmatprep.subr.bf16.mxu0 0
    %2414 = vmatpush2.bf16.xpose.msra.mxu0 0
    %2415 = vmatprep.subr.bf16.mxu0 0
    %2416 = vmatpush2.bf16.xpose.msra.mxu0 0
    %2417 = vmatprep.subr.bf16.mxu0 0
    %2418 = vmatpush2.bf16.xpose.msra.mxu0 0
    %2419 = vmatprep.subr.bf16.mxu0 0
    %2420 = vmatpush2.bf16.xpose.msra.mxu0 0
    %2421 = vmatprep.subr.bf16.mxu0 0
    %2422 = vmatpush2.bf16.xpose.msra.mxu0 0
    %2423 = vmatprep.subr.bf16.mxu0 0
    %2424 = vmatpush2.bf16.xpose.msra.mxu0 0
    %2425 = vmatprep.mubr.bf16.mxu0 0
    %2426 = vmatmul.mubr.bf16.gmra.mxu0 %v2388
    %v2427 = vpop.f32.mrf.mxu0
    %v2428 = vadd.f32 0.0, %v2427
    %v2429 = vpop.f32.mrf.mxu0
    %v2430 = vpop.f32.mrf.mxu0
    %v2431 = vpop.f32.mrf.mxu0
    %2432 = vdwg.mxu0
    %v2434 = vsel %vm600, %v2380, 0
    %v2437 = vsel %vm600, %v2384, 0
    %2439 = vmatprep.subr.bf16.mxu0 0
    %2440 = vmatpush1.bf16.xpose.msra.mxu0 0
    %2441 = vmatprep.subr.bf16.mxu0 0
    %2442 = vmatpush1.bf16.xpose.msra.mxu0 0
    %2443 = vmatprep.subr.bf16.mxu0 0
    %2444 = vmatpush1.bf16.xpose.msra.mxu0 0
    %2445 = vmatprep.subr.bf16.mxu0 0
    %2446 = vmatpush1.bf16.xpose.msra.mxu0 0
    %2447 = vmatprep.subr.bf16.mxu0 0
    %2448 = vmatpush1.bf16.xpose.msra.mxu0 0
    %2449 = vmatprep.subr.bf16.mxu0 0
    %2450 = vmatpush1.bf16.xpose.msra.mxu0 0
    %2451 = vmatprep.subr.bf16.mxu0 0
    %2452 = vmatpush1.bf16.xpose.msra.mxu0 0
    %2453 = vmatprep.subr.bf16.mxu0 0
    %2454 = vmatpush1.bf16.xpose.msra.mxu0 %v2437
    %2455 = vmatprep.subr.bf16.mxu0 0
    %2456 = vmatpush2.bf16.xpose.msra.mxu0 0
    %2457 = vmatprep.subr.bf16.mxu0 0
    %2458 = vmatpush2.bf16.xpose.msra.mxu0 0
    %2459 = vmatprep.subr.bf16.mxu0 0
    %2460 = vmatpush2.bf16.xpose.msra.mxu0 0
    %2461 = vmatprep.subr.bf16.mxu0 0
    %2462 = vmatpush2.bf16.xpose.msra.mxu0 0
    %2463 = vmatprep.subr.bf16.mxu0 0
    %2464 = vmatpush2.bf16.xpose.msra.mxu0 0
    %2465 = vmatprep.subr.bf16.mxu0 0
    %2466 = vmatpush2.bf16.xpose.msra.mxu0 0
    %2467 = vmatprep.subr.bf16.mxu0 0
    %2468 = vmatpush2.bf16.xpose.msra.mxu0 0
    %2469 = vmatprep.subr.bf16.mxu0 0
    %2470 = vmatpush2.bf16.xpose.msra.mxu0 0
    %2471 = vmatprep.mubr.bf16.mxu0 0
    %2472 = vmatmul.mubr.bf16.gmra.mxu0 %v2434
    %v2473 = vpop.f32.mrf.mxu0
    %v2474 = vadd.f32 0.0, %v2473
    %v2475 = vpop.f32.mrf.mxu0
    %v2476 = vpop.f32.mrf.mxu0
    %v2477 = vpop.f32.mrf.mxu0
    %2478 = vdwg.mxu0
    %v2480 = vsel %vm600, %v2381, 0
    %v2483 = vsel %vm600, %v2385, 0
    %2485 = vmatprep.subr.bf16.mxu0 0
    %2486 = vmatpush1.bf16.xpose.msra.mxu0 0
    %2487 = vmatprep.subr.bf16.mxu0 0
    %2488 = vmatpush1.bf16.xpose.msra.mxu0 0
    %2489 = vmatprep.subr.bf16.mxu0 0
    %2490 = vmatpush1.bf16.xpose.msra.mxu0 0
    %2491 = vmatprep.subr.bf16.mxu0 0
    %2492 = vmatpush1.bf16.xpose.msra.mxu0 0
    %2493 = vmatprep.subr.bf16.mxu0 0
    %2494 = vmatpush1.bf16.xpose.msra.mxu0 0
    %2495 = vmatprep.subr.bf16.mxu0 0
    %2496 = vmatpush1.bf16.xpose.msra.mxu0 0
    %2497 = vmatprep.subr.bf16.mxu0 0
    %2498 = vmatpush1.bf16.xpose.msra.mxu0 0
    %2499 = vmatprep.subr.bf16.mxu0 0
    %2500 = vmatpush1.bf16.xpose.msra.mxu0 %v2483
    %2501 = vmatprep.subr.bf16.mxu0 0
    %2502 = vmatpush2.bf16.xpose.msra.mxu0 0
    %2503 = vmatprep.subr.bf16.mxu0 0
    %2504 = vmatpush2.bf16.xpose.msra.mxu0 0
    %2505 = vmatprep.subr.bf16.mxu0 0
    %2506 = vmatpush2.bf16.xpose.msra.mxu0 0
    %2507 = vmatprep.subr.bf16.mxu0 0
    %2508 = vmatpush2.bf16.xpose.msra.mxu0 0
    %2509 = vmatprep.subr.bf16.mxu0 0
    %2510 = vmatpush2.bf16.xpose.msra.mxu0 0
    %2511 = vmatprep.subr.bf16.mxu0 0
    %2512 = vmatpush2.bf16.xpose.msra.mxu0 0
    %2513 = vmatprep.subr.bf16.mxu0 0
    %2514 = vmatpush2.bf16.xpose.msra.mxu0 0
    %2515 = vmatprep.subr.bf16.mxu0 0
    %2516 = vmatpush2.bf16.xpose.msra.mxu0 0
    %2517 = vmatprep.mubr.bf16.mxu0 0
    %2518 = vmatmul.mubr.bf16.gmra.mxu0 %v2480
    %v2519 = vpop.f32.mrf.mxu0
    %v2520 = vadd.f32 0.0, %v2519
    %v2521 = vpop.f32.mrf.mxu0
    %v2522 = vpop.f32.mrf.mxu0
    %v2523 = vpop.f32.mrf.mxu0
    %2524 = vdwg.mxu0
    %v2526 = vsel %vm600, %v2382, 0
    %v2529 = vsel %vm600, %v2386, 0
    %2531 = vmatprep.subr.bf16.mxu0 0
    %2532 = vmatpush1.bf16.xpose.msra.mxu0 0
    %2533 = vmatprep.subr.bf16.mxu0 0
    %2534 = vmatpush1.bf16.xpose.msra.mxu0 0
    %2535 = vmatprep.subr.bf16.mxu0 0
    %2536 = vmatpush1.bf16.xpose.msra.mxu0 0
    %2537 = vmatprep.subr.bf16.mxu0 0
    %2538 = vmatpush1.bf16.xpose.msra.mxu0 0
    %2539 = vmatprep.subr.bf16.mxu0 0
    %2540 = vmatpush1.bf16.xpose.msra.mxu0 0
    %2541 = vmatprep.subr.bf16.mxu0 0
    %2542 = vmatpush1.bf16.xpose.msra.mxu0 0
    %2543 = vmatprep.subr.bf16.mxu0 0
    %2544 = vmatpush1.bf16.xpose.msra.mxu0 0
    %2545 = vmatprep.subr.bf16.mxu0 0
    %2546 = vmatpush1.bf16.xpose.msra.mxu0 %v2529
    %2547 = vmatprep.subr.bf16.mxu0 0
    %2548 = vmatpush2.bf16.xpose.msra.mxu0 0
    %2549 = vmatprep.subr.bf16.mxu0 0
    %2550 = vmatpush2.bf16.xpose.msra.mxu0 0
    %2551 = vmatprep.subr.bf16.mxu0 0
    %2552 = vmatpush2.bf16.xpose.msra.mxu0 0
    %2553 = vmatprep.subr.bf16.mxu0 0
    %2554 = vmatpush2.bf16.xpose.msra.mxu0 0
    %2555 = vmatprep.subr.bf16.mxu0 0
    %2556 = vmatpush2.bf16.xpose.msra.mxu0 0
    %2557 = vmatprep.subr.bf16.mxu0 0
    %2558 = vmatpush2.bf16.xpose.msra.mxu0 0
    %2559 = vmatprep.subr.bf16.mxu0 0
    %2560 = vmatpush2.bf16.xpose.msra.mxu0 0
    %2561 = vmatprep.subr.bf16.mxu0 0
    %2562 = vmatpush2.bf16.xpose.msra.mxu0 0
    %2563 = vmatprep.mubr.bf16.mxu0 0
    %2564 = vmatmul.mubr.bf16.gmra.mxu0 %v2526
    %v2565 = vpop.f32.mrf.mxu0
    %v2566 = vadd.f32 0.0, %v2565
    %v2567 = vpop.f32.mrf.mxu0
    %v2568 = vpop.f32.mrf.mxu0
    %v2569 = vpop.f32.mrf.mxu0
    %2570 = vdwg.mxu0
    %v2571 = vsel %vm1035, %v2428, -inf
    %2572 = vmax.xlane.f32.xlu0 %v2571
    %v2573 = vpop.xlane.xlu0 %2572
    %v2574 = vsel %vm1035, %v2474, -inf
    %2575 = vmax.xlane.f32.xlu0 %v2574
    %v2576 = vpop.xlane.xlu0 %2575
    %v2577 = vsel %vm1035, %v2520, -inf
    %2578 = vmax.xlane.f32.xlu0 %v2577
    %v2579 = vpop.xlane.xlu0 %2578
    %v2580 = vsel %vm1035, %v2566, -inf
    %2581 = vmax.xlane.f32.xlu0 %v2580
    %v2582 = vpop.xlane.xlu0 %2581
    %v2583 = vsub.f32 %v2428, %v2573
    %v2584 = vsub.f32 %v2474, %v2576
    %v2585 = vsub.f32 %v2520, %v2579
    %v2586 = vsub.f32 %v2566, %v2582
    %v2587 = vmul.f32 %v2583, 1.442695
    %v2588 = vpow.pop %v2587
    %v2589 = vmul.f32 %v2584, 1.442695
    %v2590 = vpow.pop %v2589
    %v2591 = vmul.f32 %v2585, 1.442695
    %v2592 = vpow.pop %v2591
    %v2593 = vmul.f32 %v2586, 1.442695
    %v2594 = vpow.pop %v2593
    %v2595 = vsel %vm1035, %v2588, 0.0
    %2596 = vadd.xlane.f32.xlu0 %v2595
    %v2597 = vpop.xlane.xlu0 %2596
    %v2598 = vsel %vm1035, %v2590, 0.0
    %2599 = vadd.xlane.f32.xlu0 %v2598
    %v2600 = vpop.xlane.xlu0 %2599
    %v2601 = vsel %vm1035, %v2592, 0.0
    %2602 = vadd.xlane.f32.xlu0 %v2601
    %v2603 = vpop.xlane.xlu0 %2602
    %v2604 = vsel %vm1035, %v2594, 0.0
    %2605 = vadd.xlane.f32.xlu0 %v2604
    %v2606 = vpop.xlane.xlu0 %2605
    %v2607 = vpack.c.bf16 %v2588, %v2588
    %v2608 = vpack.c.bf16 %v2590, %v2590
    %v2609 = vpack.c.bf16 %v2592, %v2592
    %v2610 = vpack.c.bf16 %v2594, %v2594
    %v2611 = vpack.c.bf16 %v1845, %v1842
    %v2612 = vpack.c.bf16 %v2364, %v2362
    %v2613 = vpack.c.bf16 %v2370, %v2368
    %v2614 = vpack.c.bf16 %v2376, %v2374
    %v2616 = vsel %vm1035, %v2607, 0
    %2618 = vmatprep.subr.bf16.mxu0 0
    %2619 = vmatpush1.bf16.msra.mxu0 0
    %2620 = vmatprep.subr.bf16.mxu0 0
    %2621 = vmatpush1.bf16.msra.mxu0 0
    %2622 = vmatprep.subr.bf16.mxu0 0
    %2623 = vmatpush1.bf16.msra.mxu0 0
    %2624 = vmatprep.subr.bf16.mxu0 0
    %2625 = vmatpush1.bf16.msra.mxu0 0
    %2626 = vmatprep.subr.bf16.mxu0 0
    %2627 = vmatpush1.bf16.msra.mxu0 0
    %2628 = vmatprep.subr.bf16.mxu0 0
    %2629 = vmatpush1.bf16.msra.mxu0 0
    %2630 = vmatprep.subr.bf16.mxu0 0
    %2631 = vmatpush1.bf16.msra.mxu0 0
    %2632 = vmatprep.subr.bf16.mxu0 0
    %2633 = vmatpush1.bf16.msra.mxu0 %v2611
    %2634 = vmatprep.subr.bf16.mxu0 0
    %2635 = vmatpush2.bf16.msra.mxu0 0
    %2636 = vmatprep.subr.bf16.mxu0 0
    %2637 = vmatpush2.bf16.msra.mxu0 0
    %2638 = vmatprep.subr.bf16.mxu0 0
    %2639 = vmatpush2.bf16.msra.mxu0 0
    %2640 = vmatprep.subr.bf16.mxu0 0
    %2641 = vmatpush2.bf16.msra.mxu0 0
    %2642 = vmatprep.subr.bf16.mxu0 0
    %2643 = vmatpush2.bf16.msra.mxu0 0
    %2644 = vmatprep.subr.bf16.mxu0 0
    %2645 = vmatpush2.bf16.msra.mxu0 0
    %2646 = vmatprep.subr.bf16.mxu0 0
    %2647 = vmatpush2.bf16.msra.mxu0 0
    %2648 = vmatprep.subr.bf16.mxu0 0
    %2649 = vmatpush2.bf16.msra.mxu0 0
    %2650 = vmatprep.mubr.bf16.mxu0 0
    %2651 = vmatmul.mubr.bf16.gmra.mxu0 %v2616
    %v2652 = vpop.f32.mrf.mxu0
    %v2653 = vadd.f32 0.0, %v2652
    %v2654 = vpop.f32.mrf.mxu0
    %v2655 = vpop.f32.mrf.mxu0
    %v2656 = vpop.f32.mrf.mxu0
    %2657 = vdwg.mxu0
    %v2659 = vsel %vm1035, %v2608, 0
    %2661 = vmatprep.subr.bf16.mxu0 0
    %2662 = vmatpush1.bf16.msra.mxu0 0
    %2663 = vmatprep.subr.bf16.mxu0 0
    %2664 = vmatpush1.bf16.msra.mxu0 0
    %2665 = vmatprep.subr.bf16.mxu0 0
    %2666 = vmatpush1.bf16.msra.mxu0 0
    %2667 = vmatprep.subr.bf16.mxu0 0
    %2668 = vmatpush1.bf16.msra.mxu0 0
    %2669 = vmatprep.subr.bf16.mxu0 0
    %2670 = vmatpush1.bf16.msra.mxu0 0
    %2671 = vmatprep.subr.bf16.mxu0 0
    %2672 = vmatpush1.bf16.msra.mxu0 0
    %2673 = vmatprep.subr.bf16.mxu0 0
    %2674 = vmatpush1.bf16.msra.mxu0 0
    %2675 = vmatprep.subr.bf16.mxu0 0
    %2676 = vmatpush1.bf16.msra.mxu0 %v2612
    %2677 = vmatprep.subr.bf16.mxu0 0
    %2678 = vmatpush2.bf16.msra.mxu0 0
    %2679 = vmatprep.subr.bf16.mxu0 0
    %2680 = vmatpush2.bf16.msra.mxu0 0
    %2681 = vmatprep.subr.bf16.mxu0 0
    %2682 = vmatpush2.bf16.msra.mxu0 0
    %2683 = vmatprep.subr.bf16.mxu0 0
    %2684 = vmatpush2.bf16.msra.mxu0 0
    %2685 = vmatprep.subr.bf16.mxu0 0
    %2686 = vmatpush2.bf16.msra.mxu0 0
    %2687 = vmatprep.subr.bf16.mxu0 0
    %2688 = vmatpush2.bf16.msra.mxu0 0
    %2689 = vmatprep.subr.bf16.mxu0 0
    %2690 = vmatpush2.bf16.msra.mxu0 0
    %2691 = vmatprep.subr.bf16.mxu0 0
    %2692 = vmatpush2.bf16.msra.mxu0 0
    %2693 = vmatprep.mubr.bf16.mxu0 0
    %2694 = vmatmul.mubr.bf16.gmra.mxu0 %v2659
    %v2695 = vpop.f32.mrf.mxu0
    %v2696 = vadd.f32 0.0, %v2695
    %v2697 = vpop.f32.mrf.mxu0
    %v2698 = vpop.f32.mrf.mxu0
    %v2699 = vpop.f32.mrf.mxu0
    %2700 = vdwg.mxu0
    %v2702 = vsel %vm1035, %v2609, 0
    %2704 = vmatprep.subr.bf16.mxu0 0
    %2705 = vmatpush1.bf16.msra.mxu0 0
    %2706 = vmatprep.subr.bf16.mxu0 0
    %2707 = vmatpush1.bf16.msra.mxu0 0
    %2708 = vmatprep.subr.bf16.mxu0 0
    %2709 = vmatpush1.bf16.msra.mxu0 0
    %2710 = vmatprep.subr.bf16.mxu0 0
    %2711 = vmatpush1.bf16.msra.mxu0 0
    %2712 = vmatprep.subr.bf16.mxu0 0
    %2713 = vmatpush1.bf16.msra.mxu0 0
    %2714 = vmatprep.subr.bf16.mxu0 0
    %2715 = vmatpush1.bf16.msra.mxu0 0
    %2716 = vmatprep.subr.bf16.mxu0 0
    %2717 = vmatpush1.bf16.msra.mxu0 0
    %2718 = vmatprep.subr.bf16.mxu0 0
    %2719 = vmatpush1.bf16.msra.mxu0 %v2613
    %2720 = vmatprep.subr.bf16.mxu0 0
    %2721 = vmatpush2.bf16.msra.mxu0 0
    %2722 = vmatprep.subr.bf16.mxu0 0
    %2723 = vmatpush2.bf16.msra.mxu0 0
    %2724 = vmatprep.subr.bf16.mxu0 0
    %2725 = vmatpush2.bf16.msra.mxu0 0
    %2726 = vmatprep.subr.bf16.mxu0 0
    %2727 = vmatpush2.bf16.msra.mxu0 0
    %2728 = vmatprep.subr.bf16.mxu0 0
    %2729 = vmatpush2.bf16.msra.mxu0 0
    %2730 = vmatprep.subr.bf16.mxu0 0
    %2731 = vmatpush2.bf16.msra.mxu0 0
    %2732 = vmatprep.subr.bf16.mxu0 0
    %2733 = vmatpush2.bf16.msra.mxu0 0
    %2734 = vmatprep.subr.bf16.mxu0 0
    %2735 = vmatpush2.bf16.msra.mxu0 0
    %2736 = vmatprep.mubr.bf16.mxu0 0
    %2737 = vmatmul.mubr.bf16.gmra.mxu0 %v2702
    %v2738 = vpop.f32.mrf.mxu0
    %v2739 = vadd.f32 0.0, %v2738
    %v2740 = vpop.f32.mrf.mxu0
    %v2741 = vpop.f32.mrf.mxu0
    %v2742 = vpop.f32.mrf.mxu0
    %2743 = vdwg.mxu0
    %v2745 = vsel %vm1035, %v2610, 0
    %2747 = vmatprep.subr.bf16.mxu0 0
    %2748 = vmatpush1.bf16.msra.mxu0 0
    %2749 = vmatprep.subr.bf16.mxu0 0
    %2750 = vmatpush1.bf16.msra.mxu0 0
    %2751 = vmatprep.subr.bf16.mxu0 0
    %2752 = vmatpush1.bf16.msra.mxu0 0
    %2753 = vmatprep.subr.bf16.mxu0 0
    %2754 = vmatpush1.bf16.msra.mxu0 0
    %2755 = vmatprep.subr.bf16.mxu0 0
    %2756 = vmatpush1.bf16.msra.mxu0 0
    %2757 = vmatprep.subr.bf16.mxu0 0
    %2758 = vmatpush1.bf16.msra.mxu0 0
    %2759 = vmatprep.subr.bf16.mxu0 0
    %2760 = vmatpush1.bf16.msra.mxu0 0
    %2761 = vmatprep.subr.bf16.mxu0 0
    %2762 = vmatpush1.bf16.msra.mxu0 %v2614
    %2763 = vmatprep.subr.bf16.mxu0 0
    %2764 = vmatpush2.bf16.msra.mxu0 0
    %2765 = vmatprep.subr.bf16.mxu0 0
    %2766 = vmatpush2.bf16.msra.mxu0 0
    %2767 = vmatprep.subr.bf16.mxu0 0
    %2768 = vmatpush2.bf16.msra.mxu0 0
    %2769 = vmatprep.subr.bf16.mxu0 0
    %2770 = vmatpush2.bf16.msra.mxu0 0
    %2771 = vmatprep.subr.bf16.mxu0 0
    %2772 = vmatpush2.bf16.msra.mxu0 0
    %2773 = vmatprep.subr.bf16.mxu0 0
    %2774 = vmatpush2.bf16.msra.mxu0 0
    %2775 = vmatprep.subr.bf16.mxu0 0
    %2776 = vmatpush2.bf16.msra.mxu0 0
    %2777 = vmatprep.subr.bf16.mxu0 0
    %2778 = vmatpush2.bf16.msra.mxu0 0
    %2779 = vmatprep.mubr.bf16.mxu0 0
    %2780 = vmatmul.mubr.bf16.gmra.mxu0 %v2745
    %v2781 = vpop.f32.mrf.mxu0
    %v2782 = vadd.f32 0.0, %v2781
    %v2783 = vpop.f32.mrf.mxu0
    %v2784 = vpop.f32.mrf.mxu0
    %v2785 = vpop.f32.mrf.mxu0
    %2786 = vdwg.mxu0
    %v2787 = vrcp.pop %v2597
    %v2788 = vrcp.pop %v2600
    %v2789 = vrcp.pop %v2603
    %v2790 = vrcp.pop %v2606
    %v2791 = vmul.f32 %v2653, %v2787
    %v2792 = vmul.f32 %v2696, %v2788
    %v2793 = vmul.f32 %v2739, %v2789
    %v2794 = vmul.f32 %v2782, %v2790
    %2796 = vrot.lane.b32.xlu0 %v2792, 8
    %v2797 = vpop.permute.xlu0 %2796
    %2800 = vrot.lane.b32.xlu0 %v2793, 16
    %v2801 = vpop.permute.xlu0 %2800
    %2804 = vrot.lane.b32.xlu0 %v2794, 24
    %v2805 = vpop.permute.xlu0 %2804
    %v2807 = vsel %vm600, %v2791, %v2797
    %v2808 = vsel %vm1035, %v2807, %v2801
    %v2809 = vsel %vm1037, %v2808, %v2805
    %v2810 = vpack.c.bf16 %v2809, %v2328
    %v2812 = vlaneseq
    %v2813 = vshrl.u32 %v2812, 7
    %v2814 = vsub.s32 0, %v2813
    %v2815 = vrot.slane %v1640, %v2814
    %v2821 = vunpack.c.l.b16 %v1636
    %v2822 = vunpack.c.l.b16 %v1637
    %v2823 = vunpack.c.l.b16 %v1638
    %v2824 = vunpack.c.l.b16 %v1639
    %v2825 = vpack.c.b16 %v2822, %v2821
    %v2826 = vpack.c.b16 %v2824, %v2823
    %v2830 = vsel %vm309, %v2810, 0
    %2832 = vmatprep.subr.bf16.mxu0 0
    %2833 = vmatpush1.bf16.msra.mxu0 0
    %2834 = vmatprep.subr.bf16.mxu0 0
    %2835 = vmatpush1.bf16.msra.mxu0 0
    %2836 = vmatprep.subr.bf16.mxu0 0
    %2837 = vmatpush1.bf16.msra.mxu0 0
    %2838 = vmatprep.subr.bf16.mxu0 0
    %2839 = vmatpush1.bf16.msra.mxu0 0
    %2840 = vmatprep.subr.bf16.mxu0 0
    %2841 = vmatpush1.bf16.msra.mxu0 0
    %2842 = vmatprep.subr.bf16.mxu0 0
    %2843 = vmatpush1.bf16.msra.mxu0 0
    %2844 = vmatprep.subr.bf16.mxu0 0
    %2845 = vmatpush1.bf16.msra.mxu0 %v2826
    %2846 = vmatprep.subr.bf16.mxu0 0
    %2847 = vmatpush1.bf16.msra.mxu0 %v2825
    %2848 = vmatprep.subr.bf16.mxu0 0
    %2849 = vmatpush2.bf16.msra.mxu0 0
    %2850 = vmatprep.subr.bf16.mxu0 0
    %2851 = vmatpush2.bf16.msra.mxu0 0
    %2852 = vmatprep.subr.bf16.mxu0 0
    %2853 = vmatpush2.bf16.msra.mxu0 0
    %2854 = vmatprep.subr.bf16.mxu0 0
    %2855 = vmatpush2.bf16.msra.mxu0 0
    %2856 = vmatprep.subr.bf16.mxu0 0
    %2857 = vmatpush2.bf16.msra.mxu0 0
    %2858 = vmatprep.subr.bf16.mxu0 0
    %2859 = vmatpush2.bf16.msra.mxu0 0
    %2860 = vmatprep.subr.bf16.mxu0 0
    %2861 = vmatpush2.bf16.msra.mxu0 0
    %2862 = vmatprep.subr.bf16.mxu0 0
    %2863 = vmatpush2.bf16.msra.mxu0 0
    %2864 = vmatprep.mubr.bf16.mxu0 0
    %2865 = vmatmul.mubr.bf16.gmra.mxu0 %v2830
    %v2866 = vpop.f32.mrf.mxu0
    %v2867 = vadd.f32 %v2815, %v2866
    %v2868 = vpop.f32.mrf.mxu0
    %v2869 = vpop.f32.mrf.mxu0
    %v2870 = vadd.f32 %v2815, %v2869
    %v2871 = vpop.f32.mrf.mxu0
    %2872 = vdwg.mxu0
    %v2873 = vadd.f32 %v1575, %v2867
    %v2874 = vadd.f32 %v1576, %v2870
    %v2875 = vld [vmem:[%s22] sm:$0x1]
    %v2876 = vld [vmem:[%s23] sm:$0x1]
    %v2877 = vsel %vm309, %v2873, 0.0
    %2878 = vadd.xlane.f32.xlu0 %v2877
    %v2879 = vpop.xlane.xlu0 %2878
    %v2880 = vsel %vm309, %v2874, 0.0
    %2881 = vadd.xlane.f32.xlu0 %v2880
    %v2882 = vpop.xlane.xlu0 %2881
    %v2883 = vmul.f32 %v2879, %v316
    %v2884 = vmul.f32 %v2882, %v316
    %v2885 = vsub.f32 %v2873, %v2883
    %v2886 = vsub.f32 %v2874, %v2884
    %v2887 = vmul.f32 %v2885, %v2885
    %v2888 = vmul.f32 %v2886, %v2886
    %v2889 = vsel %vm309, %v2887, 0.0
    %2890 = vadd.xlane.f32.xlu0 %v2889
    %v2891 = vpop.xlane.xlu0 %2890
    %v2892 = vsel %vm309, %v2888, 0.0
    %2893 = vadd.xlane.f32.xlu0 %v2892
    %v2894 = vpop.xlane.xlu0 %2893
    %v2895 = vmul.f32 %v2891, %v316
    %v2896 = vmul.f32 %v2894, %v316
    %v2897 = vadd.f32 %v2895, 1e-05
    %v2898 = vadd.f32 %v2896, 1e-05
    %v2899 = vrsqrt.pop %v2897
    %v2900 = vrsqrt.pop %v2898
    %v2901 = vmul.f32 %v2885, %v2899
    %v2902 = vmul.f32 %v2886, %v2900
    %v2904 = vlaneseq
    %v2905 = vshrl.u32 %v2904, 7
    %v2906 = vsub.s32 0, %v2905
    %v2907 = vrot.slane %v2875, %v2906
    %v2909 = vmul.f32 %v2901, %v2907
    %v2910 = vmul.f32 %v2902, %v2907
    %v2912 = vlaneseq
    %v2913 = vshrl.u32 %v2912, 7
    %v2914 = vsub.s32 0, %v2913
    %v2915 = vrot.slane %v2876, %v2914
    %v2917 = vadd.f32 %v2909, %v2915
    %v2918 = vadd.f32 %v2910, %v2915
    %v2919 = vpack.c.bf16 %v2918, %v2917
    %v2920 = vld [vmem:[#allocation28] sm:$0xf]
    %v2921 = vld [vmem:[#allocation28 + $0x4] sm:$0xf]
    %v2922 = vld [vmem:[#allocation28 + $0x8] sm:$0xf]
    %v2923 = vld [vmem:[#allocation28 + $0xc] sm:$0xf]
    %v2924 = vld [vmem:[%s25] sm:$0x1]
    %v2926 = vlaneseq
    %v2927 = vshrl.u32 %v2926, 7
    %v2928 = vsub.s32 0, %v2927
    %v2929 = vrot.slane %v2924, %v2928
    %v2935 = vunpack.c.l.b16 %v2920
    %v2936 = vunpack.c.l.b16 %v2921
    %v2937 = vunpack.c.l.b16 %v2922
    %v2938 = vunpack.c.l.b16 %v2923
    %v2939 = vpack.c.b16 %v2936, %v2935
    %v2940 = vpack.c.b16 %v2938, %v2937
    %v2944 = vsel %vm309, %v2919, 0
    %2946 = vmatprep.subr.bf16.mxu0 0
    %2947 = vmatpush1.bf16.msra.mxu0 0
    %2948 = vmatprep.subr.bf16.mxu0 0
    %2949 = vmatpush1.bf16.msra.mxu0 0
    %2950 = vmatprep.subr.bf16.mxu0 0
    %2951 = vmatpush1.bf16.msra.mxu0 0
    %2952 = vmatprep.subr.bf16.mxu0 0
    %2953 = vmatpush1.bf16.msra.mxu0 0
    %2954 = vmatprep.subr.bf16.mxu0 0
    %2955 = vmatpush1.bf16.msra.mxu0 0
    %2956 = vmatprep.subr.bf16.mxu0 0
    %2957 = vmatpush1.bf16.msra.mxu0 0
    %2958 = vmatprep.subr.bf16.mxu0 0
    %2959 = vmatpush1.bf16.msra.mxu0 %v2940
    %2960 = vmatprep.subr.bf16.mxu0 0
    %2961 = vmatpush1.bf16.msra.mxu0 %v2939
    %2962 = vmatprep.subr.bf16.mxu0 0
    %2963 = vmatpush2.bf16.msra.mxu0 0
    %2964 = vmatprep.subr.bf16.mxu0 0
    %2965 = vmatpush2.bf16.msra.mxu0 0
    %2966 = vmatprep.subr.bf16.mxu0 0
    %2967 = vmatpush2.bf16.msra.mxu0 0
    %2968 = vmatprep.subr.bf16.mxu0 0
    %2969 = vmatpush2.bf16.msra.mxu0 0
    %2970 = vmatprep.subr.bf16.mxu0 0
    %2971 = vmatpush2.bf16.msra.mxu0 0
    %2972 = vmatprep.subr.bf16.mxu0 0
    %2973 = vmatpush2.bf16.msra.mxu0 0
    %2974 = vmatprep.subr.bf16.mxu0 0
    %2975 = vmatpush2.bf16.msra.mxu0 0
    %2976 = vmatprep.subr.bf16.mxu0 0
    %2977 = vmatpush2.bf16.msra.mxu0 0
    %2978 = vmatprep.mubr.bf16.mxu0 0
    %2979 = vmatmul.mubr.bf16.gmra.mxu0 %v2944
    %v2980 = vpop.f32.mrf.mxu0
    %v2981 = vadd.f32 %v2929, %v2980
    %v2982 = vpop.f32.mrf.mxu0
    %v2983 = vpop.f32.mrf.mxu0
    %v2984 = vadd.f32 %v2929, %v2983
    %v2985 = vpop.f32.mrf.mxu0
    %2986 = vdwg.mxu0
    %v2987 = vmax.f32 %v2981, 0.0
    %v2988 = vmax.f32 %v2984, 0.0
    %v2989 = vpack.c.bf16 %v2988, %v2987
    %v2990 = vld [vmem:[%s26] sm:$0xf]
    %v2991 = vld [vmem:[%s26 + $0x4] sm:$0xf]
    %v2992 = vld [vmem:[%s26 + $0x8] sm:$0xf]
    %v2993 = vld [vmem:[%s26 + $0xc] sm:$0xf]
    %v2994 = vld [vmem:[%s26 + $0x10] sm:$0xf]
    %v2995 = vld [vmem:[%s26 + $0x14] sm:$0xf]
    %v2996 = vld [vmem:[%s26 + $0x18] sm:$0xf]
    %v2997 = vld [vmem:[%s26 + $0x1c] sm:$0xf]
    %v3006 = vunpack.c.l.b16 %v2990
    %v3007 = vunpack.c.l.b16 %v2991
    %v3008 = vunpack.c.l.b16 %v2992
    %v3009 = vunpack.c.l.b16 %v2993
    %v3010 = vunpack.c.l.b16 %v2994
    %v3011 = vunpack.c.l.b16 %v2995
    %v3012 = vunpack.c.l.b16 %v2996
    %v3013 = vunpack.c.l.b16 %v2997
    %v3014 = vpack.c.b16 %v3007, %v3006
    %v3015 = vpack.c.b16 %v3009, %v3008
    %v3016 = vpack.c.b16 %v3011, %v3010
    %v3017 = vpack.c.b16 %v3013, %v3012
    %vm3022 = vcmask 523264
    %v3024 = vsel %vm3022, %v2989, 0
    %3026 = vmatprep.subr.bf16.mxu0 0
    %3027 = vmatpush1.bf16.msra.mxu0 0
    %3028 = vmatprep.subr.bf16.mxu0 0
    %3029 = vmatpush1.bf16.msra.mxu0 0
    %3030 = vmatprep.subr.bf16.mxu0 0
    %3031 = vmatpush1.bf16.msra.mxu0 0
    %3032 = vmatprep.subr.bf16.mxu0 0
    %3033 = vmatpush1.bf16.msra.mxu0 0
    %3034 = vmatprep.subr.bf16.mxu0 0
    %3035 = vmatpush1.bf16.msra.mxu0 %v3017
    %3036 = vmatprep.subr.bf16.mxu0 0
    %3037 = vmatpush1.bf16.msra.mxu0 %v3016
    %3038 = vmatprep.subr.bf16.mxu0 0
    %3039 = vmatpush1.bf16.msra.mxu0 %v3015
    %3040 = vmatprep.subr.bf16.mxu0 0
    %3041 = vmatpush1.bf16.msra.mxu0 %v3014
    %3042 = vmatprep.subr.bf16.mxu0 0
    %3043 = vmatpush2.bf16.msra.mxu0 0
    %3044 = vmatprep.subr.bf16.mxu0 0
    %3045 = vmatpush2.bf16.msra.mxu0 0
    %3046 = vmatprep.subr.bf16.mxu0 0
    %3047 = vmatpush2.bf16.msra.mxu0 0
    %3048 = vmatprep.subr.bf16.mxu0 0
    %3049 = vmatpush2.bf16.msra.mxu0 0
    %3050 = vmatprep.subr.bf16.mxu0 0
    %3051 = vmatpush2.bf16.msra.mxu0 0
    %3052 = vmatprep.subr.bf16.mxu0 0
    %3053 = vmatpush2.bf16.msra.mxu0 0
    %3054 = vmatprep.subr.bf16.mxu0 0
    %3055 = vmatpush2.bf16.msra.mxu0 0
    %3056 = vmatprep.subr.bf16.mxu0 0
    %3057 = vmatpush2.bf16.msra.mxu0 0
    %3058 = vmatprep.mubr.bf16.mxu0 0
    %3059 = vmatmul.mubr.bf16.gmra.mxu0 %v3024
    %v3060 = vpop.f32.mrf.mxu0
    %v3061 = vadd.f32 0.0, %v3060
    %v3062 = vpop.f32.mrf.mxu0
    %v3063 = vpop.f32.mrf.mxu0
    %v3064 = vadd.f32 0.0, %v3063
    %v3065 = vpop.f32.mrf.mxu0
    %3066 = vdwg.mxu0
    %v3067 = vadd.f32 %v2873, %v3061
    %v3068 = vadd.f32 %v2874, %v3064
    %v3069 = vld [vmem:[%s27] sm:$0x1]
    %v3071 = vlaneseq
    %v3072 = vshrl.u32 %v3071, 7
    %v3073 = vsub.s32 0, %v3072
    %v3074 = vrot.slane %v3069, %v3073
    %v3076 = vadd.f32 %v3067, %v3074
    %v3077 = vadd.f32 %v3068, %v3074
    %3078 = vst.msk [vmem:[#allocation29] sm:$0xff] %vm309, %v3076
    %3079 = vst.msk [vmem:[#allocation29 + $0x8] sm:$0xff] %vm309, %v3077
    // Predicated region
    $region182: #{tpu_custom_call.1} parent=1 // pred_check
      _
    $region183: #{tpu_custom_call.1} parent=1 // pred_check_branch
      %3081 = sbr.rel (0) target = $region185
    $region184: #{tpu_custom_call.1} parent=1 // pred_region
      %s3083 = ssub.s32 256, 256
      %3084 = vsyncadd [#allocation4], %s3083
      %s3085 = sshll.u32 [#allocation29], 4
      %s3086 = int_to_ptr.vmem [resolvable:$true] %s3085
      %3091 = dma.vmem_to_hbm [thread:$0]  %s3086, 256, %s28, [#allocation4], 128, 128, 8
    $region185: #{tpu_custom_call.1} parent=1 // pred_fallthru
      _
    // Predicated region
    $region186: #{tpu_custom_call.1} parent=1 // pred_check
      _
    $region187: #{tpu_custom_call.1} parent=1 // pred_check_branch
      %3093 = sbr.rel (0) target = $region189
    $region188: #{tpu_custom_call.1} parent=1 // pred_region
      %3094 = dma.done [#allocation4], 256
    $region189: #{tpu_custom_call.1} parent=1 // pred_fallthru
      _
    %3095 = vsyncpa [#allocation3], 1
    %3096 = vsyncpa [#allocation6], 1
    %3097 = vsyncpa [#allocation9], 1
    %3098 = vsyncpa [#allocation12], 1
    %3099 = vsyncpa [#allocation15], 1
    %3100 = vsyncpa [#allocation18], 1
    %3101 = vsyncpa [#allocation21], 1
    %3102 = vsyncpa [#allocation24], 1
    %3103 = vsyncpa [#allocation27], 1
    %3104 = vsyncpa [#allocation4], 1

</llo_original>
